<compile_context>
chip_gen: v5e
topology: v5e:2x2
jax: 0.10.0
libtpu: 0.0.40
codegen_flags: <defaults>
</compile_context>

<pallas_src>
import jax
import jax.numpy as jnp
from jax.experimental import pallas as pl
from jax.experimental.pallas import tpu as pltpu

# ---- model hyper-parameters (small, self-consistent shapes) -----------------
BATCH = 2
TIMESTEPS = 8
N_FEATURES = 32          # chosen = last hidden size so the final reshape
                         # (n_features, batch_size) is valid, as in the module
HIDDEN_SIZES = (256, 128, 64, 32)
OUT_PAD = 128            # lane-dense padded width of the final output slab


def _run_lstm_layer(x2d, w_ref, u_ref, b_ref, return_sequences):
    """One fused-gate LSTM layer, fully unrolled over TIMESTEPS.

    x2d   : [T*B, D]  time-major input slab (traced value, stays on-chip)
    w_ref : [D, 4H]   fused input->gate weights, gate order (i, f, o, g)
    u_ref : [H, 4H]   fused hidden->gate weights
    b_ref : [1, 4H]   fused gate bias
    """
    H4 = w_ref.shape[-1]
    H = H4 // 4
    B = BATCH

    W = w_ref[...]
    U = u_ref[...]
    b = b_ref[...]

    # Hoisted input projection + bias: one matmul with M = T*B (=16) instead of
    # per-timestep matmuls inside the recurrence; bias broadcast happens once.
    xw = jnp.dot(x2d, W, preferred_element_type=jnp.float32) + b      # [T*B, 4H]

    h = jnp.zeros((B, H), jnp.float32)
    c = jnp.zeros((B, H), jnp.float32)
    hs = []
    for t in range(TIMESTEPS):         # static unroll (T=8): LLO sees the body
        z = xw[t * B:(t + 1) * B] + jnp.dot(
            h, U, preferred_element_type=jnp.float32)                 # [B, 4H]
        ifo = jax.nn.sigmoid(z[:, :3 * H])    # one wide EUP pass over i/f/o
        g = jax.nn.relu(z[:, 3 * H:])         # relu candidate (activation='relu')
        i_g = ifo[:, :H]
        f_g = ifo[:, H:2 * H]
        o_g = ifo[:, 2 * H:]
        c = f_g * c + i_g * g
        h = o_g * jax.nn.relu(c)              # relu cell-output activation
        if return_sequences:
            hs.append(h)

    if return_sequences:
        return jnp.concatenate(hs, axis=0)    # [T*B, H]
    return h                                  # [B, H] final hidden state


def _encoder_kernel(x_ref,
                    w1_ref, u1_ref, b1_ref,
                    w2_ref, u2_ref, b2_ref,
                    w3_ref, u3_ref, b3_ref,
                    w4_ref, u4_ref, b4_ref,
                    out_ref):
    """All four stacked LSTM layers fused into a single Pallas invocation.

    Total weights ~2.1 MB f32: everything (weights + activations) lives in
    VMEM; only the final hidden state (padded to 128 lanes) is written out.
    """
    x2d = x_ref[...]                                                   # [T*B, 32]
    s1 = _run_lstm_layer(x2d, w1_ref, u1_ref, b1_ref, True)            # [T*B, 256]
    s2 = _run_lstm_layer(s1, w2_ref, u2_ref, b2_ref, True)             # [T*B, 128]
    s3 = _run_lstm_layer(s2, w3_ref, u3_ref, b3_ref, True)             # [T*B, 64]
    h_last = _run_lstm_layer(s3, w4_ref, u4_ref, b4_ref, False)        # [B, 32]

    # Lane-dense output: pad [B, 32] -> [B, 128] so the store is a full-lane
    # vst rather than a masked partial store; the wrapper slices it back.
    pad = jnp.zeros((BATCH, OUT_PAD - HIDDEN_SIZES[-1]), jnp.float32)
    out_ref[...] = jnp.concatenate([h_last, pad], axis=-1)


def init_params(key):
    """Deterministic init of fused-gate weights for the 4 stacked LSTM layers.

    Gate order along the fused 4H dimension is (i, f, o, g) so the sigmoid
    gates occupy one contiguous 3H slab.
    """
    params = []
    in_dim = N_FEATURES
    for li, h in enumerate(HIDDEN_SIZES):
        k = jax.random.fold_in(key, li)
        kw, ku, kb = jax.random.split(k, 3)
        scale_w = 1.0 / jnp.sqrt(jnp.float32(in_dim))
        scale_u = 1.0 / jnp.sqrt(jnp.float32(h))
        W = jax.random.uniform(kw, (in_dim, 4 * h), jnp.float32,
                               minval=-scale_w, maxval=scale_w)
        U = jax.random.uniform(ku, (h, 4 * h), jnp.float32,
                               minval=-scale_u, maxval=scale_u)
        b = jax.random.uniform(kb, (1, 4 * h), jnp.float32,
                               minval=-scale_u, maxval=scale_u)
        params.append((W, U, b))
        in_dim = h
    return params


@jax.jit
def encoder_forward(x, params):
    """x: (batch, timesteps, n_features) -> (n_features, batch)."""
    x = x.reshape((BATCH, TIMESTEPS, N_FEATURES))        # matches module reshape
    # time-major flattened slab [T*B, D] for the kernel
    x2d = jnp.transpose(x, (1, 0, 2)).reshape((TIMESTEPS * BATCH, N_FEATURES))
    x2d = x2d.astype(jnp.float32)

    flat = [t for layer in params for t in layer]
    vmem = pl.BlockSpec(memory_space=pltpu.MemorySpace.VMEM)

    out = pl.pallas_call(
        _encoder_kernel,
        out_shape=jax.ShapeDtypeStruct((BATCH, OUT_PAD), jnp.float32),
        in_specs=[vmem] * (1 + len(flat)),
        out_specs=vmem,
    )(x2d, *flat)

    h_last = out[:, :HIDDEN_SIZES[-1]]                   # (B, 32) = hidden_n
    # TODO(synk): enc5 = RepeatVector(timesteps) output is never used by the
    # module's return value, so it is not materialized here.
    # NOTE: the module does a raw row-major reshape (NOT a transpose); we
    # mirror it exactly.
    return h_last.reshape((N_FEATURES, BATCH))           # (32, 2)


if __name__ == "__main__":
    key = jax.random.PRNGKey(0)
    k_x, k_p = jax.random.split(key)
    x = jax.random.normal(k_x, (BATCH, TIMESTEPS, N_FEATURES), jnp.float32)
    params = init_params(k_p)

    out = encoder_forward(x, params)
    jax.block_until_ready(out)
    assert out.shape == (N_FEATURES, BATCH), out.shape
    assert bool(jnp.all(jnp.isfinite(out)))
    print("KERNEL_OK")
</pallas_src>

<mosaic_0001>
module attributes {stable_mosaic.version = 11 : i64} {
  func.func @_encoder_kernel(%arg0: memref<16x32xf32, #tpu.memory_space<vmem>>, %arg1: memref<32x1024xf32, #tpu.memory_space<vmem>>, %arg2: memref<256x1024xf32, #tpu.memory_space<vmem>>, %arg3: memref<1x1024xf32, #tpu.memory_space<vmem>>, %arg4: memref<256x512xf32, #tpu.memory_space<vmem>>, %arg5: memref<128x512xf32, #tpu.memory_space<vmem>>, %arg6: memref<1x512xf32, #tpu.memory_space<vmem>>, %arg7: memref<128x256xf32, #tpu.memory_space<vmem>>, %arg8: memref<64x256xf32, #tpu.memory_space<vmem>>, %arg9: memref<1x256xf32, #tpu.memory_space<vmem>>, %arg10: memref<64x128xf32, #tpu.memory_space<vmem>>, %arg11: memref<32x128xf32, #tpu.memory_space<vmem>>, %arg12: memref<1x128xf32, #tpu.memory_space<vmem>>, %arg13: memref<2x128xf32, #tpu.memory_space<vmem>>) attributes {dimension_semantics = [], scalar_prefetch = 0 : i64, scratch_operands = 0 : i64, tpu.core_type = #tpu.core_type<tc>} {
    %c0 = arith.constant 0 : index
    %c0_0 = arith.constant 0 : index
    %0 = vector.load %arg0[%c0, %c0_0] : memref<16x32xf32, #tpu.memory_space<vmem>>, vector<16x32xf32>
    %c0_1 = arith.constant 0 : index
    %c0_2 = arith.constant 0 : index
    %1 = vector.load %arg1[%c0_1, %c0_2] : memref<32x1024xf32, #tpu.memory_space<vmem>>, vector<32x1024xf32>
    %c0_3 = arith.constant 0 : index
    %c0_4 = arith.constant 0 : index
    %2 = vector.load %arg2[%c0_3, %c0_4] : memref<256x1024xf32, #tpu.memory_space<vmem>>, vector<256x1024xf32>
    %c0_5 = arith.constant 0 : index
    %c0_6 = arith.constant 0 : index
    %3 = vector.load %arg3[%c0_5, %c0_6] : memref<1x1024xf32, #tpu.memory_space<vmem>>, vector<1x1024xf32>
    %cst = arith.constant dense<0.000000e+00> : vector<16x1024xf32>
    %4 = tpu.matmul %0, %1, %cst {dimension_numbers = #tpu.dot_dimension_numbers<[1], [0], [0], [1], [0, 0, 1, 1], [], []>} : vector<16x32xf32>, vector<32x1024xf32>, vector<16x1024xf32> -> vector<16x1024xf32>
    %5 = vector.broadcast %3 : vector<1x1024xf32> to vector<16x1024xf32>
    %6 = arith.addf %4, %5 : vector<16x1024xf32>
    %cst_7 = arith.constant 0.000000e+00 : f32
    %7 = vector.broadcast %cst_7 : f32 to vector<2x256xf32>
    %cst_8 = arith.constant 0.000000e+00 : f32
    %8 = vector.broadcast %cst_8 : f32 to vector<2x256xf32>
    %9 = vector.extract_strided_slice %6 {offsets = [0, 0], sizes = [2, 1024], strides = [1, 1]} : vector<16x1024xf32> to vector<2x1024xf32>
    %cst_9 = arith.constant dense<0.000000e+00> : vector<2x1024xf32>
    %10 = tpu.matmul %7, %2, %cst_9 {dimension_numbers = #tpu.dot_dimension_numbers<[1], [0], [0], [1], [0, 0, 1, 1], [], []>} : vector<2x256xf32>, vector<256x1024xf32>, vector<2x1024xf32> -> vector<2x1024xf32>
    %11 = arith.addf %9, %10 : vector<2x1024xf32>
    %12 = vector.extract_strided_slice %11 {offsets = [0, 0], sizes = [2, 768], strides = [1, 1]} : vector<2x1024xf32> to vector<2x768xf32>
    %13 = arith.negf %12 : vector<2x768xf32>
    %14 = math.exp %13 : vector<2x768xf32>
    %cst_10 = arith.constant 1.000000e+00 : f32
    %15 = vector.broadcast %cst_10 : f32 to vector<2x768xf32>
    %16 = arith.addf %15, %14 : vector<2x768xf32>
    %17 = arith.divf %15, %16 : vector<2x768xf32>
    %18 = vector.extract_strided_slice %11 {offsets = [0, 768], sizes = [2, 256], strides = [1, 1]} : vector<2x1024xf32> to vector<2x256xf32>
    %cst_11 = arith.constant 0.000000e+00 : f32
    %19 = vector.broadcast %cst_11 : f32 to vector<2x256xf32>
    %20 = arith.maximumf %18, %19 : vector<2x256xf32>
    %21 = vector.extract_strided_slice %17 {offsets = [0, 0], sizes = [2, 256], strides = [1, 1]} : vector<2x768xf32> to vector<2x256xf32>
    %22 = vector.extract_strided_slice %17 {offsets = [0, 256], sizes = [2, 256], strides = [1, 1]} : vector<2x768xf32> to vector<2x256xf32>
    %23 = vector.extract_strided_slice %17 {offsets = [0, 512], sizes = [2, 256], strides = [1, 1]} : vector<2x768xf32> to vector<2x256xf32>
    %24 = arith.mulf %22, %8 : vector<2x256xf32>
    %25 = arith.mulf %21, %20 : vector<2x256xf32>
    %26 = arith.addf %24, %25 : vector<2x256xf32>
    %cst_12 = arith.constant 0.000000e+00 : f32
    %27 = vector.broadcast %cst_12 : f32 to vector<2x256xf32>
    %28 = arith.maximumf %26, %27 : vector<2x256xf32>
    %29 = arith.mulf %23, %28 : vector<2x256xf32>
    %30 = vector.extract_strided_slice %6 {offsets = [2, 0], sizes = [2, 1024], strides = [1, 1]} : vector<16x1024xf32> to vector<2x1024xf32>
    %cst_13 = arith.constant dense<0.000000e+00> : vector<2x1024xf32>
    %31 = tpu.matmul %29, %2, %cst_13 {dimension_numbers = #tpu.dot_dimension_numbers<[1], [0], [0], [1], [0, 0, 1, 1], [], []>} : vector<2x256xf32>, vector<256x1024xf32>, vector<2x1024xf32> -> vector<2x1024xf32>
    %32 = arith.addf %30, %31 : vector<2x1024xf32>
    %33 = vector.extract_strided_slice %32 {offsets = [0, 0], sizes = [2, 768], strides = [1, 1]} : vector<2x1024xf32> to vector<2x768xf32>
    %34 = arith.negf %33 : vector<2x768xf32>
    %35 = math.exp %34 : vector<2x768xf32>
    %cst_14 = arith.constant 1.000000e+00 : f32
    %36 = vector.broadcast %cst_14 : f32 to vector<2x768xf32>
    %37 = arith.addf %36, %35 : vector<2x768xf32>
    %38 = arith.divf %36, %37 : vector<2x768xf32>
    %39 = vector.extract_strided_slice %32 {offsets = [0, 768], sizes = [2, 256], strides = [1, 1]} : vector<2x1024xf32> to vector<2x256xf32>
    %cst_15 = arith.constant 0.000000e+00 : f32
    %40 = vector.broadcast %cst_15 : f32 to vector<2x256xf32>
    %41 = arith.maximumf %39, %40 : vector<2x256xf32>
    %42 = vector.extract_strided_slice %38 {offsets = [0, 0], sizes = [2, 256], strides = [1, 1]} : vector<2x768xf32> to vector<2x256xf32>
    %43 = vector.extract_strided_slice %38 {offsets = [0, 256], sizes = [2, 256], strides = [1, 1]} : vector<2x768xf32> to vector<2x256xf32>
    %44 = vector.extract_strided_slice %38 {offsets = [0, 512], sizes = [2, 256], strides = [1, 1]} : vector<2x768xf32> to vector<2x256xf32>
    %45 = arith.mulf %43, %26 : vector<2x256xf32>
    %46 = arith.mulf %42, %41 : vector<2x256xf32>
    %47 = arith.addf %45, %46 : vector<2x256xf32>
    %cst_16 = arith.constant 0.000000e+00 : f32
    %48 = vector.broadcast %cst_16 : f32 to vector<2x256xf32>
    %49 = arith.maximumf %47, %48 : vector<2x256xf32>
    %50 = arith.mulf %44, %49 : vector<2x256xf32>
    %51 = vector.extract_strided_slice %6 {offsets = [4, 0], sizes = [2, 1024], strides = [1, 1]} : vector<16x1024xf32> to vector<2x1024xf32>
    %cst_17 = arith.constant dense<0.000000e+00> : vector<2x1024xf32>
    %52 = tpu.matmul %50, %2, %cst_17 {dimension_numbers = #tpu.dot_dimension_numbers<[1], [0], [0], [1], [0, 0, 1, 1], [], []>} : vector<2x256xf32>, vector<256x1024xf32>, vector<2x1024xf32> -> vector<2x1024xf32>
    %53 = arith.addf %51, %52 : vector<2x1024xf32>
    %54 = vector.extract_strided_slice %53 {offsets = [0, 0], sizes = [2, 768], strides = [1, 1]} : vector<2x1024xf32> to vector<2x768xf32>
    %55 = arith.negf %54 : vector<2x768xf32>
    %56 = math.exp %55 : vector<2x768xf32>
    %cst_18 = arith.constant 1.000000e+00 : f32
    %57 = vector.broadcast %cst_18 : f32 to vector<2x768xf32>
    %58 = arith.addf %57, %56 : vector<2x768xf32>
    %59 = arith.divf %57, %58 : vector<2x768xf32>
    %60 = vector.extract_strided_slice %53 {offsets = [0, 768], sizes = [2, 256], strides = [1, 1]} : vector<2x1024xf32> to vector<2x256xf32>
    %cst_19 = arith.constant 0.000000e+00 : f32
    %61 = vector.broadcast %cst_19 : f32 to vector<2x256xf32>
    %62 = arith.maximumf %60, %61 : vector<2x256xf32>
    %63 = vector.extract_strided_slice %59 {offsets = [0, 0], sizes = [2, 256], strides = [1, 1]} : vector<2x768xf32> to vector<2x256xf32>
    %64 = vector.extract_strided_slice %59 {offsets = [0, 256], sizes = [2, 256], strides = [1, 1]} : vector<2x768xf32> to vector<2x256xf32>
    %65 = vector.extract_strided_slice %59 {offsets = [0, 512], sizes = [2, 256], strides = [1, 1]} : vector<2x768xf32> to vector<2x256xf32>
    %66 = arith.mulf %64, %47 : vector<2x256xf32>
    %67 = arith.mulf %63, %62 : vector<2x256xf32>
    %68 = arith.addf %66, %67 : vector<2x256xf32>
    %cst_20 = arith.constant 0.000000e+00 : f32
    %69 = vector.broadcast %cst_20 : f32 to vector<2x256xf32>
    %70 = arith.maximumf %68, %69 : vector<2x256xf32>
    %71 = arith.mulf %65, %70 : vector<2x256xf32>
    %72 = vector.extract_strided_slice %6 {offsets = [6, 0], sizes = [2, 1024], strides = [1, 1]} : vector<16x1024xf32> to vector<2x1024xf32>
    %cst_21 = arith.constant dense<0.000000e+00> : vector<2x1024xf32>
    %73 = tpu.matmul %71, %2, %cst_21 {dimension_numbers = #tpu.dot_dimension_numbers<[1], [0], [0], [1], [0, 0, 1, 1], [], []>} : vector<2x256xf32>, vector<256x1024xf32>, vector<2x1024xf32> -> vector<2x1024xf32>
    %74 = arith.addf %72, %73 : vector<2x1024xf32>
    %75 = vector.extract_strided_slice %74 {offsets = [0, 0], sizes = [2, 768], strides = [1, 1]} : vector<2x1024xf32> to vector<2x768xf32>
    %76 = arith.negf %75 : vector<2x768xf32>
    %77 = math.exp %76 : vector<2x768xf32>
    %cst_22 = arith.constant 1.000000e+00 : f32
    %78 = vector.broadcast %cst_22 : f32 to vector<2x768xf32>
    %79 = arith.addf %78, %77 : vector<2x768xf32>
    %80 = arith.divf %78, %79 : vector<2x768xf32>
    %81 = vector.extract_strided_slice %74 {offsets = [0, 768], sizes = [2, 256], strides = [1, 1]} : vector<2x1024xf32> to vector<2x256xf32>
    %cst_23 = arith.constant 0.000000e+00 : f32
    %82 = vector.broadcast %cst_23 : f32 to vector<2x256xf32>
    %83 = arith.maximumf %81, %82 : vector<2x256xf32>
    %84 = vector.extract_strided_slice %80 {offsets = [0, 0], sizes = [2, 256], strides = [1, 1]} : vector<2x768xf32> to vector<2x256xf32>
    %85 = vector.extract_strided_slice %80 {offsets = [0, 256], sizes = [2, 256], strides = [1, 1]} : vector<2x768xf32> to vector<2x256xf32>
    %86 = vector.extract_strided_slice %80 {offsets = [0, 512], sizes = [2, 256], strides = [1, 1]} : vector<2x768xf32> to vector<2x256xf32>
    %87 = arith.mulf %85, %68 : vector<2x256xf32>
    %88 = arith.mulf %84, %83 : vector<2x256xf32>
    %89 = arith.addf %87, %88 : vector<2x256xf32>
    %cst_24 = arith.constant 0.000000e+00 : f32
    %90 = vector.broadcast %cst_24 : f32 to vector<2x256xf32>
    %91 = arith.maximumf %89, %90 : vector<2x256xf32>
    %92 = arith.mulf %86, %91 : vector<2x256xf32>
    %93 = vector.extract_strided_slice %6 {offsets = [8, 0], sizes = [2, 1024], strides = [1, 1]} : vector<16x1024xf32> to vector<2x1024xf32>
    %cst_25 = arith.constant dense<0.000000e+00> : vector<2x1024xf32>
    %94 = tpu.matmul %92, %2, %cst_25 {dimension_numbers = #tpu.dot_dimension_numbers<[1], [0], [0], [1], [0, 0, 1, 1], [], []>} : vector<2x256xf32>, vector<256x1024xf32>, vector<2x1024xf32> -> vector<2x1024xf32>
    %95 = arith.addf %93, %94 : vector<2x1024xf32>
    %96 = vector.extract_strided_slice %95 {offsets = [0, 0], sizes = [2, 768], strides = [1, 1]} : vector<2x1024xf32> to vector<2x768xf32>
    %97 = arith.negf %96 : vector<2x768xf32>
    %98 = math.exp %97 : vector<2x768xf32>
    %cst_26 = arith.constant 1.000000e+00 : f32
    %99 = vector.broadcast %cst_26 : f32 to vector<2x768xf32>
    %100 = arith.addf %99, %98 : vector<2x768xf32>
    %101 = arith.divf %99, %100 : vector<2x768xf32>
    %102 = vector.extract_strided_slice %95 {offsets = [0, 768], sizes = [2, 256], strides = [1, 1]} : vector<2x1024xf32> to vector<2x256xf32>
    %cst_27 = arith.constant 0.000000e+00 : f32
    %103 = vector.broadcast %cst_27 : f32 to vector<2x256xf32>
    %104 = arith.maximumf %102, %103 : vector<2x256xf32>
    %105 = vector.extract_strided_slice %101 {offsets = [0, 0], sizes = [2, 256], strides = [1, 1]} : vector<2x768xf32> to vector<2x256xf32>
    %106 = vector.extract_strided_slice %101 {offsets = [0, 256], sizes = [2, 256], strides = [1, 1]} : vector<2x768xf32> to vector<2x256xf32>
    %107 = vector.extract_strided_slice %101 {offsets = [0, 512], sizes = [2, 256], strides = [1, 1]} : vector<2x768xf32> to vector<2x256xf32>
    %108 = arith.mulf %106, %89 : vector<2x256xf32>
    %109 = arith.mulf %105, %104 : vector<2x256xf32>
    %110 = arith.addf %108, %109 : vector<2x256xf32>
    %cst_28 = arith.constant 0.000000e+00 : f32
    %111 = vector.broadcast %cst_28 : f32 to vector<2x256xf32>
    %112 = arith.maximumf %110, %111 : vector<2x256xf32>
    %113 = arith.mulf %107, %112 : vector<2x256xf32>
    %114 = vector.extract_strided_slice %6 {offsets = [10, 0], sizes = [2, 1024], strides = [1, 1]} : vector<16x1024xf32> to vector<2x1024xf32>
    %cst_29 = arith.constant dense<0.000000e+00> : vector<2x1024xf32>
    %115 = tpu.matmul %113, %2, %cst_29 {dimension_numbers = #tpu.dot_dimension_numbers<[1], [0], [0], [1], [0, 0, 1, 1], [], []>} : vector<2x256xf32>, vector<256x1024xf32>, vector<2x1024xf32> -> vector<2x1024xf32>
    %116 = arith.addf %114, %115 : vector<2x1024xf32>
    %117 = vector.extract_strided_slice %116 {offsets = [0, 0], sizes = [2, 768], strides = [1, 1]} : vector<2x1024xf32> to vector<2x768xf32>
    %118 = arith.negf %117 : vector<2x768xf32>
    %119 = math.exp %118 : vector<2x768xf32>
    %cst_30 = arith.constant 1.000000e+00 : f32
    %120 = vector.broadcast %cst_30 : f32 to vector<2x768xf32>
    %121 = arith.addf %120, %119 : vector<2x768xf32>
    %122 = arith.divf %120, %121 : vector<2x768xf32>
    %123 = vector.extract_strided_slice %116 {offsets = [0, 768], sizes = [2, 256], strides = [1, 1]} : vector<2x1024xf32> to vector<2x256xf32>
    %cst_31 = arith.constant 0.000000e+00 : f32
    %124 = vector.broadcast %cst_31 : f32 to vector<2x256xf32>
    %125 = arith.maximumf %123, %124 : vector<2x256xf32>
    %126 = vector.extract_strided_slice %122 {offsets = [0, 0], sizes = [2, 256], strides = [1, 1]} : vector<2x768xf32> to vector<2x256xf32>
    %127 = vector.extract_strided_slice %122 {offsets = [0, 256], sizes = [2, 256], strides = [1, 1]} : vector<2x768xf32> to vector<2x256xf32>
    %128 = vector.extract_strided_slice %122 {offsets = [0, 512], sizes = [2, 256], strides = [1, 1]} : vector<2x768xf32> to vector<2x256xf32>
    %129 = arith.mulf %127, %110 : vector<2x256xf32>
    %130 = arith.mulf %126, %125 : vector<2x256xf32>
    %131 = arith.addf %129, %130 : vector<2x256xf32>
    %cst_32 = arith.constant 0.000000e+00 : f32
    %132 = vector.broadcast %cst_32 : f32 to vector<2x256xf32>
    %133 = arith.maximumf %131, %132 : vector<2x256xf32>
    %134 = arith.mulf %128, %133 : vector<2x256xf32>
    %135 = vector.extract_strided_slice %6 {offsets = [12, 0], sizes = [2, 1024], strides = [1, 1]} : vector<16x1024xf32> to vector<2x1024xf32>
    %cst_33 = arith.constant dense<0.000000e+00> : vector<2x1024xf32>
    %136 = tpu.matmul %134, %2, %cst_33 {dimension_numbers = #tpu.dot_dimension_numbers<[1], [0], [0], [1], [0, 0, 1, 1], [], []>} : vector<2x256xf32>, vector<256x1024xf32>, vector<2x1024xf32> -> vector<2x1024xf32>
    %137 = arith.addf %135, %136 : vector<2x1024xf32>
    %138 = vector.extract_strided_slice %137 {offsets = [0, 0], sizes = [2, 768], strides = [1, 1]} : vector<2x1024xf32> to vector<2x768xf32>
    %139 = arith.negf %138 : vector<2x768xf32>
    %140 = math.exp %139 : vector<2x768xf32>
    %cst_34 = arith.constant 1.000000e+00 : f32
    %141 = vector.broadcast %cst_34 : f32 to vector<2x768xf32>
    %142 = arith.addf %141, %140 : vector<2x768xf32>
    %143 = arith.divf %141, %142 : vector<2x768xf32>
    %144 = vector.extract_strided_slice %137 {offsets = [0, 768], sizes = [2, 256], strides = [1, 1]} : vector<2x1024xf32> to vector<2x256xf32>
    %cst_35 = arith.constant 0.000000e+00 : f32
    %145 = vector.broadcast %cst_35 : f32 to vector<2x256xf32>
    %146 = arith.maximumf %144, %145 : vector<2x256xf32>
    %147 = vector.extract_strided_slice %143 {offsets = [0, 0], sizes = [2, 256], strides = [1, 1]} : vector<2x768xf32> to vector<2x256xf32>
    %148 = vector.extract_strided_slice %143 {offsets = [0, 256], sizes = [2, 256], strides = [1, 1]} : vector<2x768xf32> to vector<2x256xf32>
    %149 = vector.extract_strided_slice %143 {offsets = [0, 512], sizes = [2, 256], strides = [1, 1]} : vector<2x768xf32> to vector<2x256xf32>
    %150 = arith.mulf %148, %131 : vector<2x256xf32>
    %151 = arith.mulf %147, %146 : vector<2x256xf32>
    %152 = arith.addf %150, %151 : vector<2x256xf32>
    %cst_36 = arith.constant 0.000000e+00 : f32
    %153 = vector.broadcast %cst_36 : f32 to vector<2x256xf32>
    %154 = arith.maximumf %152, %153 : vector<2x256xf32>
    %155 = arith.mulf %149, %154 : vector<2x256xf32>
    %156 = vector.extract_strided_slice %6 {offsets = [14, 0], sizes = [2, 1024], strides = [1, 1]} : vector<16x1024xf32> to vector<2x1024xf32>
    %cst_37 = arith.constant dense<0.000000e+00> : vector<2x1024xf32>
    %157 = tpu.matmul %155, %2, %cst_37 {dimension_numbers = #tpu.dot_dimension_numbers<[1], [0], [0], [1], [0, 0, 1, 1], [], []>} : vector<2x256xf32>, vector<256x1024xf32>, vector<2x1024xf32> -> vector<2x1024xf32>
    %158 = arith.addf %156, %157 : vector<2x1024xf32>
    %159 = vector.extract_strided_slice %158 {offsets = [0, 0], sizes = [2, 768], strides = [1, 1]} : vector<2x1024xf32> to vector<2x768xf32>
    %160 = arith.negf %159 : vector<2x768xf32>
    %161 = math.exp %160 : vector<2x768xf32>
    %cst_38 = arith.constant 1.000000e+00 : f32
    %162 = vector.broadcast %cst_38 : f32 to vector<2x768xf32>
    %163 = arith.addf %162, %161 : vector<2x768xf32>
    %164 = arith.divf %162, %163 : vector<2x768xf32>
    %165 = vector.extract_strided_slice %158 {offsets = [0, 768], sizes = [2, 256], strides = [1, 1]} : vector<2x1024xf32> to vector<2x256xf32>
    %cst_39 = arith.constant 0.000000e+00 : f32
    %166 = vector.broadcast %cst_39 : f32 to vector<2x256xf32>
    %167 = arith.maximumf %165, %166 : vector<2x256xf32>
    %168 = vector.extract_strided_slice %164 {offsets = [0, 0], sizes = [2, 256], strides = [1, 1]} : vector<2x768xf32> to vector<2x256xf32>
    %169 = vector.extract_strided_slice %164 {offsets = [0, 256], sizes = [2, 256], strides = [1, 1]} : vector<2x768xf32> to vector<2x256xf32>
    %170 = vector.extract_strided_slice %164 {offsets = [0, 512], sizes = [2, 256], strides = [1, 1]} : vector<2x768xf32> to vector<2x256xf32>
    %171 = arith.mulf %169, %152 : vector<2x256xf32>
    %172 = arith.mulf %168, %167 : vector<2x256xf32>
    %173 = arith.addf %171, %172 : vector<2x256xf32>
    %cst_40 = arith.constant 0.000000e+00 : f32
    %174 = vector.broadcast %cst_40 : f32 to vector<2x256xf32>
    %175 = arith.maximumf %173, %174 : vector<2x256xf32>
    %176 = arith.mulf %170, %175 : vector<2x256xf32>
    %177 = tpu.concatenate %29, %50, %71, %92, %113, %134, %155, %176 in 0 : vector<2x256xf32>, vector<2x256xf32>, vector<2x256xf32>, vector<2x256xf32>, vector<2x256xf32>, vector<2x256xf32>, vector<2x256xf32>, vector<2x256xf32> -> vector<16x256xf32>
    %c0_41 = arith.constant 0 : index
    %c0_42 = arith.constant 0 : index
    %178 = vector.load %arg4[%c0_41, %c0_42] : memref<256x512xf32, #tpu.memory_space<vmem>>, vector<256x512xf32>
    %c0_43 = arith.constant 0 : index
    %c0_44 = arith.constant 0 : index
    %179 = vector.load %arg5[%c0_43, %c0_44] : memref<128x512xf32, #tpu.memory_space<vmem>>, vector<128x512xf32>
    %c0_45 = arith.constant 0 : index
    %c0_46 = arith.constant 0 : index
    %180 = vector.load %arg6[%c0_45, %c0_46] : memref<1x512xf32, #tpu.memory_space<vmem>>, vector<1x512xf32>
    %cst_47 = arith.constant dense<0.000000e+00> : vector<16x512xf32>
    %181 = tpu.matmul %177, %178, %cst_47 {dimension_numbers = #tpu.dot_dimension_numbers<[1], [0], [0], [1], [0, 0, 1, 1], [], []>} : vector<16x256xf32>, vector<256x512xf32>, vector<16x512xf32> -> vector<16x512xf32>
    %182 = vector.broadcast %180 : vector<1x512xf32> to vector<16x512xf32>
    %183 = arith.addf %181, %182 : vector<16x512xf32>
    %cst_48 = arith.constant 0.000000e+00 : f32
    %184 = vector.broadcast %cst_48 : f32 to vector<2x128xf32>
    %cst_49 = arith.constant 0.000000e+00 : f32
    %185 = vector.broadcast %cst_49 : f32 to vector<2x128xf32>
    %186 = vector.extract_strided_slice %183 {offsets = [0, 0], sizes = [2, 512], strides = [1, 1]} : vector<16x512xf32> to vector<2x512xf32>
    %cst_50 = arith.constant dense<0.000000e+00> : vector<2x512xf32>
    %187 = tpu.matmul %184, %179, %cst_50 {dimension_numbers = #tpu.dot_dimension_numbers<[1], [0], [0], [1], [0, 0, 1, 1], [], []>} : vector<2x128xf32>, vector<128x512xf32>, vector<2x512xf32> -> vector<2x512xf32>
    %188 = arith.addf %186, %187 : vector<2x512xf32>
    %189 = vector.extract_strided_slice %188 {offsets = [0, 0], sizes = [2, 384], strides = [1, 1]} : vector<2x512xf32> to vector<2x384xf32>
    %190 = arith.negf %189 : vector<2x384xf32>
    %191 = math.exp %190 : vector<2x384xf32>
    %cst_51 = arith.constant 1.000000e+00 : f32
    %192 = vector.broadcast %cst_51 : f32 to vector<2x384xf32>
    %193 = arith.addf %192, %191 : vector<2x384xf32>
    %194 = arith.divf %192, %193 : vector<2x384xf32>
    %195 = vector.extract_strided_slice %188 {offsets = [0, 384], sizes = [2, 128], strides = [1, 1]} : vector<2x512xf32> to vector<2x128xf32>
    %cst_52 = arith.constant 0.000000e+00 : f32
    %196 = vector.broadcast %cst_52 : f32 to vector<2x128xf32>
    %197 = arith.maximumf %195, %196 : vector<2x128xf32>
    %198 = vector.extract_strided_slice %194 {offsets = [0, 0], sizes = [2, 128], strides = [1, 1]} : vector<2x384xf32> to vector<2x128xf32>
    %199 = vector.extract_strided_slice %194 {offsets = [0, 128], sizes = [2, 128], strides = [1, 1]} : vector<2x384xf32> to vector<2x128xf32>
    %200 = vector.extract_strided_slice %194 {offsets = [0, 256], sizes = [2, 128], strides = [1, 1]} : vector<2x384xf32> to vector<2x128xf32>
    %201 = arith.mulf %199, %185 : vector<2x128xf32>
    %202 = arith.mulf %198, %197 : vector<2x128xf32>
    %203 = arith.addf %201, %202 : vector<2x128xf32>
    %cst_53 = arith.constant 0.000000e+00 : f32
    %204 = vector.broadcast %cst_53 : f32 to vector<2x128xf32>
    %205 = arith.maximumf %203, %204 : vector<2x128xf32>
    %206 = arith.mulf %200, %205 : vector<2x128xf32>
    %207 = vector.extract_strided_slice %183 {offsets = [2, 0], sizes = [2, 512], strides = [1, 1]} : vector<16x512xf32> to vector<2x512xf32>
    %cst_54 = arith.constant dense<0.000000e+00> : vector<2x512xf32>
    %208 = tpu.matmul %206, %179, %cst_54 {dimension_numbers = #tpu.dot_dimension_numbers<[1], [0], [0], [1], [0, 0, 1, 1], [], []>} : vector<2x128xf32>, vector<128x512xf32>, vector<2x512xf32> -> vector<2x512xf32>
    %209 = arith.addf %207, %208 : vector<2x512xf32>
    %210 = vector.extract_strided_slice %209 {offsets = [0, 0], sizes = [2, 384], strides = [1, 1]} : vector<2x512xf32> to vector<2x384xf32>
    %211 = arith.negf %210 : vector<2x384xf32>
    %212 = math.exp %211 : vector<2x384xf32>
    %cst_55 = arith.constant 1.000000e+00 : f32
    %213 = vector.broadcast %cst_55 : f32 to vector<2x384xf32>
    %214 = arith.addf %213, %212 : vector<2x384xf32>
    %215 = arith.divf %213, %214 : vector<2x384xf32>
    %216 = vector.extract_strided_slice %209 {offsets = [0, 384], sizes = [2, 128], strides = [1, 1]} : vector<2x512xf32> to vector<2x128xf32>
    %cst_56 = arith.constant 0.000000e+00 : f32
    %217 = vector.broadcast %cst_56 : f32 to vector<2x128xf32>
    %218 = arith.maximumf %216, %217 : vector<2x128xf32>
    %219 = vector.extract_strided_slice %215 {offsets = [0, 0], sizes = [2, 128], strides = [1, 1]} : vector<2x384xf32> to vector<2x128xf32>
    %220 = vector.extract_strided_slice %215 {offsets = [0, 128], sizes = [2, 128], strides = [1, 1]} : vector<2x384xf32> to vector<2x128xf32>
    %221 = vector.extract_strided_slice %215 {offsets = [0, 256], sizes = [2, 128], strides = [1, 1]} : vector<2x384xf32> to vector<2x128xf32>
    %222 = arith.mulf %220, %203 : vector<2x128xf32>
    %223 = arith.mulf %219, %218 : vector<2x128xf32>
    %224 = arith.addf %222, %223 : vector<2x128xf32>
    %cst_57 = arith.constant 0.000000e+00 : f32
    %225 = vector.broadcast %cst_57 : f32 to vector<2x128xf32>
    %226 = arith.maximumf %224, %225 : vector<2x128xf32>
    %227 = arith.mulf %221, %226 : vector<2x128xf32>
    %228 = vector.extract_strided_slice %183 {offsets = [4, 0], sizes = [2, 512], strides = [1, 1]} : vector<16x512xf32> to vector<2x512xf32>
    %cst_58 = arith.constant dense<0.000000e+00> : vector<2x512xf32>
    %229 = tpu.matmul %227, %179, %cst_58 {dimension_numbers = #tpu.dot_dimension_numbers<[1], [0], [0], [1], [0, 0, 1, 1], [], []>} : vector<2x128xf32>, vector<128x512xf32>, vector<2x512xf32> -> vector<2x512xf32>
    %230 = arith.addf %228, %229 : vector<2x512xf32>
    %231 = vector.extract_strided_slice %230 {offsets = [0, 0], sizes = [2, 384], strides = [1, 1]} : vector<2x512xf32> to vector<2x384xf32>
    %232 = arith.negf %231 : vector<2x384xf32>
    %233 = math.exp %232 : vector<2x384xf32>
    %cst_59 = arith.constant 1.000000e+00 : f32
    %234 = vector.broadcast %cst_59 : f32 to vector<2x384xf32>
    %235 = arith.addf %234, %233 : vector<2x384xf32>
    %236 = arith.divf %234, %235 : vector<2x384xf32>
    %237 = vector.extract_strided_slice %230 {offsets = [0, 384], sizes = [2, 128], strides = [1, 1]} : vector<2x512xf32> to vector<2x128xf32>
    %cst_60 = arith.constant 0.000000e+00 : f32
    %238 = vector.broadcast %cst_60 : f32 to vector<2x128xf32>
    %239 = arith.maximumf %237, %238 : vector<2x128xf32>
    %240 = vector.extract_strided_slice %236 {offsets = [0, 0], sizes = [2, 128], strides = [1, 1]} : vector<2x384xf32> to vector<2x128xf32>
    %241 = vector.extract_strided_slice %236 {offsets = [0, 128], sizes = [2, 128], strides = [1, 1]} : vector<2x384xf32> to vector<2x128xf32>
    %242 = vector.extract_strided_slice %236 {offsets = [0, 256], sizes = [2, 128], strides = [1, 1]} : vector<2x384xf32> to vector<2x128xf32>
    %243 = arith.mulf %241, %224 : vector<2x128xf32>
    %244 = arith.mulf %240, %239 : vector<2x128xf32>
    %245 = arith.addf %243, %244 : vector<2x128xf32>
    %cst_61 = arith.constant 0.000000e+00 : f32
    %246 = vector.broadcast %cst_61 : f32 to vector<2x128xf32>
    %247 = arith.maximumf %245, %246 : vector<2x128xf32>
    %248 = arith.mulf %242, %247 : vector<2x128xf32>
    %249 = vector.extract_strided_slice %183 {offsets = [6, 0], sizes = [2, 512], strides = [1, 1]} : vector<16x512xf32> to vector<2x512xf32>
    %cst_62 = arith.constant dense<0.000000e+00> : vector<2x512xf32>
    %250 = tpu.matmul %248, %179, %cst_62 {dimension_numbers = #tpu.dot_dimension_numbers<[1], [0], [0], [1], [0, 0, 1, 1], [], []>} : vector<2x128xf32>, vector<128x512xf32>, vector<2x512xf32> -> vector<2x512xf32>
    %251 = arith.addf %249, %250 : vector<2x512xf32>
    %252 = vector.extract_strided_slice %251 {offsets = [0, 0], sizes = [2, 384], strides = [1, 1]} : vector<2x512xf32> to vector<2x384xf32>
    %253 = arith.negf %252 : vector<2x384xf32>
    %254 = math.exp %253 : vector<2x384xf32>
    %cst_63 = arith.constant 1.000000e+00 : f32
    %255 = vector.broadcast %cst_63 : f32 to vector<2x384xf32>
    %256 = arith.addf %255, %254 : vector<2x384xf32>
    %257 = arith.divf %255, %256 : vector<2x384xf32>
    %258 = vector.extract_strided_slice %251 {offsets = [0, 384], sizes = [2, 128], strides = [1, 1]} : vector<2x512xf32> to vector<2x128xf32>
    %cst_64 = arith.constant 0.000000e+00 : f32
    %259 = vector.broadcast %cst_64 : f32 to vector<2x128xf32>
    %260 = arith.maximumf %258, %259 : vector<2x128xf32>
    %261 = vector.extract_strided_slice %257 {offsets = [0, 0], sizes = [2, 128], strides = [1, 1]} : vector<2x384xf32> to vector<2x128xf32>
    %262 = vector.extract_strided_slice %257 {offsets = [0, 128], sizes = [2, 128], strides = [1, 1]} : vector<2x384xf32> to vector<2x128xf32>
    %263 = vector.extract_strided_slice %257 {offsets = [0, 256], sizes = [2, 128], strides = [1, 1]} : vector<2x384xf32> to vector<2x128xf32>
    %264 = arith.mulf %262, %245 : vector<2x128xf32>
    %265 = arith.mulf %261, %260 : vector<2x128xf32>
    %266 = arith.addf %264, %265 : vector<2x128xf32>
    %cst_65 = arith.constant 0.000000e+00 : f32
    %267 = vector.broadcast %cst_65 : f32 to vector<2x128xf32>
    %268 = arith.maximumf %266, %267 : vector<2x128xf32>
    %269 = arith.mulf %263, %268 : vector<2x128xf32>
    %270 = vector.extract_strided_slice %183 {offsets = [8, 0], sizes = [2, 512], strides = [1, 1]} : vector<16x512xf32> to vector<2x512xf32>
    %cst_66 = arith.constant dense<0.000000e+00> : vector<2x512xf32>
    %271 = tpu.matmul %269, %179, %cst_66 {dimension_numbers = #tpu.dot_dimension_numbers<[1], [0], [0], [1], [0, 0, 1, 1], [], []>} : vector<2x128xf32>, vector<128x512xf32>, vector<2x512xf32> -> vector<2x512xf32>
    %272 = arith.addf %270, %271 : vector<2x512xf32>
    %273 = vector.extract_strided_slice %272 {offsets = [0, 0], sizes = [2, 384], strides = [1, 1]} : vector<2x512xf32> to vector<2x384xf32>
    %274 = arith.negf %273 : vector<2x384xf32>
    %275 = math.exp %274 : vector<2x384xf32>
    %cst_67 = arith.constant 1.000000e+00 : f32
    %276 = vector.broadcast %cst_67 : f32 to vector<2x384xf32>
    %277 = arith.addf %276, %275 : vector<2x384xf32>
    %278 = arith.divf %276, %277 : vector<2x384xf32>
    %279 = vector.extract_strided_slice %272 {offsets = [0, 384], sizes = [2, 128], strides = [1, 1]} : vector<2x512xf32> to vector<2x128xf32>
    %cst_68 = arith.constant 0.000000e+00 : f32
    %280 = vector.broadcast %cst_68 : f32 to vector<2x128xf32>
    %281 = arith.maximumf %279, %280 : vector<2x128xf32>
    %282 = vector.extract_strided_slice %278 {offsets = [0, 0], sizes = [2, 128], strides = [1, 1]} : vector<2x384xf32> to vector<2x128xf32>
    %283 = vector.extract_strided_slice %278 {offsets = [0, 128], sizes = [2, 128], strides = [1, 1]} : vector<2x384xf32> to vector<2x128xf32>
    %284 = vector.extract_strided_slice %278 {offsets = [0, 256], sizes = [2, 128], strides = [1, 1]} : vector<2x384xf32> to vector<2x128xf32>
    %285 = arith.mulf %283, %266 : vector<2x128xf32>
    %286 = arith.mulf %282, %281 : vector<2x128xf32>
    %287 = arith.addf %285, %286 : vector<2x128xf32>
    %cst_69 = arith.constant 0.000000e+00 : f32
    %288 = vector.broadcast %cst_69 : f32 to vector<2x128xf32>
    %289 = arith.maximumf %287, %288 : vector<2x128xf32>
    %290 = arith.mulf %284, %289 : vector<2x128xf32>
    %291 = vector.extract_strided_slice %183 {offsets = [10, 0], sizes = [2, 512], strides = [1, 1]} : vector<16x512xf32> to vector<2x512xf32>
    %cst_70 = arith.constant dense<0.000000e+00> : vector<2x512xf32>
    %292 = tpu.matmul %290, %179, %cst_70 {dimension_numbers = #tpu.dot_dimension_numbers<[1], [0], [0], [1], [0, 0, 1, 1], [], []>} : vector<2x128xf32>, vector<128x512xf32>, vector<2x512xf32> -> vector<2x512xf32>
    %293 = arith.addf %291, %292 : vector<2x512xf32>
    %294 = vector.extract_strided_slice %293 {offsets = [0, 0], sizes = [2, 384], strides = [1, 1]} : vector<2x512xf32> to vector<2x384xf32>
    %295 = arith.negf %294 : vector<2x384xf32>
    %296 = math.exp %295 : vector<2x384xf32>
    %cst_71 = arith.constant 1.000000e+00 : f32
    %297 = vector.broadcast %cst_71 : f32 to vector<2x384xf32>
    %298 = arith.addf %297, %296 : vector<2x384xf32>
    %299 = arith.divf %297, %298 : vector<2x384xf32>
    %300 = vector.extract_strided_slice %293 {offsets = [0, 384], sizes = [2, 128], strides = [1, 1]} : vector<2x512xf32> to vector<2x128xf32>
    %cst_72 = arith.constant 0.000000e+00 : f32
    %301 = vector.broadcast %cst_72 : f32 to vector<2x128xf32>
    %302 = arith.maximumf %300, %301 : vector<2x128xf32>
    %303 = vector.extract_strided_slice %299 {offsets = [0, 0], sizes = [2, 128], strides = [1, 1]} : vector<2x384xf32> to vector<2x128xf32>
    %304 = vector.extract_strided_slice %299 {offsets = [0, 128], sizes = [2, 128], strides = [1, 1]} : vector<2x384xf32> to vector<2x128xf32>
    %305 = vector.extract_strided_slice %299 {offsets = [0, 256], sizes = [2, 128], strides = [1, 1]} : vector<2x384xf32> to vector<2x128xf32>
    %306 = arith.mulf %304, %287 : vector<2x128xf32>
    %307 = arith.mulf %303, %302 : vector<2x128xf32>
    %308 = arith.addf %306, %307 : vector<2x128xf32>
    %cst_73 = arith.constant 0.000000e+00 : f32
    %309 = vector.broadcast %cst_73 : f32 to vector<2x128xf32>
    %310 = arith.maximumf %308, %309 : vector<2x128xf32>
    %311 = arith.mulf %305, %310 : vector<2x128xf32>
    %312 = vector.extract_strided_slice %183 {offsets = [12, 0], sizes = [2, 512], strides = [1, 1]} : vector<16x512xf32> to vector<2x512xf32>
    %cst_74 = arith.constant dense<0.000000e+00> : vector<2x512xf32>
    %313 = tpu.matmul %311, %179, %cst_74 {dimension_numbers = #tpu.dot_dimension_numbers<[1], [0], [0], [1], [0, 0, 1, 1], [], []>} : vector<2x128xf32>, vector<128x512xf32>, vector<2x512xf32> -> vector<2x512xf32>
    %314 = arith.addf %312, %313 : vector<2x512xf32>
    %315 = vector.extract_strided_slice %314 {offsets = [0, 0], sizes = [2, 384], strides = [1, 1]} : vector<2x512xf32> to vector<2x384xf32>
    %316 = arith.negf %315 : vector<2x384xf32>
    %317 = math.exp %316 : vector<2x384xf32>
    %cst_75 = arith.constant 1.000000e+00 : f32
    %318 = vector.broadcast %cst_75 : f32 to vector<2x384xf32>
    %319 = arith.addf %318, %317 : vector<2x384xf32>
    %320 = arith.divf %318, %319 : vector<2x384xf32>
    %321 = vector.extract_strided_slice %314 {offsets = [0, 384], sizes = [2, 128], strides = [1, 1]} : vector<2x512xf32> to vector<2x128xf32>
    %cst_76 = arith.constant 0.000000e+00 : f32
    %322 = vector.broadcast %cst_76 : f32 to vector<2x128xf32>
    %323 = arith.maximumf %321, %322 : vector<2x128xf32>
    %324 = vector.extract_strided_slice %320 {offsets = [0, 0], sizes = [2, 128], strides = [1, 1]} : vector<2x384xf32> to vector<2x128xf32>
    %325 = vector.extract_strided_slice %320 {offsets = [0, 128], sizes = [2, 128], strides = [1, 1]} : vector<2x384xf32> to vector<2x128xf32>
    %326 = vector.extract_strided_slice %320 {offsets = [0, 256], sizes = [2, 128], strides = [1, 1]} : vector<2x384xf32> to vector<2x128xf32>
    %327 = arith.mulf %325, %308 : vector<2x128xf32>
    %328 = arith.mulf %324, %323 : vector<2x128xf32>
    %329 = arith.addf %327, %328 : vector<2x128xf32>
    %cst_77 = arith.constant 0.000000e+00 : f32
    %330 = vector.broadcast %cst_77 : f32 to vector<2x128xf32>
    %331 = arith.maximumf %329, %330 : vector<2x128xf32>
    %332 = arith.mulf %326, %331 : vector<2x128xf32>
    %333 = vector.extract_strided_slice %183 {offsets = [14, 0], sizes = [2, 512], strides = [1, 1]} : vector<16x512xf32> to vector<2x512xf32>
    %cst_78 = arith.constant dense<0.000000e+00> : vector<2x512xf32>
    %334 = tpu.matmul %332, %179, %cst_78 {dimension_numbers = #tpu.dot_dimension_numbers<[1], [0], [0], [1], [0, 0, 1, 1], [], []>} : vector<2x128xf32>, vector<128x512xf32>, vector<2x512xf32> -> vector<2x512xf32>
    %335 = arith.addf %333, %334 : vector<2x512xf32>
    %336 = vector.extract_strided_slice %335 {offsets = [0, 0], sizes = [2, 384], strides = [1, 1]} : vector<2x512xf32> to vector<2x384xf32>
    %337 = arith.negf %336 : vector<2x384xf32>
    %338 = math.exp %337 : vector<2x384xf32>
    %cst_79 = arith.constant 1.000000e+00 : f32
    %339 = vector.broadcast %cst_79 : f32 to vector<2x384xf32>
    %340 = arith.addf %339, %338 : vector<2x384xf32>
    %341 = arith.divf %339, %340 : vector<2x384xf32>
    %342 = vector.extract_strided_slice %335 {offsets = [0, 384], sizes = [2, 128], strides = [1, 1]} : vector<2x512xf32> to vector<2x128xf32>
    %cst_80 = arith.constant 0.000000e+00 : f32
    %343 = vector.broadcast %cst_80 : f32 to vector<2x128xf32>
    %344 = arith.maximumf %342, %343 : vector<2x128xf32>
    %345 = vector.extract_strided_slice %341 {offsets = [0, 0], sizes = [2, 128], strides = [1, 1]} : vector<2x384xf32> to vector<2x128xf32>
    %346 = vector.extract_strided_slice %341 {offsets = [0, 128], sizes = [2, 128], strides = [1, 1]} : vector<2x384xf32> to vector<2x128xf32>
    %347 = vector.extract_strided_slice %341 {offsets = [0, 256], sizes = [2, 128], strides = [1, 1]} : vector<2x384xf32> to vector<2x128xf32>
    %348 = arith.mulf %346, %329 : vector<2x128xf32>
    %349 = arith.mulf %345, %344 : vector<2x128xf32>
    %350 = arith.addf %348, %349 : vector<2x128xf32>
    %cst_81 = arith.constant 0.000000e+00 : f32
    %351 = vector.broadcast %cst_81 : f32 to vector<2x128xf32>
    %352 = arith.maximumf %350, %351 : vector<2x128xf32>
    %353 = arith.mulf %347, %352 : vector<2x128xf32>
    %354 = tpu.concatenate %206, %227, %248, %269, %290, %311, %332, %353 in 0 : vector<2x128xf32>, vector<2x128xf32>, vector<2x128xf32>, vector<2x128xf32>, vector<2x128xf32>, vector<2x128xf32>, vector<2x128xf32>, vector<2x128xf32> -> vector<16x128xf32>
    %c0_82 = arith.constant 0 : index
    %c0_83 = arith.constant 0 : index
    %355 = vector.load %arg7[%c0_82, %c0_83] : memref<128x256xf32, #tpu.memory_space<vmem>>, vector<128x256xf32>
    %c0_84 = arith.constant 0 : index
    %c0_85 = arith.constant 0 : index
    %356 = vector.load %arg8[%c0_84, %c0_85] : memref<64x256xf32, #tpu.memory_space<vmem>>, vector<64x256xf32>
    %c0_86 = arith.constant 0 : index
    %c0_87 = arith.constant 0 : index
    %357 = vector.load %arg9[%c0_86, %c0_87] : memref<1x256xf32, #tpu.memory_space<vmem>>, vector<1x256xf32>
    %cst_88 = arith.constant dense<0.000000e+00> : vector<16x256xf32>
    %358 = tpu.matmul %354, %355, %cst_88 {dimension_numbers = #tpu.dot_dimension_numbers<[1], [0], [0], [1], [0, 0, 1, 1], [], []>} : vector<16x128xf32>, vector<128x256xf32>, vector<16x256xf32> -> vector<16x256xf32>
    %359 = vector.broadcast %357 : vector<1x256xf32> to vector<16x256xf32>
    %360 = arith.addf %358, %359 : vector<16x256xf32>
    %cst_89 = arith.constant 0.000000e+00 : f32
    %361 = vector.broadcast %cst_89 : f32 to vector<2x64xf32>
    %cst_90 = arith.constant 0.000000e+00 : f32
    %362 = vector.broadcast %cst_90 : f32 to vector<2x64xf32>
    %363 = vector.extract_strided_slice %360 {offsets = [0, 0], sizes = [2, 256], strides = [1, 1]} : vector<16x256xf32> to vector<2x256xf32>
    %cst_91 = arith.constant dense<0.000000e+00> : vector<2x256xf32>
    %364 = tpu.matmul %361, %356, %cst_91 {dimension_numbers = #tpu.dot_dimension_numbers<[1], [0], [0], [1], [0, 0, 1, 1], [], []>} : vector<2x64xf32>, vector<64x256xf32>, vector<2x256xf32> -> vector<2x256xf32>
    %365 = arith.addf %363, %364 : vector<2x256xf32>
    %366 = vector.extract_strided_slice %365 {offsets = [0, 0], sizes = [2, 192], strides = [1, 1]} : vector<2x256xf32> to vector<2x192xf32>
    %367 = arith.negf %366 : vector<2x192xf32>
    %368 = math.exp %367 : vector<2x192xf32>
    %cst_92 = arith.constant 1.000000e+00 : f32
    %369 = vector.broadcast %cst_92 : f32 to vector<2x192xf32>
    %370 = arith.addf %369, %368 : vector<2x192xf32>
    %371 = arith.divf %369, %370 : vector<2x192xf32>
    %372 = vector.extract_strided_slice %365 {offsets = [0, 192], sizes = [2, 64], strides = [1, 1]} : vector<2x256xf32> to vector<2x64xf32>
    %cst_93 = arith.constant 0.000000e+00 : f32
    %373 = vector.broadcast %cst_93 : f32 to vector<2x64xf32>
    %374 = arith.maximumf %372, %373 : vector<2x64xf32>
    %375 = vector.extract_strided_slice %371 {offsets = [0, 0], sizes = [2, 64], strides = [1, 1]} : vector<2x192xf32> to vector<2x64xf32>
    %376 = vector.extract_strided_slice %371 {offsets = [0, 64], sizes = [2, 64], strides = [1, 1]} : vector<2x192xf32> to vector<2x64xf32>
    %377 = vector.extract_strided_slice %371 {offsets = [0, 128], sizes = [2, 64], strides = [1, 1]} : vector<2x192xf32> to vector<2x64xf32>
    %378 = arith.mulf %376, %362 : vector<2x64xf32>
    %379 = arith.mulf %375, %374 : vector<2x64xf32>
    %380 = arith.addf %378, %379 : vector<2x64xf32>
    %cst_94 = arith.constant 0.000000e+00 : f32
    %381 = vector.broadcast %cst_94 : f32 to vector<2x64xf32>
    %382 = arith.maximumf %380, %381 : vector<2x64xf32>
    %383 = arith.mulf %377, %382 : vector<2x64xf32>
    %384 = vector.extract_strided_slice %360 {offsets = [2, 0], sizes = [2, 256], strides = [1, 1]} : vector<16x256xf32> to vector<2x256xf32>
    %cst_95 = arith.constant dense<0.000000e+00> : vector<2x256xf32>
    %385 = tpu.matmul %383, %356, %cst_95 {dimension_numbers = #tpu.dot_dimension_numbers<[1], [0], [0], [1], [0, 0, 1, 1], [], []>} : vector<2x64xf32>, vector<64x256xf32>, vector<2x256xf32> -> vector<2x256xf32>
    %386 = arith.addf %384, %385 : vector<2x256xf32>
    %387 = vector.extract_strided_slice %386 {offsets = [0, 0], sizes = [2, 192], strides = [1, 1]} : vector<2x256xf32> to vector<2x192xf32>
    %388 = arith.negf %387 : vector<2x192xf32>
    %389 = math.exp %388 : vector<2x192xf32>
    %cst_96 = arith.constant 1.000000e+00 : f32
    %390 = vector.broadcast %cst_96 : f32 to vector<2x192xf32>
    %391 = arith.addf %390, %389 : vector<2x192xf32>
    %392 = arith.divf %390, %391 : vector<2x192xf32>
    %393 = vector.extract_strided_slice %386 {offsets = [0, 192], sizes = [2, 64], strides = [1, 1]} : vector<2x256xf32> to vector<2x64xf32>
    %cst_97 = arith.constant 0.000000e+00 : f32
    %394 = vector.broadcast %cst_97 : f32 to vector<2x64xf32>
    %395 = arith.maximumf %393, %394 : vector<2x64xf32>
    %396 = vector.extract_strided_slice %392 {offsets = [0, 0], sizes = [2, 64], strides = [1, 1]} : vector<2x192xf32> to vector<2x64xf32>
    %397 = vector.extract_strided_slice %392 {offsets = [0, 64], sizes = [2, 64], strides = [1, 1]} : vector<2x192xf32> to vector<2x64xf32>
    %398 = vector.extract_strided_slice %392 {offsets = [0, 128], sizes = [2, 64], strides = [1, 1]} : vector<2x192xf32> to vector<2x64xf32>
    %399 = arith.mulf %397, %380 : vector<2x64xf32>
    %400 = arith.mulf %396, %395 : vector<2x64xf32>
    %401 = arith.addf %399, %400 : vector<2x64xf32>
    %cst_98 = arith.constant 0.000000e+00 : f32
    %402 = vector.broadcast %cst_98 : f32 to vector<2x64xf32>
    %403 = arith.maximumf %401, %402 : vector<2x64xf32>
    %404 = arith.mulf %398, %403 : vector<2x64xf32>
    %405 = vector.extract_strided_slice %360 {offsets = [4, 0], sizes = [2, 256], strides = [1, 1]} : vector<16x256xf32> to vector<2x256xf32>
    %cst_99 = arith.constant dense<0.000000e+00> : vector<2x256xf32>
    %406 = tpu.matmul %404, %356, %cst_99 {dimension_numbers = #tpu.dot_dimension_numbers<[1], [0], [0], [1], [0, 0, 1, 1], [], []>} : vector<2x64xf32>, vector<64x256xf32>, vector<2x256xf32> -> vector<2x256xf32>
    %407 = arith.addf %405, %406 : vector<2x256xf32>
    %408 = vector.extract_strided_slice %407 {offsets = [0, 0], sizes = [2, 192], strides = [1, 1]} : vector<2x256xf32> to vector<2x192xf32>
    %409 = arith.negf %408 : vector<2x192xf32>
    %410 = math.exp %409 : vector<2x192xf32>
    %cst_100 = arith.constant 1.000000e+00 : f32
    %411 = vector.broadcast %cst_100 : f32 to vector<2x192xf32>
    %412 = arith.addf %411, %410 : vector<2x192xf32>
    %413 = arith.divf %411, %412 : vector<2x192xf32>
    %414 = vector.extract_strided_slice %407 {offsets = [0, 192], sizes = [2, 64], strides = [1, 1]} : vector<2x256xf32> to vector<2x64xf32>
    %cst_101 = arith.constant 0.000000e+00 : f32
    %415 = vector.broadcast %cst_101 : f32 to vector<2x64xf32>
    %416 = arith.maximumf %414, %415 : vector<2x64xf32>
    %417 = vector.extract_strided_slice %413 {offsets = [0, 0], sizes = [2, 64], strides = [1, 1]} : vector<2x192xf32> to vector<2x64xf32>
    %418 = vector.extract_strided_slice %413 {offsets = [0, 64], sizes = [2, 64], strides = [1, 1]} : vector<2x192xf32> to vector<2x64xf32>
    %419 = vector.extract_strided_slice %413 {offsets = [0, 128], sizes = [2, 64], strides = [1, 1]} : vector<2x192xf32> to vector<2x64xf32>
    %420 = arith.mulf %418, %401 : vector<2x64xf32>
    %421 = arith.mulf %417, %416 : vector<2x64xf32>
    %422 = arith.addf %420, %421 : vector<2x64xf32>
    %cst_102 = arith.constant 0.000000e+00 : f32
    %423 = vector.broadcast %cst_102 : f32 to vector<2x64xf32>
    %424 = arith.maximumf %422, %423 : vector<2x64xf32>
    %425 = arith.mulf %419, %424 : vector<2x64xf32>
    %426 = vector.extract_strided_slice %360 {offsets = [6, 0], sizes = [2, 256], strides = [1, 1]} : vector<16x256xf32> to vector<2x256xf32>
    %cst_103 = arith.constant dense<0.000000e+00> : vector<2x256xf32>
    %427 = tpu.matmul %425, %356, %cst_103 {dimension_numbers = #tpu.dot_dimension_numbers<[1], [0], [0], [1], [0, 0, 1, 1], [], []>} : vector<2x64xf32>, vector<64x256xf32>, vector<2x256xf32> -> vector<2x256xf32>
    %428 = arith.addf %426, %427 : vector<2x256xf32>
    %429 = vector.extract_strided_slice %428 {offsets = [0, 0], sizes = [2, 192], strides = [1, 1]} : vector<2x256xf32> to vector<2x192xf32>
    %430 = arith.negf %429 : vector<2x192xf32>
    %431 = math.exp %430 : vector<2x192xf32>
    %cst_104 = arith.constant 1.000000e+00 : f32
    %432 = vector.broadcast %cst_104 : f32 to vector<2x192xf32>
    %433 = arith.addf %432, %431 : vector<2x192xf32>
    %434 = arith.divf %432, %433 : vector<2x192xf32>
    %435 = vector.extract_strided_slice %428 {offsets = [0, 192], sizes = [2, 64], strides = [1, 1]} : vector<2x256xf32> to vector<2x64xf32>
    %cst_105 = arith.constant 0.000000e+00 : f32
    %436 = vector.broadcast %cst_105 : f32 to vector<2x64xf32>
    %437 = arith.maximumf %435, %436 : vector<2x64xf32>
    %438 = vector.extract_strided_slice %434 {offsets = [0, 0], sizes = [2, 64], strides = [1, 1]} : vector<2x192xf32> to vector<2x64xf32>
    %439 = vector.extract_strided_slice %434 {offsets = [0, 64], sizes = [2, 64], strides = [1, 1]} : vector<2x192xf32> to vector<2x64xf32>
    %440 = vector.extract_strided_slice %434 {offsets = [0, 128], sizes = [2, 64], strides = [1, 1]} : vector<2x192xf32> to vector<2x64xf32>
    %441 = arith.mulf %439, %422 : vector<2x64xf32>
    %442 = arith.mulf %438, %437 : vector<2x64xf32>
    %443 = arith.addf %441, %442 : vector<2x64xf32>
    %cst_106 = arith.constant 0.000000e+00 : f32
    %444 = vector.broadcast %cst_106 : f32 to vector<2x64xf32>
    %445 = arith.maximumf %443, %444 : vector<2x64xf32>
    %446 = arith.mulf %440, %445 : vector<2x64xf32>
    %447 = vector.extract_strided_slice %360 {offsets = [8, 0], sizes = [2, 256], strides = [1, 1]} : vector<16x256xf32> to vector<2x256xf32>
    %cst_107 = arith.constant dense<0.000000e+00> : vector<2x256xf32>
    %448 = tpu.matmul %446, %356, %cst_107 {dimension_numbers = #tpu.dot_dimension_numbers<[1], [0], [0], [1], [0, 0, 1, 1], [], []>} : vector<2x64xf32>, vector<64x256xf32>, vector<2x256xf32> -> vector<2x256xf32>
    %449 = arith.addf %447, %448 : vector<2x256xf32>
    %450 = vector.extract_strided_slice %449 {offsets = [0, 0], sizes = [2, 192], strides = [1, 1]} : vector<2x256xf32> to vector<2x192xf32>
    %451 = arith.negf %450 : vector<2x192xf32>
    %452 = math.exp %451 : vector<2x192xf32>
    %cst_108 = arith.constant 1.000000e+00 : f32
    %453 = vector.broadcast %cst_108 : f32 to vector<2x192xf32>
    %454 = arith.addf %453, %452 : vector<2x192xf32>
    %455 = arith.divf %453, %454 : vector<2x192xf32>
    %456 = vector.extract_strided_slice %449 {offsets = [0, 192], sizes = [2, 64], strides = [1, 1]} : vector<2x256xf32> to vector<2x64xf32>
    %cst_109 = arith.constant 0.000000e+00 : f32
    %457 = vector.broadcast %cst_109 : f32 to vector<2x64xf32>
    %458 = arith.maximumf %456, %457 : vector<2x64xf32>
    %459 = vector.extract_strided_slice %455 {offsets = [0, 0], sizes = [2, 64], strides = [1, 1]} : vector<2x192xf32> to vector<2x64xf32>
    %460 = vector.extract_strided_slice %455 {offsets = [0, 64], sizes = [2, 64], strides = [1, 1]} : vector<2x192xf32> to vector<2x64xf32>
    %461 = vector.extract_strided_slice %455 {offsets = [0, 128], sizes = [2, 64], strides = [1, 1]} : vector<2x192xf32> to vector<2x64xf32>
    %462 = arith.mulf %460, %443 : vector<2x64xf32>
    %463 = arith.mulf %459, %458 : vector<2x64xf32>
    %464 = arith.addf %462, %463 : vector<2x64xf32>
    %cst_110 = arith.constant 0.000000e+00 : f32
    %465 = vector.broadcast %cst_110 : f32 to vector<2x64xf32>
    %466 = arith.maximumf %464, %465 : vector<2x64xf32>
    %467 = arith.mulf %461, %466 : vector<2x64xf32>
    %468 = vector.extract_strided_slice %360 {offsets = [10, 0], sizes = [2, 256], strides = [1, 1]} : vector<16x256xf32> to vector<2x256xf32>
    %cst_111 = arith.constant dense<0.000000e+00> : vector<2x256xf32>
    %469 = tpu.matmul %467, %356, %cst_111 {dimension_numbers = #tpu.dot_dimension_numbers<[1], [0], [0], [1], [0, 0, 1, 1], [], []>} : vector<2x64xf32>, vector<64x256xf32>, vector<2x256xf32> -> vector<2x256xf32>
    %470 = arith.addf %468, %469 : vector<2x256xf32>
    %471 = vector.extract_strided_slice %470 {offsets = [0, 0], sizes = [2, 192], strides = [1, 1]} : vector<2x256xf32> to vector<2x192xf32>
    %472 = arith.negf %471 : vector<2x192xf32>
    %473 = math.exp %472 : vector<2x192xf32>
    %cst_112 = arith.constant 1.000000e+00 : f32
    %474 = vector.broadcast %cst_112 : f32 to vector<2x192xf32>
    %475 = arith.addf %474, %473 : vector<2x192xf32>
    %476 = arith.divf %474, %475 : vector<2x192xf32>
    %477 = vector.extract_strided_slice %470 {offsets = [0, 192], sizes = [2, 64], strides = [1, 1]} : vector<2x256xf32> to vector<2x64xf32>
    %cst_113 = arith.constant 0.000000e+00 : f32
    %478 = vector.broadcast %cst_113 : f32 to vector<2x64xf32>
    %479 = arith.maximumf %477, %478 : vector<2x64xf32>
    %480 = vector.extract_strided_slice %476 {offsets = [0, 0], sizes = [2, 64], strides = [1, 1]} : vector<2x192xf32> to vector<2x64xf32>
    %481 = vector.extract_strided_slice %476 {offsets = [0, 64], sizes = [2, 64], strides = [1, 1]} : vector<2x192xf32> to vector<2x64xf32>
    %482 = vector.extract_strided_slice %476 {offsets = [0, 128], sizes = [2, 64], strides = [1, 1]} : vector<2x192xf32> to vector<2x64xf32>
    %483 = arith.mulf %481, %464 : vector<2x64xf32>
    %484 = arith.mulf %480, %479 : vector<2x64xf32>
    %485 = arith.addf %483, %484 : vector<2x64xf32>
    %cst_114 = arith.constant 0.000000e+00 : f32
    %486 = vector.broadcast %cst_114 : f32 to vector<2x64xf32>
    %487 = arith.maximumf %485, %486 : vector<2x64xf32>
    %488 = arith.mulf %482, %487 : vector<2x64xf32>
    %489 = vector.extract_strided_slice %360 {offsets = [12, 0], sizes = [2, 256], strides = [1, 1]} : vector<16x256xf32> to vector<2x256xf32>
    %cst_115 = arith.constant dense<0.000000e+00> : vector<2x256xf32>
    %490 = tpu.matmul %488, %356, %cst_115 {dimension_numbers = #tpu.dot_dimension_numbers<[1], [0], [0], [1], [0, 0, 1, 1], [], []>} : vector<2x64xf32>, vector<64x256xf32>, vector<2x256xf32> -> vector<2x256xf32>
    %491 = arith.addf %489, %490 : vector<2x256xf32>
    %492 = vector.extract_strided_slice %491 {offsets = [0, 0], sizes = [2, 192], strides = [1, 1]} : vector<2x256xf32> to vector<2x192xf32>
    %493 = arith.negf %492 : vector<2x192xf32>
    %494 = math.exp %493 : vector<2x192xf32>
    %cst_116 = arith.constant 1.000000e+00 : f32
    %495 = vector.broadcast %cst_116 : f32 to vector<2x192xf32>
    %496 = arith.addf %495, %494 : vector<2x192xf32>
    %497 = arith.divf %495, %496 : vector<2x192xf32>
    %498 = vector.extract_strided_slice %491 {offsets = [0, 192], sizes = [2, 64], strides = [1, 1]} : vector<2x256xf32> to vector<2x64xf32>
    %cst_117 = arith.constant 0.000000e+00 : f32
    %499 = vector.broadcast %cst_117 : f32 to vector<2x64xf32>
    %500 = arith.maximumf %498, %499 : vector<2x64xf32>
    %501 = vector.extract_strided_slice %497 {offsets = [0, 0], sizes = [2, 64], strides = [1, 1]} : vector<2x192xf32> to vector<2x64xf32>
    %502 = vector.extract_strided_slice %497 {offsets = [0, 64], sizes = [2, 64], strides = [1, 1]} : vector<2x192xf32> to vector<2x64xf32>
    %503 = vector.extract_strided_slice %497 {offsets = [0, 128], sizes = [2, 64], strides = [1, 1]} : vector<2x192xf32> to vector<2x64xf32>
    %504 = arith.mulf %502, %485 : vector<2x64xf32>
    %505 = arith.mulf %501, %500 : vector<2x64xf32>
    %506 = arith.addf %504, %505 : vector<2x64xf32>
    %cst_118 = arith.constant 0.000000e+00 : f32
    %507 = vector.broadcast %cst_118 : f32 to vector<2x64xf32>
    %508 = arith.maximumf %506, %507 : vector<2x64xf32>
    %509 = arith.mulf %503, %508 : vector<2x64xf32>
    %510 = vector.extract_strided_slice %360 {offsets = [14, 0], sizes = [2, 256], strides = [1, 1]} : vector<16x256xf32> to vector<2x256xf32>
    %cst_119 = arith.constant dense<0.000000e+00> : vector<2x256xf32>
    %511 = tpu.matmul %509, %356, %cst_119 {dimension_numbers = #tpu.dot_dimension_numbers<[1], [0], [0], [1], [0, 0, 1, 1], [], []>} : vector<2x64xf32>, vector<64x256xf32>, vector<2x256xf32> -> vector<2x256xf32>
    %512 = arith.addf %510, %511 : vector<2x256xf32>
    %513 = vector.extract_strided_slice %512 {offsets = [0, 0], sizes = [2, 192], strides = [1, 1]} : vector<2x256xf32> to vector<2x192xf32>
    %514 = arith.negf %513 : vector<2x192xf32>
    %515 = math.exp %514 : vector<2x192xf32>
    %cst_120 = arith.constant 1.000000e+00 : f32
    %516 = vector.broadcast %cst_120 : f32 to vector<2x192xf32>
    %517 = arith.addf %516, %515 : vector<2x192xf32>
    %518 = arith.divf %516, %517 : vector<2x192xf32>
    %519 = vector.extract_strided_slice %512 {offsets = [0, 192], sizes = [2, 64], strides = [1, 1]} : vector<2x256xf32> to vector<2x64xf32>
    %cst_121 = arith.constant 0.000000e+00 : f32
    %520 = vector.broadcast %cst_121 : f32 to vector<2x64xf32>
    %521 = arith.maximumf %519, %520 : vector<2x64xf32>
    %522 = vector.extract_strided_slice %518 {offsets = [0, 0], sizes = [2, 64], strides = [1, 1]} : vector<2x192xf32> to vector<2x64xf32>
    %523 = vector.extract_strided_slice %518 {offsets = [0, 64], sizes = [2, 64], strides = [1, 1]} : vector<2x192xf32> to vector<2x64xf32>
    %524 = vector.extract_strided_slice %518 {offsets = [0, 128], sizes = [2, 64], strides = [1, 1]} : vector<2x192xf32> to vector<2x64xf32>
    %525 = arith.mulf %523, %506 : vector<2x64xf32>
    %526 = arith.mulf %522, %521 : vector<2x64xf32>
    %527 = arith.addf %525, %526 : vector<2x64xf32>
    %cst_122 = arith.constant 0.000000e+00 : f32
    %528 = vector.broadcast %cst_122 : f32 to vector<2x64xf32>
    %529 = arith.maximumf %527, %528 : vector<2x64xf32>
    %530 = arith.mulf %524, %529 : vector<2x64xf32>
    %531 = tpu.concatenate %383, %404, %425, %446, %467, %488, %509, %530 in 0 : vector<2x64xf32>, vector<2x64xf32>, vector<2x64xf32>, vector<2x64xf32>, vector<2x64xf32>, vector<2x64xf32>, vector<2x64xf32>, vector<2x64xf32> -> vector<16x64xf32>
    %c0_123 = arith.constant 0 : index
    %c0_124 = arith.constant 0 : index
    %532 = vector.load %arg10[%c0_123, %c0_124] : memref<64x128xf32, #tpu.memory_space<vmem>>, vector<64x128xf32>
    %c0_125 = arith.constant 0 : index
    %c0_126 = arith.constant 0 : index
    %533 = vector.load %arg11[%c0_125, %c0_126] : memref<32x128xf32, #tpu.memory_space<vmem>>, vector<32x128xf32>
    %c0_127 = arith.constant 0 : index
    %c0_128 = arith.constant 0 : index
    %534 = vector.load %arg12[%c0_127, %c0_128] : memref<1x128xf32, #tpu.memory_space<vmem>>, vector<1x128xf32>
    %cst_129 = arith.constant dense<0.000000e+00> : vector<16x128xf32>
    %535 = tpu.matmul %531, %532, %cst_129 {dimension_numbers = #tpu.dot_dimension_numbers<[1], [0], [0], [1], [0, 0, 1, 1], [], []>} : vector<16x64xf32>, vector<64x128xf32>, vector<16x128xf32> -> vector<16x128xf32>
    %536 = vector.broadcast %534 : vector<1x128xf32> to vector<16x128xf32>
    %537 = arith.addf %535, %536 : vector<16x128xf32>
    %cst_130 = arith.constant 0.000000e+00 : f32
    %538 = vector.broadcast %cst_130 : f32 to vector<2x32xf32>
    %cst_131 = arith.constant 0.000000e+00 : f32
    %539 = vector.broadcast %cst_131 : f32 to vector<2x32xf32>
    %540 = vector.extract_strided_slice %537 {offsets = [0, 0], sizes = [2, 128], strides = [1, 1]} : vector<16x128xf32> to vector<2x128xf32>
    %cst_132 = arith.constant dense<0.000000e+00> : vector<2x128xf32>
    %541 = tpu.matmul %538, %533, %cst_132 {dimension_numbers = #tpu.dot_dimension_numbers<[1], [0], [0], [1], [0, 0, 1, 1], [], []>} : vector<2x32xf32>, vector<32x128xf32>, vector<2x128xf32> -> vector<2x128xf32>
    %542 = arith.addf %540, %541 : vector<2x128xf32>
    %543 = vector.extract_strided_slice %542 {offsets = [0, 0], sizes = [2, 96], strides = [1, 1]} : vector<2x128xf32> to vector<2x96xf32>
    %544 = arith.negf %543 : vector<2x96xf32>
    %545 = math.exp %544 : vector<2x96xf32>
    %cst_133 = arith.constant 1.000000e+00 : f32
    %546 = vector.broadcast %cst_133 : f32 to vector<2x96xf32>
    %547 = arith.addf %546, %545 : vector<2x96xf32>
    %548 = arith.divf %546, %547 : vector<2x96xf32>
    %549 = vector.extract_strided_slice %542 {offsets = [0, 96], sizes = [2, 32], strides = [1, 1]} : vector<2x128xf32> to vector<2x32xf32>
    %cst_134 = arith.constant 0.000000e+00 : f32
    %550 = vector.broadcast %cst_134 : f32 to vector<2x32xf32>
    %551 = arith.maximumf %549, %550 : vector<2x32xf32>
    %552 = vector.extract_strided_slice %548 {offsets = [0, 0], sizes = [2, 32], strides = [1, 1]} : vector<2x96xf32> to vector<2x32xf32>
    %553 = vector.extract_strided_slice %548 {offsets = [0, 32], sizes = [2, 32], strides = [1, 1]} : vector<2x96xf32> to vector<2x32xf32>
    %554 = vector.extract_strided_slice %548 {offsets = [0, 64], sizes = [2, 32], strides = [1, 1]} : vector<2x96xf32> to vector<2x32xf32>
    %555 = arith.mulf %553, %539 : vector<2x32xf32>
    %556 = arith.mulf %552, %551 : vector<2x32xf32>
    %557 = arith.addf %555, %556 : vector<2x32xf32>
    %cst_135 = arith.constant 0.000000e+00 : f32
    %558 = vector.broadcast %cst_135 : f32 to vector<2x32xf32>
    %559 = arith.maximumf %557, %558 : vector<2x32xf32>
    %560 = arith.mulf %554, %559 : vector<2x32xf32>
    %561 = vector.extract_strided_slice %537 {offsets = [2, 0], sizes = [2, 128], strides = [1, 1]} : vector<16x128xf32> to vector<2x128xf32>
    %cst_136 = arith.constant dense<0.000000e+00> : vector<2x128xf32>
    %562 = tpu.matmul %560, %533, %cst_136 {dimension_numbers = #tpu.dot_dimension_numbers<[1], [0], [0], [1], [0, 0, 1, 1], [], []>} : vector<2x32xf32>, vector<32x128xf32>, vector<2x128xf32> -> vector<2x128xf32>
    %563 = arith.addf %561, %562 : vector<2x128xf32>
    %564 = vector.extract_strided_slice %563 {offsets = [0, 0], sizes = [2, 96], strides = [1, 1]} : vector<2x128xf32> to vector<2x96xf32>
    %565 = arith.negf %564 : vector<2x96xf32>
    %566 = math.exp %565 : vector<2x96xf32>
    %cst_137 = arith.constant 1.000000e+00 : f32
    %567 = vector.broadcast %cst_137 : f32 to vector<2x96xf32>
    %568 = arith.addf %567, %566 : vector<2x96xf32>
    %569 = arith.divf %567, %568 : vector<2x96xf32>
    %570 = vector.extract_strided_slice %563 {offsets = [0, 96], sizes = [2, 32], strides = [1, 1]} : vector<2x128xf32> to vector<2x32xf32>
    %cst_138 = arith.constant 0.000000e+00 : f32
    %571 = vector.broadcast %cst_138 : f32 to vector<2x32xf32>
    %572 = arith.maximumf %570, %571 : vector<2x32xf32>
    %573 = vector.extract_strided_slice %569 {offsets = [0, 0], sizes = [2, 32], strides = [1, 1]} : vector<2x96xf32> to vector<2x32xf32>
    %574 = vector.extract_strided_slice %569 {offsets = [0, 32], sizes = [2, 32], strides = [1, 1]} : vector<2x96xf32> to vector<2x32xf32>
    %575 = vector.extract_strided_slice %569 {offsets = [0, 64], sizes = [2, 32], strides = [1, 1]} : vector<2x96xf32> to vector<2x32xf32>
    %576 = arith.mulf %574, %557 : vector<2x32xf32>
    %577 = arith.mulf %573, %572 : vector<2x32xf32>
    %578 = arith.addf %576, %577 : vector<2x32xf32>
    %cst_139 = arith.constant 0.000000e+00 : f32
    %579 = vector.broadcast %cst_139 : f32 to vector<2x32xf32>
    %580 = arith.maximumf %578, %579 : vector<2x32xf32>
    %581 = arith.mulf %575, %580 : vector<2x32xf32>
    %582 = vector.extract_strided_slice %537 {offsets = [4, 0], sizes = [2, 128], strides = [1, 1]} : vector<16x128xf32> to vector<2x128xf32>
    %cst_140 = arith.constant dense<0.000000e+00> : vector<2x128xf32>
    %583 = tpu.matmul %581, %533, %cst_140 {dimension_numbers = #tpu.dot_dimension_numbers<[1], [0], [0], [1], [0, 0, 1, 1], [], []>} : vector<2x32xf32>, vector<32x128xf32>, vector<2x128xf32> -> vector<2x128xf32>
    %584 = arith.addf %582, %583 : vector<2x128xf32>
    %585 = vector.extract_strided_slice %584 {offsets = [0, 0], sizes = [2, 96], strides = [1, 1]} : vector<2x128xf32> to vector<2x96xf32>
    %586 = arith.negf %585 : vector<2x96xf32>
    %587 = math.exp %586 : vector<2x96xf32>
    %cst_141 = arith.constant 1.000000e+00 : f32
    %588 = vector.broadcast %cst_141 : f32 to vector<2x96xf32>
    %589 = arith.addf %588, %587 : vector<2x96xf32>
    %590 = arith.divf %588, %589 : vector<2x96xf32>
    %591 = vector.extract_strided_slice %584 {offsets = [0, 96], sizes = [2, 32], strides = [1, 1]} : vector<2x128xf32> to vector<2x32xf32>
    %cst_142 = arith.constant 0.000000e+00 : f32
    %592 = vector.broadcast %cst_142 : f32 to vector<2x32xf32>
    %593 = arith.maximumf %591, %592 : vector<2x32xf32>
    %594 = vector.extract_strided_slice %590 {offsets = [0, 0], sizes = [2, 32], strides = [1, 1]} : vector<2x96xf32> to vector<2x32xf32>
    %595 = vector.extract_strided_slice %590 {offsets = [0, 32], sizes = [2, 32], strides = [1, 1]} : vector<2x96xf32> to vector<2x32xf32>
    %596 = vector.extract_strided_slice %590 {offsets = [0, 64], sizes = [2, 32], strides = [1, 1]} : vector<2x96xf32> to vector<2x32xf32>
    %597 = arith.mulf %595, %578 : vector<2x32xf32>
    %598 = arith.mulf %594, %593 : vector<2x32xf32>
    %599 = arith.addf %597, %598 : vector<2x32xf32>
    %cst_143 = arith.constant 0.000000e+00 : f32
    %600 = vector.broadcast %cst_143 : f32 to vector<2x32xf32>
    %601 = arith.maximumf %599, %600 : vector<2x32xf32>
    %602 = arith.mulf %596, %601 : vector<2x32xf32>
    %603 = vector.extract_strided_slice %537 {offsets = [6, 0], sizes = [2, 128], strides = [1, 1]} : vector<16x128xf32> to vector<2x128xf32>
    %cst_144 = arith.constant dense<0.000000e+00> : vector<2x128xf32>
    %604 = tpu.matmul %602, %533, %cst_144 {dimension_numbers = #tpu.dot_dimension_numbers<[1], [0], [0], [1], [0, 0, 1, 1], [], []>} : vector<2x32xf32>, vector<32x128xf32>, vector<2x128xf32> -> vector<2x128xf32>
    %605 = arith.addf %603, %604 : vector<2x128xf32>
    %606 = vector.extract_strided_slice %605 {offsets = [0, 0], sizes = [2, 96], strides = [1, 1]} : vector<2x128xf32> to vector<2x96xf32>
    %607 = arith.negf %606 : vector<2x96xf32>
    %608 = math.exp %607 : vector<2x96xf32>
    %cst_145 = arith.constant 1.000000e+00 : f32
    %609 = vector.broadcast %cst_145 : f32 to vector<2x96xf32>
    %610 = arith.addf %609, %608 : vector<2x96xf32>
    %611 = arith.divf %609, %610 : vector<2x96xf32>
    %612 = vector.extract_strided_slice %605 {offsets = [0, 96], sizes = [2, 32], strides = [1, 1]} : vector<2x128xf32> to vector<2x32xf32>
    %cst_146 = arith.constant 0.000000e+00 : f32
    %613 = vector.broadcast %cst_146 : f32 to vector<2x32xf32>
    %614 = arith.maximumf %612, %613 : vector<2x32xf32>
    %615 = vector.extract_strided_slice %611 {offsets = [0, 0], sizes = [2, 32], strides = [1, 1]} : vector<2x96xf32> to vector<2x32xf32>
    %616 = vector.extract_strided_slice %611 {offsets = [0, 32], sizes = [2, 32], strides = [1, 1]} : vector<2x96xf32> to vector<2x32xf32>
    %617 = vector.extract_strided_slice %611 {offsets = [0, 64], sizes = [2, 32], strides = [1, 1]} : vector<2x96xf32> to vector<2x32xf32>
    %618 = arith.mulf %616, %599 : vector<2x32xf32>
    %619 = arith.mulf %615, %614 : vector<2x32xf32>
    %620 = arith.addf %618, %619 : vector<2x32xf32>
    %cst_147 = arith.constant 0.000000e+00 : f32
    %621 = vector.broadcast %cst_147 : f32 to vector<2x32xf32>
    %622 = arith.maximumf %620, %621 : vector<2x32xf32>
    %623 = arith.mulf %617, %622 : vector<2x32xf32>
    %624 = vector.extract_strided_slice %537 {offsets = [8, 0], sizes = [2, 128], strides = [1, 1]} : vector<16x128xf32> to vector<2x128xf32>
    %cst_148 = arith.constant dense<0.000000e+00> : vector<2x128xf32>
    %625 = tpu.matmul %623, %533, %cst_148 {dimension_numbers = #tpu.dot_dimension_numbers<[1], [0], [0], [1], [0, 0, 1, 1], [], []>} : vector<2x32xf32>, vector<32x128xf32>, vector<2x128xf32> -> vector<2x128xf32>
    %626 = arith.addf %624, %625 : vector<2x128xf32>
    %627 = vector.extract_strided_slice %626 {offsets = [0, 0], sizes = [2, 96], strides = [1, 1]} : vector<2x128xf32> to vector<2x96xf32>
    %628 = arith.negf %627 : vector<2x96xf32>
    %629 = math.exp %628 : vector<2x96xf32>
    %cst_149 = arith.constant 1.000000e+00 : f32
    %630 = vector.broadcast %cst_149 : f32 to vector<2x96xf32>
    %631 = arith.addf %630, %629 : vector<2x96xf32>
    %632 = arith.divf %630, %631 : vector<2x96xf32>
    %633 = vector.extract_strided_slice %626 {offsets = [0, 96], sizes = [2, 32], strides = [1, 1]} : vector<2x128xf32> to vector<2x32xf32>
    %cst_150 = arith.constant 0.000000e+00 : f32
    %634 = vector.broadcast %cst_150 : f32 to vector<2x32xf32>
    %635 = arith.maximumf %633, %634 : vector<2x32xf32>
    %636 = vector.extract_strided_slice %632 {offsets = [0, 0], sizes = [2, 32], strides = [1, 1]} : vector<2x96xf32> to vector<2x32xf32>
    %637 = vector.extract_strided_slice %632 {offsets = [0, 32], sizes = [2, 32], strides = [1, 1]} : vector<2x96xf32> to vector<2x32xf32>
    %638 = vector.extract_strided_slice %632 {offsets = [0, 64], sizes = [2, 32], strides = [1, 1]} : vector<2x96xf32> to vector<2x32xf32>
    %639 = arith.mulf %637, %620 : vector<2x32xf32>
    %640 = arith.mulf %636, %635 : vector<2x32xf32>
    %641 = arith.addf %639, %640 : vector<2x32xf32>
    %cst_151 = arith.constant 0.000000e+00 : f32
    %642 = vector.broadcast %cst_151 : f32 to vector<2x32xf32>
    %643 = arith.maximumf %641, %642 : vector<2x32xf32>
    %644 = arith.mulf %638, %643 : vector<2x32xf32>
    %645 = vector.extract_strided_slice %537 {offsets = [10, 0], sizes = [2, 128], strides = [1, 1]} : vector<16x128xf32> to vector<2x128xf32>
    %cst_152 = arith.constant dense<0.000000e+00> : vector<2x128xf32>
    %646 = tpu.matmul %644, %533, %cst_152 {dimension_numbers = #tpu.dot_dimension_numbers<[1], [0], [0], [1], [0, 0, 1, 1], [], []>} : vector<2x32xf32>, vector<32x128xf32>, vector<2x128xf32> -> vector<2x128xf32>
    %647 = arith.addf %645, %646 : vector<2x128xf32>
    %648 = vector.extract_strided_slice %647 {offsets = [0, 0], sizes = [2, 96], strides = [1, 1]} : vector<2x128xf32> to vector<2x96xf32>
    %649 = arith.negf %648 : vector<2x96xf32>
    %650 = math.exp %649 : vector<2x96xf32>
    %cst_153 = arith.constant 1.000000e+00 : f32
    %651 = vector.broadcast %cst_153 : f32 to vector<2x96xf32>
    %652 = arith.addf %651, %650 : vector<2x96xf32>
    %653 = arith.divf %651, %652 : vector<2x96xf32>
    %654 = vector.extract_strided_slice %647 {offsets = [0, 96], sizes = [2, 32], strides = [1, 1]} : vector<2x128xf32> to vector<2x32xf32>
    %cst_154 = arith.constant 0.000000e+00 : f32
    %655 = vector.broadcast %cst_154 : f32 to vector<2x32xf32>
    %656 = arith.maximumf %654, %655 : vector<2x32xf32>
    %657 = vector.extract_strided_slice %653 {offsets = [0, 0], sizes = [2, 32], strides = [1, 1]} : vector<2x96xf32> to vector<2x32xf32>
    %658 = vector.extract_strided_slice %653 {offsets = [0, 32], sizes = [2, 32], strides = [1, 1]} : vector<2x96xf32> to vector<2x32xf32>
    %659 = vector.extract_strided_slice %653 {offsets = [0, 64], sizes = [2, 32], strides = [1, 1]} : vector<2x96xf32> to vector<2x32xf32>
    %660 = arith.mulf %658, %641 : vector<2x32xf32>
    %661 = arith.mulf %657, %656 : vector<2x32xf32>
    %662 = arith.addf %660, %661 : vector<2x32xf32>
    %cst_155 = arith.constant 0.000000e+00 : f32
    %663 = vector.broadcast %cst_155 : f32 to vector<2x32xf32>
    %664 = arith.maximumf %662, %663 : vector<2x32xf32>
    %665 = arith.mulf %659, %664 : vector<2x32xf32>
    %666 = vector.extract_strided_slice %537 {offsets = [12, 0], sizes = [2, 128], strides = [1, 1]} : vector<16x128xf32> to vector<2x128xf32>
    %cst_156 = arith.constant dense<0.000000e+00> : vector<2x128xf32>
    %667 = tpu.matmul %665, %533, %cst_156 {dimension_numbers = #tpu.dot_dimension_numbers<[1], [0], [0], [1], [0, 0, 1, 1], [], []>} : vector<2x32xf32>, vector<32x128xf32>, vector<2x128xf32> -> vector<2x128xf32>
    %668 = arith.addf %666, %667 : vector<2x128xf32>
    %669 = vector.extract_strided_slice %668 {offsets = [0, 0], sizes = [2, 96], strides = [1, 1]} : vector<2x128xf32> to vector<2x96xf32>
    %670 = arith.negf %669 : vector<2x96xf32>
    %671 = math.exp %670 : vector<2x96xf32>
    %cst_157 = arith.constant 1.000000e+00 : f32
    %672 = vector.broadcast %cst_157 : f32 to vector<2x96xf32>
    %673 = arith.addf %672, %671 : vector<2x96xf32>
    %674 = arith.divf %672, %673 : vector<2x96xf32>
    %675 = vector.extract_strided_slice %668 {offsets = [0, 96], sizes = [2, 32], strides = [1, 1]} : vector<2x128xf32> to vector<2x32xf32>
    %cst_158 = arith.constant 0.000000e+00 : f32
    %676 = vector.broadcast %cst_158 : f32 to vector<2x32xf32>
    %677 = arith.maximumf %675, %676 : vector<2x32xf32>
    %678 = vector.extract_strided_slice %674 {offsets = [0, 0], sizes = [2, 32], strides = [1, 1]} : vector<2x96xf32> to vector<2x32xf32>
    %679 = vector.extract_strided_slice %674 {offsets = [0, 32], sizes = [2, 32], strides = [1, 1]} : vector<2x96xf32> to vector<2x32xf32>
    %680 = vector.extract_strided_slice %674 {offsets = [0, 64], sizes = [2, 32], strides = [1, 1]} : vector<2x96xf32> to vector<2x32xf32>
    %681 = arith.mulf %679, %662 : vector<2x32xf32>
    %682 = arith.mulf %678, %677 : vector<2x32xf32>
    %683 = arith.addf %681, %682 : vector<2x32xf32>
    %cst_159 = arith.constant 0.000000e+00 : f32
    %684 = vector.broadcast %cst_159 : f32 to vector<2x32xf32>
    %685 = arith.maximumf %683, %684 : vector<2x32xf32>
    %686 = arith.mulf %680, %685 : vector<2x32xf32>
    %687 = vector.extract_strided_slice %537 {offsets = [14, 0], sizes = [2, 128], strides = [1, 1]} : vector<16x128xf32> to vector<2x128xf32>
    %cst_160 = arith.constant dense<0.000000e+00> : vector<2x128xf32>
    %688 = tpu.matmul %686, %533, %cst_160 {dimension_numbers = #tpu.dot_dimension_numbers<[1], [0], [0], [1], [0, 0, 1, 1], [], []>} : vector<2x32xf32>, vector<32x128xf32>, vector<2x128xf32> -> vector<2x128xf32>
    %689 = arith.addf %687, %688 : vector<2x128xf32>
    %690 = vector.extract_strided_slice %689 {offsets = [0, 0], sizes = [2, 96], strides = [1, 1]} : vector<2x128xf32> to vector<2x96xf32>
    %691 = arith.negf %690 : vector<2x96xf32>
    %692 = math.exp %691 : vector<2x96xf32>
    %cst_161 = arith.constant 1.000000e+00 : f32
    %693 = vector.broadcast %cst_161 : f32 to vector<2x96xf32>
    %694 = arith.addf %693, %692 : vector<2x96xf32>
    %695 = arith.divf %693, %694 : vector<2x96xf32>
    %696 = vector.extract_strided_slice %689 {offsets = [0, 96], sizes = [2, 32], strides = [1, 1]} : vector<2x128xf32> to vector<2x32xf32>
    %cst_162 = arith.constant 0.000000e+00 : f32
    %697 = vector.broadcast %cst_162 : f32 to vector<2x32xf32>
    %698 = arith.maximumf %696, %697 : vector<2x32xf32>
    %699 = vector.extract_strided_slice %695 {offsets = [0, 0], sizes = [2, 32], strides = [1, 1]} : vector<2x96xf32> to vector<2x32xf32>
    %700 = vector.extract_strided_slice %695 {offsets = [0, 32], sizes = [2, 32], strides = [1, 1]} : vector<2x96xf32> to vector<2x32xf32>
    %701 = vector.extract_strided_slice %695 {offsets = [0, 64], sizes = [2, 32], strides = [1, 1]} : vector<2x96xf32> to vector<2x32xf32>
    %702 = arith.mulf %700, %683 : vector<2x32xf32>
    %703 = arith.mulf %699, %698 : vector<2x32xf32>
    %704 = arith.addf %702, %703 : vector<2x32xf32>
    %cst_163 = arith.constant 0.000000e+00 : f32
    %705 = vector.broadcast %cst_163 : f32 to vector<2x32xf32>
    %706 = arith.maximumf %704, %705 : vector<2x32xf32>
    %707 = arith.mulf %701, %706 : vector<2x32xf32>
    %cst_164 = arith.constant 0.000000e+00 : f32
    %708 = vector.broadcast %cst_164 : f32 to vector<2x96xf32>
    %709 = tpu.concatenate %707, %708 in 1 : vector<2x32xf32>, vector<2x96xf32> -> vector<2x128xf32>
    %c0_165 = arith.constant 0 : index
    %c0_166 = arith.constant 0 : index
    %710 = vector.load %arg13[%c0_165, %c0_166] : memref<2x128xf32, #tpu.memory_space<vmem>>, vector<2x128xf32>
    tpu.vector_store %arg13[%c0_165, %c0_166], %709 {strides = array<i32>} : memref<2x128xf32, #tpu.memory_space<vmem>>, vector<2x128xf32>,
    return
  }
}

</mosaic_0001>

<llo_original>
// kernel: encoder_forward.1
$region0: #{encoder_forward.1}
  #allocation0 [shape = 'u32[]', space=smem, size = 0x4, offset = 0x4, fixed_abs, tag = 'smem constant byte address 0x4 - core index']
  #allocation1 [shape = 'u32[72,128]{1,0:T(1,128)}', space=vmem, size = 0x9000, scoped, tag = 'internal scratch']
  %s0 = inlined_call_operand.vmem [shape: f32[16,32], index: 0, kind: input, shape index: {}]
  %s1 = inlined_call_operand.hbm [shape: f32[32,1024], index: 1, kind: input, shape index: {}]
  %s2 = inlined_call_operand.hbm [shape: f32[256,1024], index: 2, kind: input, shape index: {}]
  %s3 = inlined_call_operand.vmem [shape: f32[1,1024], index: 3, kind: input, shape index: {}]
  %s4 = inlined_call_operand.hbm [shape: f32[256,512], index: 4, kind: input, shape index: {}]
  %s5 = inlined_call_operand.hbm [shape: f32[128,512], index: 5, kind: input, shape index: {}]
  %s6 = inlined_call_operand.vmem [shape: f32[1,512], index: 6, kind: input, shape index: {}]
  %s7 = inlined_call_operand.hbm [shape: f32[128,256], index: 7, kind: input, shape index: {}]
  %s8 = inlined_call_operand.hbm [shape: f32[64,256], index: 8, kind: input, shape index: {}]
  %s9 = inlined_call_operand.hbm [shape: f32[1,256], index: 9, kind: input, shape index: {}]
  %s10 = inlined_call_operand.hbm [shape: f32[64,128], index: 10, kind: input, shape index: {}]
  %s11 = inlined_call_operand.vmem [shape: f32[32,128], index: 11, kind: input, shape index: {}]
  %s12 = inlined_call_operand.vmem [shape: f32[1,128], index: 12, kind: input, shape index: {}]
  %s13 = inlined_call_operand.vmem [shape: f32[2,128], index: 13, kind: output, shape index: {}]
  %s14 = sld [smem:[#allocation0]]
  $region94: #{encoder_forward.1} parent=0
    _
  %s16 = ssub.s32 1, %s14
  %s17 = scalar_select 0, %s16, %s14
  $region1: #{encoder_forward.1} parent=0
    #allocation2 [shape = 'u8[131072]{0}', space=vmem, size = 0x20000, scoped, tag = 'input window, operand 1, single buffered']
    #allocation3 [shape = 's32[1]{0}', space=sflag, size = 0x4, scoped, tag = 'scoped memory for encoder_forward.1']
    #allocation4 [shape = 'u8[1048576]{0}', space=vmem, size = 0x100000, scoped, tag = 'input window, operand 2, single buffered']
    #allocation5 [shape = 's32[1]{0}', space=sflag, size = 0x4, scoped, tag = 'scoped memory for encoder_forward.1']
    #allocation6 [shape = 'u8[524288]{0}', space=vmem, size = 0x80000, scoped, tag = 'input window, operand 4, single buffered']
    #allocation7 [shape = 'u8[262144]{0}', space=vmem, size = 0x40000, scoped, tag = 'input window, operand 5, single buffered']
    #allocation8 [shape = 's32[1]{0}', space=sflag, size = 0x4, scoped, tag = 'scoped memory for encoder_forward.1']
    #allocation9 [shape = 'u8[131072]{0}', space=vmem, size = 0x20000, scoped, tag = 'input window, operand 7, single buffered']
    #allocation10 [shape = 'u8[65536]{0}', space=vmem, size = 0x10000, scoped, tag = 'input window, operand 8, single buffered']
    #allocation11 [shape = 's32[1]{0}', space=sflag, size = 0x4, scoped, tag = 'scoped memory for encoder_forward.1']
    #allocation12 [shape = 'u8[1024]{0}', space=vmem, size = 0x400, scoped, tag = 'input window, operand 9, single buffered']
    #allocation13 [shape = 'u8[32768]{0}', space=vmem, size = 0x8000, scoped, tag = 'input window, operand 10, single buffered']
    #allocation14 [shape = 's32[1]{0}', space=sflag, size = 0x4, scoped, tag = 'scoped memory for encoder_forward.1']
    %18 = vsyncpa [#allocation3], 0
    %19 = vsyncpa [#allocation5], 0
    %20 = vsyncpa [#allocation8], 0
    %21 = vsyncpa [#allocation11], 0
    %22 = vsyncpa [#allocation14], 0
    // Predicated region
    $region2: #{encoder_forward.1} parent=1 // pred_check
      _
    $region3: #{encoder_forward.1} parent=1 // pred_check_branch
      %24 = sbr.rel (0) target = $region5
    $region4: #{encoder_forward.1} parent=1 // pred_region
      _
    $region5: #{encoder_forward.1} parent=1 // pred_fallthru
      _
    // Predicated region
    $region6: #{encoder_forward.1} parent=1 // pred_check
      _
    $region7: #{encoder_forward.1} parent=1 // pred_check_branch
      %26 = sbr.rel (0) target = $region9
    $region8: #{encoder_forward.1} parent=1 // pred_region
      %28 = vsyncadd [#allocation3], 0
      %s29 = sshll.u32 %s1, 4
      %s30 = int_to_ptr.hbm [resolvable:$true] %s29
      %s31 = sshll.u32 [#allocation2], 4
      %s32 = int_to_ptr.vmem [resolvable:$true] %s31
      %37 = dma.hbm_to_vmem [thread:$0]  %s30, 4096, %s32, [#allocation3], 1024, 1024, 64
    $region9: #{encoder_forward.1} parent=1 // pred_fallthru
      _
    // Predicated region
    $region10: #{encoder_forward.1} parent=1 // pred_check
      _
    $region11: #{encoder_forward.1} parent=1 // pred_check_branch
      %39 = sbr.rel (0) target = $region13
    $region12: #{encoder_forward.1} parent=1 // pred_region
      %41 = vsyncadd [#allocation5], 0
      %s42 = sshll.u32 %s2, 4
      %s43 = int_to_ptr.hbm [resolvable:$true] %s42
      %s44 = sshll.u32 [#allocation4], 4
      %s45 = int_to_ptr.vmem [resolvable:$true] %s44
      %50 = dma.hbm_to_vmem [thread:$0]  %s43, 32768, %s45, [#allocation5], 1024, 1024, 64
    $region13: #{encoder_forward.1} parent=1 // pred_fallthru
      _
    // Predicated region
    $region14: #{encoder_forward.1} parent=1 // pred_check
      _
    $region15: #{encoder_forward.1} parent=1 // pred_check_branch
      %52 = sbr.rel (0) target = $region17
    $region16: #{encoder_forward.1} parent=1 // pred_region
      _
    $region17: #{encoder_forward.1} parent=1 // pred_fallthru
      _
    // Predicated region
    $region18: #{encoder_forward.1} parent=1 // pred_check
      _
    $region19: #{encoder_forward.1} parent=1 // pred_check_branch
      %54 = sbr.rel (0) target = $region21
    $region20: #{encoder_forward.1} parent=1 // pred_region
      %56 = vsyncadd [#allocation5], 0
      %s57 = sshll.u32 %s4, 4
      %s58 = int_to_ptr.hbm [resolvable:$true] %s57
      %s59 = sshll.u32 [#allocation6], 4
      %s60 = int_to_ptr.vmem [resolvable:$true] %s59
      %65 = dma.hbm_to_vmem [thread:$0]  %s58, 16384, %s60, [#allocation5], 512, 512, 32
    $region21: #{encoder_forward.1} parent=1 // pred_fallthru
      _
    // Predicated region
    $region22: #{encoder_forward.1} parent=1 // pred_check
      _
    $region23: #{encoder_forward.1} parent=1 // pred_check_branch
      %67 = sbr.rel (0) target = $region25
    $region24: #{encoder_forward.1} parent=1 // pred_region
      %69 = vsyncadd [#allocation8], 0
      %s70 = sshll.u32 %s5, 4
      %s71 = int_to_ptr.hbm [resolvable:$true] %s70
      %s72 = sshll.u32 [#allocation7], 4
      %s73 = int_to_ptr.vmem [resolvable:$true] %s72
      %78 = dma.hbm_to_vmem [thread:$0]  %s71, 8192, %s73, [#allocation8], 512, 512, 32
    $region25: #{encoder_forward.1} parent=1 // pred_fallthru
      _
    // Predicated region
    $region26: #{encoder_forward.1} parent=1 // pred_check
      _
    $region27: #{encoder_forward.1} parent=1 // pred_check_branch
      %80 = sbr.rel (0) target = $region29
    $region28: #{encoder_forward.1} parent=1 // pred_region
      _
    $region29: #{encoder_forward.1} parent=1 // pred_fallthru
      _
    // Predicated region
    $region30: #{encoder_forward.1} parent=1 // pred_check
      _
    $region31: #{encoder_forward.1} parent=1 // pred_check_branch
      %82 = sbr.rel (0) target = $region33
    $region32: #{encoder_forward.1} parent=1 // pred_region
      %84 = vsyncadd [#allocation8], 0
      %s85 = sshll.u32 %s7, 4
      %s86 = int_to_ptr.hbm [resolvable:$true] %s85
      %s87 = sshll.u32 [#allocation9], 4
      %s88 = int_to_ptr.vmem [resolvable:$true] %s87
      %93 = dma.hbm_to_vmem [thread:$0]  %s86, 4096, %s88, [#allocation8], 256, 256, 16
    $region33: #{encoder_forward.1} parent=1 // pred_fallthru
      _
    // Predicated region
    $region34: #{encoder_forward.1} parent=1 // pred_check
      _
    $region35: #{encoder_forward.1} parent=1 // pred_check_branch
      %95 = sbr.rel (0) target = $region37
    $region36: #{encoder_forward.1} parent=1 // pred_region
      %97 = vsyncadd [#allocation11], 0
      %s98 = sshll.u32 %s8, 4
      %s99 = int_to_ptr.hbm [resolvable:$true] %s98
      %s100 = sshll.u32 [#allocation10], 4
      %s101 = int_to_ptr.vmem [resolvable:$true] %s100
      %106 = dma.hbm_to_vmem [thread:$0]  %s99, 2048, %s101, [#allocation11], 256, 256, 16
    $region37: #{encoder_forward.1} parent=1 // pred_fallthru
      _
    // Predicated region
    $region38: #{encoder_forward.1} parent=1 // pred_check
      _
    $region39: #{encoder_forward.1} parent=1 // pred_check_branch
      %108 = sbr.rel (0) target = $region41
    $region40: #{encoder_forward.1} parent=1 // pred_region
      %110 = vsyncadd [#allocation11], 0
      %s112 = sshll.u32 %s9, 4
      %s113 = int_to_ptr.hbm [resolvable:$true] %s112
      %s114 = sshll.u32 [#allocation12], 4
      %s115 = int_to_ptr.vmem [resolvable:$true] %s114
      %117 = dma.hbm_to_vmem [thread:$0]  %s113, 32, %s115, [#allocation11]
    $region41: #{encoder_forward.1} parent=1 // pred_fallthru
      _
    // Predicated region
    $region42: #{encoder_forward.1} parent=1 // pred_check
      _
    $region43: #{encoder_forward.1} parent=1 // pred_check_branch
      %119 = sbr.rel (0) target = $region45
    $region44: #{encoder_forward.1} parent=1 // pred_region
      %121 = vsyncadd [#allocation14], 0
      %s122 = sshll.u32 %s10, 4
      %s123 = int_to_ptr.hbm [resolvable:$true] %s122
      %s124 = sshll.u32 [#allocation13], 4
      %s125 = int_to_ptr.vmem [resolvable:$true] %s124
      %130 = dma.hbm_to_vmem [thread:$0]  %s123, 1024, %s125, [#allocation14], 128, 128, 8
    $region45: #{encoder_forward.1} parent=1 // pred_fallthru
      _
    // Predicated region
    $region46: #{encoder_forward.1} parent=1 // pred_check
      _
    $region47: #{encoder_forward.1} parent=1 // pred_check_branch
      %132 = sbr.rel (0) target = $region49
    $region48: #{encoder_forward.1} parent=1 // pred_region
      _
    $region49: #{encoder_forward.1} parent=1 // pred_fallthru
      _
    // Predicated region
    $region50: #{encoder_forward.1} parent=1 // pred_check
      _
    $region51: #{encoder_forward.1} parent=1 // pred_check_branch
      %134 = sbr.rel (0) target = $region53
    $region52: #{encoder_forward.1} parent=1 // pred_region
      _
    $region53: #{encoder_forward.1} parent=1 // pred_fallthru
      _
    // Predicated region
    $region54: #{encoder_forward.1} parent=1 // pred_check
      _
    $region55: #{encoder_forward.1} parent=1 // pred_check_branch
      %136 = sbr.rel (0) target = $region57
    $region56: #{encoder_forward.1} parent=1 // pred_region
      %138 = dma.done [#allocation3], 4096
    $region57: #{encoder_forward.1} parent=1 // pred_fallthru
      _
    // Predicated region
    $region58: #{encoder_forward.1} parent=1 // pred_check
      _
    $region59: #{encoder_forward.1} parent=1 // pred_check_branch
      %140 = sbr.rel (0) target = $region61
    $region60: #{encoder_forward.1} parent=1 // pred_region
      %142 = dma.done [#allocation5], 32768
    $region61: #{encoder_forward.1} parent=1 // pred_fallthru
      _
    // Predicated region
    $region62: #{encoder_forward.1} parent=1 // pred_check
      _
    $region63: #{encoder_forward.1} parent=1 // pred_check_branch
      %144 = sbr.rel (0) target = $region65
    $region64: #{encoder_forward.1} parent=1 // pred_region
      %146 = dma.done [#allocation5], 16384
    $region65: #{encoder_forward.1} parent=1 // pred_fallthru
      _
    // Predicated region
    $region66: #{encoder_forward.1} parent=1 // pred_check
      _
    $region67: #{encoder_forward.1} parent=1 // pred_check_branch
      %148 = sbr.rel (0) target = $region69
    $region68: #{encoder_forward.1} parent=1 // pred_region
      %150 = dma.done [#allocation8], 8192
    $region69: #{encoder_forward.1} parent=1 // pred_fallthru
      _
    // Predicated region
    $region70: #{encoder_forward.1} parent=1 // pred_check
      _
    $region71: #{encoder_forward.1} parent=1 // pred_check_branch
      %152 = sbr.rel (0) target = $region73
    $region72: #{encoder_forward.1} parent=1 // pred_region
      %154 = dma.done [#allocation8], 4096
    $region73: #{encoder_forward.1} parent=1 // pred_fallthru
      _
    // Predicated region
    $region74: #{encoder_forward.1} parent=1 // pred_check
      _
    $region75: #{encoder_forward.1} parent=1 // pred_check_branch
      %156 = sbr.rel (0) target = $region77
    $region76: #{encoder_forward.1} parent=1 // pred_region
      %158 = dma.done [#allocation11], 2048
    $region77: #{encoder_forward.1} parent=1 // pred_fallthru
      _
    // Predicated region
    $region78: #{encoder_forward.1} parent=1 // pred_check
      _
    $region79: #{encoder_forward.1} parent=1 // pred_check_branch
      %160 = sbr.rel (0) target = $region81
    $region80: #{encoder_forward.1} parent=1 // pred_region
      %162 = dma.done [#allocation11], 32
    $region81: #{encoder_forward.1} parent=1 // pred_fallthru
      _
    // Predicated region
    $region82: #{encoder_forward.1} parent=1 // pred_check
      _
    $region83: #{encoder_forward.1} parent=1 // pred_check_branch
      %164 = sbr.rel (0) target = $region85
    $region84: #{encoder_forward.1} parent=1 // pred_region
      %166 = dma.done [#allocation14], 1024
    $region85: #{encoder_forward.1} parent=1 // pred_fallthru
      _
    %v167 = vld [vmem:[%s0] sm:$0xff]
    %v168 = vld [vmem:[%s0 + $0x8] sm:$0xff]
    %v169 = vld [vmem:[#allocation2] sm:$0xff]
    %v170 = vld [vmem:[#allocation2 + $0x8] sm:$0xff]
    %v171 = vld [vmem:[#allocation2 + $0x10] sm:$0xff]
    %v172 = vld [vmem:[#allocation2 + $0x18] sm:$0xff]
    %v173 = vld [vmem:[#allocation2 + $0x20] sm:$0xff]
    %v174 = vld [vmem:[#allocation2 + $0x28] sm:$0xff]
    %v175 = vld [vmem:[#allocation2 + $0x30] sm:$0xff]
    %v176 = vld [vmem:[#allocation2 + $0x38] sm:$0xff]
    %v177 = vld [vmem:[#allocation2 + $0x40] sm:$0xff]
    %v178 = vld [vmem:[#allocation2 + $0x48] sm:$0xff]
    %v179 = vld [vmem:[#allocation2 + $0x50] sm:$0xff]
    %v180 = vld [vmem:[#allocation2 + $0x58] sm:$0xff]
    %v181 = vld [vmem:[#allocation2 + $0x60] sm:$0xff]
    %v182 = vld [vmem:[#allocation2 + $0x68] sm:$0xff]
    %v183 = vld [vmem:[#allocation2 + $0x70] sm:$0xff]
    %v184 = vld [vmem:[#allocation2 + $0x78] sm:$0xff]
    %v185 = vld [vmem:[#allocation2 + $0x80] sm:$0xff]
    %v186 = vld [vmem:[#allocation2 + $0x88] sm:$0xff]
    %v187 = vld [vmem:[#allocation2 + $0x90] sm:$0xff]
    %v188 = vld [vmem:[#allocation2 + $0x98] sm:$0xff]
    %v189 = vld [vmem:[#allocation2 + $0xa0] sm:$0xff]
    %v190 = vld [vmem:[#allocation2 + $0xa8] sm:$0xff]
    %v191 = vld [vmem:[#allocation2 + $0xb0] sm:$0xff]
    %v192 = vld [vmem:[#allocation2 + $0xb8] sm:$0xff]
    %v193 = vld [vmem:[#allocation2 + $0xc0] sm:$0xff]
    %v194 = vld [vmem:[#allocation2 + $0xc8] sm:$0xff]
    %v195 = vld [vmem:[#allocation2 + $0xd0] sm:$0xff]
    %v196 = vld [vmem:[#allocation2 + $0xd8] sm:$0xff]
    %v197 = vld [vmem:[#allocation2 + $0xe0] sm:$0xff]
    %v198 = vld [vmem:[#allocation2 + $0xe8] sm:$0xff]
    %v199 = vld [vmem:[#allocation2 + $0xf0] sm:$0xff]
    %v200 = vld [vmem:[#allocation2 + $0xf8] sm:$0xff]
    %v201 = vld [vmem:[#allocation4] sm:$0xff]
    %v202 = vld [vmem:[#allocation4 + $0x8] sm:$0xff]
    %v203 = vld [vmem:[#allocation4 + $0x10] sm:$0xff]
    %v204 = vld [vmem:[#allocation4 + $0x18] sm:$0xff]
    %v205 = vld [vmem:[#allocation4 + $0x20] sm:$0xff]
    %v206 = vld [vmem:[#allocation4 + $0x28] sm:$0xff]
    %v207 = vld [vmem:[#allocation4 + $0x30] sm:$0xff]
    %v208 = vld [vmem:[#allocation4 + $0x38] sm:$0xff]
    %v209 = vld [vmem:[#allocation4 + $0x40] sm:$0xff]
    %v210 = vld [vmem:[#allocation4 + $0x48] sm:$0xff]
    %v211 = vld [vmem:[#allocation4 + $0x50] sm:$0xff]
    %v212 = vld [vmem:[#allocation4 + $0x58] sm:$0xff]
    %v213 = vld [vmem:[#allocation4 + $0x60] sm:$0xff]
    %v214 = vld [vmem:[#allocation4 + $0x68] sm:$0xff]
    %v215 = vld [vmem:[#allocation4 + $0x70] sm:$0xff]
    %v216 = vld [vmem:[#allocation4 + $0x78] sm:$0xff]
    %v217 = vld [vmem:[#allocation4 + $0x80] sm:$0xff]
    %v218 = vld [vmem:[#allocation4 + $0x88] sm:$0xff]
    %v219 = vld [vmem:[#allocation4 + $0x90] sm:$0xff]
    %v220 = vld [vmem:[#allocation4 + $0x98] sm:$0xff]
    %v221 = vld [vmem:[#allocation4 + $0xa0] sm:$0xff]
    %v222 = vld [vmem:[#allocation4 + $0xa8] sm:$0xff]
    %v223 = vld [vmem:[#allocation4 + $0xb0] sm:$0xff]
    %v224 = vld [vmem:[#allocation4 + $0xb8] sm:$0xff]
    %v225 = vld [vmem:[#allocation4 + $0xc0] sm:$0xff]
    %v226 = vld [vmem:[#allocation4 + $0xc8] sm:$0xff]
    %v227 = vld [vmem:[#allocation4 + $0xd0] sm:$0xff]
    %v228 = vld [vmem:[#allocation4 + $0xd8] sm:$0xff]
    %v229 = vld [vmem:[#allocation4 + $0xe0] sm:$0xff]
    %v230 = vld [vmem:[#allocation4 + $0xe8] sm:$0xff]
    %v231 = vld [vmem:[#allocation4 + $0xf0] sm:$0xff]
    %v232 = vld [vmem:[#allocation4 + $0xf8] sm:$0xff]
    %v233 = vld [vmem:[#allocation4 + $0x100] sm:$0xff]
    %v234 = vld [vmem:[#allocation4 + $0x108] sm:$0xff]
    %v235 = vld [vmem:[#allocation4 + $0x110] sm:$0xff]
    %v236 = vld [vmem:[#allocation4 + $0x118] sm:$0xff]
    %v237 = vld [vmem:[#allocation4 + $0x120] sm:$0xff]
    %v238 = vld [vmem:[#allocation4 + $0x128] sm:$0xff]
    %v239 = vld [vmem:[#allocation4 + $0x130] sm:$0xff]
    %v240 = vld [vmem:[#allocation4 + $0x138] sm:$0xff]
    %v241 = vld [vmem:[#allocation4 + $0x140] sm:$0xff]
    %v242 = vld [vmem:[#allocation4 + $0x148] sm:$0xff]
    %v243 = vld [vmem:[#allocation4 + $0x150] sm:$0xff]
    %v244 = vld [vmem:[#allocation4 + $0x158] sm:$0xff]
    %v245 = vld [vmem:[#allocation4 + $0x160] sm:$0xff]
    %v246 = vld [vmem:[#allocation4 + $0x168] sm:$0xff]
    %v247 = vld [vmem:[#allocation4 + $0x170] sm:$0xff]
    %v248 = vld [vmem:[#allocation4 + $0x178] sm:$0xff]
    %v249 = vld [vmem:[#allocation4 + $0x180] sm:$0xff]
    %v250 = vld [vmem:[#allocation4 + $0x188] sm:$0xff]
    %v251 = vld [vmem:[#allocation4 + $0x190] sm:$0xff]
    %v252 = vld [vmem:[#allocation4 + $0x198] sm:$0xff]
    %v253 = vld [vmem:[#allocation4 + $0x1a0] sm:$0xff]
    %v254 = vld [vmem:[#allocation4 + $0x1a8] sm:$0xff]
    %v255 = vld [vmem:[#allocation4 + $0x1b0] sm:$0xff]
    %v256 = vld [vmem:[#allocation4 + $0x1b8] sm:$0xff]
    %v257 = vld [vmem:[#allocation4 + $0x1c0] sm:$0xff]
    %v258 = vld [vmem:[#allocation4 + $0x1c8] sm:$0xff]
    %v259 = vld [vmem:[#allocation4 + $0x1d0] sm:$0xff]
    %v260 = vld [vmem:[#allocation4 + $0x1d8] sm:$0xff]
    %v261 = vld [vmem:[#allocation4 + $0x1e0] sm:$0xff]
    %v262 = vld [vmem:[#allocation4 + $0x1e8] sm:$0xff]
    %v263 = vld [vmem:[#allocation4 + $0x1f0] sm:$0xff]
    %v264 = vld [vmem:[#allocation4 + $0x1f8] sm:$0xff]
    %v265 = vld [vmem:[#allocation4 + $0x200] sm:$0xff]
    %v266 = vld [vmem:[#allocation4 + $0x208] sm:$0xff]
    %v267 = vld [vmem:[#allocation4 + $0x210] sm:$0xff]
    %v268 = vld [vmem:[#allocation4 + $0x218] sm:$0xff]
    %v269 = vld [vmem:[#allocation4 + $0x220] sm:$0xff]
    %v270 = vld [vmem:[#allocation4 + $0x228] sm:$0xff]
    %v271 = vld [vmem:[#allocation4 + $0x230] sm:$0xff]
    %v272 = vld [vmem:[#allocation4 + $0x238] sm:$0xff]
    %v273 = vld [vmem:[#allocation4 + $0x240] sm:$0xff]
    %v274 = vld [vmem:[#allocation4 + $0x248] sm:$0xff]
    %v275 = vld [vmem:[#allocation4 + $0x250] sm:$0xff]
    %v276 = vld [vmem:[#allocation4 + $0x258] sm:$0xff]
    %v277 = vld [vmem:[#allocation4 + $0x260] sm:$0xff]
    %v278 = vld [vmem:[#allocation4 + $0x268] sm:$0xff]
    %v279 = vld [vmem:[#allocation4 + $0x270] sm:$0xff]
    %v280 = vld [vmem:[#allocation4 + $0x278] sm:$0xff]
    %v281 = vld [vmem:[#allocation4 + $0x280] sm:$0xff]
    %v282 = vld [vmem:[#allocation4 + $0x288] sm:$0xff]
    %v283 = vld [vmem:[#allocation4 + $0x290] sm:$0xff]
    %v284 = vld [vmem:[#allocation4 + $0x298] sm:$0xff]
    %v285 = vld [vmem:[#allocation4 + $0x2a0] sm:$0xff]
    %v286 = vld [vmem:[#allocation4 + $0x2a8] sm:$0xff]
    %v287 = vld [vmem:[#allocation4 + $0x2b0] sm:$0xff]
    %v288 = vld [vmem:[#allocation4 + $0x2b8] sm:$0xff]
    %v289 = vld [vmem:[#allocation4 + $0x2c0] sm:$0xff]
    %v290 = vld [vmem:[#allocation4 + $0x2c8] sm:$0xff]
    %v291 = vld [vmem:[#allocation4 + $0x2d0] sm:$0xff]
    %v292 = vld [vmem:[#allocation4 + $0x2d8] sm:$0xff]
    %v293 = vld [vmem:[#allocation4 + $0x2e0] sm:$0xff]
    %v294 = vld [vmem:[#allocation4 + $0x2e8] sm:$0xff]
    %v295 = vld [vmem:[#allocation4 + $0x2f0] sm:$0xff]
    %v296 = vld [vmem:[#allocation4 + $0x2f8] sm:$0xff]
    %v297 = vld [vmem:[#allocation4 + $0x300] sm:$0xff]
    %v298 = vld [vmem:[#allocation4 + $0x308] sm:$0xff]
    %v299 = vld [vmem:[#allocation4 + $0x310] sm:$0xff]
    %v300 = vld [vmem:[#allocation4 + $0x318] sm:$0xff]
    %v301 = vld [vmem:[#allocation4 + $0x320] sm:$0xff]
    %v302 = vld [vmem:[#allocation4 + $0x328] sm:$0xff]
    %v303 = vld [vmem:[#allocation4 + $0x330] sm:$0xff]
    %v304 = vld [vmem:[#allocation4 + $0x338] sm:$0xff]
    %v305 = vld [vmem:[#allocation4 + $0x340] sm:$0xff]
    %v306 = vld [vmem:[#allocation4 + $0x348] sm:$0xff]
    %v307 = vld [vmem:[#allocation4 + $0x350] sm:$0xff]
    %v308 = vld [vmem:[#allocation4 + $0x358] sm:$0xff]
    %v309 = vld [vmem:[#allocation4 + $0x360] sm:$0xff]
    %v310 = vld [vmem:[#allocation4 + $0x368] sm:$0xff]
    %v311 = vld [vmem:[#allocation4 + $0x370] sm:$0xff]
    %v312 = vld [vmem:[#allocation4 + $0x378] sm:$0xff]
    %v313 = vld [vmem:[#allocation4 + $0x380] sm:$0xff]
    %v314 = vld [vmem:[#allocation4 + $0x388] sm:$0xff]
    %v315 = vld [vmem:[#allocation4 + $0x390] sm:$0xff]
    %v316 = vld [vmem:[#allocation4 + $0x398] sm:$0xff]
    %v317 = vld [vmem:[#allocation4 + $0x3a0] sm:$0xff]
    %v318 = vld [vmem:[#allocation4 + $0x3a8] sm:$0xff]
    %v319 = vld [vmem:[#allocation4 + $0x3b0] sm:$0xff]
    %v320 = vld [vmem:[#allocation4 + $0x3b8] sm:$0xff]
    %v321 = vld [vmem:[#allocation4 + $0x3c0] sm:$0xff]
    %v322 = vld [vmem:[#allocation4 + $0x3c8] sm:$0xff]
    %v323 = vld [vmem:[#allocation4 + $0x3d0] sm:$0xff]
    %v324 = vld [vmem:[#allocation4 + $0x3d8] sm:$0xff]
    %v325 = vld [vmem:[#allocation4 + $0x3e0] sm:$0xff]
    %v326 = vld [vmem:[#allocation4 + $0x3e8] sm:$0xff]
    %v327 = vld [vmem:[#allocation4 + $0x3f0] sm:$0xff]
    %v328 = vld [vmem:[#allocation4 + $0x3f8] sm:$0xff]
    %v329 = vld [vmem:[#allocation4 + $0x400] sm:$0xff]
    %v330 = vld [vmem:[#allocation4 + $0x408] sm:$0xff]
    %v331 = vld [vmem:[#allocation4 + $0x410] sm:$0xff]
    %v332 = vld [vmem:[#allocation4 + $0x418] sm:$0xff]
    %v333 = vld [vmem:[#allocation4 + $0x420] sm:$0xff]
    %v334 = vld [vmem:[#allocation4 + $0x428] sm:$0xff]
    %v335 = vld [vmem:[#allocation4 + $0x430] sm:$0xff]
    %v336 = vld [vmem:[#allocation4 + $0x438] sm:$0xff]
    %v337 = vld [vmem:[#allocation4 + $0x440] sm:$0xff]
    %v338 = vld [vmem:[#allocation4 + $0x448] sm:$0xff]
    %v339 = vld [vmem:[#allocation4 + $0x450] sm:$0xff]
    %v340 = vld [vmem:[#allocation4 + $0x458] sm:$0xff]
    %v341 = vld [vmem:[#allocation4 + $0x460] sm:$0xff]
    %v342 = vld [vmem:[#allocation4 + $0x468] sm:$0xff]
    %v343 = vld [vmem:[#allocation4 + $0x470] sm:$0xff]
    %v344 = vld [vmem:[#allocation4 + $0x478] sm:$0xff]
    %v345 = vld [vmem:[#allocation4 + $0x480] sm:$0xff]
    %v346 = vld [vmem:[#allocation4 + $0x488] sm:$0xff]
    %v347 = vld [vmem:[#allocation4 + $0x490] sm:$0xff]
    %v348 = vld [vmem:[#allocation4 + $0x498] sm:$0xff]
    %v349 = vld [vmem:[#allocation4 + $0x4a0] sm:$0xff]
    %v350 = vld [vmem:[#allocation4 + $0x4a8] sm:$0xff]
    %v351 = vld [vmem:[#allocation4 + $0x4b0] sm:$0xff]
    %v352 = vld [vmem:[#allocation4 + $0x4b8] sm:$0xff]
    %v353 = vld [vmem:[#allocation4 + $0x4c0] sm:$0xff]
    %v354 = vld [vmem:[#allocation4 + $0x4c8] sm:$0xff]
    %v355 = vld [vmem:[#allocation4 + $0x4d0] sm:$0xff]
    %v356 = vld [vmem:[#allocation4 + $0x4d8] sm:$0xff]
    %v357 = vld [vmem:[#allocation4 + $0x4e0] sm:$0xff]
    %v358 = vld [vmem:[#allocation4 + $0x4e8] sm:$0xff]
    %v359 = vld [vmem:[#allocation4 + $0x4f0] sm:$0xff]
    %v360 = vld [vmem:[#allocation4 + $0x4f8] sm:$0xff]
    %v361 = vld [vmem:[#allocation4 + $0x500] sm:$0xff]
    %v362 = vld [vmem:[#allocation4 + $0x508] sm:$0xff]
    %v363 = vld [vmem:[#allocation4 + $0x510] sm:$0xff]
    %v364 = vld [vmem:[#allocation4 + $0x518] sm:$0xff]
    %v365 = vld [vmem:[#allocation4 + $0x520] sm:$0xff]
    %v366 = vld [vmem:[#allocation4 + $0x528] sm:$0xff]
    %v367 = vld [vmem:[#allocation4 + $0x530] sm:$0xff]
    %v368 = vld [vmem:[#allocation4 + $0x538] sm:$0xff]
    %v369 = vld [vmem:[#allocation4 + $0x540] sm:$0xff]
    %v370 = vld [vmem:[#allocation4 + $0x548] sm:$0xff]
    %v371 = vld [vmem:[#allocation4 + $0x550] sm:$0xff]
    %v372 = vld [vmem:[#allocation4 + $0x558] sm:$0xff]
    %v373 = vld [vmem:[#allocation4 + $0x560] sm:$0xff]
    %v374 = vld [vmem:[#allocation4 + $0x568] sm:$0xff]
    %v375 = vld [vmem:[#allocation4 + $0x570] sm:$0xff]
    %v376 = vld [vmem:[#allocation4 + $0x578] sm:$0xff]
    %v377 = vld [vmem:[#allocation4 + $0x580] sm:$0xff]
    %v378 = vld [vmem:[#allocation4 + $0x588] sm:$0xff]
    %v379 = vld [vmem:[#allocation4 + $0x590] sm:$0xff]
    %v380 = vld [vmem:[#allocation4 + $0x598] sm:$0xff]
    %v381 = vld [vmem:[#allocation4 + $0x5a0] sm:$0xff]
    %v382 = vld [vmem:[#allocation4 + $0x5a8] sm:$0xff]
    %v383 = vld [vmem:[#allocation4 + $0x5b0] sm:$0xff]
    %v384 = vld [vmem:[#allocation4 + $0x5b8] sm:$0xff]
    %v385 = vld [vmem:[#allocation4 + $0x5c0] sm:$0xff]
    %v386 = vld [vmem:[#allocation4 + $0x5c8] sm:$0xff]
    %v387 = vld [vmem:[#allocation4 + $0x5d0] sm:$0xff]
    %v388 = vld [vmem:[#allocation4 + $0x5d8] sm:$0xff]
    %v389 = vld [vmem:[#allocation4 + $0x5e0] sm:$0xff]
    %v390 = vld [vmem:[#allocation4 + $0x5e8] sm:$0xff]
    %v391 = vld [vmem:[#allocation4 + $0x5f0] sm:$0xff]
    %v392 = vld [vmem:[#allocation4 + $0x5f8] sm:$0xff]
    %v393 = vld [vmem:[#allocation4 + $0x600] sm:$0xff]
    %v394 = vld [vmem:[#allocation4 + $0x608] sm:$0xff]
    %v395 = vld [vmem:[#allocation4 + $0x610] sm:$0xff]
    %v396 = vld [vmem:[#allocation4 + $0x618] sm:$0xff]
    %v397 = vld [vmem:[#allocation4 + $0x620] sm:$0xff]
    %v398 = vld [vmem:[#allocation4 + $0x628] sm:$0xff]
    %v399 = vld [vmem:[#allocation4 + $0x630] sm:$0xff]
    %v400 = vld [vmem:[#allocation4 + $0x638] sm:$0xff]
    %v401 = vld [vmem:[#allocation4 + $0x640] sm:$0xff]
    %v402 = vld [vmem:[#allocation4 + $0x648] sm:$0xff]
    %v403 = vld [vmem:[#allocation4 + $0x650] sm:$0xff]
    %v404 = vld [vmem:[#allocation4 + $0x658] sm:$0xff]
    %v405 = vld [vmem:[#allocation4 + $0x660] sm:$0xff]
    %v406 = vld [vmem:[#allocation4 + $0x668] sm:$0xff]
    %v407 = vld [vmem:[#allocation4 + $0x670] sm:$0xff]
    %v408 = vld [vmem:[#allocation4 + $0x678] sm:$0xff]
    %v409 = vld [vmem:[#allocation4 + $0x680] sm:$0xff]
    %v410 = vld [vmem:[#allocation4 + $0x688] sm:$0xff]
    %v411 = vld [vmem:[#allocation4 + $0x690] sm:$0xff]
    %v412 = vld [vmem:[#allocation4 + $0x698] sm:$0xff]
    %v413 = vld [vmem:[#allocation4 + $0x6a0] sm:$0xff]
    %v414 = vld [vmem:[#allocation4 + $0x6a8] sm:$0xff]
    %v415 = vld [vmem:[#allocation4 + $0x6b0] sm:$0xff]
    %v416 = vld [vmem:[#allocation4 + $0x6b8] sm:$0xff]
    %v417 = vld [vmem:[#allocation4 + $0x6c0] sm:$0xff]
    %v418 = vld [vmem:[#allocation4 + $0x6c8] sm:$0xff]
    %v419 = vld [vmem:[#allocation4 + $0x6d0] sm:$0xff]
    %v420 = vld [vmem:[#allocation4 + $0x6d8] sm:$0xff]
    %v421 = vld [vmem:[#allocation4 + $0x6e0] sm:$0xff]
    %v422 = vld [vmem:[#allocation4 + $0x6e8] sm:$0xff]
    %v423 = vld [vmem:[#allocation4 + $0x6f0] sm:$0xff]
    %v424 = vld [vmem:[#allocation4 + $0x6f8] sm:$0xff]
    %v425 = vld [vmem:[#allocation4 + $0x700] sm:$0xff]
    %v426 = vld [vmem:[#allocation4 + $0x708] sm:$0xff]
    %v427 = vld [vmem:[#allocation4 + $0x710] sm:$0xff]
    %v428 = vld [vmem:[#allocation4 + $0x718] sm:$0xff]
    %v429 = vld [vmem:[#allocation4 + $0x720] sm:$0xff]
    %v430 = vld [vmem:[#allocation4 + $0x728] sm:$0xff]
    %v431 = vld [vmem:[#allocation4 + $0x730] sm:$0xff]
    %v432 = vld [vmem:[#allocation4 + $0x738] sm:$0xff]
    %v433 = vld [vmem:[#allocation4 + $0x740] sm:$0xff]
    %v434 = vld [vmem:[#allocation4 + $0x748] sm:$0xff]
    %v435 = vld [vmem:[#allocation4 + $0x750] sm:$0xff]
    %v436 = vld [vmem:[#allocation4 + $0x758] sm:$0xff]
    %v437 = vld [vmem:[#allocation4 + $0x760] sm:$0xff]
    %v438 = vld [vmem:[#allocation4 + $0x768] sm:$0xff]
    %v439 = vld [vmem:[#allocation4 + $0x770] sm:$0xff]
    %v440 = vld [vmem:[#allocation4 + $0x778] sm:$0xff]
    %v441 = vld [vmem:[#allocation4 + $0x780] sm:$0xff]
    %v442 = vld [vmem:[#allocation4 + $0x788] sm:$0xff]
    %v443 = vld [vmem:[#allocation4 + $0x790] sm:$0xff]
    %v444 = vld [vmem:[#allocation4 + $0x798] sm:$0xff]
    %v445 = vld [vmem:[#allocation4 + $0x7a0] sm:$0xff]
    %v446 = vld [vmem:[#allocation4 + $0x7a8] sm:$0xff]
    %v447 = vld [vmem:[#allocation4 + $0x7b0] sm:$0xff]
    %v448 = vld [vmem:[#allocation4 + $0x7b8] sm:$0xff]
    %v449 = vld [vmem:[#allocation4 + $0x7c0] sm:$0xff]
    %v450 = vld [vmem:[#allocation4 + $0x7c8] sm:$0xff]
    %v451 = vld [vmem:[#allocation4 + $0x7d0] sm:$0xff]
    %v452 = vld [vmem:[#allocation4 + $0x7d8] sm:$0xff]
    %v453 = vld [vmem:[#allocation4 + $0x7e0] sm:$0xff]
    %v454 = vld [vmem:[#allocation4 + $0x7e8] sm:$0xff]
    %v455 = vld [vmem:[#allocation4 + $0x7f0] sm:$0xff]
    %v456 = vld [vmem:[#allocation4 + $0x7f8] sm:$0xff]
    %v457 = vld [vmem:[%s3] sm:$0xff]
    %v459 = vperm.slane %v457, 0
    %v460 = vperm.slane %v457, 1
    %v461 = vperm.slane %v457, 2
    %v462 = vperm.slane %v457, 3
    %v463 = vperm.slane %v457, 4
    %v464 = vperm.slane %v457, 5
    %v465 = vperm.slane %v457, 6
    %v466 = vperm.slane %v457, 7
    %vm475 = vcmask 261120
    %v477 = vsel %vm475, %v167, 0
    %v480 = vsel %vm475, %v168, 0
    %482 = vmatpush.msra.mxu0 0.0
    %483 = vmatpush.msra.mxu0 0.0
    %484 = vmatpush.msra.mxu0 0.0
    %485 = vmatpush.msra.mxu0 0.0
    %486 = vmatpush.msra.mxu0 0.0
    %487 = vmatpush.msra.mxu0 0.0
    %488 = vmatpush.msra.mxu0 0.0
    %489 = vmatpush.msra.mxu0 0.0
    %490 = vmatpush.msra.mxu0 0.0
    %491 = vmatpush.msra.mxu0 0.0
    %492 = vmatpush.msra.mxu0 0.0
    %493 = vmatpush.msra.mxu0 0.0
    %494 = vmatpush.msra.mxu0 %v193
    %495 = vmatpush.msra.mxu0 %v185
    %496 = vmatpush.msra.mxu0 %v177
    %497 = vmatpush.msra.mxu0 %v169
    %498 = vmatmul.f32.gmra.mxu0 %v477
    %v499 = vpop.f32.mrf.mxu0
    %v500 = vadd.f32 %v459, %v499
    %501 = vmatmul.f32.gmra.mxu0 %v480
    %v502 = vpop.f32.mrf.mxu0
    %v503 = vadd.f32 %v459, %v502
    %504 = vdwg.mxu0
    %505 = vmatpush.msra.mxu0 0.0
    %506 = vmatpush.msra.mxu0 0.0
    %507 = vmatpush.msra.mxu0 0.0
    %508 = vmatpush.msra.mxu0 0.0
    %509 = vmatpush.msra.mxu0 0.0
    %510 = vmatpush.msra.mxu0 0.0
    %511 = vmatpush.msra.mxu0 0.0
    %512 = vmatpush.msra.mxu0 0.0
    %513 = vmatpush.msra.mxu0 0.0
    %514 = vmatpush.msra.mxu0 0.0
    %515 = vmatpush.msra.mxu0 0.0
    %516 = vmatpush.msra.mxu0 0.0
    %517 = vmatpush.msra.mxu0 %v194
    %518 = vmatpush.msra.mxu0 %v186
    %519 = vmatpush.msra.mxu0 %v178
    %520 = vmatpush.msra.mxu0 %v170
    %521 = vmatmul.f32.gmra.mxu0 %v477
    %v522 = vpop.f32.mrf.mxu0
    %v523 = vadd.f32 %v460, %v522
    %524 = vmatmul.f32.gmra.mxu0 %v480
    %v525 = vpop.f32.mrf.mxu0
    %v526 = vadd.f32 %v460, %v525
    %527 = vdwg.mxu0
    %528 = vmatpush.msra.mxu0 0.0
    %529 = vmatpush.msra.mxu0 0.0
    %530 = vmatpush.msra.mxu0 0.0
    %531 = vmatpush.msra.mxu0 0.0
    %532 = vmatpush.msra.mxu0 0.0
    %533 = vmatpush.msra.mxu0 0.0
    %534 = vmatpush.msra.mxu0 0.0
    %535 = vmatpush.msra.mxu0 0.0
    %536 = vmatpush.msra.mxu0 0.0
    %537 = vmatpush.msra.mxu0 0.0
    %538 = vmatpush.msra.mxu0 0.0
    %539 = vmatpush.msra.mxu0 0.0
    %540 = vmatpush.msra.mxu0 %v195
    %541 = vmatpush.msra.mxu0 %v187
    %542 = vmatpush.msra.mxu0 %v179
    %543 = vmatpush.msra.mxu0 %v171
    %544 = vmatmul.f32.gmra.mxu0 %v477
    %v545 = vpop.f32.mrf.mxu0
    %v546 = vadd.f32 %v461, %v545
    %547 = vmatmul.f32.gmra.mxu0 %v480
    %v548 = vpop.f32.mrf.mxu0
    %v549 = vadd.f32 %v461, %v548
    %550 = vdwg.mxu0
    %551 = vmatpush.msra.mxu0 0.0
    %552 = vmatpush.msra.mxu0 0.0
    %553 = vmatpush.msra.mxu0 0.0
    %554 = vmatpush.msra.mxu0 0.0
    %555 = vmatpush.msra.mxu0 0.0
    %556 = vmatpush.msra.mxu0 0.0
    %557 = vmatpush.msra.mxu0 0.0
    %558 = vmatpush.msra.mxu0 0.0
    %559 = vmatpush.msra.mxu0 0.0
    %560 = vmatpush.msra.mxu0 0.0
    %561 = vmatpush.msra.mxu0 0.0
    %562 = vmatpush.msra.mxu0 0.0
    %563 = vmatpush.msra.mxu0 %v196
    %564 = vmatpush.msra.mxu0 %v188
    %565 = vmatpush.msra.mxu0 %v180
    %566 = vmatpush.msra.mxu0 %v172
    %567 = vmatmul.f32.gmra.mxu0 %v477
    %v568 = vpop.f32.mrf.mxu0
    %v569 = vadd.f32 %v462, %v568
    %570 = vmatmul.f32.gmra.mxu0 %v480
    %v571 = vpop.f32.mrf.mxu0
    %v572 = vadd.f32 %v462, %v571
    %573 = vdwg.mxu0
    %574 = vmatpush.msra.mxu0 0.0
    %575 = vmatpush.msra.mxu0 0.0
    %576 = vmatpush.msra.mxu0 0.0
    %577 = vmatpush.msra.mxu0 0.0
    %578 = vmatpush.msra.mxu0 0.0
    %579 = vmatpush.msra.mxu0 0.0
    %580 = vmatpush.msra.mxu0 0.0
    %581 = vmatpush.msra.mxu0 0.0
    %582 = vmatpush.msra.mxu0 0.0
    %583 = vmatpush.msra.mxu0 0.0
    %584 = vmatpush.msra.mxu0 0.0
    %585 = vmatpush.msra.mxu0 0.0
    %586 = vmatpush.msra.mxu0 %v197
    %587 = vmatpush.msra.mxu0 %v189
    %588 = vmatpush.msra.mxu0 %v181
    %589 = vmatpush.msra.mxu0 %v173
    %590 = vmatmul.f32.gmra.mxu0 %v477
    %v591 = vpop.f32.mrf.mxu0
    %v592 = vadd.f32 %v463, %v591
    %593 = vmatmul.f32.gmra.mxu0 %v480
    %v594 = vpop.f32.mrf.mxu0
    %v595 = vadd.f32 %v463, %v594
    %596 = vdwg.mxu0
    %597 = vmatpush.msra.mxu0 0.0
    %598 = vmatpush.msra.mxu0 0.0
    %599 = vmatpush.msra.mxu0 0.0
    %600 = vmatpush.msra.mxu0 0.0
    %601 = vmatpush.msra.mxu0 0.0
    %602 = vmatpush.msra.mxu0 0.0
    %603 = vmatpush.msra.mxu0 0.0
    %604 = vmatpush.msra.mxu0 0.0
    %605 = vmatpush.msra.mxu0 0.0
    %606 = vmatpush.msra.mxu0 0.0
    %607 = vmatpush.msra.mxu0 0.0
    %608 = vmatpush.msra.mxu0 0.0
    %609 = vmatpush.msra.mxu0 %v198
    %610 = vmatpush.msra.mxu0 %v190
    %611 = vmatpush.msra.mxu0 %v182
    %612 = vmatpush.msra.mxu0 %v174
    %613 = vmatmul.f32.gmra.mxu0 %v477
    %v614 = vpop.f32.mrf.mxu0
    %v615 = vadd.f32 %v464, %v614
    %616 = vmatmul.f32.gmra.mxu0 %v480
    %v617 = vpop.f32.mrf.mxu0
    %v618 = vadd.f32 %v464, %v617
    %619 = vdwg.mxu0
    %620 = vmatpush.msra.mxu0 0.0
    %621 = vmatpush.msra.mxu0 0.0
    %622 = vmatpush.msra.mxu0 0.0
    %623 = vmatpush.msra.mxu0 0.0
    %624 = vmatpush.msra.mxu0 0.0
    %625 = vmatpush.msra.mxu0 0.0
    %626 = vmatpush.msra.mxu0 0.0
    %627 = vmatpush.msra.mxu0 0.0
    %628 = vmatpush.msra.mxu0 0.0
    %629 = vmatpush.msra.mxu0 0.0
    %630 = vmatpush.msra.mxu0 0.0
    %631 = vmatpush.msra.mxu0 0.0
    %632 = vmatpush.msra.mxu0 %v199
    %633 = vmatpush.msra.mxu0 %v191
    %634 = vmatpush.msra.mxu0 %v183
    %635 = vmatpush.msra.mxu0 %v175
    %636 = vmatmul.f32.gmra.mxu0 %v477
    %v637 = vpop.f32.mrf.mxu0
    %v638 = vadd.f32 %v465, %v637
    %639 = vmatmul.f32.gmra.mxu0 %v480
    %v640 = vpop.f32.mrf.mxu0
    %v641 = vadd.f32 %v465, %v640
    %642 = vdwg.mxu0
    %643 = vmatpush.msra.mxu0 0.0
    %644 = vmatpush.msra.mxu0 0.0
    %645 = vmatpush.msra.mxu0 0.0
    %646 = vmatpush.msra.mxu0 0.0
    %647 = vmatpush.msra.mxu0 0.0
    %648 = vmatpush.msra.mxu0 0.0
    %649 = vmatpush.msra.mxu0 0.0
    %650 = vmatpush.msra.mxu0 0.0
    %651 = vmatpush.msra.mxu0 0.0
    %652 = vmatpush.msra.mxu0 0.0
    %653 = vmatpush.msra.mxu0 0.0
    %654 = vmatpush.msra.mxu0 0.0
    %655 = vmatpush.msra.mxu0 %v200
    %656 = vmatpush.msra.mxu0 %v192
    %657 = vmatpush.msra.mxu0 %v184
    %658 = vmatpush.msra.mxu0 %v176
    %659 = vmatmul.f32.gmra.mxu0 %v477
    %v660 = vpop.f32.mrf.mxu0
    %v661 = vadd.f32 %v466, %v660
    %662 = vmatmul.f32.gmra.mxu0 %v480
    %v663 = vpop.f32.mrf.mxu0
    %v664 = vadd.f32 %v466, %v663
    %665 = vdwg.mxu0
    %666 = vmatpush.msra.mxu0 %v321
    %667 = vmatpush.msra.mxu0 %v313
    %668 = vmatpush.msra.mxu0 %v305
    %669 = vmatpush.msra.mxu0 %v297
    %670 = vmatpush.msra.mxu0 %v289
    %671 = vmatpush.msra.mxu0 %v281
    %672 = vmatpush.msra.mxu0 %v273
    %673 = vmatpush.msra.mxu0 %v265
    %674 = vmatpush.msra.mxu0 %v257
    %675 = vmatpush.msra.mxu0 %v249
    %676 = vmatpush.msra.mxu0 %v241
    %677 = vmatpush.msra.mxu0 %v233
    %678 = vmatpush.msra.mxu0 %v225
    %679 = vmatpush.msra.mxu0 %v217
    %680 = vmatpush.msra.mxu0 %v209
    %681 = vmatpush.msra.mxu0 %v201
    %682 = vmatmul.f32.gmra.mxu0 0.0
    %v683 = vpop.f32.mrf.mxu0
    %v684 = vadd.f32 0.0, %v683
    %685 = vdwg.mxu0
    %686 = vmatpush.msra.mxu0 %v449
    %687 = vmatpush.msra.mxu0 %v441
    %688 = vmatpush.msra.mxu0 %v433
    %689 = vmatpush.msra.mxu0 %v425
    %690 = vmatpush.msra.mxu0 %v417
    %691 = vmatpush.msra.mxu0 %v409
    %692 = vmatpush.msra.mxu0 %v401
    %693 = vmatpush.msra.mxu0 %v393
    %694 = vmatpush.msra.mxu0 %v385
    %695 = vmatpush.msra.mxu0 %v377
    %696 = vmatpush.msra.mxu0 %v369
    %697 = vmatpush.msra.mxu0 %v361
    %698 = vmatpush.msra.mxu0 %v353
    %699 = vmatpush.msra.mxu0 %v345
    %700 = vmatpush.msra.mxu0 %v337
    %701 = vmatpush.msra.mxu0 %v329
    %702 = vmatmul.f32.gmra.mxu0 0.0
    %v703 = vpop.f32.mrf.mxu0
    %v704 = vadd.f32 %v684, %v703
    %705 = vdwg.mxu0
    %706 = vmatpush.msra.mxu0 %v322
    %707 = vmatpush.msra.mxu0 %v314
    %708 = vmatpush.msra.mxu0 %v306
    %709 = vmatpush.msra.mxu0 %v298
    %710 = vmatpush.msra.mxu0 %v290
    %711 = vmatpush.msra.mxu0 %v282
    %712 = vmatpush.msra.mxu0 %v274
    %713 = vmatpush.msra.mxu0 %v266
    %714 = vmatpush.msra.mxu0 %v258
    %715 = vmatpush.msra.mxu0 %v250
    %716 = vmatpush.msra.mxu0 %v242
    %717 = vmatpush.msra.mxu0 %v234
    %718 = vmatpush.msra.mxu0 %v226
    %719 = vmatpush.msra.mxu0 %v218
    %720 = vmatpush.msra.mxu0 %v210
    %721 = vmatpush.msra.mxu0 %v202
    %722 = vmatmul.f32.gmra.mxu0 0.0
    %v723 = vpop.f32.mrf.mxu0
    %v724 = vadd.f32 0.0, %v723
    %725 = vdwg.mxu0
    %726 = vmatpush.msra.mxu0 %v450
    %727 = vmatpush.msra.mxu0 %v442
    %728 = vmatpush.msra.mxu0 %v434
    %729 = vmatpush.msra.mxu0 %v426
    %730 = vmatpush.msra.mxu0 %v418
    %731 = vmatpush.msra.mxu0 %v410
    %732 = vmatpush.msra.mxu0 %v402
    %733 = vmatpush.msra.mxu0 %v394
    %734 = vmatpush.msra.mxu0 %v386
    %735 = vmatpush.msra.mxu0 %v378
    %736 = vmatpush.msra.mxu0 %v370
    %737 = vmatpush.msra.mxu0 %v362
    %738 = vmatpush.msra.mxu0 %v354
    %739 = vmatpush.msra.mxu0 %v346
    %740 = vmatpush.msra.mxu0 %v338
    %741 = vmatpush.msra.mxu0 %v330
    %742 = vmatmul.f32.gmra.mxu0 0.0
    %v743 = vpop.f32.mrf.mxu0
    %v744 = vadd.f32 %v724, %v743
    %745 = vdwg.mxu0
    %746 = vmatpush.msra.mxu0 %v323
    %747 = vmatpush.msra.mxu0 %v315
    %748 = vmatpush.msra.mxu0 %v307
    %749 = vmatpush.msra.mxu0 %v299
    %750 = vmatpush.msra.mxu0 %v291
    %751 = vmatpush.msra.mxu0 %v283
    %752 = vmatpush.msra.mxu0 %v275
    %753 = vmatpush.msra.mxu0 %v267
    %754 = vmatpush.msra.mxu0 %v259
    %755 = vmatpush.msra.mxu0 %v251
    %756 = vmatpush.msra.mxu0 %v243
    %757 = vmatpush.msra.mxu0 %v235
    %758 = vmatpush.msra.mxu0 %v227
    %759 = vmatpush.msra.mxu0 %v219
    %760 = vmatpush.msra.mxu0 %v211
    %761 = vmatpush.msra.mxu0 %v203
    %762 = vmatmul.f32.gmra.mxu0 0.0
    %v763 = vpop.f32.mrf.mxu0
    %v764 = vadd.f32 0.0, %v763
    %765 = vdwg.mxu0
    %766 = vmatpush.msra.mxu0 %v451
    %767 = vmatpush.msra.mxu0 %v443
    %768 = vmatpush.msra.mxu0 %v435
    %769 = vmatpush.msra.mxu0 %v427
    %770 = vmatpush.msra.mxu0 %v419
    %771 = vmatpush.msra.mxu0 %v411
    %772 = vmatpush.msra.mxu0 %v403
    %773 = vmatpush.msra.mxu0 %v395
    %774 = vmatpush.msra.mxu0 %v387
    %775 = vmatpush.msra.mxu0 %v379
    %776 = vmatpush.msra.mxu0 %v371
    %777 = vmatpush.msra.mxu0 %v363
    %778 = vmatpush.msra.mxu0 %v355
    %779 = vmatpush.msra.mxu0 %v347
    %780 = vmatpush.msra.mxu0 %v339
    %781 = vmatpush.msra.mxu0 %v331
    %782 = vmatmul.f32.gmra.mxu0 0.0
    %v783 = vpop.f32.mrf.mxu0
    %v784 = vadd.f32 %v764, %v783
    %785 = vdwg.mxu0
    %786 = vmatpush.msra.mxu0 %v324
    %787 = vmatpush.msra.mxu0 %v316
    %788 = vmatpush.msra.mxu0 %v308
    %789 = vmatpush.msra.mxu0 %v300
    %790 = vmatpush.msra.mxu0 %v292
    %791 = vmatpush.msra.mxu0 %v284
    %792 = vmatpush.msra.mxu0 %v276
    %793 = vmatpush.msra.mxu0 %v268
    %794 = vmatpush.msra.mxu0 %v260
    %795 = vmatpush.msra.mxu0 %v252
    %796 = vmatpush.msra.mxu0 %v244
    %797 = vmatpush.msra.mxu0 %v236
    %798 = vmatpush.msra.mxu0 %v228
    %799 = vmatpush.msra.mxu0 %v220
    %800 = vmatpush.msra.mxu0 %v212
    %801 = vmatpush.msra.mxu0 %v204
    %802 = vmatmul.f32.gmra.mxu0 0.0
    %v803 = vpop.f32.mrf.mxu0
    %v804 = vadd.f32 0.0, %v803
    %805 = vdwg.mxu0
    %806 = vmatpush.msra.mxu0 %v452
    %807 = vmatpush.msra.mxu0 %v444
    %808 = vmatpush.msra.mxu0 %v436
    %809 = vmatpush.msra.mxu0 %v428
    %810 = vmatpush.msra.mxu0 %v420
    %811 = vmatpush.msra.mxu0 %v412
    %812 = vmatpush.msra.mxu0 %v404
    %813 = vmatpush.msra.mxu0 %v396
    %814 = vmatpush.msra.mxu0 %v388
    %815 = vmatpush.msra.mxu0 %v380
    %816 = vmatpush.msra.mxu0 %v372
    %817 = vmatpush.msra.mxu0 %v364
    %818 = vmatpush.msra.mxu0 %v356
    %819 = vmatpush.msra.mxu0 %v348
    %820 = vmatpush.msra.mxu0 %v340
    %821 = vmatpush.msra.mxu0 %v332
    %822 = vmatmul.f32.gmra.mxu0 0.0
    %v823 = vpop.f32.mrf.mxu0
    %v824 = vadd.f32 %v804, %v823
    %825 = vdwg.mxu0
    %826 = vmatpush.msra.mxu0 %v325
    %827 = vmatpush.msra.mxu0 %v317
    %828 = vmatpush.msra.mxu0 %v309
    %829 = vmatpush.msra.mxu0 %v301
    %830 = vmatpush.msra.mxu0 %v293
    %831 = vmatpush.msra.mxu0 %v285
    %832 = vmatpush.msra.mxu0 %v277
    %833 = vmatpush.msra.mxu0 %v269
    %834 = vmatpush.msra.mxu0 %v261
    %835 = vmatpush.msra.mxu0 %v253
    %836 = vmatpush.msra.mxu0 %v245
    %837 = vmatpush.msra.mxu0 %v237
    %838 = vmatpush.msra.mxu0 %v229
    %839 = vmatpush.msra.mxu0 %v221
    %840 = vmatpush.msra.mxu0 %v213
    %841 = vmatpush.msra.mxu0 %v205
    %842 = vmatmul.f32.gmra.mxu0 0.0
    %v843 = vpop.f32.mrf.mxu0
    %v844 = vadd.f32 0.0, %v843
    %845 = vdwg.mxu0
    %846 = vmatpush.msra.mxu0 %v453
    %847 = vmatpush.msra.mxu0 %v445
    %848 = vmatpush.msra.mxu0 %v437
    %849 = vmatpush.msra.mxu0 %v429
    %850 = vmatpush.msra.mxu0 %v421
    %851 = vmatpush.msra.mxu0 %v413
    %852 = vmatpush.msra.mxu0 %v405
    %853 = vmatpush.msra.mxu0 %v397
    %854 = vmatpush.msra.mxu0 %v389
    %855 = vmatpush.msra.mxu0 %v381
    %856 = vmatpush.msra.mxu0 %v373
    %857 = vmatpush.msra.mxu0 %v365
    %858 = vmatpush.msra.mxu0 %v357
    %859 = vmatpush.msra.mxu0 %v349
    %860 = vmatpush.msra.mxu0 %v341
    %861 = vmatpush.msra.mxu0 %v333
    %862 = vmatmul.f32.gmra.mxu0 0.0
    %v863 = vpop.f32.mrf.mxu0
    %v864 = vadd.f32 %v844, %v863
    %865 = vdwg.mxu0
    %866 = vmatpush.msra.mxu0 %v326
    %867 = vmatpush.msra.mxu0 %v318
    %868 = vmatpush.msra.mxu0 %v310
    %869 = vmatpush.msra.mxu0 %v302
    %870 = vmatpush.msra.mxu0 %v294
    %871 = vmatpush.msra.mxu0 %v286
    %872 = vmatpush.msra.mxu0 %v278
    %873 = vmatpush.msra.mxu0 %v270
    %874 = vmatpush.msra.mxu0 %v262
    %875 = vmatpush.msra.mxu0 %v254
    %876 = vmatpush.msra.mxu0 %v246
    %877 = vmatpush.msra.mxu0 %v238
    %878 = vmatpush.msra.mxu0 %v230
    %879 = vmatpush.msra.mxu0 %v222
    %880 = vmatpush.msra.mxu0 %v214
    %881 = vmatpush.msra.mxu0 %v206
    %882 = vmatmul.f32.gmra.mxu0 0.0
    %v883 = vpop.f32.mrf.mxu0
    %v884 = vadd.f32 0.0, %v883
    %885 = vdwg.mxu0
    %886 = vmatpush.msra.mxu0 %v454
    %887 = vmatpush.msra.mxu0 %v446
    %888 = vmatpush.msra.mxu0 %v438
    %889 = vmatpush.msra.mxu0 %v430
    %890 = vmatpush.msra.mxu0 %v422
    %891 = vmatpush.msra.mxu0 %v414
    %892 = vmatpush.msra.mxu0 %v406
    %893 = vmatpush.msra.mxu0 %v398
    %894 = vmatpush.msra.mxu0 %v390
    %895 = vmatpush.msra.mxu0 %v382
    %896 = vmatpush.msra.mxu0 %v374
    %897 = vmatpush.msra.mxu0 %v366
    %898 = vmatpush.msra.mxu0 %v358
    %899 = vmatpush.msra.mxu0 %v350
    %900 = vmatpush.msra.mxu0 %v342
    %901 = vmatpush.msra.mxu0 %v334
    %902 = vmatmul.f32.gmra.mxu0 0.0
    %v903 = vpop.f32.mrf.mxu0
    %v904 = vadd.f32 %v884, %v903
    %905 = vdwg.mxu0
    %906 = vmatpush.msra.mxu0 %v327
    %907 = vmatpush.msra.mxu0 %v319
    %908 = vmatpush.msra.mxu0 %v311
    %909 = vmatpush.msra.mxu0 %v303
    %910 = vmatpush.msra.mxu0 %v295
    %911 = vmatpush.msra.mxu0 %v287
    %912 = vmatpush.msra.mxu0 %v279
    %913 = vmatpush.msra.mxu0 %v271
    %914 = vmatpush.msra.mxu0 %v263
    %915 = vmatpush.msra.mxu0 %v255
    %916 = vmatpush.msra.mxu0 %v247
    %917 = vmatpush.msra.mxu0 %v239
    %918 = vmatpush.msra.mxu0 %v231
    %919 = vmatpush.msra.mxu0 %v223
    %920 = vmatpush.msra.mxu0 %v215
    %921 = vmatpush.msra.mxu0 %v207
    %922 = vmatmul.f32.gmra.mxu0 0.0
    %v923 = vpop.f32.mrf.mxu0
    %v924 = vadd.f32 0.0, %v923
    %925 = vdwg.mxu0
    %926 = vmatpush.msra.mxu0 %v455
    %927 = vmatpush.msra.mxu0 %v447
    %928 = vmatpush.msra.mxu0 %v439
    %929 = vmatpush.msra.mxu0 %v431
    %930 = vmatpush.msra.mxu0 %v423
    %931 = vmatpush.msra.mxu0 %v415
    %932 = vmatpush.msra.mxu0 %v407
    %933 = vmatpush.msra.mxu0 %v399
    %934 = vmatpush.msra.mxu0 %v391
    %935 = vmatpush.msra.mxu0 %v383
    %936 = vmatpush.msra.mxu0 %v375
    %937 = vmatpush.msra.mxu0 %v367
    %938 = vmatpush.msra.mxu0 %v359
    %939 = vmatpush.msra.mxu0 %v351
    %940 = vmatpush.msra.mxu0 %v343
    %941 = vmatpush.msra.mxu0 %v335
    %942 = vmatmul.f32.gmra.mxu0 0.0
    %v943 = vpop.f32.mrf.mxu0
    %v944 = vadd.f32 %v924, %v943
    %945 = vdwg.mxu0
    %946 = vmatpush.msra.mxu0 %v328
    %947 = vmatpush.msra.mxu0 %v320
    %948 = vmatpush.msra.mxu0 %v312
    %949 = vmatpush.msra.mxu0 %v304
    %950 = vmatpush.msra.mxu0 %v296
    %951 = vmatpush.msra.mxu0 %v288
    %952 = vmatpush.msra.mxu0 %v280
    %953 = vmatpush.msra.mxu0 %v272
    %954 = vmatpush.msra.mxu0 %v264
    %955 = vmatpush.msra.mxu0 %v256
    %956 = vmatpush.msra.mxu0 %v248
    %957 = vmatpush.msra.mxu0 %v240
    %958 = vmatpush.msra.mxu0 %v232
    %959 = vmatpush.msra.mxu0 %v224
    %960 = vmatpush.msra.mxu0 %v216
    %961 = vmatpush.msra.mxu0 %v208
    %962 = vmatmul.f32.gmra.mxu0 0.0
    %v963 = vpop.f32.mrf.mxu0
    %v964 = vadd.f32 0.0, %v963
    %965 = vdwg.mxu0
    %966 = vmatpush.msra.mxu0 %v456
    %967 = vmatpush.msra.mxu0 %v448
    %968 = vmatpush.msra.mxu0 %v440
    %969 = vmatpush.msra.mxu0 %v432
    %970 = vmatpush.msra.mxu0 %v424
    %971 = vmatpush.msra.mxu0 %v416
    %972 = vmatpush.msra.mxu0 %v408
    %973 = vmatpush.msra.mxu0 %v400
    %974 = vmatpush.msra.mxu0 %v392
    %975 = vmatpush.msra.mxu0 %v384
    %976 = vmatpush.msra.mxu0 %v376
    %977 = vmatpush.msra.mxu0 %v368
    %978 = vmatpush.msra.mxu0 %v360
    %979 = vmatpush.msra.mxu0 %v352
    %980 = vmatpush.msra.mxu0 %v344
    %981 = vmatpush.msra.mxu0 %v336
    %982 = vmatmul.f32.gmra.mxu0 0.0
    %v983 = vpop.f32.mrf.mxu0
    %v984 = vadd.f32 %v964, %v983
    %985 = vdwg.mxu0
    %v986 = vadd.f32 %v500, %v704
    %v987 = vadd.f32 %v523, %v744
    %v988 = vadd.f32 %v546, %v784
    %v989 = vadd.f32 %v569, %v824
    %v990 = vadd.f32 %v592, %v864
    %v991 = vadd.f32 %v615, %v904
    %v992 = vadd.f32 %v638, %v944
    %v993 = vadd.f32 %v661, %v984
    %v994 = vxor.u32 %v986, 2147483648
    %v995 = vxor.u32 %v987, 2147483648
    %v996 = vxor.u32 %v988, 2147483648
    %v997 = vxor.u32 %v989, 2147483648
    %v998 = vxor.u32 %v990, 2147483648
    %v999 = vxor.u32 %v991, 2147483648
    %v1000 = vmul.f32 %v994, 1.442695
    %v1001 = vpow.pop %v1000
    %v1002 = vmul.f32 %v995, 1.442695
    %v1003 = vpow.pop %v1002
    %v1004 = vmul.f32 %v996, 1.442695
    %v1005 = vpow.pop %v1004
    %v1006 = vmul.f32 %v997, 1.442695
    %v1007 = vpow.pop %v1006
    %v1008 = vmul.f32 %v998, 1.442695
    %v1009 = vpow.pop %v1008
    %v1010 = vmul.f32 %v999, 1.442695
    %v1011 = vpow.pop %v1010
    %v1012 = vadd.f32 %v1001, 1.0
    %v1013 = vadd.f32 %v1003, 1.0
    %v1014 = vadd.f32 %v1005, 1.0
    %v1015 = vadd.f32 %v1007, 1.0
    %v1016 = vadd.f32 %v1009, 1.0
    %v1017 = vadd.f32 %v1011, 1.0
    %v1018 = vrcp.pop %v1012
    %v1019 = vmul.f32 %v1012, %v1018
    %v1020 = vsub.f32 1.0, %v1019
    %v1021 = vmul.f32 %v1018, %v1020
    %v1022 = vadd.f32 %v1018, %v1021
    %vm1023 = vweird.f32 %v1012
    %vm1024 = vweird.f32 %v1018
    %vm1025 = vmor %vm1023, %vm1024
    %v1026 = vsel %vm1025, %v1018, %v1022
    %v1027 = vand.u32 2147483647, %v1012
    %vm1028 = vcmp.eq.f32.partialorder %v1027, 8.507059e+37
    %v1029 = vand.u32 %v1012, 2147483648
    %v1030 = vor.u32 1.1754944e-38, %v1029
    %v1031 = vsel %vm1028, %v1030, %v1026
    %v1032 = vmul.f32 1.0, %v1031
    %v1033 = vrcp.pop %v1013
    %v1034 = vmul.f32 %v1013, %v1033
    %v1035 = vsub.f32 1.0, %v1034
    %v1036 = vmul.f32 %v1033, %v1035
    %v1037 = vadd.f32 %v1033, %v1036
    %vm1038 = vweird.f32 %v1013
    %vm1039 = vweird.f32 %v1033
    %vm1040 = vmor %vm1038, %vm1039
    %v1041 = vsel %vm1040, %v1033, %v1037
    %v1042 = vand.u32 2147483647, %v1013
    %vm1043 = vcmp.eq.f32.partialorder %v1042, 8.507059e+37
    %v1044 = vand.u32 %v1013, 2147483648
    %v1045 = vor.u32 1.1754944e-38, %v1044
    %v1046 = vsel %vm1043, %v1045, %v1041
    %v1047 = vmul.f32 1.0, %v1046
    %v1048 = vrcp.pop %v1014
    %v1049 = vmul.f32 %v1014, %v1048
    %v1050 = vsub.f32 1.0, %v1049
    %v1051 = vmul.f32 %v1048, %v1050
    %v1052 = vadd.f32 %v1048, %v1051
    %vm1053 = vweird.f32 %v1014
    %vm1054 = vweird.f32 %v1048
    %vm1055 = vmor %vm1053, %vm1054
    %v1056 = vsel %vm1055, %v1048, %v1052
    %v1057 = vand.u32 2147483647, %v1014
    %vm1058 = vcmp.eq.f32.partialorder %v1057, 8.507059e+37
    %v1059 = vand.u32 %v1014, 2147483648
    %v1060 = vor.u32 1.1754944e-38, %v1059
    %v1061 = vsel %vm1058, %v1060, %v1056
    %v1062 = vmul.f32 1.0, %v1061
    %v1063 = vrcp.pop %v1015
    %v1064 = vmul.f32 %v1015, %v1063
    %v1065 = vsub.f32 1.0, %v1064
    %v1066 = vmul.f32 %v1063, %v1065
    %v1067 = vadd.f32 %v1063, %v1066
    %vm1068 = vweird.f32 %v1015
    %vm1069 = vweird.f32 %v1063
    %vm1070 = vmor %vm1068, %vm1069
    %v1071 = vsel %vm1070, %v1063, %v1067
    %v1072 = vand.u32 2147483647, %v1015
    %vm1073 = vcmp.eq.f32.partialorder %v1072, 8.507059e+37
    %v1074 = vand.u32 %v1015, 2147483648
    %v1075 = vor.u32 1.1754944e-38, %v1074
    %v1076 = vsel %vm1073, %v1075, %v1071
    %v1077 = vmul.f32 1.0, %v1076
    %v1078 = vrcp.pop %v1016
    %v1079 = vmul.f32 %v1016, %v1078
    %v1080 = vsub.f32 1.0, %v1079
    %v1081 = vmul.f32 %v1078, %v1080
    %v1082 = vadd.f32 %v1078, %v1081
    %vm1083 = vweird.f32 %v1016
    %vm1084 = vweird.f32 %v1078
    %vm1085 = vmor %vm1083, %vm1084
    %v1086 = vsel %vm1085, %v1078, %v1082
    %v1087 = vand.u32 2147483647, %v1016
    %vm1088 = vcmp.eq.f32.partialorder %v1087, 8.507059e+37
    %v1089 = vand.u32 %v1016, 2147483648
    %v1090 = vor.u32 1.1754944e-38, %v1089
    %v1091 = vsel %vm1088, %v1090, %v1086
    %v1092 = vmul.f32 1.0, %v1091
    %v1093 = vrcp.pop %v1017
    %v1094 = vmul.f32 %v1017, %v1093
    %v1095 = vsub.f32 1.0, %v1094
    %v1096 = vmul.f32 %v1093, %v1095
    %v1097 = vadd.f32 %v1093, %v1096
    %vm1098 = vweird.f32 %v1017
    %vm1099 = vweird.f32 %v1093
    %vm1100 = vmor %vm1098, %vm1099
    %v1101 = vsel %vm1100, %v1093, %v1097
    %v1102 = vand.u32 2147483647, %v1017
    %vm1103 = vcmp.eq.f32.partialorder %v1102, 8.507059e+37
    %v1104 = vand.u32 %v1017, 2147483648
    %v1105 = vor.u32 1.1754944e-38, %v1104
    %v1106 = vsel %vm1103, %v1105, %v1101
    %v1107 = vmul.f32 1.0, %v1106
    %v1108 = vmax.f32 %v992, 0.0
    %v1109 = vmax.f32 %v993, 0.0
    %v1110 = vmul.f32 %v1062, 0.0
    %v1111 = vmul.f32 %v1077, 0.0
    %v1112 = vmul.f32 %v1032, %v1108
    %v1113 = vmul.f32 %v1047, %v1109
    %v1114 = vadd.f32 %v1110, %v1112
    %v1115 = vadd.f32 %v1111, %v1113
    %v1116 = vmax.f32 %v1114, 0.0
    %v1117 = vmax.f32 %v1115, 0.0
    %v1118 = vmul.f32 %v1092, %v1116
    %v1119 = vmul.f32 %v1107, %v1117
    %1120 = vmatpush.msra.mxu0 %v321
    %1121 = vmatpush.msra.mxu0 %v313
    %1122 = vmatpush.msra.mxu0 %v305
    %1123 = vmatpush.msra.mxu0 %v297
    %1124 = vmatpush.msra.mxu0 %v289
    %1125 = vmatpush.msra.mxu0 %v281
    %1126 = vmatpush.msra.mxu0 %v273
    %1127 = vmatpush.msra.mxu0 %v265
    %1128 = vmatpush.msra.mxu0 %v257
    %1129 = vmatpush.msra.mxu0 %v249
    %1130 = vmatpush.msra.mxu0 %v241
    %1131 = vmatpush.msra.mxu0 %v233
    %1132 = vmatpush.msra.mxu0 %v225
    %1133 = vmatpush.msra.mxu0 %v217
    %1134 = vmatpush.msra.mxu0 %v209
    %1135 = vmatpush.msra.mxu0 %v201
    %1136 = vmatmul.f32.gmra.mxu0 %v1118
    %v1137 = vpop.f32.mrf.mxu0
    %v1138 = vadd.f32 0.0, %v1137
    %1139 = vdwg.mxu0
    %1140 = vmatpush.msra.mxu0 %v449
    %1141 = vmatpush.msra.mxu0 %v441
    %1142 = vmatpush.msra.mxu0 %v433
    %1143 = vmatpush.msra.mxu0 %v425
    %1144 = vmatpush.msra.mxu0 %v417
    %1145 = vmatpush.msra.mxu0 %v409
    %1146 = vmatpush.msra.mxu0 %v401
    %1147 = vmatpush.msra.mxu0 %v393
    %1148 = vmatpush.msra.mxu0 %v385
    %1149 = vmatpush.msra.mxu0 %v377
    %1150 = vmatpush.msra.mxu0 %v369
    %1151 = vmatpush.msra.mxu0 %v361
    %1152 = vmatpush.msra.mxu0 %v353
    %1153 = vmatpush.msra.mxu0 %v345
    %1154 = vmatpush.msra.mxu0 %v337
    %1155 = vmatpush.msra.mxu0 %v329
    %1156 = vmatmul.f32.gmra.mxu0 %v1119
    %v1157 = vpop.f32.mrf.mxu0
    %v1158 = vadd.f32 %v1138, %v1157
    %1159 = vdwg.mxu0
    %1160 = vmatpush.msra.mxu0 %v322
    %1161 = vmatpush.msra.mxu0 %v314
    %1162 = vmatpush.msra.mxu0 %v306
    %1163 = vmatpush.msra.mxu0 %v298
    %1164 = vmatpush.msra.mxu0 %v290
    %1165 = vmatpush.msra.mxu0 %v282
    %1166 = vmatpush.msra.mxu0 %v274
    %1167 = vmatpush.msra.mxu0 %v266
    %1168 = vmatpush.msra.mxu0 %v258
    %1169 = vmatpush.msra.mxu0 %v250
    %1170 = vmatpush.msra.mxu0 %v242
    %1171 = vmatpush.msra.mxu0 %v234
    %1172 = vmatpush.msra.mxu0 %v226
    %1173 = vmatpush.msra.mxu0 %v218
    %1174 = vmatpush.msra.mxu0 %v210
    %1175 = vmatpush.msra.mxu0 %v202
    %1176 = vmatmul.f32.gmra.mxu0 %v1118
    %v1177 = vpop.f32.mrf.mxu0
    %v1178 = vadd.f32 0.0, %v1177
    %1179 = vdwg.mxu0
    %1180 = vmatpush.msra.mxu0 %v450
    %1181 = vmatpush.msra.mxu0 %v442
    %1182 = vmatpush.msra.mxu0 %v434
    %1183 = vmatpush.msra.mxu0 %v426
    %1184 = vmatpush.msra.mxu0 %v418
    %1185 = vmatpush.msra.mxu0 %v410
    %1186 = vmatpush.msra.mxu0 %v402
    %1187 = vmatpush.msra.mxu0 %v394
    %1188 = vmatpush.msra.mxu0 %v386
    %1189 = vmatpush.msra.mxu0 %v378
    %1190 = vmatpush.msra.mxu0 %v370
    %1191 = vmatpush.msra.mxu0 %v362
    %1192 = vmatpush.msra.mxu0 %v354
    %1193 = vmatpush.msra.mxu0 %v346
    %1194 = vmatpush.msra.mxu0 %v338
    %1195 = vmatpush.msra.mxu0 %v330
    %1196 = vmatmul.f32.gmra.mxu0 %v1119
    %v1197 = vpop.f32.mrf.mxu0
    %v1198 = vadd.f32 %v1178, %v1197
    %1199 = vdwg.mxu0
    %1200 = vmatpush.msra.mxu0 %v323
    %1201 = vmatpush.msra.mxu0 %v315
    %1202 = vmatpush.msra.mxu0 %v307
    %1203 = vmatpush.msra.mxu0 %v299
    %1204 = vmatpush.msra.mxu0 %v291
    %1205 = vmatpush.msra.mxu0 %v283
    %1206 = vmatpush.msra.mxu0 %v275
    %1207 = vmatpush.msra.mxu0 %v267
    %1208 = vmatpush.msra.mxu0 %v259
    %1209 = vmatpush.msra.mxu0 %v251
    %1210 = vmatpush.msra.mxu0 %v243
    %1211 = vmatpush.msra.mxu0 %v235
    %1212 = vmatpush.msra.mxu0 %v227
    %1213 = vmatpush.msra.mxu0 %v219
    %1214 = vmatpush.msra.mxu0 %v211
    %1215 = vmatpush.msra.mxu0 %v203
    %1216 = vmatmul.f32.gmra.mxu0 %v1118
    %v1217 = vpop.f32.mrf.mxu0
    %v1218 = vadd.f32 0.0, %v1217
    %1219 = vdwg.mxu0
    %1220 = vmatpush.msra.mxu0 %v451
    %1221 = vmatpush.msra.mxu0 %v443
    %1222 = vmatpush.msra.mxu0 %v435
    %1223 = vmatpush.msra.mxu0 %v427
    %1224 = vmatpush.msra.mxu0 %v419
    %1225 = vmatpush.msra.mxu0 %v411
    %1226 = vmatpush.msra.mxu0 %v403
    %1227 = vmatpush.msra.mxu0 %v395
    %1228 = vmatpush.msra.mxu0 %v387
    %1229 = vmatpush.msra.mxu0 %v379
    %1230 = vmatpush.msra.mxu0 %v371
    %1231 = vmatpush.msra.mxu0 %v363
    %1232 = vmatpush.msra.mxu0 %v355
    %1233 = vmatpush.msra.mxu0 %v347
    %1234 = vmatpush.msra.mxu0 %v339
    %1235 = vmatpush.msra.mxu0 %v331
    %1236 = vmatmul.f32.gmra.mxu0 %v1119
    %v1237 = vpop.f32.mrf.mxu0
    %v1238 = vadd.f32 %v1218, %v1237
    %1239 = vdwg.mxu0
    %1240 = vmatpush.msra.mxu0 %v324
    %1241 = vmatpush.msra.mxu0 %v316
    %1242 = vmatpush.msra.mxu0 %v308
    %1243 = vmatpush.msra.mxu0 %v300
    %1244 = vmatpush.msra.mxu0 %v292
    %1245 = vmatpush.msra.mxu0 %v284
    %1246 = vmatpush.msra.mxu0 %v276
    %1247 = vmatpush.msra.mxu0 %v268
    %1248 = vmatpush.msra.mxu0 %v260
    %1249 = vmatpush.msra.mxu0 %v252
    %1250 = vmatpush.msra.mxu0 %v244
    %1251 = vmatpush.msra.mxu0 %v236
    %1252 = vmatpush.msra.mxu0 %v228
    %1253 = vmatpush.msra.mxu0 %v220
    %1254 = vmatpush.msra.mxu0 %v212
    %1255 = vmatpush.msra.mxu0 %v204
    %1256 = vmatmul.f32.gmra.mxu0 %v1118
    %v1257 = vpop.f32.mrf.mxu0
    %v1258 = vadd.f32 0.0, %v1257
    %1259 = vdwg.mxu0
    %1260 = vmatpush.msra.mxu0 %v452
    %1261 = vmatpush.msra.mxu0 %v444
    %1262 = vmatpush.msra.mxu0 %v436
    %1263 = vmatpush.msra.mxu0 %v428
    %1264 = vmatpush.msra.mxu0 %v420
    %1265 = vmatpush.msra.mxu0 %v412
    %1266 = vmatpush.msra.mxu0 %v404
    %1267 = vmatpush.msra.mxu0 %v396
    %1268 = vmatpush.msra.mxu0 %v388
    %1269 = vmatpush.msra.mxu0 %v380
    %1270 = vmatpush.msra.mxu0 %v372
    %1271 = vmatpush.msra.mxu0 %v364
    %1272 = vmatpush.msra.mxu0 %v356
    %1273 = vmatpush.msra.mxu0 %v348
    %1274 = vmatpush.msra.mxu0 %v340
    %1275 = vmatpush.msra.mxu0 %v332
    %1276 = vmatmul.f32.gmra.mxu0 %v1119
    %v1277 = vpop.f32.mrf.mxu0
    %v1278 = vadd.f32 %v1258, %v1277
    %1279 = vdwg.mxu0
    %1280 = vmatpush.msra.mxu0 %v325
    %1281 = vmatpush.msra.mxu0 %v317
    %1282 = vmatpush.msra.mxu0 %v309
    %1283 = vmatpush.msra.mxu0 %v301
    %1284 = vmatpush.msra.mxu0 %v293
    %1285 = vmatpush.msra.mxu0 %v285
    %1286 = vmatpush.msra.mxu0 %v277
    %1287 = vmatpush.msra.mxu0 %v269
    %1288 = vmatpush.msra.mxu0 %v261
    %1289 = vmatpush.msra.mxu0 %v253
    %1290 = vmatpush.msra.mxu0 %v245
    %1291 = vmatpush.msra.mxu0 %v237
    %1292 = vmatpush.msra.mxu0 %v229
    %1293 = vmatpush.msra.mxu0 %v221
    %1294 = vmatpush.msra.mxu0 %v213
    %1295 = vmatpush.msra.mxu0 %v205
    %1296 = vmatmul.f32.gmra.mxu0 %v1118
    %v1297 = vpop.f32.mrf.mxu0
    %v1298 = vadd.f32 0.0, %v1297
    %1299 = vdwg.mxu0
    %1300 = vmatpush.msra.mxu0 %v453
    %1301 = vmatpush.msra.mxu0 %v445
    %1302 = vmatpush.msra.mxu0 %v437
    %1303 = vmatpush.msra.mxu0 %v429
    %1304 = vmatpush.msra.mxu0 %v421
    %1305 = vmatpush.msra.mxu0 %v413
    %1306 = vmatpush.msra.mxu0 %v405
    %1307 = vmatpush.msra.mxu0 %v397
    %1308 = vmatpush.msra.mxu0 %v389
    %1309 = vmatpush.msra.mxu0 %v381
    %1310 = vmatpush.msra.mxu0 %v373
    %1311 = vmatpush.msra.mxu0 %v365
    %1312 = vmatpush.msra.mxu0 %v357
    %1313 = vmatpush.msra.mxu0 %v349
    %1314 = vmatpush.msra.mxu0 %v341
    %1315 = vmatpush.msra.mxu0 %v333
    %1316 = vmatmul.f32.gmra.mxu0 %v1119
    %v1317 = vpop.f32.mrf.mxu0
    %v1318 = vadd.f32 %v1298, %v1317
    %1319 = vdwg.mxu0
    %1320 = vmatpush.msra.mxu0 %v326
    %1321 = vmatpush.msra.mxu0 %v318
    %1322 = vmatpush.msra.mxu0 %v310
    %1323 = vmatpush.msra.mxu0 %v302
    %1324 = vmatpush.msra.mxu0 %v294
    %1325 = vmatpush.msra.mxu0 %v286
    %1326 = vmatpush.msra.mxu0 %v278
    %1327 = vmatpush.msra.mxu0 %v270
    %1328 = vmatpush.msra.mxu0 %v262
    %1329 = vmatpush.msra.mxu0 %v254
    %1330 = vmatpush.msra.mxu0 %v246
    %1331 = vmatpush.msra.mxu0 %v238
    %1332 = vmatpush.msra.mxu0 %v230
    %1333 = vmatpush.msra.mxu0 %v222
    %1334 = vmatpush.msra.mxu0 %v214
    %1335 = vmatpush.msra.mxu0 %v206
    %1336 = vmatmul.f32.gmra.mxu0 %v1118
    %v1337 = vpop.f32.mrf.mxu0
    %v1338 = vadd.f32 0.0, %v1337
    %1339 = vdwg.mxu0
    %1340 = vmatpush.msra.mxu0 %v454
    %1341 = vmatpush.msra.mxu0 %v446
    %1342 = vmatpush.msra.mxu0 %v438
    %1343 = vmatpush.msra.mxu0 %v430
    %1344 = vmatpush.msra.mxu0 %v422
    %1345 = vmatpush.msra.mxu0 %v414
    %1346 = vmatpush.msra.mxu0 %v406
    %1347 = vmatpush.msra.mxu0 %v398
    %1348 = vmatpush.msra.mxu0 %v390
    %1349 = vmatpush.msra.mxu0 %v382
    %1350 = vmatpush.msra.mxu0 %v374
    %1351 = vmatpush.msra.mxu0 %v366
    %1352 = vmatpush.msra.mxu0 %v358
    %1353 = vmatpush.msra.mxu0 %v350
    %1354 = vmatpush.msra.mxu0 %v342
    %1355 = vmatpush.msra.mxu0 %v334
    %1356 = vmatmul.f32.gmra.mxu0 %v1119
    %v1357 = vpop.f32.mrf.mxu0
    %v1358 = vadd.f32 %v1338, %v1357
    %1359 = vdwg.mxu0
    %1360 = vmatpush.msra.mxu0 %v327
    %1361 = vmatpush.msra.mxu0 %v319
    %1362 = vmatpush.msra.mxu0 %v311
    %1363 = vmatpush.msra.mxu0 %v303
    %1364 = vmatpush.msra.mxu0 %v295
    %1365 = vmatpush.msra.mxu0 %v287
    %1366 = vmatpush.msra.mxu0 %v279
    %1367 = vmatpush.msra.mxu0 %v271
    %1368 = vmatpush.msra.mxu0 %v263
    %1369 = vmatpush.msra.mxu0 %v255
    %1370 = vmatpush.msra.mxu0 %v247
    %1371 = vmatpush.msra.mxu0 %v239
    %1372 = vmatpush.msra.mxu0 %v231
    %1373 = vmatpush.msra.mxu0 %v223
    %1374 = vmatpush.msra.mxu0 %v215
    %1375 = vmatpush.msra.mxu0 %v207
    %1376 = vmatmul.f32.gmra.mxu0 %v1118
    %v1377 = vpop.f32.mrf.mxu0
    %v1378 = vadd.f32 0.0, %v1377
    %1379 = vdwg.mxu0
    %1380 = vmatpush.msra.mxu0 %v455
    %1381 = vmatpush.msra.mxu0 %v447
    %1382 = vmatpush.msra.mxu0 %v439
    %1383 = vmatpush.msra.mxu0 %v431
    %1384 = vmatpush.msra.mxu0 %v423
    %1385 = vmatpush.msra.mxu0 %v415
    %1386 = vmatpush.msra.mxu0 %v407
    %1387 = vmatpush.msra.mxu0 %v399
    %1388 = vmatpush.msra.mxu0 %v391
    %1389 = vmatpush.msra.mxu0 %v383
    %1390 = vmatpush.msra.mxu0 %v375
    %1391 = vmatpush.msra.mxu0 %v367
    %1392 = vmatpush.msra.mxu0 %v359
    %1393 = vmatpush.msra.mxu0 %v351
    %1394 = vmatpush.msra.mxu0 %v343
    %1395 = vmatpush.msra.mxu0 %v335
    %1396 = vmatmul.f32.gmra.mxu0 %v1119
    %v1397 = vpop.f32.mrf.mxu0
    %v1398 = vadd.f32 %v1378, %v1397
    %1399 = vdwg.mxu0
    %1400 = vmatpush.msra.mxu0 %v328
    %1401 = vmatpush.msra.mxu0 %v320
    %1402 = vmatpush.msra.mxu0 %v312
    %1403 = vmatpush.msra.mxu0 %v304
    %1404 = vmatpush.msra.mxu0 %v296
    %1405 = vmatpush.msra.mxu0 %v288
    %1406 = vmatpush.msra.mxu0 %v280
    %1407 = vmatpush.msra.mxu0 %v272
    %1408 = vmatpush.msra.mxu0 %v264
    %1409 = vmatpush.msra.mxu0 %v256
    %1410 = vmatpush.msra.mxu0 %v248
    %1411 = vmatpush.msra.mxu0 %v240
    %1412 = vmatpush.msra.mxu0 %v232
    %1413 = vmatpush.msra.mxu0 %v224
    %1414 = vmatpush.msra.mxu0 %v216
    %1415 = vmatpush.msra.mxu0 %v208
    %1416 = vmatmul.f32.gmra.mxu0 %v1118
    %v1417 = vpop.f32.mrf.mxu0
    %v1418 = vadd.f32 0.0, %v1417
    %1419 = vdwg.mxu0
    %1420 = vmatpush.msra.mxu0 %v456
    %1421 = vmatpush.msra.mxu0 %v448
    %1422 = vmatpush.msra.mxu0 %v440
    %1423 = vmatpush.msra.mxu0 %v432
    %1424 = vmatpush.msra.mxu0 %v424
    %1425 = vmatpush.msra.mxu0 %v416
    %1426 = vmatpush.msra.mxu0 %v408
    %1427 = vmatpush.msra.mxu0 %v400
    %1428 = vmatpush.msra.mxu0 %v392
    %1429 = vmatpush.msra.mxu0 %v384
    %1430 = vmatpush.msra.mxu0 %v376
    %1431 = vmatpush.msra.mxu0 %v368
    %1432 = vmatpush.msra.mxu0 %v360
    %1433 = vmatpush.msra.mxu0 %v352
    %1434 = vmatpush.msra.mxu0 %v344
    %1435 = vmatpush.msra.mxu0 %v336
    %1436 = vmatmul.f32.gmra.mxu0 %v1119
    %v1437 = vpop.f32.mrf.mxu0
    %v1438 = vadd.f32 %v1418, %v1437
    %1439 = vdwg.mxu0
    %v1448 = vrot.slane %v1158, 6
    %v1449 = vrot.slane %v1198, 6
    %v1450 = vrot.slane %v1238, 6
    %v1451 = vrot.slane %v1278, 6
    %v1452 = vrot.slane %v1318, 6
    %v1453 = vrot.slane %v1358, 6
    %v1454 = vrot.slane %v1398, 6
    %v1455 = vrot.slane %v1438, 6
    %v1464 = vadd.f32 %v500, %v1448
    %v1465 = vadd.f32 %v523, %v1449
    %v1466 = vadd.f32 %v546, %v1450
    %v1467 = vadd.f32 %v569, %v1451
    %v1468 = vadd.f32 %v592, %v1452
    %v1469 = vadd.f32 %v615, %v1453
    %v1470 = vadd.f32 %v638, %v1454
    %v1471 = vadd.f32 %v661, %v1455
    %v1472 = vxor.u32 %v1464, 2147483648
    %v1473 = vxor.u32 %v1465, 2147483648
    %v1474 = vxor.u32 %v1466, 2147483648
    %v1475 = vxor.u32 %v1467, 2147483648
    %v1476 = vxor.u32 %v1468, 2147483648
    %v1477 = vxor.u32 %v1469, 2147483648
    %v1478 = vmul.f32 %v1472, 1.442695
    %v1479 = vpow.pop %v1478
    %v1480 = vmul.f32 %v1473, 1.442695
    %v1481 = vpow.pop %v1480
    %v1482 = vmul.f32 %v1474, 1.442695
    %v1483 = vpow.pop %v1482
    %v1484 = vmul.f32 %v1475, 1.442695
    %v1485 = vpow.pop %v1484
    %v1486 = vmul.f32 %v1476, 1.442695
    %v1487 = vpow.pop %v1486
    %v1488 = vmul.f32 %v1477, 1.442695
    %v1489 = vpow.pop %v1488
    %v1490 = vadd.f32 %v1479, 1.0
    %v1491 = vadd.f32 %v1481, 1.0
    %v1492 = vadd.f32 %v1483, 1.0
    %v1493 = vadd.f32 %v1485, 1.0
    %v1494 = vadd.f32 %v1487, 1.0
    %v1495 = vadd.f32 %v1489, 1.0
    %v1496 = vrcp.pop %v1490
    %v1497 = vmul.f32 %v1490, %v1496
    %v1498 = vsub.f32 1.0, %v1497
    %v1499 = vmul.f32 %v1496, %v1498
    %v1500 = vadd.f32 %v1496, %v1499
    %vm1501 = vweird.f32 %v1490
    %vm1502 = vweird.f32 %v1496
    %vm1503 = vmor %vm1501, %vm1502
    %v1504 = vsel %vm1503, %v1496, %v1500
    %v1505 = vand.u32 2147483647, %v1490
    %vm1506 = vcmp.eq.f32.partialorder %v1505, 8.507059e+37
    %v1507 = vand.u32 %v1490, 2147483648
    %v1508 = vor.u32 1.1754944e-38, %v1507
    %v1509 = vsel %vm1506, %v1508, %v1504
    %v1510 = vmul.f32 1.0, %v1509
    %v1511 = vrcp.pop %v1491
    %v1512 = vmul.f32 %v1491, %v1511
    %v1513 = vsub.f32 1.0, %v1512
    %v1514 = vmul.f32 %v1511, %v1513
    %v1515 = vadd.f32 %v1511, %v1514
    %vm1516 = vweird.f32 %v1491
    %vm1517 = vweird.f32 %v1511
    %vm1518 = vmor %vm1516, %vm1517
    %v1519 = vsel %vm1518, %v1511, %v1515
    %v1520 = vand.u32 2147483647, %v1491
    %vm1521 = vcmp.eq.f32.partialorder %v1520, 8.507059e+37
    %v1522 = vand.u32 %v1491, 2147483648
    %v1523 = vor.u32 1.1754944e-38, %v1522
    %v1524 = vsel %vm1521, %v1523, %v1519
    %v1525 = vmul.f32 1.0, %v1524
    %v1526 = vrcp.pop %v1492
    %v1527 = vmul.f32 %v1492, %v1526
    %v1528 = vsub.f32 1.0, %v1527
    %v1529 = vmul.f32 %v1526, %v1528
    %v1530 = vadd.f32 %v1526, %v1529
    %vm1531 = vweird.f32 %v1492
    %vm1532 = vweird.f32 %v1526
    %vm1533 = vmor %vm1531, %vm1532
    %v1534 = vsel %vm1533, %v1526, %v1530
    %v1535 = vand.u32 2147483647, %v1492
    %vm1536 = vcmp.eq.f32.partialorder %v1535, 8.507059e+37
    %v1537 = vand.u32 %v1492, 2147483648
    %v1538 = vor.u32 1.1754944e-38, %v1537
    %v1539 = vsel %vm1536, %v1538, %v1534
    %v1540 = vmul.f32 1.0, %v1539
    %v1541 = vrcp.pop %v1493
    %v1542 = vmul.f32 %v1493, %v1541
    %v1543 = vsub.f32 1.0, %v1542
    %v1544 = vmul.f32 %v1541, %v1543
    %v1545 = vadd.f32 %v1541, %v1544
    %vm1546 = vweird.f32 %v1493
    %vm1547 = vweird.f32 %v1541
    %vm1548 = vmor %vm1546, %vm1547
    %v1549 = vsel %vm1548, %v1541, %v1545
    %v1550 = vand.u32 2147483647, %v1493
    %vm1551 = vcmp.eq.f32.partialorder %v1550, 8.507059e+37
    %v1552 = vand.u32 %v1493, 2147483648
    %v1553 = vor.u32 1.1754944e-38, %v1552
    %v1554 = vsel %vm1551, %v1553, %v1549
    %v1555 = vmul.f32 1.0, %v1554
    %v1556 = vrcp.pop %v1494
    %v1557 = vmul.f32 %v1494, %v1556
    %v1558 = vsub.f32 1.0, %v1557
    %v1559 = vmul.f32 %v1556, %v1558
    %v1560 = vadd.f32 %v1556, %v1559
    %vm1561 = vweird.f32 %v1494
    %vm1562 = vweird.f32 %v1556
    %vm1563 = vmor %vm1561, %vm1562
    %v1564 = vsel %vm1563, %v1556, %v1560
    %v1565 = vand.u32 2147483647, %v1494
    %vm1566 = vcmp.eq.f32.partialorder %v1565, 8.507059e+37
    %v1567 = vand.u32 %v1494, 2147483648
    %v1568 = vor.u32 1.1754944e-38, %v1567
    %v1569 = vsel %vm1566, %v1568, %v1564
    %v1570 = vmul.f32 1.0, %v1569
    %v1571 = vrcp.pop %v1495
    %v1572 = vmul.f32 %v1495, %v1571
    %v1573 = vsub.f32 1.0, %v1572
    %v1574 = vmul.f32 %v1571, %v1573
    %v1575 = vadd.f32 %v1571, %v1574
    %vm1576 = vweird.f32 %v1495
    %vm1577 = vweird.f32 %v1571
    %vm1578 = vmor %vm1576, %vm1577
    %v1579 = vsel %vm1578, %v1571, %v1575
    %v1580 = vand.u32 2147483647, %v1495
    %vm1581 = vcmp.eq.f32.partialorder %v1580, 8.507059e+37
    %v1582 = vand.u32 %v1495, 2147483648
    %v1583 = vor.u32 1.1754944e-38, %v1582
    %v1584 = vsel %vm1581, %v1583, %v1579
    %v1585 = vmul.f32 1.0, %v1584
    %v1586 = vmax.f32 %v1470, 0.0
    %v1587 = vmax.f32 %v1471, 0.0
    %v1590 = vrot.slane %v1114, 6
    %v1591 = vrot.slane %v1115, 6
    %v1594 = vmul.f32 %v1540, %v1590
    %v1595 = vmul.f32 %v1555, %v1591
    %v1596 = vmul.f32 %v1510, %v1586
    %v1597 = vmul.f32 %v1525, %v1587
    %v1598 = vadd.f32 %v1594, %v1596
    %v1599 = vadd.f32 %v1595, %v1597
    %v1600 = vmax.f32 %v1598, 0.0
    %v1601 = vmax.f32 %v1599, 0.0
    %v1602 = vmul.f32 %v1570, %v1600
    %v1603 = vmul.f32 %v1585, %v1601
    %v1606 = vrot.slane %v1602, 2
    %v1607 = vrot.slane %v1603, 2
    %1610 = vmatpush.msra.mxu0 %v321
    %1611 = vmatpush.msra.mxu0 %v313
    %1612 = vmatpush.msra.mxu0 %v305
    %1613 = vmatpush.msra.mxu0 %v297
    %1614 = vmatpush.msra.mxu0 %v289
    %1615 = vmatpush.msra.mxu0 %v281
    %1616 = vmatpush.msra.mxu0 %v273
    %1617 = vmatpush.msra.mxu0 %v265
    %1618 = vmatpush.msra.mxu0 %v257
    %1619 = vmatpush.msra.mxu0 %v249
    %1620 = vmatpush.msra.mxu0 %v241
    %1621 = vmatpush.msra.mxu0 %v233
    %1622 = vmatpush.msra.mxu0 %v225
    %1623 = vmatpush.msra.mxu0 %v217
    %1624 = vmatpush.msra.mxu0 %v209
    %1625 = vmatpush.msra.mxu0 %v201
    %1626 = vmatmul.f32.gmra.mxu0 %v1606
    %v1627 = vpop.f32.mrf.mxu0
    %v1628 = vadd.f32 0.0, %v1627
    %1629 = vdwg.mxu0
    %1630 = vmatpush.msra.mxu0 %v449
    %1631 = vmatpush.msra.mxu0 %v441
    %1632 = vmatpush.msra.mxu0 %v433
    %1633 = vmatpush.msra.mxu0 %v425
    %1634 = vmatpush.msra.mxu0 %v417
    %1635 = vmatpush.msra.mxu0 %v409
    %1636 = vmatpush.msra.mxu0 %v401
    %1637 = vmatpush.msra.mxu0 %v393
    %1638 = vmatpush.msra.mxu0 %v385
    %1639 = vmatpush.msra.mxu0 %v377
    %1640 = vmatpush.msra.mxu0 %v369
    %1641 = vmatpush.msra.mxu0 %v361
    %1642 = vmatpush.msra.mxu0 %v353
    %1643 = vmatpush.msra.mxu0 %v345
    %1644 = vmatpush.msra.mxu0 %v337
    %1645 = vmatpush.msra.mxu0 %v329
    %1646 = vmatmul.f32.gmra.mxu0 %v1607
    %v1647 = vpop.f32.mrf.mxu0
    %v1648 = vadd.f32 %v1628, %v1647
    %1649 = vdwg.mxu0
    %1650 = vmatpush.msra.mxu0 %v322
    %1651 = vmatpush.msra.mxu0 %v314
    %1652 = vmatpush.msra.mxu0 %v306
    %1653 = vmatpush.msra.mxu0 %v298
    %1654 = vmatpush.msra.mxu0 %v290
    %1655 = vmatpush.msra.mxu0 %v282
    %1656 = vmatpush.msra.mxu0 %v274
    %1657 = vmatpush.msra.mxu0 %v266
    %1658 = vmatpush.msra.mxu0 %v258
    %1659 = vmatpush.msra.mxu0 %v250
    %1660 = vmatpush.msra.mxu0 %v242
    %1661 = vmatpush.msra.mxu0 %v234
    %1662 = vmatpush.msra.mxu0 %v226
    %1663 = vmatpush.msra.mxu0 %v218
    %1664 = vmatpush.msra.mxu0 %v210
    %1665 = vmatpush.msra.mxu0 %v202
    %1666 = vmatmul.f32.gmra.mxu0 %v1606
    %v1667 = vpop.f32.mrf.mxu0
    %v1668 = vadd.f32 0.0, %v1667
    %1669 = vdwg.mxu0
    %1670 = vmatpush.msra.mxu0 %v450
    %1671 = vmatpush.msra.mxu0 %v442
    %1672 = vmatpush.msra.mxu0 %v434
    %1673 = vmatpush.msra.mxu0 %v426
    %1674 = vmatpush.msra.mxu0 %v418
    %1675 = vmatpush.msra.mxu0 %v410
    %1676 = vmatpush.msra.mxu0 %v402
    %1677 = vmatpush.msra.mxu0 %v394
    %1678 = vmatpush.msra.mxu0 %v386
    %1679 = vmatpush.msra.mxu0 %v378
    %1680 = vmatpush.msra.mxu0 %v370
    %1681 = vmatpush.msra.mxu0 %v362
    %1682 = vmatpush.msra.mxu0 %v354
    %1683 = vmatpush.msra.mxu0 %v346
    %1684 = vmatpush.msra.mxu0 %v338
    %1685 = vmatpush.msra.mxu0 %v330
    %1686 = vmatmul.f32.gmra.mxu0 %v1607
    %v1687 = vpop.f32.mrf.mxu0
    %v1688 = vadd.f32 %v1668, %v1687
    %1689 = vdwg.mxu0
    %1690 = vmatpush.msra.mxu0 %v323
    %1691 = vmatpush.msra.mxu0 %v315
    %1692 = vmatpush.msra.mxu0 %v307
    %1693 = vmatpush.msra.mxu0 %v299
    %1694 = vmatpush.msra.mxu0 %v291
    %1695 = vmatpush.msra.mxu0 %v283
    %1696 = vmatpush.msra.mxu0 %v275
    %1697 = vmatpush.msra.mxu0 %v267
    %1698 = vmatpush.msra.mxu0 %v259
    %1699 = vmatpush.msra.mxu0 %v251
    %1700 = vmatpush.msra.mxu0 %v243
    %1701 = vmatpush.msra.mxu0 %v235
    %1702 = vmatpush.msra.mxu0 %v227
    %1703 = vmatpush.msra.mxu0 %v219
    %1704 = vmatpush.msra.mxu0 %v211
    %1705 = vmatpush.msra.mxu0 %v203
    %1706 = vmatmul.f32.gmra.mxu0 %v1606
    %v1707 = vpop.f32.mrf.mxu0
    %v1708 = vadd.f32 0.0, %v1707
    %1709 = vdwg.mxu0
    %1710 = vmatpush.msra.mxu0 %v451
    %1711 = vmatpush.msra.mxu0 %v443
    %1712 = vmatpush.msra.mxu0 %v435
    %1713 = vmatpush.msra.mxu0 %v427
    %1714 = vmatpush.msra.mxu0 %v419
    %1715 = vmatpush.msra.mxu0 %v411
    %1716 = vmatpush.msra.mxu0 %v403
    %1717 = vmatpush.msra.mxu0 %v395
    %1718 = vmatpush.msra.mxu0 %v387
    %1719 = vmatpush.msra.mxu0 %v379
    %1720 = vmatpush.msra.mxu0 %v371
    %1721 = vmatpush.msra.mxu0 %v363
    %1722 = vmatpush.msra.mxu0 %v355
    %1723 = vmatpush.msra.mxu0 %v347
    %1724 = vmatpush.msra.mxu0 %v339
    %1725 = vmatpush.msra.mxu0 %v331
    %1726 = vmatmul.f32.gmra.mxu0 %v1607
    %v1727 = vpop.f32.mrf.mxu0
    %v1728 = vadd.f32 %v1708, %v1727
    %1729 = vdwg.mxu0
    %1730 = vmatpush.msra.mxu0 %v324
    %1731 = vmatpush.msra.mxu0 %v316
    %1732 = vmatpush.msra.mxu0 %v308
    %1733 = vmatpush.msra.mxu0 %v300
    %1734 = vmatpush.msra.mxu0 %v292
    %1735 = vmatpush.msra.mxu0 %v284
    %1736 = vmatpush.msra.mxu0 %v276
    %1737 = vmatpush.msra.mxu0 %v268
    %1738 = vmatpush.msra.mxu0 %v260
    %1739 = vmatpush.msra.mxu0 %v252
    %1740 = vmatpush.msra.mxu0 %v244
    %1741 = vmatpush.msra.mxu0 %v236
    %1742 = vmatpush.msra.mxu0 %v228
    %1743 = vmatpush.msra.mxu0 %v220
    %1744 = vmatpush.msra.mxu0 %v212
    %1745 = vmatpush.msra.mxu0 %v204
    %1746 = vmatmul.f32.gmra.mxu0 %v1606
    %v1747 = vpop.f32.mrf.mxu0
    %v1748 = vadd.f32 0.0, %v1747
    %1749 = vdwg.mxu0
    %1750 = vmatpush.msra.mxu0 %v452
    %1751 = vmatpush.msra.mxu0 %v444
    %1752 = vmatpush.msra.mxu0 %v436
    %1753 = vmatpush.msra.mxu0 %v428
    %1754 = vmatpush.msra.mxu0 %v420
    %1755 = vmatpush.msra.mxu0 %v412
    %1756 = vmatpush.msra.mxu0 %v404
    %1757 = vmatpush.msra.mxu0 %v396
    %1758 = vmatpush.msra.mxu0 %v388
    %1759 = vmatpush.msra.mxu0 %v380
    %1760 = vmatpush.msra.mxu0 %v372
    %1761 = vmatpush.msra.mxu0 %v364
    %1762 = vmatpush.msra.mxu0 %v356
    %1763 = vmatpush.msra.mxu0 %v348
    %1764 = vmatpush.msra.mxu0 %v340
    %1765 = vmatpush.msra.mxu0 %v332
    %1766 = vmatmul.f32.gmra.mxu0 %v1607
    %v1767 = vpop.f32.mrf.mxu0
    %v1768 = vadd.f32 %v1748, %v1767
    %1769 = vdwg.mxu0
    %1770 = vmatpush.msra.mxu0 %v325
    %1771 = vmatpush.msra.mxu0 %v317
    %1772 = vmatpush.msra.mxu0 %v309
    %1773 = vmatpush.msra.mxu0 %v301
    %1774 = vmatpush.msra.mxu0 %v293
    %1775 = vmatpush.msra.mxu0 %v285
    %1776 = vmatpush.msra.mxu0 %v277
    %1777 = vmatpush.msra.mxu0 %v269
    %1778 = vmatpush.msra.mxu0 %v261
    %1779 = vmatpush.msra.mxu0 %v253
    %1780 = vmatpush.msra.mxu0 %v245
    %1781 = vmatpush.msra.mxu0 %v237
    %1782 = vmatpush.msra.mxu0 %v229
    %1783 = vmatpush.msra.mxu0 %v221
    %1784 = vmatpush.msra.mxu0 %v213
    %1785 = vmatpush.msra.mxu0 %v205
    %1786 = vmatmul.f32.gmra.mxu0 %v1606
    %v1787 = vpop.f32.mrf.mxu0
    %v1788 = vadd.f32 0.0, %v1787
    %1789 = vdwg.mxu0
    %1790 = vmatpush.msra.mxu0 %v453
    %1791 = vmatpush.msra.mxu0 %v445
    %1792 = vmatpush.msra.mxu0 %v437
    %1793 = vmatpush.msra.mxu0 %v429
    %1794 = vmatpush.msra.mxu0 %v421
    %1795 = vmatpush.msra.mxu0 %v413
    %1796 = vmatpush.msra.mxu0 %v405
    %1797 = vmatpush.msra.mxu0 %v397
    %1798 = vmatpush.msra.mxu0 %v389
    %1799 = vmatpush.msra.mxu0 %v381
    %1800 = vmatpush.msra.mxu0 %v373
    %1801 = vmatpush.msra.mxu0 %v365
    %1802 = vmatpush.msra.mxu0 %v357
    %1803 = vmatpush.msra.mxu0 %v349
    %1804 = vmatpush.msra.mxu0 %v341
    %1805 = vmatpush.msra.mxu0 %v333
    %1806 = vmatmul.f32.gmra.mxu0 %v1607
    %v1807 = vpop.f32.mrf.mxu0
    %v1808 = vadd.f32 %v1788, %v1807
    %1809 = vdwg.mxu0
    %1810 = vmatpush.msra.mxu0 %v326
    %1811 = vmatpush.msra.mxu0 %v318
    %1812 = vmatpush.msra.mxu0 %v310
    %1813 = vmatpush.msra.mxu0 %v302
    %1814 = vmatpush.msra.mxu0 %v294
    %1815 = vmatpush.msra.mxu0 %v286
    %1816 = vmatpush.msra.mxu0 %v278
    %1817 = vmatpush.msra.mxu0 %v270
    %1818 = vmatpush.msra.mxu0 %v262
    %1819 = vmatpush.msra.mxu0 %v254
    %1820 = vmatpush.msra.mxu0 %v246
    %1821 = vmatpush.msra.mxu0 %v238
    %1822 = vmatpush.msra.mxu0 %v230
    %1823 = vmatpush.msra.mxu0 %v222
    %1824 = vmatpush.msra.mxu0 %v214
    %1825 = vmatpush.msra.mxu0 %v206
    %1826 = vmatmul.f32.gmra.mxu0 %v1606
    %v1827 = vpop.f32.mrf.mxu0
    %v1828 = vadd.f32 0.0, %v1827
    %1829 = vdwg.mxu0
    %1830 = vmatpush.msra.mxu0 %v454
    %1831 = vmatpush.msra.mxu0 %v446
    %1832 = vmatpush.msra.mxu0 %v438
    %1833 = vmatpush.msra.mxu0 %v430
    %1834 = vmatpush.msra.mxu0 %v422
    %1835 = vmatpush.msra.mxu0 %v414
    %1836 = vmatpush.msra.mxu0 %v406
    %1837 = vmatpush.msra.mxu0 %v398
    %1838 = vmatpush.msra.mxu0 %v390
    %1839 = vmatpush.msra.mxu0 %v382
    %1840 = vmatpush.msra.mxu0 %v374
    %1841 = vmatpush.msra.mxu0 %v366
    %1842 = vmatpush.msra.mxu0 %v358
    %1843 = vmatpush.msra.mxu0 %v350
    %1844 = vmatpush.msra.mxu0 %v342
    %1845 = vmatpush.msra.mxu0 %v334
    %1846 = vmatmul.f32.gmra.mxu0 %v1607
    %v1847 = vpop.f32.mrf.mxu0
    %v1848 = vadd.f32 %v1828, %v1847
    %1849 = vdwg.mxu0
    %1850 = vmatpush.msra.mxu0 %v327
    %1851 = vmatpush.msra.mxu0 %v319
    %1852 = vmatpush.msra.mxu0 %v311
    %1853 = vmatpush.msra.mxu0 %v303
    %1854 = vmatpush.msra.mxu0 %v295
    %1855 = vmatpush.msra.mxu0 %v287
    %1856 = vmatpush.msra.mxu0 %v279
    %1857 = vmatpush.msra.mxu0 %v271
    %1858 = vmatpush.msra.mxu0 %v263
    %1859 = vmatpush.msra.mxu0 %v255
    %1860 = vmatpush.msra.mxu0 %v247
    %1861 = vmatpush.msra.mxu0 %v239
    %1862 = vmatpush.msra.mxu0 %v231
    %1863 = vmatpush.msra.mxu0 %v223
    %1864 = vmatpush.msra.mxu0 %v215
    %1865 = vmatpush.msra.mxu0 %v207
    %1866 = vmatmul.f32.gmra.mxu0 %v1606
    %v1867 = vpop.f32.mrf.mxu0
    %v1868 = vadd.f32 0.0, %v1867
    %1869 = vdwg.mxu0
    %1870 = vmatpush.msra.mxu0 %v455
    %1871 = vmatpush.msra.mxu0 %v447
    %1872 = vmatpush.msra.mxu0 %v439
    %1873 = vmatpush.msra.mxu0 %v431
    %1874 = vmatpush.msra.mxu0 %v423
    %1875 = vmatpush.msra.mxu0 %v415
    %1876 = vmatpush.msra.mxu0 %v407
    %1877 = vmatpush.msra.mxu0 %v399
    %1878 = vmatpush.msra.mxu0 %v391
    %1879 = vmatpush.msra.mxu0 %v383
    %1880 = vmatpush.msra.mxu0 %v375
    %1881 = vmatpush.msra.mxu0 %v367
    %1882 = vmatpush.msra.mxu0 %v359
    %1883 = vmatpush.msra.mxu0 %v351
    %1884 = vmatpush.msra.mxu0 %v343
    %1885 = vmatpush.msra.mxu0 %v335
    %1886 = vmatmul.f32.gmra.mxu0 %v1607
    %v1887 = vpop.f32.mrf.mxu0
    %v1888 = vadd.f32 %v1868, %v1887
    %1889 = vdwg.mxu0
    %1890 = vmatpush.msra.mxu0 %v328
    %1891 = vmatpush.msra.mxu0 %v320
    %1892 = vmatpush.msra.mxu0 %v312
    %1893 = vmatpush.msra.mxu0 %v304
    %1894 = vmatpush.msra.mxu0 %v296
    %1895 = vmatpush.msra.mxu0 %v288
    %1896 = vmatpush.msra.mxu0 %v280
    %1897 = vmatpush.msra.mxu0 %v272
    %1898 = vmatpush.msra.mxu0 %v264
    %1899 = vmatpush.msra.mxu0 %v256
    %1900 = vmatpush.msra.mxu0 %v248
    %1901 = vmatpush.msra.mxu0 %v240
    %1902 = vmatpush.msra.mxu0 %v232
    %1903 = vmatpush.msra.mxu0 %v224
    %1904 = vmatpush.msra.mxu0 %v216
    %1905 = vmatpush.msra.mxu0 %v208
    %1906 = vmatmul.f32.gmra.mxu0 %v1606
    %v1907 = vpop.f32.mrf.mxu0
    %v1908 = vadd.f32 0.0, %v1907
    %1909 = vdwg.mxu0
    %1910 = vmatpush.msra.mxu0 %v456
    %1911 = vmatpush.msra.mxu0 %v448
    %1912 = vmatpush.msra.mxu0 %v440
    %1913 = vmatpush.msra.mxu0 %v432
    %1914 = vmatpush.msra.mxu0 %v424
    %1915 = vmatpush.msra.mxu0 %v416
    %1916 = vmatpush.msra.mxu0 %v408
    %1917 = vmatpush.msra.mxu0 %v400
    %1918 = vmatpush.msra.mxu0 %v392
    %1919 = vmatpush.msra.mxu0 %v384
    %1920 = vmatpush.msra.mxu0 %v376
    %1921 = vmatpush.msra.mxu0 %v368
    %1922 = vmatpush.msra.mxu0 %v360
    %1923 = vmatpush.msra.mxu0 %v352
    %1924 = vmatpush.msra.mxu0 %v344
    %1925 = vmatpush.msra.mxu0 %v336
    %1926 = vmatmul.f32.gmra.mxu0 %v1607
    %v1927 = vpop.f32.mrf.mxu0
    %v1928 = vadd.f32 %v1908, %v1927
    %1929 = vdwg.mxu0
    %v1938 = vrot.slane %v1648, 4
    %v1939 = vrot.slane %v1688, 4
    %v1940 = vrot.slane %v1728, 4
    %v1941 = vrot.slane %v1768, 4
    %v1942 = vrot.slane %v1808, 4
    %v1943 = vrot.slane %v1848, 4
    %v1944 = vrot.slane %v1888, 4
    %v1945 = vrot.slane %v1928, 4
    %v1954 = vadd.f32 %v500, %v1938
    %v1955 = vadd.f32 %v523, %v1939
    %v1956 = vadd.f32 %v546, %v1940
    %v1957 = vadd.f32 %v569, %v1941
    %v1958 = vadd.f32 %v592, %v1942
    %v1959 = vadd.f32 %v615, %v1943
    %v1960 = vadd.f32 %v638, %v1944
    %v1961 = vadd.f32 %v661, %v1945
    %v1962 = vxor.u32 %v1954, 2147483648
    %v1963 = vxor.u32 %v1955, 2147483648
    %v1964 = vxor.u32 %v1956, 2147483648
    %v1965 = vxor.u32 %v1957, 2147483648
    %v1966 = vxor.u32 %v1958, 2147483648
    %v1967 = vxor.u32 %v1959, 2147483648
    %v1968 = vmul.f32 %v1962, 1.442695
    %v1969 = vpow.pop %v1968
    %v1970 = vmul.f32 %v1963, 1.442695
    %v1971 = vpow.pop %v1970
    %v1972 = vmul.f32 %v1964, 1.442695
    %v1973 = vpow.pop %v1972
    %v1974 = vmul.f32 %v1965, 1.442695
    %v1975 = vpow.pop %v1974
    %v1976 = vmul.f32 %v1966, 1.442695
    %v1977 = vpow.pop %v1976
    %v1978 = vmul.f32 %v1967, 1.442695
    %v1979 = vpow.pop %v1978
    %v1980 = vadd.f32 %v1969, 1.0
    %v1981 = vadd.f32 %v1971, 1.0
    %v1982 = vadd.f32 %v1973, 1.0
    %v1983 = vadd.f32 %v1975, 1.0
    %v1984 = vadd.f32 %v1977, 1.0
    %v1985 = vadd.f32 %v1979, 1.0
    %v1986 = vrcp.pop %v1980
    %v1987 = vmul.f32 %v1980, %v1986
    %v1988 = vsub.f32 1.0, %v1987
    %v1989 = vmul.f32 %v1986, %v1988
    %v1990 = vadd.f32 %v1986, %v1989
    %vm1991 = vweird.f32 %v1980
    %vm1992 = vweird.f32 %v1986
    %vm1993 = vmor %vm1991, %vm1992
    %v1994 = vsel %vm1993, %v1986, %v1990
    %v1995 = vand.u32 2147483647, %v1980
    %vm1996 = vcmp.eq.f32.partialorder %v1995, 8.507059e+37
    %v1997 = vand.u32 %v1980, 2147483648
    %v1998 = vor.u32 1.1754944e-38, %v1997
    %v1999 = vsel %vm1996, %v1998, %v1994
    %v2000 = vmul.f32 1.0, %v1999
    %v2001 = vrcp.pop %v1981
    %v2002 = vmul.f32 %v1981, %v2001
    %v2003 = vsub.f32 1.0, %v2002
    %v2004 = vmul.f32 %v2001, %v2003
    %v2005 = vadd.f32 %v2001, %v2004
    %vm2006 = vweird.f32 %v1981
    %vm2007 = vweird.f32 %v2001
    %vm2008 = vmor %vm2006, %vm2007
    %v2009 = vsel %vm2008, %v2001, %v2005
    %v2010 = vand.u32 2147483647, %v1981
    %vm2011 = vcmp.eq.f32.partialorder %v2010, 8.507059e+37
    %v2012 = vand.u32 %v1981, 2147483648
    %v2013 = vor.u32 1.1754944e-38, %v2012
    %v2014 = vsel %vm2011, %v2013, %v2009
    %v2015 = vmul.f32 1.0, %v2014
    %v2016 = vrcp.pop %v1982
    %v2017 = vmul.f32 %v1982, %v2016
    %v2018 = vsub.f32 1.0, %v2017
    %v2019 = vmul.f32 %v2016, %v2018
    %v2020 = vadd.f32 %v2016, %v2019
    %vm2021 = vweird.f32 %v1982
    %vm2022 = vweird.f32 %v2016
    %vm2023 = vmor %vm2021, %vm2022
    %v2024 = vsel %vm2023, %v2016, %v2020
    %v2025 = vand.u32 2147483647, %v1982
    %vm2026 = vcmp.eq.f32.partialorder %v2025, 8.507059e+37
    %v2027 = vand.u32 %v1982, 2147483648
    %v2028 = vor.u32 1.1754944e-38, %v2027
    %v2029 = vsel %vm2026, %v2028, %v2024
    %v2030 = vmul.f32 1.0, %v2029
    %v2031 = vrcp.pop %v1983
    %v2032 = vmul.f32 %v1983, %v2031
    %v2033 = vsub.f32 1.0, %v2032
    %v2034 = vmul.f32 %v2031, %v2033
    %v2035 = vadd.f32 %v2031, %v2034
    %vm2036 = vweird.f32 %v1983
    %vm2037 = vweird.f32 %v2031
    %vm2038 = vmor %vm2036, %vm2037
    %v2039 = vsel %vm2038, %v2031, %v2035
    %v2040 = vand.u32 2147483647, %v1983
    %vm2041 = vcmp.eq.f32.partialorder %v2040, 8.507059e+37
    %v2042 = vand.u32 %v1983, 2147483648
    %v2043 = vor.u32 1.1754944e-38, %v2042
    %v2044 = vsel %vm2041, %v2043, %v2039
    %v2045 = vmul.f32 1.0, %v2044
    %v2046 = vrcp.pop %v1984
    %v2047 = vmul.f32 %v1984, %v2046
    %v2048 = vsub.f32 1.0, %v2047
    %v2049 = vmul.f32 %v2046, %v2048
    %v2050 = vadd.f32 %v2046, %v2049
    %vm2051 = vweird.f32 %v1984
    %vm2052 = vweird.f32 %v2046
    %vm2053 = vmor %vm2051, %vm2052
    %v2054 = vsel %vm2053, %v2046, %v2050
    %v2055 = vand.u32 2147483647, %v1984
    %vm2056 = vcmp.eq.f32.partialorder %v2055, 8.507059e+37
    %v2057 = vand.u32 %v1984, 2147483648
    %v2058 = vor.u32 1.1754944e-38, %v2057
    %v2059 = vsel %vm2056, %v2058, %v2054
    %v2060 = vmul.f32 1.0, %v2059
    %v2061 = vrcp.pop %v1985
    %v2062 = vmul.f32 %v1985, %v2061
    %v2063 = vsub.f32 1.0, %v2062
    %v2064 = vmul.f32 %v2061, %v2063
    %v2065 = vadd.f32 %v2061, %v2064
    %vm2066 = vweird.f32 %v1985
    %vm2067 = vweird.f32 %v2061
    %vm2068 = vmor %vm2066, %vm2067
    %v2069 = vsel %vm2068, %v2061, %v2065
    %v2070 = vand.u32 2147483647, %v1985
    %vm2071 = vcmp.eq.f32.partialorder %v2070, 8.507059e+37
    %v2072 = vand.u32 %v1985, 2147483648
    %v2073 = vor.u32 1.1754944e-38, %v2072
    %v2074 = vsel %vm2071, %v2073, %v2069
    %v2075 = vmul.f32 1.0, %v2074
    %v2076 = vmax.f32 %v1960, 0.0
    %v2077 = vmax.f32 %v1961, 0.0
    %v2080 = vrot.slane %v1598, 6
    %v2081 = vrot.slane %v1599, 6
    %v2084 = vmul.f32 %v2030, %v2080
    %v2085 = vmul.f32 %v2045, %v2081
    %v2086 = vmul.f32 %v2000, %v2076
    %v2087 = vmul.f32 %v2015, %v2077
    %v2088 = vadd.f32 %v2084, %v2086
    %v2089 = vadd.f32 %v2085, %v2087
    %v2090 = vmax.f32 %v2088, 0.0
    %v2091 = vmax.f32 %v2089, 0.0
    %v2092 = vmul.f32 %v2060, %v2090
    %v2093 = vmul.f32 %v2075, %v2091
    %v2096 = vrot.slane %v2092, 4
    %v2097 = vrot.slane %v2093, 4
    %2100 = vmatpush.msra.mxu0 %v321
    %2101 = vmatpush.msra.mxu0 %v313
    %2102 = vmatpush.msra.mxu0 %v305
    %2103 = vmatpush.msra.mxu0 %v297
    %2104 = vmatpush.msra.mxu0 %v289
    %2105 = vmatpush.msra.mxu0 %v281
    %2106 = vmatpush.msra.mxu0 %v273
    %2107 = vmatpush.msra.mxu0 %v265
    %2108 = vmatpush.msra.mxu0 %v257
    %2109 = vmatpush.msra.mxu0 %v249
    %2110 = vmatpush.msra.mxu0 %v241
    %2111 = vmatpush.msra.mxu0 %v233
    %2112 = vmatpush.msra.mxu0 %v225
    %2113 = vmatpush.msra.mxu0 %v217
    %2114 = vmatpush.msra.mxu0 %v209
    %2115 = vmatpush.msra.mxu0 %v201
    %2116 = vmatmul.f32.gmra.mxu0 %v2096
    %v2117 = vpop.f32.mrf.mxu0
    %v2118 = vadd.f32 0.0, %v2117
    %2119 = vdwg.mxu0
    %2120 = vmatpush.msra.mxu0 %v449
    %2121 = vmatpush.msra.mxu0 %v441
    %2122 = vmatpush.msra.mxu0 %v433
    %2123 = vmatpush.msra.mxu0 %v425
    %2124 = vmatpush.msra.mxu0 %v417
    %2125 = vmatpush.msra.mxu0 %v409
    %2126 = vmatpush.msra.mxu0 %v401
    %2127 = vmatpush.msra.mxu0 %v393
    %2128 = vmatpush.msra.mxu0 %v385
    %2129 = vmatpush.msra.mxu0 %v377
    %2130 = vmatpush.msra.mxu0 %v369
    %2131 = vmatpush.msra.mxu0 %v361
    %2132 = vmatpush.msra.mxu0 %v353
    %2133 = vmatpush.msra.mxu0 %v345
    %2134 = vmatpush.msra.mxu0 %v337
    %2135 = vmatpush.msra.mxu0 %v329
    %2136 = vmatmul.f32.gmra.mxu0 %v2097
    %v2137 = vpop.f32.mrf.mxu0
    %v2138 = vadd.f32 %v2118, %v2137
    %2139 = vdwg.mxu0
    %2140 = vmatpush.msra.mxu0 %v322
    %2141 = vmatpush.msra.mxu0 %v314
    %2142 = vmatpush.msra.mxu0 %v306
    %2143 = vmatpush.msra.mxu0 %v298
    %2144 = vmatpush.msra.mxu0 %v290
    %2145 = vmatpush.msra.mxu0 %v282
    %2146 = vmatpush.msra.mxu0 %v274
    %2147 = vmatpush.msra.mxu0 %v266
    %2148 = vmatpush.msra.mxu0 %v258
    %2149 = vmatpush.msra.mxu0 %v250
    %2150 = vmatpush.msra.mxu0 %v242
    %2151 = vmatpush.msra.mxu0 %v234
    %2152 = vmatpush.msra.mxu0 %v226
    %2153 = vmatpush.msra.mxu0 %v218
    %2154 = vmatpush.msra.mxu0 %v210
    %2155 = vmatpush.msra.mxu0 %v202
    %2156 = vmatmul.f32.gmra.mxu0 %v2096
    %v2157 = vpop.f32.mrf.mxu0
    %v2158 = vadd.f32 0.0, %v2157
    %2159 = vdwg.mxu0
    %2160 = vmatpush.msra.mxu0 %v450
    %2161 = vmatpush.msra.mxu0 %v442
    %2162 = vmatpush.msra.mxu0 %v434
    %2163 = vmatpush.msra.mxu0 %v426
    %2164 = vmatpush.msra.mxu0 %v418
    %2165 = vmatpush.msra.mxu0 %v410
    %2166 = vmatpush.msra.mxu0 %v402
    %2167 = vmatpush.msra.mxu0 %v394
    %2168 = vmatpush.msra.mxu0 %v386
    %2169 = vmatpush.msra.mxu0 %v378
    %2170 = vmatpush.msra.mxu0 %v370
    %2171 = vmatpush.msra.mxu0 %v362
    %2172 = vmatpush.msra.mxu0 %v354
    %2173 = vmatpush.msra.mxu0 %v346
    %2174 = vmatpush.msra.mxu0 %v338
    %2175 = vmatpush.msra.mxu0 %v330
    %2176 = vmatmul.f32.gmra.mxu0 %v2097
    %v2177 = vpop.f32.mrf.mxu0
    %v2178 = vadd.f32 %v2158, %v2177
    %2179 = vdwg.mxu0
    %2180 = vmatpush.msra.mxu0 %v323
    %2181 = vmatpush.msra.mxu0 %v315
    %2182 = vmatpush.msra.mxu0 %v307
    %2183 = vmatpush.msra.mxu0 %v299
    %2184 = vmatpush.msra.mxu0 %v291
    %2185 = vmatpush.msra.mxu0 %v283
    %2186 = vmatpush.msra.mxu0 %v275
    %2187 = vmatpush.msra.mxu0 %v267
    %2188 = vmatpush.msra.mxu0 %v259
    %2189 = vmatpush.msra.mxu0 %v251
    %2190 = vmatpush.msra.mxu0 %v243
    %2191 = vmatpush.msra.mxu0 %v235
    %2192 = vmatpush.msra.mxu0 %v227
    %2193 = vmatpush.msra.mxu0 %v219
    %2194 = vmatpush.msra.mxu0 %v211
    %2195 = vmatpush.msra.mxu0 %v203
    %2196 = vmatmul.f32.gmra.mxu0 %v2096
    %v2197 = vpop.f32.mrf.mxu0
    %v2198 = vadd.f32 0.0, %v2197
    %2199 = vdwg.mxu0
    %2200 = vmatpush.msra.mxu0 %v451
    %2201 = vmatpush.msra.mxu0 %v443
    %2202 = vmatpush.msra.mxu0 %v435
    %2203 = vmatpush.msra.mxu0 %v427
    %2204 = vmatpush.msra.mxu0 %v419
    %2205 = vmatpush.msra.mxu0 %v411
    %2206 = vmatpush.msra.mxu0 %v403
    %2207 = vmatpush.msra.mxu0 %v395
    %2208 = vmatpush.msra.mxu0 %v387
    %2209 = vmatpush.msra.mxu0 %v379
    %2210 = vmatpush.msra.mxu0 %v371
    %2211 = vmatpush.msra.mxu0 %v363
    %2212 = vmatpush.msra.mxu0 %v355
    %2213 = vmatpush.msra.mxu0 %v347
    %2214 = vmatpush.msra.mxu0 %v339
    %2215 = vmatpush.msra.mxu0 %v331
    %2216 = vmatmul.f32.gmra.mxu0 %v2097
    %v2217 = vpop.f32.mrf.mxu0
    %v2218 = vadd.f32 %v2198, %v2217
    %2219 = vdwg.mxu0
    %2220 = vmatpush.msra.mxu0 %v324
    %2221 = vmatpush.msra.mxu0 %v316
    %2222 = vmatpush.msra.mxu0 %v308
    %2223 = vmatpush.msra.mxu0 %v300
    %2224 = vmatpush.msra.mxu0 %v292
    %2225 = vmatpush.msra.mxu0 %v284
    %2226 = vmatpush.msra.mxu0 %v276
    %2227 = vmatpush.msra.mxu0 %v268
    %2228 = vmatpush.msra.mxu0 %v260
    %2229 = vmatpush.msra.mxu0 %v252
    %2230 = vmatpush.msra.mxu0 %v244
    %2231 = vmatpush.msra.mxu0 %v236
    %2232 = vmatpush.msra.mxu0 %v228
    %2233 = vmatpush.msra.mxu0 %v220
    %2234 = vmatpush.msra.mxu0 %v212
    %2235 = vmatpush.msra.mxu0 %v204
    %2236 = vmatmul.f32.gmra.mxu0 %v2096
    %v2237 = vpop.f32.mrf.mxu0
    %v2238 = vadd.f32 0.0, %v2237
    %2239 = vdwg.mxu0
    %2240 = vmatpush.msra.mxu0 %v452
    %2241 = vmatpush.msra.mxu0 %v444
    %2242 = vmatpush.msra.mxu0 %v436
    %2243 = vmatpush.msra.mxu0 %v428
    %2244 = vmatpush.msra.mxu0 %v420
    %2245 = vmatpush.msra.mxu0 %v412
    %2246 = vmatpush.msra.mxu0 %v404
    %2247 = vmatpush.msra.mxu0 %v396
    %2248 = vmatpush.msra.mxu0 %v388
    %2249 = vmatpush.msra.mxu0 %v380
    %2250 = vmatpush.msra.mxu0 %v372
    %2251 = vmatpush.msra.mxu0 %v364
    %2252 = vmatpush.msra.mxu0 %v356
    %2253 = vmatpush.msra.mxu0 %v348
    %2254 = vmatpush.msra.mxu0 %v340
    %2255 = vmatpush.msra.mxu0 %v332
    %2256 = vmatmul.f32.gmra.mxu0 %v2097
    %v2257 = vpop.f32.mrf.mxu0
    %v2258 = vadd.f32 %v2238, %v2257
    %2259 = vdwg.mxu0
    %2260 = vmatpush.msra.mxu0 %v325
    %2261 = vmatpush.msra.mxu0 %v317
    %2262 = vmatpush.msra.mxu0 %v309
    %2263 = vmatpush.msra.mxu0 %v301
    %2264 = vmatpush.msra.mxu0 %v293
    %2265 = vmatpush.msra.mxu0 %v285
    %2266 = vmatpush.msra.mxu0 %v277
    %2267 = vmatpush.msra.mxu0 %v269
    %2268 = vmatpush.msra.mxu0 %v261
    %2269 = vmatpush.msra.mxu0 %v253
    %2270 = vmatpush.msra.mxu0 %v245
    %2271 = vmatpush.msra.mxu0 %v237
    %2272 = vmatpush.msra.mxu0 %v229
    %2273 = vmatpush.msra.mxu0 %v221
    %2274 = vmatpush.msra.mxu0 %v213
    %2275 = vmatpush.msra.mxu0 %v205
    %2276 = vmatmul.f32.gmra.mxu0 %v2096
    %v2277 = vpop.f32.mrf.mxu0
    %v2278 = vadd.f32 0.0, %v2277
    %2279 = vdwg.mxu0
    %2280 = vmatpush.msra.mxu0 %v453
    %2281 = vmatpush.msra.mxu0 %v445
    %2282 = vmatpush.msra.mxu0 %v437
    %2283 = vmatpush.msra.mxu0 %v429
    %2284 = vmatpush.msra.mxu0 %v421
    %2285 = vmatpush.msra.mxu0 %v413
    %2286 = vmatpush.msra.mxu0 %v405
    %2287 = vmatpush.msra.mxu0 %v397
    %2288 = vmatpush.msra.mxu0 %v389
    %2289 = vmatpush.msra.mxu0 %v381
    %2290 = vmatpush.msra.mxu0 %v373
    %2291 = vmatpush.msra.mxu0 %v365
    %2292 = vmatpush.msra.mxu0 %v357
    %2293 = vmatpush.msra.mxu0 %v349
    %2294 = vmatpush.msra.mxu0 %v341
    %2295 = vmatpush.msra.mxu0 %v333
    %2296 = vmatmul.f32.gmra.mxu0 %v2097
    %v2297 = vpop.f32.mrf.mxu0
    %v2298 = vadd.f32 %v2278, %v2297
    %2299 = vdwg.mxu0
    %2300 = vmatpush.msra.mxu0 %v326
    %2301 = vmatpush.msra.mxu0 %v318
    %2302 = vmatpush.msra.mxu0 %v310
    %2303 = vmatpush.msra.mxu0 %v302
    %2304 = vmatpush.msra.mxu0 %v294
    %2305 = vmatpush.msra.mxu0 %v286
    %2306 = vmatpush.msra.mxu0 %v278
    %2307 = vmatpush.msra.mxu0 %v270
    %2308 = vmatpush.msra.mxu0 %v262
    %2309 = vmatpush.msra.mxu0 %v254
    %2310 = vmatpush.msra.mxu0 %v246
    %2311 = vmatpush.msra.mxu0 %v238
    %2312 = vmatpush.msra.mxu0 %v230
    %2313 = vmatpush.msra.mxu0 %v222
    %2314 = vmatpush.msra.mxu0 %v214
    %2315 = vmatpush.msra.mxu0 %v206
    %2316 = vmatmul.f32.gmra.mxu0 %v2096
    %v2317 = vpop.f32.mrf.mxu0
    %v2318 = vadd.f32 0.0, %v2317
    %2319 = vdwg.mxu0
    %2320 = vmatpush.msra.mxu0 %v454
    %2321 = vmatpush.msra.mxu0 %v446
    %2322 = vmatpush.msra.mxu0 %v438
    %2323 = vmatpush.msra.mxu0 %v430
    %2324 = vmatpush.msra.mxu0 %v422
    %2325 = vmatpush.msra.mxu0 %v414
    %2326 = vmatpush.msra.mxu0 %v406
    %2327 = vmatpush.msra.mxu0 %v398
    %2328 = vmatpush.msra.mxu0 %v390
    %2329 = vmatpush.msra.mxu0 %v382
    %2330 = vmatpush.msra.mxu0 %v374
    %2331 = vmatpush.msra.mxu0 %v366
    %2332 = vmatpush.msra.mxu0 %v358
    %2333 = vmatpush.msra.mxu0 %v350
    %2334 = vmatpush.msra.mxu0 %v342
    %2335 = vmatpush.msra.mxu0 %v334
    %2336 = vmatmul.f32.gmra.mxu0 %v2097
    %v2337 = vpop.f32.mrf.mxu0
    %v2338 = vadd.f32 %v2318, %v2337
    %2339 = vdwg.mxu0
    %2340 = vmatpush.msra.mxu0 %v327
    %2341 = vmatpush.msra.mxu0 %v319
    %2342 = vmatpush.msra.mxu0 %v311
    %2343 = vmatpush.msra.mxu0 %v303
    %2344 = vmatpush.msra.mxu0 %v295
    %2345 = vmatpush.msra.mxu0 %v287
    %2346 = vmatpush.msra.mxu0 %v279
    %2347 = vmatpush.msra.mxu0 %v271
    %2348 = vmatpush.msra.mxu0 %v263
    %2349 = vmatpush.msra.mxu0 %v255
    %2350 = vmatpush.msra.mxu0 %v247
    %2351 = vmatpush.msra.mxu0 %v239
    %2352 = vmatpush.msra.mxu0 %v231
    %2353 = vmatpush.msra.mxu0 %v223
    %2354 = vmatpush.msra.mxu0 %v215
    %2355 = vmatpush.msra.mxu0 %v207
    %2356 = vmatmul.f32.gmra.mxu0 %v2096
    %v2357 = vpop.f32.mrf.mxu0
    %v2358 = vadd.f32 0.0, %v2357
    %2359 = vdwg.mxu0
    %2360 = vmatpush.msra.mxu0 %v455
    %2361 = vmatpush.msra.mxu0 %v447
    %2362 = vmatpush.msra.mxu0 %v439
    %2363 = vmatpush.msra.mxu0 %v431
    %2364 = vmatpush.msra.mxu0 %v423
    %2365 = vmatpush.msra.mxu0 %v415
    %2366 = vmatpush.msra.mxu0 %v407
    %2367 = vmatpush.msra.mxu0 %v399
    %2368 = vmatpush.msra.mxu0 %v391
    %2369 = vmatpush.msra.mxu0 %v383
    %2370 = vmatpush.msra.mxu0 %v375
    %2371 = vmatpush.msra.mxu0 %v367
    %2372 = vmatpush.msra.mxu0 %v359
    %2373 = vmatpush.msra.mxu0 %v351
    %2374 = vmatpush.msra.mxu0 %v343
    %2375 = vmatpush.msra.mxu0 %v335
    %2376 = vmatmul.f32.gmra.mxu0 %v2097
    %v2377 = vpop.f32.mrf.mxu0
    %v2378 = vadd.f32 %v2358, %v2377
    %2379 = vdwg.mxu0
    %2380 = vmatpush.msra.mxu0 %v328
    %2381 = vmatpush.msra.mxu0 %v320
    %2382 = vmatpush.msra.mxu0 %v312
    %2383 = vmatpush.msra.mxu0 %v304
    %2384 = vmatpush.msra.mxu0 %v296
    %2385 = vmatpush.msra.mxu0 %v288
    %2386 = vmatpush.msra.mxu0 %v280
    %2387 = vmatpush.msra.mxu0 %v272
    %2388 = vmatpush.msra.mxu0 %v264
    %2389 = vmatpush.msra.mxu0 %v256
    %2390 = vmatpush.msra.mxu0 %v248
    %2391 = vmatpush.msra.mxu0 %v240
    %2392 = vmatpush.msra.mxu0 %v232
    %2393 = vmatpush.msra.mxu0 %v224
    %2394 = vmatpush.msra.mxu0 %v216
    %2395 = vmatpush.msra.mxu0 %v208
    %2396 = vmatmul.f32.gmra.mxu0 %v2096
    %v2397 = vpop.f32.mrf.mxu0
    %v2398 = vadd.f32 0.0, %v2397
    %2399 = vdwg.mxu0
    %2400 = vmatpush.msra.mxu0 %v456
    %2401 = vmatpush.msra.mxu0 %v448
    %2402 = vmatpush.msra.mxu0 %v440
    %2403 = vmatpush.msra.mxu0 %v432
    %2404 = vmatpush.msra.mxu0 %v424
    %2405 = vmatpush.msra.mxu0 %v416
    %2406 = vmatpush.msra.mxu0 %v408
    %2407 = vmatpush.msra.mxu0 %v400
    %2408 = vmatpush.msra.mxu0 %v392
    %2409 = vmatpush.msra.mxu0 %v384
    %2410 = vmatpush.msra.mxu0 %v376
    %2411 = vmatpush.msra.mxu0 %v368
    %2412 = vmatpush.msra.mxu0 %v360
    %2413 = vmatpush.msra.mxu0 %v352
    %2414 = vmatpush.msra.mxu0 %v344
    %2415 = vmatpush.msra.mxu0 %v336
    %2416 = vmatmul.f32.gmra.mxu0 %v2097
    %v2417 = vpop.f32.mrf.mxu0
    %v2418 = vadd.f32 %v2398, %v2417
    %2419 = vdwg.mxu0
    %v2428 = vrot.slane %v2138, 2
    %v2429 = vrot.slane %v2178, 2
    %v2430 = vrot.slane %v2218, 2
    %v2431 = vrot.slane %v2258, 2
    %v2432 = vrot.slane %v2298, 2
    %v2433 = vrot.slane %v2338, 2
    %v2434 = vrot.slane %v2378, 2
    %v2435 = vrot.slane %v2418, 2
    %v2444 = vadd.f32 %v500, %v2428
    %v2445 = vadd.f32 %v523, %v2429
    %v2446 = vadd.f32 %v546, %v2430
    %v2447 = vadd.f32 %v569, %v2431
    %v2448 = vadd.f32 %v592, %v2432
    %v2449 = vadd.f32 %v615, %v2433
    %v2450 = vadd.f32 %v638, %v2434
    %v2451 = vadd.f32 %v661, %v2435
    %v2452 = vxor.u32 %v2444, 2147483648
    %v2453 = vxor.u32 %v2445, 2147483648
    %v2454 = vxor.u32 %v2446, 2147483648
    %v2455 = vxor.u32 %v2447, 2147483648
    %v2456 = vxor.u32 %v2448, 2147483648
    %v2457 = vxor.u32 %v2449, 2147483648
    %v2458 = vmul.f32 %v2452, 1.442695
    %v2459 = vpow.pop %v2458
    %v2460 = vmul.f32 %v2453, 1.442695
    %v2461 = vpow.pop %v2460
    %v2462 = vmul.f32 %v2454, 1.442695
    %v2463 = vpow.pop %v2462
    %v2464 = vmul.f32 %v2455, 1.442695
    %v2465 = vpow.pop %v2464
    %v2466 = vmul.f32 %v2456, 1.442695
    %v2467 = vpow.pop %v2466
    %v2468 = vmul.f32 %v2457, 1.442695
    %v2469 = vpow.pop %v2468
    %v2470 = vadd.f32 %v2459, 1.0
    %v2471 = vadd.f32 %v2461, 1.0
    %v2472 = vadd.f32 %v2463, 1.0
    %v2473 = vadd.f32 %v2465, 1.0
    %v2474 = vadd.f32 %v2467, 1.0
    %v2475 = vadd.f32 %v2469, 1.0
    %v2476 = vrcp.pop %v2470
    %v2477 = vmul.f32 %v2470, %v2476
    %v2478 = vsub.f32 1.0, %v2477
    %v2479 = vmul.f32 %v2476, %v2478
    %v2480 = vadd.f32 %v2476, %v2479
    %vm2481 = vweird.f32 %v2470
    %vm2482 = vweird.f32 %v2476
    %vm2483 = vmor %vm2481, %vm2482
    %v2484 = vsel %vm2483, %v2476, %v2480
    %v2485 = vand.u32 2147483647, %v2470
    %vm2486 = vcmp.eq.f32.partialorder %v2485, 8.507059e+37
    %v2487 = vand.u32 %v2470, 2147483648
    %v2488 = vor.u32 1.1754944e-38, %v2487
    %v2489 = vsel %vm2486, %v2488, %v2484
    %v2490 = vmul.f32 1.0, %v2489
    %v2491 = vrcp.pop %v2471
    %v2492 = vmul.f32 %v2471, %v2491
    %v2493 = vsub.f32 1.0, %v2492
    %v2494 = vmul.f32 %v2491, %v2493
    %v2495 = vadd.f32 %v2491, %v2494
    %vm2496 = vweird.f32 %v2471
    %vm2497 = vweird.f32 %v2491
    %vm2498 = vmor %vm2496, %vm2497
    %v2499 = vsel %vm2498, %v2491, %v2495
    %v2500 = vand.u32 2147483647, %v2471
    %vm2501 = vcmp.eq.f32.partialorder %v2500, 8.507059e+37
    %v2502 = vand.u32 %v2471, 2147483648
    %v2503 = vor.u32 1.1754944e-38, %v2502
    %v2504 = vsel %vm2501, %v2503, %v2499
    %v2505 = vmul.f32 1.0, %v2504
    %v2506 = vrcp.pop %v2472
    %v2507 = vmul.f32 %v2472, %v2506
    %v2508 = vsub.f32 1.0, %v2507
    %v2509 = vmul.f32 %v2506, %v2508
    %v2510 = vadd.f32 %v2506, %v2509
    %vm2511 = vweird.f32 %v2472
    %vm2512 = vweird.f32 %v2506
    %vm2513 = vmor %vm2511, %vm2512
    %v2514 = vsel %vm2513, %v2506, %v2510
    %v2515 = vand.u32 2147483647, %v2472
    %vm2516 = vcmp.eq.f32.partialorder %v2515, 8.507059e+37
    %v2517 = vand.u32 %v2472, 2147483648
    %v2518 = vor.u32 1.1754944e-38, %v2517
    %v2519 = vsel %vm2516, %v2518, %v2514
    %v2520 = vmul.f32 1.0, %v2519
    %v2521 = vrcp.pop %v2473
    %v2522 = vmul.f32 %v2473, %v2521
    %v2523 = vsub.f32 1.0, %v2522
    %v2524 = vmul.f32 %v2521, %v2523
    %v2525 = vadd.f32 %v2521, %v2524
    %vm2526 = vweird.f32 %v2473
    %vm2527 = vweird.f32 %v2521
    %vm2528 = vmor %vm2526, %vm2527
    %v2529 = vsel %vm2528, %v2521, %v2525
    %v2530 = vand.u32 2147483647, %v2473
    %vm2531 = vcmp.eq.f32.partialorder %v2530, 8.507059e+37
    %v2532 = vand.u32 %v2473, 2147483648
    %v2533 = vor.u32 1.1754944e-38, %v2532
    %v2534 = vsel %vm2531, %v2533, %v2529
    %v2535 = vmul.f32 1.0, %v2534
    %v2536 = vrcp.pop %v2474
    %v2537 = vmul.f32 %v2474, %v2536
    %v2538 = vsub.f32 1.0, %v2537
    %v2539 = vmul.f32 %v2536, %v2538
    %v2540 = vadd.f32 %v2536, %v2539
    %vm2541 = vweird.f32 %v2474
    %vm2542 = vweird.f32 %v2536
    %vm2543 = vmor %vm2541, %vm2542
    %v2544 = vsel %vm2543, %v2536, %v2540
    %v2545 = vand.u32 2147483647, %v2474
    %vm2546 = vcmp.eq.f32.partialorder %v2545, 8.507059e+37
    %v2547 = vand.u32 %v2474, 2147483648
    %v2548 = vor.u32 1.1754944e-38, %v2547
    %v2549 = vsel %vm2546, %v2548, %v2544
    %v2550 = vmul.f32 1.0, %v2549
    %v2551 = vrcp.pop %v2475
    %v2552 = vmul.f32 %v2475, %v2551
    %v2553 = vsub.f32 1.0, %v2552
    %v2554 = vmul.f32 %v2551, %v2553
    %v2555 = vadd.f32 %v2551, %v2554
    %vm2556 = vweird.f32 %v2475
    %vm2557 = vweird.f32 %v2551
    %vm2558 = vmor %vm2556, %vm2557
    %v2559 = vsel %vm2558, %v2551, %v2555
    %v2560 = vand.u32 2147483647, %v2475
    %vm2561 = vcmp.eq.f32.partialorder %v2560, 8.507059e+37
    %v2562 = vand.u32 %v2475, 2147483648
    %v2563 = vor.u32 1.1754944e-38, %v2562
    %v2564 = vsel %vm2561, %v2563, %v2559
    %v2565 = vmul.f32 1.0, %v2564
    %v2566 = vmax.f32 %v2450, 0.0
    %v2567 = vmax.f32 %v2451, 0.0
    %v2570 = vrot.slane %v2088, 6
    %v2571 = vrot.slane %v2089, 6
    %v2574 = vmul.f32 %v2520, %v2570
    %v2575 = vmul.f32 %v2535, %v2571
    %v2576 = vmul.f32 %v2490, %v2566
    %v2577 = vmul.f32 %v2505, %v2567
    %v2578 = vadd.f32 %v2574, %v2576
    %v2579 = vadd.f32 %v2575, %v2577
    %v2580 = vmax.f32 %v2578, 0.0
    %v2581 = vmax.f32 %v2579, 0.0
    %v2582 = vmul.f32 %v2550, %v2580
    %v2583 = vmul.f32 %v2565, %v2581
    %v2586 = vrot.slane %v2582, 6
    %v2587 = vrot.slane %v2583, 6
    %2590 = vmatpush.msra.mxu0 %v321
    %2591 = vmatpush.msra.mxu0 %v313
    %2592 = vmatpush.msra.mxu0 %v305
    %2593 = vmatpush.msra.mxu0 %v297
    %2594 = vmatpush.msra.mxu0 %v289
    %2595 = vmatpush.msra.mxu0 %v281
    %2596 = vmatpush.msra.mxu0 %v273
    %2597 = vmatpush.msra.mxu0 %v265
    %2598 = vmatpush.msra.mxu0 %v257
    %2599 = vmatpush.msra.mxu0 %v249
    %2600 = vmatpush.msra.mxu0 %v241
    %2601 = vmatpush.msra.mxu0 %v233
    %2602 = vmatpush.msra.mxu0 %v225
    %2603 = vmatpush.msra.mxu0 %v217
    %2604 = vmatpush.msra.mxu0 %v209
    %2605 = vmatpush.msra.mxu0 %v201
    %2606 = vmatmul.f32.gmra.mxu0 %v2586
    %v2607 = vpop.f32.mrf.mxu0
    %v2608 = vadd.f32 0.0, %v2607
    %2609 = vdwg.mxu0
    %2610 = vmatpush.msra.mxu0 %v449
    %2611 = vmatpush.msra.mxu0 %v441
    %2612 = vmatpush.msra.mxu0 %v433
    %2613 = vmatpush.msra.mxu0 %v425
    %2614 = vmatpush.msra.mxu0 %v417
    %2615 = vmatpush.msra.mxu0 %v409
    %2616 = vmatpush.msra.mxu0 %v401
    %2617 = vmatpush.msra.mxu0 %v393
    %2618 = vmatpush.msra.mxu0 %v385
    %2619 = vmatpush.msra.mxu0 %v377
    %2620 = vmatpush.msra.mxu0 %v369
    %2621 = vmatpush.msra.mxu0 %v361
    %2622 = vmatpush.msra.mxu0 %v353
    %2623 = vmatpush.msra.mxu0 %v345
    %2624 = vmatpush.msra.mxu0 %v337
    %2625 = vmatpush.msra.mxu0 %v329
    %2626 = vmatmul.f32.gmra.mxu0 %v2587
    %v2627 = vpop.f32.mrf.mxu0
    %v2628 = vadd.f32 %v2608, %v2627
    %2629 = vdwg.mxu0
    %2630 = vmatpush.msra.mxu0 %v322
    %2631 = vmatpush.msra.mxu0 %v314
    %2632 = vmatpush.msra.mxu0 %v306
    %2633 = vmatpush.msra.mxu0 %v298
    %2634 = vmatpush.msra.mxu0 %v290
    %2635 = vmatpush.msra.mxu0 %v282
    %2636 = vmatpush.msra.mxu0 %v274
    %2637 = vmatpush.msra.mxu0 %v266
    %2638 = vmatpush.msra.mxu0 %v258
    %2639 = vmatpush.msra.mxu0 %v250
    %2640 = vmatpush.msra.mxu0 %v242
    %2641 = vmatpush.msra.mxu0 %v234
    %2642 = vmatpush.msra.mxu0 %v226
    %2643 = vmatpush.msra.mxu0 %v218
    %2644 = vmatpush.msra.mxu0 %v210
    %2645 = vmatpush.msra.mxu0 %v202
    %2646 = vmatmul.f32.gmra.mxu0 %v2586
    %v2647 = vpop.f32.mrf.mxu0
    %v2648 = vadd.f32 0.0, %v2647
    %2649 = vdwg.mxu0
    %2650 = vmatpush.msra.mxu0 %v450
    %2651 = vmatpush.msra.mxu0 %v442
    %2652 = vmatpush.msra.mxu0 %v434
    %2653 = vmatpush.msra.mxu0 %v426
    %2654 = vmatpush.msra.mxu0 %v418
    %2655 = vmatpush.msra.mxu0 %v410
    %2656 = vmatpush.msra.mxu0 %v402
    %2657 = vmatpush.msra.mxu0 %v394
    %2658 = vmatpush.msra.mxu0 %v386
    %2659 = vmatpush.msra.mxu0 %v378
    %2660 = vmatpush.msra.mxu0 %v370
    %2661 = vmatpush.msra.mxu0 %v362
    %2662 = vmatpush.msra.mxu0 %v354
    %2663 = vmatpush.msra.mxu0 %v346
    %2664 = vmatpush.msra.mxu0 %v338
    %2665 = vmatpush.msra.mxu0 %v330
    %2666 = vmatmul.f32.gmra.mxu0 %v2587
    %v2667 = vpop.f32.mrf.mxu0
    %v2668 = vadd.f32 %v2648, %v2667
    %2669 = vdwg.mxu0
    %2670 = vmatpush.msra.mxu0 %v323
    %2671 = vmatpush.msra.mxu0 %v315
    %2672 = vmatpush.msra.mxu0 %v307
    %2673 = vmatpush.msra.mxu0 %v299
    %2674 = vmatpush.msra.mxu0 %v291
    %2675 = vmatpush.msra.mxu0 %v283
    %2676 = vmatpush.msra.mxu0 %v275
    %2677 = vmatpush.msra.mxu0 %v267
    %2678 = vmatpush.msra.mxu0 %v259
    %2679 = vmatpush.msra.mxu0 %v251
    %2680 = vmatpush.msra.mxu0 %v243
    %2681 = vmatpush.msra.mxu0 %v235
    %2682 = vmatpush.msra.mxu0 %v227
    %2683 = vmatpush.msra.mxu0 %v219
    %2684 = vmatpush.msra.mxu0 %v211
    %2685 = vmatpush.msra.mxu0 %v203
    %2686 = vmatmul.f32.gmra.mxu0 %v2586
    %v2687 = vpop.f32.mrf.mxu0
    %v2688 = vadd.f32 0.0, %v2687
    %2689 = vdwg.mxu0
    %2690 = vmatpush.msra.mxu0 %v451
    %2691 = vmatpush.msra.mxu0 %v443
    %2692 = vmatpush.msra.mxu0 %v435
    %2693 = vmatpush.msra.mxu0 %v427
    %2694 = vmatpush.msra.mxu0 %v419
    %2695 = vmatpush.msra.mxu0 %v411
    %2696 = vmatpush.msra.mxu0 %v403
    %2697 = vmatpush.msra.mxu0 %v395
    %2698 = vmatpush.msra.mxu0 %v387
    %2699 = vmatpush.msra.mxu0 %v379
    %2700 = vmatpush.msra.mxu0 %v371
    %2701 = vmatpush.msra.mxu0 %v363
    %2702 = vmatpush.msra.mxu0 %v355
    %2703 = vmatpush.msra.mxu0 %v347
    %2704 = vmatpush.msra.mxu0 %v339
    %2705 = vmatpush.msra.mxu0 %v331
    %2706 = vmatmul.f32.gmra.mxu0 %v2587
    %v2707 = vpop.f32.mrf.mxu0
    %v2708 = vadd.f32 %v2688, %v2707
    %2709 = vdwg.mxu0
    %2710 = vmatpush.msra.mxu0 %v324
    %2711 = vmatpush.msra.mxu0 %v316
    %2712 = vmatpush.msra.mxu0 %v308
    %2713 = vmatpush.msra.mxu0 %v300
    %2714 = vmatpush.msra.mxu0 %v292
    %2715 = vmatpush.msra.mxu0 %v284
    %2716 = vmatpush.msra.mxu0 %v276
    %2717 = vmatpush.msra.mxu0 %v268
    %2718 = vmatpush.msra.mxu0 %v260
    %2719 = vmatpush.msra.mxu0 %v252
    %2720 = vmatpush.msra.mxu0 %v244
    %2721 = vmatpush.msra.mxu0 %v236
    %2722 = vmatpush.msra.mxu0 %v228
    %2723 = vmatpush.msra.mxu0 %v220
    %2724 = vmatpush.msra.mxu0 %v212
    %2725 = vmatpush.msra.mxu0 %v204
    %2726 = vmatmul.f32.gmra.mxu0 %v2586
    %v2727 = vpop.f32.mrf.mxu0
    %v2728 = vadd.f32 0.0, %v2727
    %2729 = vdwg.mxu0
    %2730 = vmatpush.msra.mxu0 %v452
    %2731 = vmatpush.msra.mxu0 %v444
    %2732 = vmatpush.msra.mxu0 %v436
    %2733 = vmatpush.msra.mxu0 %v428
    %2734 = vmatpush.msra.mxu0 %v420
    %2735 = vmatpush.msra.mxu0 %v412
    %2736 = vmatpush.msra.mxu0 %v404
    %2737 = vmatpush.msra.mxu0 %v396
    %2738 = vmatpush.msra.mxu0 %v388
    %2739 = vmatpush.msra.mxu0 %v380
    %2740 = vmatpush.msra.mxu0 %v372
    %2741 = vmatpush.msra.mxu0 %v364
    %2742 = vmatpush.msra.mxu0 %v356
    %2743 = vmatpush.msra.mxu0 %v348
    %2744 = vmatpush.msra.mxu0 %v340
    %2745 = vmatpush.msra.mxu0 %v332
    %2746 = vmatmul.f32.gmra.mxu0 %v2587
    %v2747 = vpop.f32.mrf.mxu0
    %v2748 = vadd.f32 %v2728, %v2747
    %2749 = vdwg.mxu0
    %2750 = vmatpush.msra.mxu0 %v325
    %2751 = vmatpush.msra.mxu0 %v317
    %2752 = vmatpush.msra.mxu0 %v309
    %2753 = vmatpush.msra.mxu0 %v301
    %2754 = vmatpush.msra.mxu0 %v293
    %2755 = vmatpush.msra.mxu0 %v285
    %2756 = vmatpush.msra.mxu0 %v277
    %2757 = vmatpush.msra.mxu0 %v269
    %2758 = vmatpush.msra.mxu0 %v261
    %2759 = vmatpush.msra.mxu0 %v253
    %2760 = vmatpush.msra.mxu0 %v245
    %2761 = vmatpush.msra.mxu0 %v237
    %2762 = vmatpush.msra.mxu0 %v229
    %2763 = vmatpush.msra.mxu0 %v221
    %2764 = vmatpush.msra.mxu0 %v213
    %2765 = vmatpush.msra.mxu0 %v205
    %2766 = vmatmul.f32.gmra.mxu0 %v2586
    %v2767 = vpop.f32.mrf.mxu0
    %v2768 = vadd.f32 0.0, %v2767
    %2769 = vdwg.mxu0
    %2770 = vmatpush.msra.mxu0 %v453
    %2771 = vmatpush.msra.mxu0 %v445
    %2772 = vmatpush.msra.mxu0 %v437
    %2773 = vmatpush.msra.mxu0 %v429
    %2774 = vmatpush.msra.mxu0 %v421
    %2775 = vmatpush.msra.mxu0 %v413
    %2776 = vmatpush.msra.mxu0 %v405
    %2777 = vmatpush.msra.mxu0 %v397
    %2778 = vmatpush.msra.mxu0 %v389
    %2779 = vmatpush.msra.mxu0 %v381
    %2780 = vmatpush.msra.mxu0 %v373
    %2781 = vmatpush.msra.mxu0 %v365
    %2782 = vmatpush.msra.mxu0 %v357
    %2783 = vmatpush.msra.mxu0 %v349
    %2784 = vmatpush.msra.mxu0 %v341
    %2785 = vmatpush.msra.mxu0 %v333
    %2786 = vmatmul.f32.gmra.mxu0 %v2587
    %v2787 = vpop.f32.mrf.mxu0
    %v2788 = vadd.f32 %v2768, %v2787
    %2789 = vdwg.mxu0
    %2790 = vmatpush.msra.mxu0 %v326
    %2791 = vmatpush.msra.mxu0 %v318
    %2792 = vmatpush.msra.mxu0 %v310
    %2793 = vmatpush.msra.mxu0 %v302
    %2794 = vmatpush.msra.mxu0 %v294
    %2795 = vmatpush.msra.mxu0 %v286
    %2796 = vmatpush.msra.mxu0 %v278
    %2797 = vmatpush.msra.mxu0 %v270
    %2798 = vmatpush.msra.mxu0 %v262
    %2799 = vmatpush.msra.mxu0 %v254
    %2800 = vmatpush.msra.mxu0 %v246
    %2801 = vmatpush.msra.mxu0 %v238
    %2802 = vmatpush.msra.mxu0 %v230
    %2803 = vmatpush.msra.mxu0 %v222
    %2804 = vmatpush.msra.mxu0 %v214
    %2805 = vmatpush.msra.mxu0 %v206
    %2806 = vmatmul.f32.gmra.mxu0 %v2586
    %v2807 = vpop.f32.mrf.mxu0
    %v2808 = vadd.f32 0.0, %v2807
    %2809 = vdwg.mxu0
    %2810 = vmatpush.msra.mxu0 %v454
    %2811 = vmatpush.msra.mxu0 %v446
    %2812 = vmatpush.msra.mxu0 %v438
    %2813 = vmatpush.msra.mxu0 %v430
    %2814 = vmatpush.msra.mxu0 %v422
    %2815 = vmatpush.msra.mxu0 %v414
    %2816 = vmatpush.msra.mxu0 %v406
    %2817 = vmatpush.msra.mxu0 %v398
    %2818 = vmatpush.msra.mxu0 %v390
    %2819 = vmatpush.msra.mxu0 %v382
    %2820 = vmatpush.msra.mxu0 %v374
    %2821 = vmatpush.msra.mxu0 %v366
    %2822 = vmatpush.msra.mxu0 %v358
    %2823 = vmatpush.msra.mxu0 %v350
    %2824 = vmatpush.msra.mxu0 %v342
    %2825 = vmatpush.msra.mxu0 %v334
    %2826 = vmatmul.f32.gmra.mxu0 %v2587
    %v2827 = vpop.f32.mrf.mxu0
    %v2828 = vadd.f32 %v2808, %v2827
    %2829 = vdwg.mxu0
    %2830 = vmatpush.msra.mxu0 %v327
    %2831 = vmatpush.msra.mxu0 %v319
    %2832 = vmatpush.msra.mxu0 %v311
    %2833 = vmatpush.msra.mxu0 %v303
    %2834 = vmatpush.msra.mxu0 %v295
    %2835 = vmatpush.msra.mxu0 %v287
    %2836 = vmatpush.msra.mxu0 %v279
    %2837 = vmatpush.msra.mxu0 %v271
    %2838 = vmatpush.msra.mxu0 %v263
    %2839 = vmatpush.msra.mxu0 %v255
    %2840 = vmatpush.msra.mxu0 %v247
    %2841 = vmatpush.msra.mxu0 %v239
    %2842 = vmatpush.msra.mxu0 %v231
    %2843 = vmatpush.msra.mxu0 %v223
    %2844 = vmatpush.msra.mxu0 %v215
    %2845 = vmatpush.msra.mxu0 %v207
    %2846 = vmatmul.f32.gmra.mxu0 %v2586
    %v2847 = vpop.f32.mrf.mxu0
    %v2848 = vadd.f32 0.0, %v2847
    %2849 = vdwg.mxu0
    %2850 = vmatpush.msra.mxu0 %v455
    %2851 = vmatpush.msra.mxu0 %v447
    %2852 = vmatpush.msra.mxu0 %v439
    %2853 = vmatpush.msra.mxu0 %v431
    %2854 = vmatpush.msra.mxu0 %v423
    %2855 = vmatpush.msra.mxu0 %v415
    %2856 = vmatpush.msra.mxu0 %v407
    %2857 = vmatpush.msra.mxu0 %v399
    %2858 = vmatpush.msra.mxu0 %v391
    %2859 = vmatpush.msra.mxu0 %v383
    %2860 = vmatpush.msra.mxu0 %v375
    %2861 = vmatpush.msra.mxu0 %v367
    %2862 = vmatpush.msra.mxu0 %v359
    %2863 = vmatpush.msra.mxu0 %v351
    %2864 = vmatpush.msra.mxu0 %v343
    %2865 = vmatpush.msra.mxu0 %v335
    %2866 = vmatmul.f32.gmra.mxu0 %v2587
    %v2867 = vpop.f32.mrf.mxu0
    %v2868 = vadd.f32 %v2848, %v2867
    %2869 = vdwg.mxu0
    %2870 = vmatpush.msra.mxu0 %v328
    %2871 = vmatpush.msra.mxu0 %v320
    %2872 = vmatpush.msra.mxu0 %v312
    %2873 = vmatpush.msra.mxu0 %v304
    %2874 = vmatpush.msra.mxu0 %v296
    %2875 = vmatpush.msra.mxu0 %v288
    %2876 = vmatpush.msra.mxu0 %v280
    %2877 = vmatpush.msra.mxu0 %v272
    %2878 = vmatpush.msra.mxu0 %v264
    %2879 = vmatpush.msra.mxu0 %v256
    %2880 = vmatpush.msra.mxu0 %v248
    %2881 = vmatpush.msra.mxu0 %v240
    %2882 = vmatpush.msra.mxu0 %v232
    %2883 = vmatpush.msra.mxu0 %v224
    %2884 = vmatpush.msra.mxu0 %v216
    %2885 = vmatpush.msra.mxu0 %v208
    %2886 = vmatmul.f32.gmra.mxu0 %v2586
    %v2887 = vpop.f32.mrf.mxu0
    %v2888 = vadd.f32 0.0, %v2887
    %2889 = vdwg.mxu0
    %2890 = vmatpush.msra.mxu0 %v456
    %2891 = vmatpush.msra.mxu0 %v448
    %2892 = vmatpush.msra.mxu0 %v440
    %2893 = vmatpush.msra.mxu0 %v432
    %2894 = vmatpush.msra.mxu0 %v424
    %2895 = vmatpush.msra.mxu0 %v416
    %2896 = vmatpush.msra.mxu0 %v408
    %2897 = vmatpush.msra.mxu0 %v400
    %2898 = vmatpush.msra.mxu0 %v392
    %2899 = vmatpush.msra.mxu0 %v384
    %2900 = vmatpush.msra.mxu0 %v376
    %2901 = vmatpush.msra.mxu0 %v368
    %2902 = vmatpush.msra.mxu0 %v360
    %2903 = vmatpush.msra.mxu0 %v352
    %2904 = vmatpush.msra.mxu0 %v344
    %2905 = vmatpush.msra.mxu0 %v336
    %2906 = vmatmul.f32.gmra.mxu0 %v2587
    %v2907 = vpop.f32.mrf.mxu0
    %v2908 = vadd.f32 %v2888, %v2907
    %2909 = vdwg.mxu0
    %v2910 = vadd.f32 %v503, %v2628
    %v2911 = vadd.f32 %v526, %v2668
    %v2912 = vadd.f32 %v549, %v2708
    %v2913 = vadd.f32 %v572, %v2748
    %v2914 = vadd.f32 %v595, %v2788
    %v2915 = vadd.f32 %v618, %v2828
    %v2916 = vadd.f32 %v641, %v2868
    %v2917 = vadd.f32 %v664, %v2908
    %v2918 = vxor.u32 %v2910, 2147483648
    %v2919 = vxor.u32 %v2911, 2147483648
    %v2920 = vxor.u32 %v2912, 2147483648
    %v2921 = vxor.u32 %v2913, 2147483648
    %v2922 = vxor.u32 %v2914, 2147483648
    %v2923 = vxor.u32 %v2915, 2147483648
    %v2924 = vmul.f32 %v2918, 1.442695
    %v2925 = vpow.pop %v2924
    %v2926 = vmul.f32 %v2919, 1.442695
    %v2927 = vpow.pop %v2926
    %v2928 = vmul.f32 %v2920, 1.442695
    %v2929 = vpow.pop %v2928
    %v2930 = vmul.f32 %v2921, 1.442695
    %v2931 = vpow.pop %v2930
    %v2932 = vmul.f32 %v2922, 1.442695
    %v2933 = vpow.pop %v2932
    %v2934 = vmul.f32 %v2923, 1.442695
    %v2935 = vpow.pop %v2934
    %v2936 = vadd.f32 %v2925, 1.0
    %v2937 = vadd.f32 %v2927, 1.0
    %v2938 = vadd.f32 %v2929, 1.0
    %v2939 = vadd.f32 %v2931, 1.0
    %v2940 = vadd.f32 %v2933, 1.0
    %v2941 = vadd.f32 %v2935, 1.0
    %v2942 = vrcp.pop %v2936
    %v2943 = vmul.f32 %v2936, %v2942
    %v2944 = vsub.f32 1.0, %v2943
    %v2945 = vmul.f32 %v2942, %v2944
    %v2946 = vadd.f32 %v2942, %v2945
    %vm2947 = vweird.f32 %v2936
    %vm2948 = vweird.f32 %v2942
    %vm2949 = vmor %vm2947, %vm2948
    %v2950 = vsel %vm2949, %v2942, %v2946
    %v2951 = vand.u32 2147483647, %v2936
    %vm2952 = vcmp.eq.f32.partialorder %v2951, 8.507059e+37
    %v2953 = vand.u32 %v2936, 2147483648
    %v2954 = vor.u32 1.1754944e-38, %v2953
    %v2955 = vsel %vm2952, %v2954, %v2950
    %v2956 = vmul.f32 1.0, %v2955
    %v2957 = vrcp.pop %v2937
    %v2958 = vmul.f32 %v2937, %v2957
    %v2959 = vsub.f32 1.0, %v2958
    %v2960 = vmul.f32 %v2957, %v2959
    %v2961 = vadd.f32 %v2957, %v2960
    %vm2962 = vweird.f32 %v2937
    %vm2963 = vweird.f32 %v2957
    %vm2964 = vmor %vm2962, %vm2963
    %v2965 = vsel %vm2964, %v2957, %v2961
    %v2966 = vand.u32 2147483647, %v2937
    %vm2967 = vcmp.eq.f32.partialorder %v2966, 8.507059e+37
    %v2968 = vand.u32 %v2937, 2147483648
    %v2969 = vor.u32 1.1754944e-38, %v2968
    %v2970 = vsel %vm2967, %v2969, %v2965
    %v2971 = vmul.f32 1.0, %v2970
    %v2972 = vrcp.pop %v2938
    %v2973 = vmul.f32 %v2938, %v2972
    %v2974 = vsub.f32 1.0, %v2973
    %v2975 = vmul.f32 %v2972, %v2974
    %v2976 = vadd.f32 %v2972, %v2975
    %vm2977 = vweird.f32 %v2938
    %vm2978 = vweird.f32 %v2972
    %vm2979 = vmor %vm2977, %vm2978
    %v2980 = vsel %vm2979, %v2972, %v2976
    %v2981 = vand.u32 2147483647, %v2938
    %vm2982 = vcmp.eq.f32.partialorder %v2981, 8.507059e+37
    %v2983 = vand.u32 %v2938, 2147483648
    %v2984 = vor.u32 1.1754944e-38, %v2983
    %v2985 = vsel %vm2982, %v2984, %v2980
    %v2986 = vmul.f32 1.0, %v2985
    %v2987 = vrcp.pop %v2939
    %v2988 = vmul.f32 %v2939, %v2987
    %v2989 = vsub.f32 1.0, %v2988
    %v2990 = vmul.f32 %v2987, %v2989
    %v2991 = vadd.f32 %v2987, %v2990
    %vm2992 = vweird.f32 %v2939
    %vm2993 = vweird.f32 %v2987
    %vm2994 = vmor %vm2992, %vm2993
    %v2995 = vsel %vm2994, %v2987, %v2991
    %v2996 = vand.u32 2147483647, %v2939
    %vm2997 = vcmp.eq.f32.partialorder %v2996, 8.507059e+37
    %v2998 = vand.u32 %v2939, 2147483648
    %v2999 = vor.u32 1.1754944e-38, %v2998
    %v3000 = vsel %vm2997, %v2999, %v2995
    %v3001 = vmul.f32 1.0, %v3000
    %v3002 = vrcp.pop %v2940
    %v3003 = vmul.f32 %v2940, %v3002
    %v3004 = vsub.f32 1.0, %v3003
    %v3005 = vmul.f32 %v3002, %v3004
    %v3006 = vadd.f32 %v3002, %v3005
    %vm3007 = vweird.f32 %v2940
    %vm3008 = vweird.f32 %v3002
    %vm3009 = vmor %vm3007, %vm3008
    %v3010 = vsel %vm3009, %v3002, %v3006
    %v3011 = vand.u32 2147483647, %v2940
    %vm3012 = vcmp.eq.f32.partialorder %v3011, 8.507059e+37
    %v3013 = vand.u32 %v2940, 2147483648
    %v3014 = vor.u32 1.1754944e-38, %v3013
    %v3015 = vsel %vm3012, %v3014, %v3010
    %v3016 = vmul.f32 1.0, %v3015
    %v3017 = vrcp.pop %v2941
    %v3018 = vmul.f32 %v2941, %v3017
    %v3019 = vsub.f32 1.0, %v3018
    %v3020 = vmul.f32 %v3017, %v3019
    %v3021 = vadd.f32 %v3017, %v3020
    %vm3022 = vweird.f32 %v2941
    %vm3023 = vweird.f32 %v3017
    %vm3024 = vmor %vm3022, %vm3023
    %v3025 = vsel %vm3024, %v3017, %v3021
    %v3026 = vand.u32 2147483647, %v2941
    %vm3027 = vcmp.eq.f32.partialorder %v3026, 8.507059e+37
    %v3028 = vand.u32 %v2941, 2147483648
    %v3029 = vor.u32 1.1754944e-38, %v3028
    %v3030 = vsel %vm3027, %v3029, %v3025
    %v3031 = vmul.f32 1.0, %v3030
    %v3032 = vmax.f32 %v2916, 0.0
    %v3033 = vmax.f32 %v2917, 0.0
    %v3036 = vrot.slane %v2578, 6
    %v3037 = vrot.slane %v2579, 6
    %v3040 = vmul.f32 %v2986, %v3036
    %v3041 = vmul.f32 %v3001, %v3037
    %v3042 = vmul.f32 %v2956, %v3032
    %v3043 = vmul.f32 %v2971, %v3033
    %v3044 = vadd.f32 %v3040, %v3042
    %v3045 = vadd.f32 %v3041, %v3043
    %v3046 = vmax.f32 %v3044, 0.0
    %v3047 = vmax.f32 %v3045, 0.0
    %v3048 = vmul.f32 %v3016, %v3046
    %v3049 = vmul.f32 %v3031, %v3047
    %3050 = vmatpush.msra.mxu0 %v321
    %3051 = vmatpush.msra.mxu0 %v313
    %3052 = vmatpush.msra.mxu0 %v305
    %3053 = vmatpush.msra.mxu0 %v297
    %3054 = vmatpush.msra.mxu0 %v289
    %3055 = vmatpush.msra.mxu0 %v281
    %3056 = vmatpush.msra.mxu0 %v273
    %3057 = vmatpush.msra.mxu0 %v265
    %3058 = vmatpush.msra.mxu0 %v257
    %3059 = vmatpush.msra.mxu0 %v249
    %3060 = vmatpush.msra.mxu0 %v241
    %3061 = vmatpush.msra.mxu0 %v233
    %3062 = vmatpush.msra.mxu0 %v225
    %3063 = vmatpush.msra.mxu0 %v217
    %3064 = vmatpush.msra.mxu0 %v209
    %3065 = vmatpush.msra.mxu0 %v201
    %3066 = vmatmul.f32.gmra.mxu0 %v3048
    %v3067 = vpop.f32.mrf.mxu0
    %v3068 = vadd.f32 0.0, %v3067
    %3069 = vdwg.mxu0
    %3070 = vmatpush.msra.mxu0 %v449
    %3071 = vmatpush.msra.mxu0 %v441
    %3072 = vmatpush.msra.mxu0 %v433
    %3073 = vmatpush.msra.mxu0 %v425
    %3074 = vmatpush.msra.mxu0 %v417
    %3075 = vmatpush.msra.mxu0 %v409
    %3076 = vmatpush.msra.mxu0 %v401
    %3077 = vmatpush.msra.mxu0 %v393
    %3078 = vmatpush.msra.mxu0 %v385
    %3079 = vmatpush.msra.mxu0 %v377
    %3080 = vmatpush.msra.mxu0 %v369
    %3081 = vmatpush.msra.mxu0 %v361
    %3082 = vmatpush.msra.mxu0 %v353
    %3083 = vmatpush.msra.mxu0 %v345
    %3084 = vmatpush.msra.mxu0 %v337
    %3085 = vmatpush.msra.mxu0 %v329
    %3086 = vmatmul.f32.gmra.mxu0 %v3049
    %v3087 = vpop.f32.mrf.mxu0
    %v3088 = vadd.f32 %v3068, %v3087
    %3089 = vdwg.mxu0
    %3090 = vmatpush.msra.mxu0 %v322
    %3091 = vmatpush.msra.mxu0 %v314
    %3092 = vmatpush.msra.mxu0 %v306
    %3093 = vmatpush.msra.mxu0 %v298
    %3094 = vmatpush.msra.mxu0 %v290
    %3095 = vmatpush.msra.mxu0 %v282
    %3096 = vmatpush.msra.mxu0 %v274
    %3097 = vmatpush.msra.mxu0 %v266
    %3098 = vmatpush.msra.mxu0 %v258
    %3099 = vmatpush.msra.mxu0 %v250
    %3100 = vmatpush.msra.mxu0 %v242
    %3101 = vmatpush.msra.mxu0 %v234
    %3102 = vmatpush.msra.mxu0 %v226
    %3103 = vmatpush.msra.mxu0 %v218
    %3104 = vmatpush.msra.mxu0 %v210
    %3105 = vmatpush.msra.mxu0 %v202
    %3106 = vmatmul.f32.gmra.mxu0 %v3048
    %v3107 = vpop.f32.mrf.mxu0
    %v3108 = vadd.f32 0.0, %v3107
    %3109 = vdwg.mxu0
    %3110 = vmatpush.msra.mxu0 %v450
    %3111 = vmatpush.msra.mxu0 %v442
    %3112 = vmatpush.msra.mxu0 %v434
    %3113 = vmatpush.msra.mxu0 %v426
    %3114 = vmatpush.msra.mxu0 %v418
    %3115 = vmatpush.msra.mxu0 %v410
    %3116 = vmatpush.msra.mxu0 %v402
    %3117 = vmatpush.msra.mxu0 %v394
    %3118 = vmatpush.msra.mxu0 %v386
    %3119 = vmatpush.msra.mxu0 %v378
    %3120 = vmatpush.msra.mxu0 %v370
    %3121 = vmatpush.msra.mxu0 %v362
    %3122 = vmatpush.msra.mxu0 %v354
    %3123 = vmatpush.msra.mxu0 %v346
    %3124 = vmatpush.msra.mxu0 %v338
    %3125 = vmatpush.msra.mxu0 %v330
    %3126 = vmatmul.f32.gmra.mxu0 %v3049
    %v3127 = vpop.f32.mrf.mxu0
    %v3128 = vadd.f32 %v3108, %v3127
    %3129 = vdwg.mxu0
    %3130 = vmatpush.msra.mxu0 %v323
    %3131 = vmatpush.msra.mxu0 %v315
    %3132 = vmatpush.msra.mxu0 %v307
    %3133 = vmatpush.msra.mxu0 %v299
    %3134 = vmatpush.msra.mxu0 %v291
    %3135 = vmatpush.msra.mxu0 %v283
    %3136 = vmatpush.msra.mxu0 %v275
    %3137 = vmatpush.msra.mxu0 %v267
    %3138 = vmatpush.msra.mxu0 %v259
    %3139 = vmatpush.msra.mxu0 %v251
    %3140 = vmatpush.msra.mxu0 %v243
    %3141 = vmatpush.msra.mxu0 %v235
    %3142 = vmatpush.msra.mxu0 %v227
    %3143 = vmatpush.msra.mxu0 %v219
    %3144 = vmatpush.msra.mxu0 %v211
    %3145 = vmatpush.msra.mxu0 %v203
    %3146 = vmatmul.f32.gmra.mxu0 %v3048
    %v3147 = vpop.f32.mrf.mxu0
    %v3148 = vadd.f32 0.0, %v3147
    %3149 = vdwg.mxu0
    %3150 = vmatpush.msra.mxu0 %v451
    %3151 = vmatpush.msra.mxu0 %v443
    %3152 = vmatpush.msra.mxu0 %v435
    %3153 = vmatpush.msra.mxu0 %v427
    %3154 = vmatpush.msra.mxu0 %v419
    %3155 = vmatpush.msra.mxu0 %v411
    %3156 = vmatpush.msra.mxu0 %v403
    %3157 = vmatpush.msra.mxu0 %v395
    %3158 = vmatpush.msra.mxu0 %v387
    %3159 = vmatpush.msra.mxu0 %v379
    %3160 = vmatpush.msra.mxu0 %v371
    %3161 = vmatpush.msra.mxu0 %v363
    %3162 = vmatpush.msra.mxu0 %v355
    %3163 = vmatpush.msra.mxu0 %v347
    %3164 = vmatpush.msra.mxu0 %v339
    %3165 = vmatpush.msra.mxu0 %v331
    %3166 = vmatmul.f32.gmra.mxu0 %v3049
    %v3167 = vpop.f32.mrf.mxu0
    %v3168 = vadd.f32 %v3148, %v3167
    %3169 = vdwg.mxu0
    %3170 = vmatpush.msra.mxu0 %v324
    %3171 = vmatpush.msra.mxu0 %v316
    %3172 = vmatpush.msra.mxu0 %v308
    %3173 = vmatpush.msra.mxu0 %v300
    %3174 = vmatpush.msra.mxu0 %v292
    %3175 = vmatpush.msra.mxu0 %v284
    %3176 = vmatpush.msra.mxu0 %v276
    %3177 = vmatpush.msra.mxu0 %v268
    %3178 = vmatpush.msra.mxu0 %v260
    %3179 = vmatpush.msra.mxu0 %v252
    %3180 = vmatpush.msra.mxu0 %v244
    %3181 = vmatpush.msra.mxu0 %v236
    %3182 = vmatpush.msra.mxu0 %v228
    %3183 = vmatpush.msra.mxu0 %v220
    %3184 = vmatpush.msra.mxu0 %v212
    %3185 = vmatpush.msra.mxu0 %v204
    %3186 = vmatmul.f32.gmra.mxu0 %v3048
    %v3187 = vpop.f32.mrf.mxu0
    %v3188 = vadd.f32 0.0, %v3187
    %3189 = vdwg.mxu0
    %3190 = vmatpush.msra.mxu0 %v452
    %3191 = vmatpush.msra.mxu0 %v444
    %3192 = vmatpush.msra.mxu0 %v436
    %3193 = vmatpush.msra.mxu0 %v428
    %3194 = vmatpush.msra.mxu0 %v420
    %3195 = vmatpush.msra.mxu0 %v412
    %3196 = vmatpush.msra.mxu0 %v404
    %3197 = vmatpush.msra.mxu0 %v396
    %3198 = vmatpush.msra.mxu0 %v388
    %3199 = vmatpush.msra.mxu0 %v380
    %3200 = vmatpush.msra.mxu0 %v372
    %3201 = vmatpush.msra.mxu0 %v364
    %3202 = vmatpush.msra.mxu0 %v356
    %3203 = vmatpush.msra.mxu0 %v348
    %3204 = vmatpush.msra.mxu0 %v340
    %3205 = vmatpush.msra.mxu0 %v332
    %3206 = vmatmul.f32.gmra.mxu0 %v3049
    %v3207 = vpop.f32.mrf.mxu0
    %v3208 = vadd.f32 %v3188, %v3207
    %3209 = vdwg.mxu0
    %3210 = vmatpush.msra.mxu0 %v325
    %3211 = vmatpush.msra.mxu0 %v317
    %3212 = vmatpush.msra.mxu0 %v309
    %3213 = vmatpush.msra.mxu0 %v301
    %3214 = vmatpush.msra.mxu0 %v293
    %3215 = vmatpush.msra.mxu0 %v285
    %3216 = vmatpush.msra.mxu0 %v277
    %3217 = vmatpush.msra.mxu0 %v269
    %3218 = vmatpush.msra.mxu0 %v261
    %3219 = vmatpush.msra.mxu0 %v253
    %3220 = vmatpush.msra.mxu0 %v245
    %3221 = vmatpush.msra.mxu0 %v237
    %3222 = vmatpush.msra.mxu0 %v229
    %3223 = vmatpush.msra.mxu0 %v221
    %3224 = vmatpush.msra.mxu0 %v213
    %3225 = vmatpush.msra.mxu0 %v205
    %3226 = vmatmul.f32.gmra.mxu0 %v3048
    %v3227 = vpop.f32.mrf.mxu0
    %v3228 = vadd.f32 0.0, %v3227
    %3229 = vdwg.mxu0
    %3230 = vmatpush.msra.mxu0 %v453
    %3231 = vmatpush.msra.mxu0 %v445
    %3232 = vmatpush.msra.mxu0 %v437
    %3233 = vmatpush.msra.mxu0 %v429
    %3234 = vmatpush.msra.mxu0 %v421
    %3235 = vmatpush.msra.mxu0 %v413
    %3236 = vmatpush.msra.mxu0 %v405
    %3237 = vmatpush.msra.mxu0 %v397
    %3238 = vmatpush.msra.mxu0 %v389
    %3239 = vmatpush.msra.mxu0 %v381
    %3240 = vmatpush.msra.mxu0 %v373
    %3241 = vmatpush.msra.mxu0 %v365
    %3242 = vmatpush.msra.mxu0 %v357
    %3243 = vmatpush.msra.mxu0 %v349
    %3244 = vmatpush.msra.mxu0 %v341
    %3245 = vmatpush.msra.mxu0 %v333
    %3246 = vmatmul.f32.gmra.mxu0 %v3049
    %v3247 = vpop.f32.mrf.mxu0
    %v3248 = vadd.f32 %v3228, %v3247
    %3249 = vdwg.mxu0
    %3250 = vmatpush.msra.mxu0 %v326
    %3251 = vmatpush.msra.mxu0 %v318
    %3252 = vmatpush.msra.mxu0 %v310
    %3253 = vmatpush.msra.mxu0 %v302
    %3254 = vmatpush.msra.mxu0 %v294
    %3255 = vmatpush.msra.mxu0 %v286
    %3256 = vmatpush.msra.mxu0 %v278
    %3257 = vmatpush.msra.mxu0 %v270
    %3258 = vmatpush.msra.mxu0 %v262
    %3259 = vmatpush.msra.mxu0 %v254
    %3260 = vmatpush.msra.mxu0 %v246
    %3261 = vmatpush.msra.mxu0 %v238
    %3262 = vmatpush.msra.mxu0 %v230
    %3263 = vmatpush.msra.mxu0 %v222
    %3264 = vmatpush.msra.mxu0 %v214
    %3265 = vmatpush.msra.mxu0 %v206
    %3266 = vmatmul.f32.gmra.mxu0 %v3048
    %v3267 = vpop.f32.mrf.mxu0
    %v3268 = vadd.f32 0.0, %v3267
    %3269 = vdwg.mxu0
    %3270 = vmatpush.msra.mxu0 %v454
    %3271 = vmatpush.msra.mxu0 %v446
    %3272 = vmatpush.msra.mxu0 %v438
    %3273 = vmatpush.msra.mxu0 %v430
    %3274 = vmatpush.msra.mxu0 %v422
    %3275 = vmatpush.msra.mxu0 %v414
    %3276 = vmatpush.msra.mxu0 %v406
    %3277 = vmatpush.msra.mxu0 %v398
    %3278 = vmatpush.msra.mxu0 %v390
    %3279 = vmatpush.msra.mxu0 %v382
    %3280 = vmatpush.msra.mxu0 %v374
    %3281 = vmatpush.msra.mxu0 %v366
    %3282 = vmatpush.msra.mxu0 %v358
    %3283 = vmatpush.msra.mxu0 %v350
    %3284 = vmatpush.msra.mxu0 %v342
    %3285 = vmatpush.msra.mxu0 %v334
    %3286 = vmatmul.f32.gmra.mxu0 %v3049
    %v3287 = vpop.f32.mrf.mxu0
    %v3288 = vadd.f32 %v3268, %v3287
    %3289 = vdwg.mxu0
    %3290 = vmatpush.msra.mxu0 %v327
    %3291 = vmatpush.msra.mxu0 %v319
    %3292 = vmatpush.msra.mxu0 %v311
    %3293 = vmatpush.msra.mxu0 %v303
    %3294 = vmatpush.msra.mxu0 %v295
    %3295 = vmatpush.msra.mxu0 %v287
    %3296 = vmatpush.msra.mxu0 %v279
    %3297 = vmatpush.msra.mxu0 %v271
    %3298 = vmatpush.msra.mxu0 %v263
    %3299 = vmatpush.msra.mxu0 %v255
    %3300 = vmatpush.msra.mxu0 %v247
    %3301 = vmatpush.msra.mxu0 %v239
    %3302 = vmatpush.msra.mxu0 %v231
    %3303 = vmatpush.msra.mxu0 %v223
    %3304 = vmatpush.msra.mxu0 %v215
    %3305 = vmatpush.msra.mxu0 %v207
    %3306 = vmatmul.f32.gmra.mxu0 %v3048
    %v3307 = vpop.f32.mrf.mxu0
    %v3308 = vadd.f32 0.0, %v3307
    %3309 = vdwg.mxu0
    %3310 = vmatpush.msra.mxu0 %v455
    %3311 = vmatpush.msra.mxu0 %v447
    %3312 = vmatpush.msra.mxu0 %v439
    %3313 = vmatpush.msra.mxu0 %v431
    %3314 = vmatpush.msra.mxu0 %v423
    %3315 = vmatpush.msra.mxu0 %v415
    %3316 = vmatpush.msra.mxu0 %v407
    %3317 = vmatpush.msra.mxu0 %v399
    %3318 = vmatpush.msra.mxu0 %v391
    %3319 = vmatpush.msra.mxu0 %v383
    %3320 = vmatpush.msra.mxu0 %v375
    %3321 = vmatpush.msra.mxu0 %v367
    %3322 = vmatpush.msra.mxu0 %v359
    %3323 = vmatpush.msra.mxu0 %v351
    %3324 = vmatpush.msra.mxu0 %v343
    %3325 = vmatpush.msra.mxu0 %v335
    %3326 = vmatmul.f32.gmra.mxu0 %v3049
    %v3327 = vpop.f32.mrf.mxu0
    %v3328 = vadd.f32 %v3308, %v3327
    %3329 = vdwg.mxu0
    %3330 = vmatpush.msra.mxu0 %v328
    %3331 = vmatpush.msra.mxu0 %v320
    %3332 = vmatpush.msra.mxu0 %v312
    %3333 = vmatpush.msra.mxu0 %v304
    %3334 = vmatpush.msra.mxu0 %v296
    %3335 = vmatpush.msra.mxu0 %v288
    %3336 = vmatpush.msra.mxu0 %v280
    %3337 = vmatpush.msra.mxu0 %v272
    %3338 = vmatpush.msra.mxu0 %v264
    %3339 = vmatpush.msra.mxu0 %v256
    %3340 = vmatpush.msra.mxu0 %v248
    %3341 = vmatpush.msra.mxu0 %v240
    %3342 = vmatpush.msra.mxu0 %v232
    %3343 = vmatpush.msra.mxu0 %v224
    %3344 = vmatpush.msra.mxu0 %v216
    %3345 = vmatpush.msra.mxu0 %v208
    %3346 = vmatmul.f32.gmra.mxu0 %v3048
    %v3347 = vpop.f32.mrf.mxu0
    %v3348 = vadd.f32 0.0, %v3347
    %3349 = vdwg.mxu0
    %3350 = vmatpush.msra.mxu0 %v456
    %3351 = vmatpush.msra.mxu0 %v448
    %3352 = vmatpush.msra.mxu0 %v440
    %3353 = vmatpush.msra.mxu0 %v432
    %3354 = vmatpush.msra.mxu0 %v424
    %3355 = vmatpush.msra.mxu0 %v416
    %3356 = vmatpush.msra.mxu0 %v408
    %3357 = vmatpush.msra.mxu0 %v400
    %3358 = vmatpush.msra.mxu0 %v392
    %3359 = vmatpush.msra.mxu0 %v384
    %3360 = vmatpush.msra.mxu0 %v376
    %3361 = vmatpush.msra.mxu0 %v368
    %3362 = vmatpush.msra.mxu0 %v360
    %3363 = vmatpush.msra.mxu0 %v352
    %3364 = vmatpush.msra.mxu0 %v344
    %3365 = vmatpush.msra.mxu0 %v336
    %3366 = vmatmul.f32.gmra.mxu0 %v3049
    %v3367 = vpop.f32.mrf.mxu0
    %v3368 = vadd.f32 %v3348, %v3367
    %3369 = vdwg.mxu0
    %v3378 = vrot.slane %v3088, 6
    %v3379 = vrot.slane %v3128, 6
    %v3380 = vrot.slane %v3168, 6
    %v3381 = vrot.slane %v3208, 6
    %v3382 = vrot.slane %v3248, 6
    %v3383 = vrot.slane %v3288, 6
    %v3384 = vrot.slane %v3328, 6
    %v3385 = vrot.slane %v3368, 6
    %v3394 = vadd.f32 %v503, %v3378
    %v3395 = vadd.f32 %v526, %v3379
    %v3396 = vadd.f32 %v549, %v3380
    %v3397 = vadd.f32 %v572, %v3381
    %v3398 = vadd.f32 %v595, %v3382
    %v3399 = vadd.f32 %v618, %v3383
    %v3400 = vadd.f32 %v641, %v3384
    %v3401 = vadd.f32 %v664, %v3385
    %v3402 = vxor.u32 %v3394, 2147483648
    %v3403 = vxor.u32 %v3395, 2147483648
    %v3404 = vxor.u32 %v3396, 2147483648
    %v3405 = vxor.u32 %v3397, 2147483648
    %v3406 = vxor.u32 %v3398, 2147483648
    %v3407 = vxor.u32 %v3399, 2147483648
    %v3408 = vmul.f32 %v3402, 1.442695
    %v3409 = vpow.pop %v3408
    %v3410 = vmul.f32 %v3403, 1.442695
    %v3411 = vpow.pop %v3410
    %v3412 = vmul.f32 %v3404, 1.442695
    %v3413 = vpow.pop %v3412
    %v3414 = vmul.f32 %v3405, 1.442695
    %v3415 = vpow.pop %v3414
    %v3416 = vmul.f32 %v3406, 1.442695
    %v3417 = vpow.pop %v3416
    %v3418 = vmul.f32 %v3407, 1.442695
    %v3419 = vpow.pop %v3418
    %v3420 = vadd.f32 %v3409, 1.0
    %v3421 = vadd.f32 %v3411, 1.0
    %v3422 = vadd.f32 %v3413, 1.0
    %v3423 = vadd.f32 %v3415, 1.0
    %v3424 = vadd.f32 %v3417, 1.0
    %v3425 = vadd.f32 %v3419, 1.0
    %v3426 = vrcp.pop %v3420
    %v3427 = vmul.f32 %v3420, %v3426
    %v3428 = vsub.f32 1.0, %v3427
    %v3429 = vmul.f32 %v3426, %v3428
    %v3430 = vadd.f32 %v3426, %v3429
    %vm3431 = vweird.f32 %v3420
    %vm3432 = vweird.f32 %v3426
    %vm3433 = vmor %vm3431, %vm3432
    %v3434 = vsel %vm3433, %v3426, %v3430
    %v3435 = vand.u32 2147483647, %v3420
    %vm3436 = vcmp.eq.f32.partialorder %v3435, 8.507059e+37
    %v3437 = vand.u32 %v3420, 2147483648
    %v3438 = vor.u32 1.1754944e-38, %v3437
    %v3439 = vsel %vm3436, %v3438, %v3434
    %v3440 = vmul.f32 1.0, %v3439
    %v3441 = vrcp.pop %v3421
    %v3442 = vmul.f32 %v3421, %v3441
    %v3443 = vsub.f32 1.0, %v3442
    %v3444 = vmul.f32 %v3441, %v3443
    %v3445 = vadd.f32 %v3441, %v3444
    %vm3446 = vweird.f32 %v3421
    %vm3447 = vweird.f32 %v3441
    %vm3448 = vmor %vm3446, %vm3447
    %v3449 = vsel %vm3448, %v3441, %v3445
    %v3450 = vand.u32 2147483647, %v3421
    %vm3451 = vcmp.eq.f32.partialorder %v3450, 8.507059e+37
    %v3452 = vand.u32 %v3421, 2147483648
    %v3453 = vor.u32 1.1754944e-38, %v3452
    %v3454 = vsel %vm3451, %v3453, %v3449
    %v3455 = vmul.f32 1.0, %v3454
    %v3456 = vrcp.pop %v3422
    %v3457 = vmul.f32 %v3422, %v3456
    %v3458 = vsub.f32 1.0, %v3457
    %v3459 = vmul.f32 %v3456, %v3458
    %v3460 = vadd.f32 %v3456, %v3459
    %vm3461 = vweird.f32 %v3422
    %vm3462 = vweird.f32 %v3456
    %vm3463 = vmor %vm3461, %vm3462
    %v3464 = vsel %vm3463, %v3456, %v3460
    %v3465 = vand.u32 2147483647, %v3422
    %vm3466 = vcmp.eq.f32.partialorder %v3465, 8.507059e+37
    %v3467 = vand.u32 %v3422, 2147483648
    %v3468 = vor.u32 1.1754944e-38, %v3467
    %v3469 = vsel %vm3466, %v3468, %v3464
    %v3470 = vmul.f32 1.0, %v3469
    %v3471 = vrcp.pop %v3423
    %v3472 = vmul.f32 %v3423, %v3471
    %v3473 = vsub.f32 1.0, %v3472
    %v3474 = vmul.f32 %v3471, %v3473
    %v3475 = vadd.f32 %v3471, %v3474
    %vm3476 = vweird.f32 %v3423
    %vm3477 = vweird.f32 %v3471
    %vm3478 = vmor %vm3476, %vm3477
    %v3479 = vsel %vm3478, %v3471, %v3475
    %v3480 = vand.u32 2147483647, %v3423
    %vm3481 = vcmp.eq.f32.partialorder %v3480, 8.507059e+37
    %v3482 = vand.u32 %v3423, 2147483648
    %v3483 = vor.u32 1.1754944e-38, %v3482
    %v3484 = vsel %vm3481, %v3483, %v3479
    %v3485 = vmul.f32 1.0, %v3484
    %v3486 = vrcp.pop %v3424
    %v3487 = vmul.f32 %v3424, %v3486
    %v3488 = vsub.f32 1.0, %v3487
    %v3489 = vmul.f32 %v3486, %v3488
    %v3490 = vadd.f32 %v3486, %v3489
    %vm3491 = vweird.f32 %v3424
    %vm3492 = vweird.f32 %v3486
    %vm3493 = vmor %vm3491, %vm3492
    %v3494 = vsel %vm3493, %v3486, %v3490
    %v3495 = vand.u32 2147483647, %v3424
    %vm3496 = vcmp.eq.f32.partialorder %v3495, 8.507059e+37
    %v3497 = vand.u32 %v3424, 2147483648
    %v3498 = vor.u32 1.1754944e-38, %v3497
    %v3499 = vsel %vm3496, %v3498, %v3494
    %v3500 = vmul.f32 1.0, %v3499
    %v3501 = vrcp.pop %v3425
    %v3502 = vmul.f32 %v3425, %v3501
    %v3503 = vsub.f32 1.0, %v3502
    %v3504 = vmul.f32 %v3501, %v3503
    %v3505 = vadd.f32 %v3501, %v3504
    %vm3506 = vweird.f32 %v3425
    %vm3507 = vweird.f32 %v3501
    %vm3508 = vmor %vm3506, %vm3507
    %v3509 = vsel %vm3508, %v3501, %v3505
    %v3510 = vand.u32 2147483647, %v3425
    %vm3511 = vcmp.eq.f32.partialorder %v3510, 8.507059e+37
    %v3512 = vand.u32 %v3425, 2147483648
    %v3513 = vor.u32 1.1754944e-38, %v3512
    %v3514 = vsel %vm3511, %v3513, %v3509
    %v3515 = vmul.f32 1.0, %v3514
    %v3516 = vmax.f32 %v3400, 0.0
    %v3517 = vmax.f32 %v3401, 0.0
    %v3520 = vrot.slane %v3044, 6
    %v3521 = vrot.slane %v3045, 6
    %v3524 = vmul.f32 %v3470, %v3520
    %v3525 = vmul.f32 %v3485, %v3521
    %v3526 = vmul.f32 %v3440, %v3516
    %v3527 = vmul.f32 %v3455, %v3517
    %v3528 = vadd.f32 %v3524, %v3526
    %v3529 = vadd.f32 %v3525, %v3527
    %v3530 = vmax.f32 %v3528, 0.0
    %v3531 = vmax.f32 %v3529, 0.0
    %v3532 = vmul.f32 %v3500, %v3530
    %v3533 = vmul.f32 %v3515, %v3531
    %v3536 = vrot.slane %v3532, 2
    %v3537 = vrot.slane %v3533, 2
    %3540 = vmatpush.msra.mxu0 %v321
    %3541 = vmatpush.msra.mxu0 %v313
    %3542 = vmatpush.msra.mxu0 %v305
    %3543 = vmatpush.msra.mxu0 %v297
    %3544 = vmatpush.msra.mxu0 %v289
    %3545 = vmatpush.msra.mxu0 %v281
    %3546 = vmatpush.msra.mxu0 %v273
    %3547 = vmatpush.msra.mxu0 %v265
    %3548 = vmatpush.msra.mxu0 %v257
    %3549 = vmatpush.msra.mxu0 %v249
    %3550 = vmatpush.msra.mxu0 %v241
    %3551 = vmatpush.msra.mxu0 %v233
    %3552 = vmatpush.msra.mxu0 %v225
    %3553 = vmatpush.msra.mxu0 %v217
    %3554 = vmatpush.msra.mxu0 %v209
    %3555 = vmatpush.msra.mxu0 %v201
    %3556 = vmatmul.f32.gmra.mxu0 %v3536
    %v3557 = vpop.f32.mrf.mxu0
    %v3558 = vadd.f32 0.0, %v3557
    %3559 = vdwg.mxu0
    %3560 = vmatpush.msra.mxu0 %v449
    %3561 = vmatpush.msra.mxu0 %v441
    %3562 = vmatpush.msra.mxu0 %v433
    %3563 = vmatpush.msra.mxu0 %v425
    %3564 = vmatpush.msra.mxu0 %v417
    %3565 = vmatpush.msra.mxu0 %v409
    %3566 = vmatpush.msra.mxu0 %v401
    %3567 = vmatpush.msra.mxu0 %v393
    %3568 = vmatpush.msra.mxu0 %v385
    %3569 = vmatpush.msra.mxu0 %v377
    %3570 = vmatpush.msra.mxu0 %v369
    %3571 = vmatpush.msra.mxu0 %v361
    %3572 = vmatpush.msra.mxu0 %v353
    %3573 = vmatpush.msra.mxu0 %v345
    %3574 = vmatpush.msra.mxu0 %v337
    %3575 = vmatpush.msra.mxu0 %v329
    %3576 = vmatmul.f32.gmra.mxu0 %v3537
    %v3577 = vpop.f32.mrf.mxu0
    %v3578 = vadd.f32 %v3558, %v3577
    %3579 = vdwg.mxu0
    %3580 = vmatpush.msra.mxu0 %v322
    %3581 = vmatpush.msra.mxu0 %v314
    %3582 = vmatpush.msra.mxu0 %v306
    %3583 = vmatpush.msra.mxu0 %v298
    %3584 = vmatpush.msra.mxu0 %v290
    %3585 = vmatpush.msra.mxu0 %v282
    %3586 = vmatpush.msra.mxu0 %v274
    %3587 = vmatpush.msra.mxu0 %v266
    %3588 = vmatpush.msra.mxu0 %v258
    %3589 = vmatpush.msra.mxu0 %v250
    %3590 = vmatpush.msra.mxu0 %v242
    %3591 = vmatpush.msra.mxu0 %v234
    %3592 = vmatpush.msra.mxu0 %v226
    %3593 = vmatpush.msra.mxu0 %v218
    %3594 = vmatpush.msra.mxu0 %v210
    %3595 = vmatpush.msra.mxu0 %v202
    %3596 = vmatmul.f32.gmra.mxu0 %v3536
    %v3597 = vpop.f32.mrf.mxu0
    %v3598 = vadd.f32 0.0, %v3597
    %3599 = vdwg.mxu0
    %3600 = vmatpush.msra.mxu0 %v450
    %3601 = vmatpush.msra.mxu0 %v442
    %3602 = vmatpush.msra.mxu0 %v434
    %3603 = vmatpush.msra.mxu0 %v426
    %3604 = vmatpush.msra.mxu0 %v418
    %3605 = vmatpush.msra.mxu0 %v410
    %3606 = vmatpush.msra.mxu0 %v402
    %3607 = vmatpush.msra.mxu0 %v394
    %3608 = vmatpush.msra.mxu0 %v386
    %3609 = vmatpush.msra.mxu0 %v378
    %3610 = vmatpush.msra.mxu0 %v370
    %3611 = vmatpush.msra.mxu0 %v362
    %3612 = vmatpush.msra.mxu0 %v354
    %3613 = vmatpush.msra.mxu0 %v346
    %3614 = vmatpush.msra.mxu0 %v338
    %3615 = vmatpush.msra.mxu0 %v330
    %3616 = vmatmul.f32.gmra.mxu0 %v3537
    %v3617 = vpop.f32.mrf.mxu0
    %v3618 = vadd.f32 %v3598, %v3617
    %3619 = vdwg.mxu0
    %3620 = vmatpush.msra.mxu0 %v323
    %3621 = vmatpush.msra.mxu0 %v315
    %3622 = vmatpush.msra.mxu0 %v307
    %3623 = vmatpush.msra.mxu0 %v299
    %3624 = vmatpush.msra.mxu0 %v291
    %3625 = vmatpush.msra.mxu0 %v283
    %3626 = vmatpush.msra.mxu0 %v275
    %3627 = vmatpush.msra.mxu0 %v267
    %3628 = vmatpush.msra.mxu0 %v259
    %3629 = vmatpush.msra.mxu0 %v251
    %3630 = vmatpush.msra.mxu0 %v243
    %3631 = vmatpush.msra.mxu0 %v235
    %3632 = vmatpush.msra.mxu0 %v227
    %3633 = vmatpush.msra.mxu0 %v219
    %3634 = vmatpush.msra.mxu0 %v211
    %3635 = vmatpush.msra.mxu0 %v203
    %3636 = vmatmul.f32.gmra.mxu0 %v3536
    %v3637 = vpop.f32.mrf.mxu0
    %v3638 = vadd.f32 0.0, %v3637
    %3639 = vdwg.mxu0
    %3640 = vmatpush.msra.mxu0 %v451
    %3641 = vmatpush.msra.mxu0 %v443
    %3642 = vmatpush.msra.mxu0 %v435
    %3643 = vmatpush.msra.mxu0 %v427
    %3644 = vmatpush.msra.mxu0 %v419
    %3645 = vmatpush.msra.mxu0 %v411
    %3646 = vmatpush.msra.mxu0 %v403
    %3647 = vmatpush.msra.mxu0 %v395
    %3648 = vmatpush.msra.mxu0 %v387
    %3649 = vmatpush.msra.mxu0 %v379
    %3650 = vmatpush.msra.mxu0 %v371
    %3651 = vmatpush.msra.mxu0 %v363
    %3652 = vmatpush.msra.mxu0 %v355
    %3653 = vmatpush.msra.mxu0 %v347
    %3654 = vmatpush.msra.mxu0 %v339
    %3655 = vmatpush.msra.mxu0 %v331
    %3656 = vmatmul.f32.gmra.mxu0 %v3537
    %v3657 = vpop.f32.mrf.mxu0
    %v3658 = vadd.f32 %v3638, %v3657
    %3659 = vdwg.mxu0
    %3660 = vmatpush.msra.mxu0 %v324
    %3661 = vmatpush.msra.mxu0 %v316
    %3662 = vmatpush.msra.mxu0 %v308
    %3663 = vmatpush.msra.mxu0 %v300
    %3664 = vmatpush.msra.mxu0 %v292
    %3665 = vmatpush.msra.mxu0 %v284
    %3666 = vmatpush.msra.mxu0 %v276
    %3667 = vmatpush.msra.mxu0 %v268
    %3668 = vmatpush.msra.mxu0 %v260
    %3669 = vmatpush.msra.mxu0 %v252
    %3670 = vmatpush.msra.mxu0 %v244
    %3671 = vmatpush.msra.mxu0 %v236
    %3672 = vmatpush.msra.mxu0 %v228
    %3673 = vmatpush.msra.mxu0 %v220
    %3674 = vmatpush.msra.mxu0 %v212
    %3675 = vmatpush.msra.mxu0 %v204
    %3676 = vmatmul.f32.gmra.mxu0 %v3536
    %v3677 = vpop.f32.mrf.mxu0
    %v3678 = vadd.f32 0.0, %v3677
    %3679 = vdwg.mxu0
    %3680 = vmatpush.msra.mxu0 %v452
    %3681 = vmatpush.msra.mxu0 %v444
    %3682 = vmatpush.msra.mxu0 %v436
    %3683 = vmatpush.msra.mxu0 %v428
    %3684 = vmatpush.msra.mxu0 %v420
    %3685 = vmatpush.msra.mxu0 %v412
    %3686 = vmatpush.msra.mxu0 %v404
    %3687 = vmatpush.msra.mxu0 %v396
    %3688 = vmatpush.msra.mxu0 %v388
    %3689 = vmatpush.msra.mxu0 %v380
    %3690 = vmatpush.msra.mxu0 %v372
    %3691 = vmatpush.msra.mxu0 %v364
    %3692 = vmatpush.msra.mxu0 %v356
    %3693 = vmatpush.msra.mxu0 %v348
    %3694 = vmatpush.msra.mxu0 %v340
    %3695 = vmatpush.msra.mxu0 %v332
    %3696 = vmatmul.f32.gmra.mxu0 %v3537
    %v3697 = vpop.f32.mrf.mxu0
    %v3698 = vadd.f32 %v3678, %v3697
    %3699 = vdwg.mxu0
    %3700 = vmatpush.msra.mxu0 %v325
    %3701 = vmatpush.msra.mxu0 %v317
    %3702 = vmatpush.msra.mxu0 %v309
    %3703 = vmatpush.msra.mxu0 %v301
    %3704 = vmatpush.msra.mxu0 %v293
    %3705 = vmatpush.msra.mxu0 %v285
    %3706 = vmatpush.msra.mxu0 %v277
    %3707 = vmatpush.msra.mxu0 %v269
    %3708 = vmatpush.msra.mxu0 %v261
    %3709 = vmatpush.msra.mxu0 %v253
    %3710 = vmatpush.msra.mxu0 %v245
    %3711 = vmatpush.msra.mxu0 %v237
    %3712 = vmatpush.msra.mxu0 %v229
    %3713 = vmatpush.msra.mxu0 %v221
    %3714 = vmatpush.msra.mxu0 %v213
    %3715 = vmatpush.msra.mxu0 %v205
    %3716 = vmatmul.f32.gmra.mxu0 %v3536
    %v3717 = vpop.f32.mrf.mxu0
    %v3718 = vadd.f32 0.0, %v3717
    %3719 = vdwg.mxu0
    %3720 = vmatpush.msra.mxu0 %v453
    %3721 = vmatpush.msra.mxu0 %v445
    %3722 = vmatpush.msra.mxu0 %v437
    %3723 = vmatpush.msra.mxu0 %v429
    %3724 = vmatpush.msra.mxu0 %v421
    %3725 = vmatpush.msra.mxu0 %v413
    %3726 = vmatpush.msra.mxu0 %v405
    %3727 = vmatpush.msra.mxu0 %v397
    %3728 = vmatpush.msra.mxu0 %v389
    %3729 = vmatpush.msra.mxu0 %v381
    %3730 = vmatpush.msra.mxu0 %v373
    %3731 = vmatpush.msra.mxu0 %v365
    %3732 = vmatpush.msra.mxu0 %v357
    %3733 = vmatpush.msra.mxu0 %v349
    %3734 = vmatpush.msra.mxu0 %v341
    %3735 = vmatpush.msra.mxu0 %v333
    %3736 = vmatmul.f32.gmra.mxu0 %v3537
    %v3737 = vpop.f32.mrf.mxu0
    %v3738 = vadd.f32 %v3718, %v3737
    %3739 = vdwg.mxu0
    %3740 = vmatpush.msra.mxu0 %v326
    %3741 = vmatpush.msra.mxu0 %v318
    %3742 = vmatpush.msra.mxu0 %v310
    %3743 = vmatpush.msra.mxu0 %v302
    %3744 = vmatpush.msra.mxu0 %v294
    %3745 = vmatpush.msra.mxu0 %v286
    %3746 = vmatpush.msra.mxu0 %v278
    %3747 = vmatpush.msra.mxu0 %v270
    %3748 = vmatpush.msra.mxu0 %v262
    %3749 = vmatpush.msra.mxu0 %v254
    %3750 = vmatpush.msra.mxu0 %v246
    %3751 = vmatpush.msra.mxu0 %v238
    %3752 = vmatpush.msra.mxu0 %v230
    %3753 = vmatpush.msra.mxu0 %v222
    %3754 = vmatpush.msra.mxu0 %v214
    %3755 = vmatpush.msra.mxu0 %v206
    %3756 = vmatmul.f32.gmra.mxu0 %v3536
    %v3757 = vpop.f32.mrf.mxu0
    %v3758 = vadd.f32 0.0, %v3757
    %3759 = vdwg.mxu0
    %3760 = vmatpush.msra.mxu0 %v454
    %3761 = vmatpush.msra.mxu0 %v446
    %3762 = vmatpush.msra.mxu0 %v438
    %3763 = vmatpush.msra.mxu0 %v430
    %3764 = vmatpush.msra.mxu0 %v422
    %3765 = vmatpush.msra.mxu0 %v414
    %3766 = vmatpush.msra.mxu0 %v406
    %3767 = vmatpush.msra.mxu0 %v398
    %3768 = vmatpush.msra.mxu0 %v390
    %3769 = vmatpush.msra.mxu0 %v382
    %3770 = vmatpush.msra.mxu0 %v374
    %3771 = vmatpush.msra.mxu0 %v366
    %3772 = vmatpush.msra.mxu0 %v358
    %3773 = vmatpush.msra.mxu0 %v350
    %3774 = vmatpush.msra.mxu0 %v342
    %3775 = vmatpush.msra.mxu0 %v334
    %3776 = vmatmul.f32.gmra.mxu0 %v3537
    %v3777 = vpop.f32.mrf.mxu0
    %v3778 = vadd.f32 %v3758, %v3777
    %3779 = vdwg.mxu0
    %3780 = vmatpush.msra.mxu0 %v327
    %3781 = vmatpush.msra.mxu0 %v319
    %3782 = vmatpush.msra.mxu0 %v311
    %3783 = vmatpush.msra.mxu0 %v303
    %3784 = vmatpush.msra.mxu0 %v295
    %3785 = vmatpush.msra.mxu0 %v287
    %3786 = vmatpush.msra.mxu0 %v279
    %3787 = vmatpush.msra.mxu0 %v271
    %3788 = vmatpush.msra.mxu0 %v263
    %3789 = vmatpush.msra.mxu0 %v255
    %3790 = vmatpush.msra.mxu0 %v247
    %3791 = vmatpush.msra.mxu0 %v239
    %3792 = vmatpush.msra.mxu0 %v231
    %3793 = vmatpush.msra.mxu0 %v223
    %3794 = vmatpush.msra.mxu0 %v215
    %3795 = vmatpush.msra.mxu0 %v207
    %3796 = vmatmul.f32.gmra.mxu0 %v3536
    %v3797 = vpop.f32.mrf.mxu0
    %v3798 = vadd.f32 0.0, %v3797
    %3799 = vdwg.mxu0
    %3800 = vmatpush.msra.mxu0 %v455
    %3801 = vmatpush.msra.mxu0 %v447
    %3802 = vmatpush.msra.mxu0 %v439
    %3803 = vmatpush.msra.mxu0 %v431
    %3804 = vmatpush.msra.mxu0 %v423
    %3805 = vmatpush.msra.mxu0 %v415
    %3806 = vmatpush.msra.mxu0 %v407
    %3807 = vmatpush.msra.mxu0 %v399
    %3808 = vmatpush.msra.mxu0 %v391
    %3809 = vmatpush.msra.mxu0 %v383
    %3810 = vmatpush.msra.mxu0 %v375
    %3811 = vmatpush.msra.mxu0 %v367
    %3812 = vmatpush.msra.mxu0 %v359
    %3813 = vmatpush.msra.mxu0 %v351
    %3814 = vmatpush.msra.mxu0 %v343
    %3815 = vmatpush.msra.mxu0 %v335
    %3816 = vmatmul.f32.gmra.mxu0 %v3537
    %v3817 = vpop.f32.mrf.mxu0
    %v3818 = vadd.f32 %v3798, %v3817
    %3819 = vdwg.mxu0
    %3820 = vmatpush.msra.mxu0 %v328
    %3821 = vmatpush.msra.mxu0 %v320
    %3822 = vmatpush.msra.mxu0 %v312
    %3823 = vmatpush.msra.mxu0 %v304
    %3824 = vmatpush.msra.mxu0 %v296
    %3825 = vmatpush.msra.mxu0 %v288
    %3826 = vmatpush.msra.mxu0 %v280
    %3827 = vmatpush.msra.mxu0 %v272
    %3828 = vmatpush.msra.mxu0 %v264
    %3829 = vmatpush.msra.mxu0 %v256
    %3830 = vmatpush.msra.mxu0 %v248
    %3831 = vmatpush.msra.mxu0 %v240
    %3832 = vmatpush.msra.mxu0 %v232
    %3833 = vmatpush.msra.mxu0 %v224
    %3834 = vmatpush.msra.mxu0 %v216
    %3835 = vmatpush.msra.mxu0 %v208
    %3836 = vmatmul.f32.gmra.mxu0 %v3536
    %v3837 = vpop.f32.mrf.mxu0
    %v3838 = vadd.f32 0.0, %v3837
    %3839 = vdwg.mxu0
    %3840 = vmatpush.msra.mxu0 %v456
    %3841 = vmatpush.msra.mxu0 %v448
    %3842 = vmatpush.msra.mxu0 %v440
    %3843 = vmatpush.msra.mxu0 %v432
    %3844 = vmatpush.msra.mxu0 %v424
    %3845 = vmatpush.msra.mxu0 %v416
    %3846 = vmatpush.msra.mxu0 %v408
    %3847 = vmatpush.msra.mxu0 %v400
    %3848 = vmatpush.msra.mxu0 %v392
    %3849 = vmatpush.msra.mxu0 %v384
    %3850 = vmatpush.msra.mxu0 %v376
    %3851 = vmatpush.msra.mxu0 %v368
    %3852 = vmatpush.msra.mxu0 %v360
    %3853 = vmatpush.msra.mxu0 %v352
    %3854 = vmatpush.msra.mxu0 %v344
    %3855 = vmatpush.msra.mxu0 %v336
    %3856 = vmatmul.f32.gmra.mxu0 %v3537
    %v3857 = vpop.f32.mrf.mxu0
    %v3858 = vadd.f32 %v3838, %v3857
    %3859 = vdwg.mxu0
    %v3868 = vrot.slane %v3578, 4
    %v3869 = vrot.slane %v3618, 4
    %v3870 = vrot.slane %v3658, 4
    %v3871 = vrot.slane %v3698, 4
    %v3872 = vrot.slane %v3738, 4
    %v3873 = vrot.slane %v3778, 4
    %v3874 = vrot.slane %v3818, 4
    %v3875 = vrot.slane %v3858, 4
    %v3884 = vadd.f32 %v503, %v3868
    %v3885 = vadd.f32 %v526, %v3869
    %v3886 = vadd.f32 %v549, %v3870
    %v3887 = vadd.f32 %v572, %v3871
    %v3888 = vadd.f32 %v595, %v3872
    %v3889 = vadd.f32 %v618, %v3873
    %v3890 = vadd.f32 %v641, %v3874
    %v3891 = vadd.f32 %v664, %v3875
    %v3892 = vxor.u32 %v3884, 2147483648
    %v3893 = vxor.u32 %v3885, 2147483648
    %v3894 = vxor.u32 %v3886, 2147483648
    %v3895 = vxor.u32 %v3887, 2147483648
    %v3896 = vxor.u32 %v3888, 2147483648
    %v3897 = vxor.u32 %v3889, 2147483648
    %v3898 = vmul.f32 %v3892, 1.442695
    %v3899 = vpow.pop %v3898
    %v3900 = vmul.f32 %v3893, 1.442695
    %v3901 = vpow.pop %v3900
    %v3902 = vmul.f32 %v3894, 1.442695
    %v3903 = vpow.pop %v3902
    %v3904 = vmul.f32 %v3895, 1.442695
    %v3905 = vpow.pop %v3904
    %v3906 = vmul.f32 %v3896, 1.442695
    %v3907 = vpow.pop %v3906
    %v3908 = vmul.f32 %v3897, 1.442695
    %v3909 = vpow.pop %v3908
    %v3910 = vadd.f32 %v3899, 1.0
    %v3911 = vadd.f32 %v3901, 1.0
    %v3912 = vadd.f32 %v3903, 1.0
    %v3913 = vadd.f32 %v3905, 1.0
    %v3914 = vadd.f32 %v3907, 1.0
    %v3915 = vadd.f32 %v3909, 1.0
    %v3916 = vrcp.pop %v3910
    %v3917 = vmul.f32 %v3910, %v3916
    %v3918 = vsub.f32 1.0, %v3917
    %v3919 = vmul.f32 %v3916, %v3918
    %v3920 = vadd.f32 %v3916, %v3919
    %vm3921 = vweird.f32 %v3910
    %vm3922 = vweird.f32 %v3916
    %vm3923 = vmor %vm3921, %vm3922
    %v3924 = vsel %vm3923, %v3916, %v3920
    %v3925 = vand.u32 2147483647, %v3910
    %vm3926 = vcmp.eq.f32.partialorder %v3925, 8.507059e+37
    %v3927 = vand.u32 %v3910, 2147483648
    %v3928 = vor.u32 1.1754944e-38, %v3927
    %v3929 = vsel %vm3926, %v3928, %v3924
    %v3930 = vmul.f32 1.0, %v3929
    %v3931 = vrcp.pop %v3911
    %v3932 = vmul.f32 %v3911, %v3931
    %v3933 = vsub.f32 1.0, %v3932
    %v3934 = vmul.f32 %v3931, %v3933
    %v3935 = vadd.f32 %v3931, %v3934
    %vm3936 = vweird.f32 %v3911
    %vm3937 = vweird.f32 %v3931
    %vm3938 = vmor %vm3936, %vm3937
    %v3939 = vsel %vm3938, %v3931, %v3935
    %v3940 = vand.u32 2147483647, %v3911
    %vm3941 = vcmp.eq.f32.partialorder %v3940, 8.507059e+37
    %v3942 = vand.u32 %v3911, 2147483648
    %v3943 = vor.u32 1.1754944e-38, %v3942
    %v3944 = vsel %vm3941, %v3943, %v3939
    %v3945 = vmul.f32 1.0, %v3944
    %v3946 = vrcp.pop %v3912
    %v3947 = vmul.f32 %v3912, %v3946
    %v3948 = vsub.f32 1.0, %v3947
    %v3949 = vmul.f32 %v3946, %v3948
    %v3950 = vadd.f32 %v3946, %v3949
    %vm3951 = vweird.f32 %v3912
    %vm3952 = vweird.f32 %v3946
    %vm3953 = vmor %vm3951, %vm3952
    %v3954 = vsel %vm3953, %v3946, %v3950
    %v3955 = vand.u32 2147483647, %v3912
    %vm3956 = vcmp.eq.f32.partialorder %v3955, 8.507059e+37
    %v3957 = vand.u32 %v3912, 2147483648
    %v3958 = vor.u32 1.1754944e-38, %v3957
    %v3959 = vsel %vm3956, %v3958, %v3954
    %v3960 = vmul.f32 1.0, %v3959
    %v3961 = vrcp.pop %v3913
    %v3962 = vmul.f32 %v3913, %v3961
    %v3963 = vsub.f32 1.0, %v3962
    %v3964 = vmul.f32 %v3961, %v3963
    %v3965 = vadd.f32 %v3961, %v3964
    %vm3966 = vweird.f32 %v3913
    %vm3967 = vweird.f32 %v3961
    %vm3968 = vmor %vm3966, %vm3967
    %v3969 = vsel %vm3968, %v3961, %v3965
    %v3970 = vand.u32 2147483647, %v3913
    %vm3971 = vcmp.eq.f32.partialorder %v3970, 8.507059e+37
    %v3972 = vand.u32 %v3913, 2147483648
    %v3973 = vor.u32 1.1754944e-38, %v3972
    %v3974 = vsel %vm3971, %v3973, %v3969
    %v3975 = vmul.f32 1.0, %v3974
    %v3976 = vrcp.pop %v3914
    %v3977 = vmul.f32 %v3914, %v3976
    %v3978 = vsub.f32 1.0, %v3977
    %v3979 = vmul.f32 %v3976, %v3978
    %v3980 = vadd.f32 %v3976, %v3979
    %vm3981 = vweird.f32 %v3914
    %vm3982 = vweird.f32 %v3976
    %vm3983 = vmor %vm3981, %vm3982
    %v3984 = vsel %vm3983, %v3976, %v3980
    %v3985 = vand.u32 2147483647, %v3914
    %vm3986 = vcmp.eq.f32.partialorder %v3985, 8.507059e+37
    %v3987 = vand.u32 %v3914, 2147483648
    %v3988 = vor.u32 1.1754944e-38, %v3987
    %v3989 = vsel %vm3986, %v3988, %v3984
    %v3990 = vmul.f32 1.0, %v3989
    %v3991 = vrcp.pop %v3915
    %v3992 = vmul.f32 %v3915, %v3991
    %v3993 = vsub.f32 1.0, %v3992
    %v3994 = vmul.f32 %v3991, %v3993
    %v3995 = vadd.f32 %v3991, %v3994
    %vm3996 = vweird.f32 %v3915
    %vm3997 = vweird.f32 %v3991
    %vm3998 = vmor %vm3996, %vm3997
    %v3999 = vsel %vm3998, %v3991, %v3995
    %v4000 = vand.u32 2147483647, %v3915
    %vm4001 = vcmp.eq.f32.partialorder %v4000, 8.507059e+37
    %v4002 = vand.u32 %v3915, 2147483648
    %v4003 = vor.u32 1.1754944e-38, %v4002
    %v4004 = vsel %vm4001, %v4003, %v3999
    %v4005 = vmul.f32 1.0, %v4004
    %v4006 = vmax.f32 %v3890, 0.0
    %v4007 = vmax.f32 %v3891, 0.0
    %v4010 = vrot.slane %v3528, 6
    %v4011 = vrot.slane %v3529, 6
    %v4014 = vmul.f32 %v3960, %v4010
    %v4015 = vmul.f32 %v3975, %v4011
    %v4016 = vmul.f32 %v3930, %v4006
    %v4017 = vmul.f32 %v3945, %v4007
    %v4018 = vadd.f32 %v4014, %v4016
    %v4019 = vadd.f32 %v4015, %v4017
    %v4020 = vmax.f32 %v4018, 0.0
    %v4021 = vmax.f32 %v4019, 0.0
    %v4022 = vmul.f32 %v3990, %v4020
    %v4023 = vmul.f32 %v4005, %v4021
    %v4026 = vrot.slane %v4022, 4
    %v4027 = vrot.slane %v4023, 4
    %4030 = vmatpush.msra.mxu0 %v321
    %4031 = vmatpush.msra.mxu0 %v313
    %4032 = vmatpush.msra.mxu0 %v305
    %4033 = vmatpush.msra.mxu0 %v297
    %4034 = vmatpush.msra.mxu0 %v289
    %4035 = vmatpush.msra.mxu0 %v281
    %4036 = vmatpush.msra.mxu0 %v273
    %4037 = vmatpush.msra.mxu0 %v265
    %4038 = vmatpush.msra.mxu0 %v257
    %4039 = vmatpush.msra.mxu0 %v249
    %4040 = vmatpush.msra.mxu0 %v241
    %4041 = vmatpush.msra.mxu0 %v233
    %4042 = vmatpush.msra.mxu0 %v225
    %4043 = vmatpush.msra.mxu0 %v217
    %4044 = vmatpush.msra.mxu0 %v209
    %4045 = vmatpush.msra.mxu0 %v201
    %4046 = vmatmul.f32.gmra.mxu0 %v4026
    %v4047 = vpop.f32.mrf.mxu0
    %v4048 = vadd.f32 0.0, %v4047
    %4049 = vdwg.mxu0
    %4050 = vmatpush.msra.mxu0 %v449
    %4051 = vmatpush.msra.mxu0 %v441
    %4052 = vmatpush.msra.mxu0 %v433
    %4053 = vmatpush.msra.mxu0 %v425
    %4054 = vmatpush.msra.mxu0 %v417
    %4055 = vmatpush.msra.mxu0 %v409
    %4056 = vmatpush.msra.mxu0 %v401
    %4057 = vmatpush.msra.mxu0 %v393
    %4058 = vmatpush.msra.mxu0 %v385
    %4059 = vmatpush.msra.mxu0 %v377
    %4060 = vmatpush.msra.mxu0 %v369
    %4061 = vmatpush.msra.mxu0 %v361
    %4062 = vmatpush.msra.mxu0 %v353
    %4063 = vmatpush.msra.mxu0 %v345
    %4064 = vmatpush.msra.mxu0 %v337
    %4065 = vmatpush.msra.mxu0 %v329
    %4066 = vmatmul.f32.gmra.mxu0 %v4027
    %v4067 = vpop.f32.mrf.mxu0
    %v4068 = vadd.f32 %v4048, %v4067
    %4069 = vdwg.mxu0
    %4070 = vmatpush.msra.mxu0 %v322
    %4071 = vmatpush.msra.mxu0 %v314
    %4072 = vmatpush.msra.mxu0 %v306
    %4073 = vmatpush.msra.mxu0 %v298
    %4074 = vmatpush.msra.mxu0 %v290
    %4075 = vmatpush.msra.mxu0 %v282
    %4076 = vmatpush.msra.mxu0 %v274
    %4077 = vmatpush.msra.mxu0 %v266
    %4078 = vmatpush.msra.mxu0 %v258
    %4079 = vmatpush.msra.mxu0 %v250
    %4080 = vmatpush.msra.mxu0 %v242
    %4081 = vmatpush.msra.mxu0 %v234
    %4082 = vmatpush.msra.mxu0 %v226
    %4083 = vmatpush.msra.mxu0 %v218
    %4084 = vmatpush.msra.mxu0 %v210
    %4085 = vmatpush.msra.mxu0 %v202
    %4086 = vmatmul.f32.gmra.mxu0 %v4026
    %v4087 = vpop.f32.mrf.mxu0
    %v4088 = vadd.f32 0.0, %v4087
    %4089 = vdwg.mxu0
    %4090 = vmatpush.msra.mxu0 %v450
    %4091 = vmatpush.msra.mxu0 %v442
    %4092 = vmatpush.msra.mxu0 %v434
    %4093 = vmatpush.msra.mxu0 %v426
    %4094 = vmatpush.msra.mxu0 %v418
    %4095 = vmatpush.msra.mxu0 %v410
    %4096 = vmatpush.msra.mxu0 %v402
    %4097 = vmatpush.msra.mxu0 %v394
    %4098 = vmatpush.msra.mxu0 %v386
    %4099 = vmatpush.msra.mxu0 %v378
    %4100 = vmatpush.msra.mxu0 %v370
    %4101 = vmatpush.msra.mxu0 %v362
    %4102 = vmatpush.msra.mxu0 %v354
    %4103 = vmatpush.msra.mxu0 %v346
    %4104 = vmatpush.msra.mxu0 %v338
    %4105 = vmatpush.msra.mxu0 %v330
    %4106 = vmatmul.f32.gmra.mxu0 %v4027
    %v4107 = vpop.f32.mrf.mxu0
    %v4108 = vadd.f32 %v4088, %v4107
    %4109 = vdwg.mxu0
    %4110 = vmatpush.msra.mxu0 %v323
    %4111 = vmatpush.msra.mxu0 %v315
    %4112 = vmatpush.msra.mxu0 %v307
    %4113 = vmatpush.msra.mxu0 %v299
    %4114 = vmatpush.msra.mxu0 %v291
    %4115 = vmatpush.msra.mxu0 %v283
    %4116 = vmatpush.msra.mxu0 %v275
    %4117 = vmatpush.msra.mxu0 %v267
    %4118 = vmatpush.msra.mxu0 %v259
    %4119 = vmatpush.msra.mxu0 %v251
    %4120 = vmatpush.msra.mxu0 %v243
    %4121 = vmatpush.msra.mxu0 %v235
    %4122 = vmatpush.msra.mxu0 %v227
    %4123 = vmatpush.msra.mxu0 %v219
    %4124 = vmatpush.msra.mxu0 %v211
    %4125 = vmatpush.msra.mxu0 %v203
    %4126 = vmatmul.f32.gmra.mxu0 %v4026
    %v4127 = vpop.f32.mrf.mxu0
    %v4128 = vadd.f32 0.0, %v4127
    %4129 = vdwg.mxu0
    %4130 = vmatpush.msra.mxu0 %v451
    %4131 = vmatpush.msra.mxu0 %v443
    %4132 = vmatpush.msra.mxu0 %v435
    %4133 = vmatpush.msra.mxu0 %v427
    %4134 = vmatpush.msra.mxu0 %v419
    %4135 = vmatpush.msra.mxu0 %v411
    %4136 = vmatpush.msra.mxu0 %v403
    %4137 = vmatpush.msra.mxu0 %v395
    %4138 = vmatpush.msra.mxu0 %v387
    %4139 = vmatpush.msra.mxu0 %v379
    %4140 = vmatpush.msra.mxu0 %v371
    %4141 = vmatpush.msra.mxu0 %v363
    %4142 = vmatpush.msra.mxu0 %v355
    %4143 = vmatpush.msra.mxu0 %v347
    %4144 = vmatpush.msra.mxu0 %v339
    %4145 = vmatpush.msra.mxu0 %v331
    %4146 = vmatmul.f32.gmra.mxu0 %v4027
    %v4147 = vpop.f32.mrf.mxu0
    %v4148 = vadd.f32 %v4128, %v4147
    %4149 = vdwg.mxu0
    %4150 = vmatpush.msra.mxu0 %v324
    %4151 = vmatpush.msra.mxu0 %v316
    %4152 = vmatpush.msra.mxu0 %v308
    %4153 = vmatpush.msra.mxu0 %v300
    %4154 = vmatpush.msra.mxu0 %v292
    %4155 = vmatpush.msra.mxu0 %v284
    %4156 = vmatpush.msra.mxu0 %v276
    %4157 = vmatpush.msra.mxu0 %v268
    %4158 = vmatpush.msra.mxu0 %v260
    %4159 = vmatpush.msra.mxu0 %v252
    %4160 = vmatpush.msra.mxu0 %v244
    %4161 = vmatpush.msra.mxu0 %v236
    %4162 = vmatpush.msra.mxu0 %v228
    %4163 = vmatpush.msra.mxu0 %v220
    %4164 = vmatpush.msra.mxu0 %v212
    %4165 = vmatpush.msra.mxu0 %v204
    %4166 = vmatmul.f32.gmra.mxu0 %v4026
    %v4167 = vpop.f32.mrf.mxu0
    %v4168 = vadd.f32 0.0, %v4167
    %4169 = vdwg.mxu0
    %4170 = vmatpush.msra.mxu0 %v452
    %4171 = vmatpush.msra.mxu0 %v444
    %4172 = vmatpush.msra.mxu0 %v436
    %4173 = vmatpush.msra.mxu0 %v428
    %4174 = vmatpush.msra.mxu0 %v420
    %4175 = vmatpush.msra.mxu0 %v412
    %4176 = vmatpush.msra.mxu0 %v404
    %4177 = vmatpush.msra.mxu0 %v396
    %4178 = vmatpush.msra.mxu0 %v388
    %4179 = vmatpush.msra.mxu0 %v380
    %4180 = vmatpush.msra.mxu0 %v372
    %4181 = vmatpush.msra.mxu0 %v364
    %4182 = vmatpush.msra.mxu0 %v356
    %4183 = vmatpush.msra.mxu0 %v348
    %4184 = vmatpush.msra.mxu0 %v340
    %4185 = vmatpush.msra.mxu0 %v332
    %4186 = vmatmul.f32.gmra.mxu0 %v4027
    %v4187 = vpop.f32.mrf.mxu0
    %v4188 = vadd.f32 %v4168, %v4187
    %4189 = vdwg.mxu0
    %4190 = vmatpush.msra.mxu0 %v325
    %4191 = vmatpush.msra.mxu0 %v317
    %4192 = vmatpush.msra.mxu0 %v309
    %4193 = vmatpush.msra.mxu0 %v301
    %4194 = vmatpush.msra.mxu0 %v293
    %4195 = vmatpush.msra.mxu0 %v285
    %4196 = vmatpush.msra.mxu0 %v277
    %4197 = vmatpush.msra.mxu0 %v269
    %4198 = vmatpush.msra.mxu0 %v261
    %4199 = vmatpush.msra.mxu0 %v253
    %4200 = vmatpush.msra.mxu0 %v245
    %4201 = vmatpush.msra.mxu0 %v237
    %4202 = vmatpush.msra.mxu0 %v229
    %4203 = vmatpush.msra.mxu0 %v221
    %4204 = vmatpush.msra.mxu0 %v213
    %4205 = vmatpush.msra.mxu0 %v205
    %4206 = vmatmul.f32.gmra.mxu0 %v4026
    %v4207 = vpop.f32.mrf.mxu0
    %v4208 = vadd.f32 0.0, %v4207
    %4209 = vdwg.mxu0
    %4210 = vmatpush.msra.mxu0 %v453
    %4211 = vmatpush.msra.mxu0 %v445
    %4212 = vmatpush.msra.mxu0 %v437
    %4213 = vmatpush.msra.mxu0 %v429
    %4214 = vmatpush.msra.mxu0 %v421
    %4215 = vmatpush.msra.mxu0 %v413
    %4216 = vmatpush.msra.mxu0 %v405
    %4217 = vmatpush.msra.mxu0 %v397
    %4218 = vmatpush.msra.mxu0 %v389
    %4219 = vmatpush.msra.mxu0 %v381
    %4220 = vmatpush.msra.mxu0 %v373
    %4221 = vmatpush.msra.mxu0 %v365
    %4222 = vmatpush.msra.mxu0 %v357
    %4223 = vmatpush.msra.mxu0 %v349
    %4224 = vmatpush.msra.mxu0 %v341
    %4225 = vmatpush.msra.mxu0 %v333
    %4226 = vmatmul.f32.gmra.mxu0 %v4027
    %v4227 = vpop.f32.mrf.mxu0
    %v4228 = vadd.f32 %v4208, %v4227
    %4229 = vdwg.mxu0
    %4230 = vmatpush.msra.mxu0 %v326
    %4231 = vmatpush.msra.mxu0 %v318
    %4232 = vmatpush.msra.mxu0 %v310
    %4233 = vmatpush.msra.mxu0 %v302
    %4234 = vmatpush.msra.mxu0 %v294
    %4235 = vmatpush.msra.mxu0 %v286
    %4236 = vmatpush.msra.mxu0 %v278
    %4237 = vmatpush.msra.mxu0 %v270
    %4238 = vmatpush.msra.mxu0 %v262
    %4239 = vmatpush.msra.mxu0 %v254
    %4240 = vmatpush.msra.mxu0 %v246
    %4241 = vmatpush.msra.mxu0 %v238
    %4242 = vmatpush.msra.mxu0 %v230
    %4243 = vmatpush.msra.mxu0 %v222
    %4244 = vmatpush.msra.mxu0 %v214
    %4245 = vmatpush.msra.mxu0 %v206
    %4246 = vmatmul.f32.gmra.mxu0 %v4026
    %v4247 = vpop.f32.mrf.mxu0
    %v4248 = vadd.f32 0.0, %v4247
    %4249 = vdwg.mxu0
    %4250 = vmatpush.msra.mxu0 %v454
    %4251 = vmatpush.msra.mxu0 %v446
    %4252 = vmatpush.msra.mxu0 %v438
    %4253 = vmatpush.msra.mxu0 %v430
    %4254 = vmatpush.msra.mxu0 %v422
    %4255 = vmatpush.msra.mxu0 %v414
    %4256 = vmatpush.msra.mxu0 %v406
    %4257 = vmatpush.msra.mxu0 %v398
    %4258 = vmatpush.msra.mxu0 %v390
    %4259 = vmatpush.msra.mxu0 %v382
    %4260 = vmatpush.msra.mxu0 %v374
    %4261 = vmatpush.msra.mxu0 %v366
    %4262 = vmatpush.msra.mxu0 %v358
    %4263 = vmatpush.msra.mxu0 %v350
    %4264 = vmatpush.msra.mxu0 %v342
    %4265 = vmatpush.msra.mxu0 %v334
    %4266 = vmatmul.f32.gmra.mxu0 %v4027
    %v4267 = vpop.f32.mrf.mxu0
    %v4268 = vadd.f32 %v4248, %v4267
    %4269 = vdwg.mxu0
    %4270 = vmatpush.msra.mxu0 %v327
    %4271 = vmatpush.msra.mxu0 %v319
    %4272 = vmatpush.msra.mxu0 %v311
    %4273 = vmatpush.msra.mxu0 %v303
    %4274 = vmatpush.msra.mxu0 %v295
    %4275 = vmatpush.msra.mxu0 %v287
    %4276 = vmatpush.msra.mxu0 %v279
    %4277 = vmatpush.msra.mxu0 %v271
    %4278 = vmatpush.msra.mxu0 %v263
    %4279 = vmatpush.msra.mxu0 %v255
    %4280 = vmatpush.msra.mxu0 %v247
    %4281 = vmatpush.msra.mxu0 %v239
    %4282 = vmatpush.msra.mxu0 %v231
    %4283 = vmatpush.msra.mxu0 %v223
    %4284 = vmatpush.msra.mxu0 %v215
    %4285 = vmatpush.msra.mxu0 %v207
    %4286 = vmatmul.f32.gmra.mxu0 %v4026
    %v4287 = vpop.f32.mrf.mxu0
    %v4288 = vadd.f32 0.0, %v4287
    %4289 = vdwg.mxu0
    %4290 = vmatpush.msra.mxu0 %v455
    %4291 = vmatpush.msra.mxu0 %v447
    %4292 = vmatpush.msra.mxu0 %v439
    %4293 = vmatpush.msra.mxu0 %v431
    %4294 = vmatpush.msra.mxu0 %v423
    %4295 = vmatpush.msra.mxu0 %v415
    %4296 = vmatpush.msra.mxu0 %v407
    %4297 = vmatpush.msra.mxu0 %v399
    %4298 = vmatpush.msra.mxu0 %v391
    %4299 = vmatpush.msra.mxu0 %v383
    %4300 = vmatpush.msra.mxu0 %v375
    %4301 = vmatpush.msra.mxu0 %v367
    %4302 = vmatpush.msra.mxu0 %v359
    %4303 = vmatpush.msra.mxu0 %v351
    %4304 = vmatpush.msra.mxu0 %v343
    %4305 = vmatpush.msra.mxu0 %v335
    %4306 = vmatmul.f32.gmra.mxu0 %v4027
    %v4307 = vpop.f32.mrf.mxu0
    %v4308 = vadd.f32 %v4288, %v4307
    %4309 = vdwg.mxu0
    %4310 = vmatpush.msra.mxu0 %v328
    %4311 = vmatpush.msra.mxu0 %v320
    %4312 = vmatpush.msra.mxu0 %v312
    %4313 = vmatpush.msra.mxu0 %v304
    %4314 = vmatpush.msra.mxu0 %v296
    %4315 = vmatpush.msra.mxu0 %v288
    %4316 = vmatpush.msra.mxu0 %v280
    %4317 = vmatpush.msra.mxu0 %v272
    %4318 = vmatpush.msra.mxu0 %v264
    %4319 = vmatpush.msra.mxu0 %v256
    %4320 = vmatpush.msra.mxu0 %v248
    %4321 = vmatpush.msra.mxu0 %v240
    %4322 = vmatpush.msra.mxu0 %v232
    %4323 = vmatpush.msra.mxu0 %v224
    %4324 = vmatpush.msra.mxu0 %v216
    %4325 = vmatpush.msra.mxu0 %v208
    %4326 = vmatmul.f32.gmra.mxu0 %v4026
    %v4327 = vpop.f32.mrf.mxu0
    %v4328 = vadd.f32 0.0, %v4327
    %4329 = vdwg.mxu0
    %4330 = vmatpush.msra.mxu0 %v456
    %4331 = vmatpush.msra.mxu0 %v448
    %4332 = vmatpush.msra.mxu0 %v440
    %4333 = vmatpush.msra.mxu0 %v432
    %4334 = vmatpush.msra.mxu0 %v424
    %4335 = vmatpush.msra.mxu0 %v416
    %4336 = vmatpush.msra.mxu0 %v408
    %4337 = vmatpush.msra.mxu0 %v400
    %4338 = vmatpush.msra.mxu0 %v392
    %4339 = vmatpush.msra.mxu0 %v384
    %4340 = vmatpush.msra.mxu0 %v376
    %4341 = vmatpush.msra.mxu0 %v368
    %4342 = vmatpush.msra.mxu0 %v360
    %4343 = vmatpush.msra.mxu0 %v352
    %4344 = vmatpush.msra.mxu0 %v344
    %4345 = vmatpush.msra.mxu0 %v336
    %4346 = vmatmul.f32.gmra.mxu0 %v4027
    %v4347 = vpop.f32.mrf.mxu0
    %v4348 = vadd.f32 %v4328, %v4347
    %4349 = vdwg.mxu0
    %v4358 = vrot.slane %v4068, 2
    %v4359 = vrot.slane %v4108, 2
    %v4360 = vrot.slane %v4148, 2
    %v4361 = vrot.slane %v4188, 2
    %v4362 = vrot.slane %v4228, 2
    %v4363 = vrot.slane %v4268, 2
    %v4364 = vrot.slane %v4308, 2
    %v4365 = vrot.slane %v4348, 2
    %v4374 = vadd.f32 %v503, %v4358
    %v4375 = vadd.f32 %v526, %v4359
    %v4376 = vadd.f32 %v549, %v4360
    %v4377 = vadd.f32 %v572, %v4361
    %v4378 = vadd.f32 %v595, %v4362
    %v4379 = vadd.f32 %v618, %v4363
    %v4380 = vadd.f32 %v641, %v4364
    %v4381 = vadd.f32 %v664, %v4365
    %v4382 = vxor.u32 %v4374, 2147483648
    %v4383 = vxor.u32 %v4375, 2147483648
    %v4384 = vxor.u32 %v4376, 2147483648
    %v4385 = vxor.u32 %v4377, 2147483648
    %v4386 = vxor.u32 %v4378, 2147483648
    %v4387 = vxor.u32 %v4379, 2147483648
    %v4388 = vmul.f32 %v4382, 1.442695
    %v4389 = vpow.pop %v4388
    %v4390 = vmul.f32 %v4383, 1.442695
    %v4391 = vpow.pop %v4390
    %v4392 = vmul.f32 %v4384, 1.442695
    %v4393 = vpow.pop %v4392
    %v4394 = vmul.f32 %v4385, 1.442695
    %v4395 = vpow.pop %v4394
    %v4396 = vmul.f32 %v4386, 1.442695
    %v4397 = vpow.pop %v4396
    %v4398 = vmul.f32 %v4387, 1.442695
    %v4399 = vpow.pop %v4398
    %v4400 = vadd.f32 %v4389, 1.0
    %v4401 = vadd.f32 %v4391, 1.0
    %v4402 = vadd.f32 %v4393, 1.0
    %v4403 = vadd.f32 %v4395, 1.0
    %v4404 = vadd.f32 %v4397, 1.0
    %v4405 = vadd.f32 %v4399, 1.0
    %v4406 = vrcp.pop %v4400
    %v4407 = vmul.f32 %v4400, %v4406
    %v4408 = vsub.f32 1.0, %v4407
    %v4409 = vmul.f32 %v4406, %v4408
    %v4410 = vadd.f32 %v4406, %v4409
    %vm4411 = vweird.f32 %v4400
    %vm4412 = vweird.f32 %v4406
    %vm4413 = vmor %vm4411, %vm4412
    %v4414 = vsel %vm4413, %v4406, %v4410
    %v4415 = vand.u32 2147483647, %v4400
    %vm4416 = vcmp.eq.f32.partialorder %v4415, 8.507059e+37
    %v4417 = vand.u32 %v4400, 2147483648
    %v4418 = vor.u32 1.1754944e-38, %v4417
    %v4419 = vsel %vm4416, %v4418, %v4414
    %v4420 = vmul.f32 1.0, %v4419
    %v4421 = vrcp.pop %v4401
    %v4422 = vmul.f32 %v4401, %v4421
    %v4423 = vsub.f32 1.0, %v4422
    %v4424 = vmul.f32 %v4421, %v4423
    %v4425 = vadd.f32 %v4421, %v4424
    %vm4426 = vweird.f32 %v4401
    %vm4427 = vweird.f32 %v4421
    %vm4428 = vmor %vm4426, %vm4427
    %v4429 = vsel %vm4428, %v4421, %v4425
    %v4430 = vand.u32 2147483647, %v4401
    %vm4431 = vcmp.eq.f32.partialorder %v4430, 8.507059e+37
    %v4432 = vand.u32 %v4401, 2147483648
    %v4433 = vor.u32 1.1754944e-38, %v4432
    %v4434 = vsel %vm4431, %v4433, %v4429
    %v4435 = vmul.f32 1.0, %v4434
    %v4436 = vrcp.pop %v4402
    %v4437 = vmul.f32 %v4402, %v4436
    %v4438 = vsub.f32 1.0, %v4437
    %v4439 = vmul.f32 %v4436, %v4438
    %v4440 = vadd.f32 %v4436, %v4439
    %vm4441 = vweird.f32 %v4402
    %vm4442 = vweird.f32 %v4436
    %vm4443 = vmor %vm4441, %vm4442
    %v4444 = vsel %vm4443, %v4436, %v4440
    %v4445 = vand.u32 2147483647, %v4402
    %vm4446 = vcmp.eq.f32.partialorder %v4445, 8.507059e+37
    %v4447 = vand.u32 %v4402, 2147483648
    %v4448 = vor.u32 1.1754944e-38, %v4447
    %v4449 = vsel %vm4446, %v4448, %v4444
    %v4450 = vmul.f32 1.0, %v4449
    %v4451 = vrcp.pop %v4403
    %v4452 = vmul.f32 %v4403, %v4451
    %v4453 = vsub.f32 1.0, %v4452
    %v4454 = vmul.f32 %v4451, %v4453
    %v4455 = vadd.f32 %v4451, %v4454
    %vm4456 = vweird.f32 %v4403
    %vm4457 = vweird.f32 %v4451
    %vm4458 = vmor %vm4456, %vm4457
    %v4459 = vsel %vm4458, %v4451, %v4455
    %v4460 = vand.u32 2147483647, %v4403
    %vm4461 = vcmp.eq.f32.partialorder %v4460, 8.507059e+37
    %v4462 = vand.u32 %v4403, 2147483648
    %v4463 = vor.u32 1.1754944e-38, %v4462
    %v4464 = vsel %vm4461, %v4463, %v4459
    %v4465 = vmul.f32 1.0, %v4464
    %v4466 = vrcp.pop %v4404
    %v4467 = vmul.f32 %v4404, %v4466
    %v4468 = vsub.f32 1.0, %v4467
    %v4469 = vmul.f32 %v4466, %v4468
    %v4470 = vadd.f32 %v4466, %v4469
    %vm4471 = vweird.f32 %v4404
    %vm4472 = vweird.f32 %v4466
    %vm4473 = vmor %vm4471, %vm4472
    %v4474 = vsel %vm4473, %v4466, %v4470
    %v4475 = vand.u32 2147483647, %v4404
    %vm4476 = vcmp.eq.f32.partialorder %v4475, 8.507059e+37
    %v4477 = vand.u32 %v4404, 2147483648
    %v4478 = vor.u32 1.1754944e-38, %v4477
    %v4479 = vsel %vm4476, %v4478, %v4474
    %v4480 = vmul.f32 1.0, %v4479
    %v4481 = vrcp.pop %v4405
    %v4482 = vmul.f32 %v4405, %v4481
    %v4483 = vsub.f32 1.0, %v4482
    %v4484 = vmul.f32 %v4481, %v4483
    %v4485 = vadd.f32 %v4481, %v4484
    %vm4486 = vweird.f32 %v4405
    %vm4487 = vweird.f32 %v4481
    %vm4488 = vmor %vm4486, %vm4487
    %v4489 = vsel %vm4488, %v4481, %v4485
    %v4490 = vand.u32 2147483647, %v4405
    %vm4491 = vcmp.eq.f32.partialorder %v4490, 8.507059e+37
    %v4492 = vand.u32 %v4405, 2147483648
    %v4493 = vor.u32 1.1754944e-38, %v4492
    %v4494 = vsel %vm4491, %v4493, %v4489
    %v4495 = vmul.f32 1.0, %v4494
    %v4496 = vmax.f32 %v4380, 0.0
    %v4497 = vmax.f32 %v4381, 0.0
    %v4500 = vrot.slane %v4018, 6
    %v4501 = vrot.slane %v4019, 6
    %v4504 = vmul.f32 %v4450, %v4500
    %v4505 = vmul.f32 %v4465, %v4501
    %v4506 = vmul.f32 %v4420, %v4496
    %v4507 = vmul.f32 %v4435, %v4497
    %v4508 = vadd.f32 %v4504, %v4506
    %v4509 = vadd.f32 %v4505, %v4507
    %v4510 = vmax.f32 %v4508, 0.0
    %v4511 = vmax.f32 %v4509, 0.0
    %v4512 = vmul.f32 %v4480, %v4510
    %v4513 = vmul.f32 %v4495, %v4511
    %vm4514 = vcmask 1041408
    %v4515 = vsel %vm4514, %v1118, %v1602
    %v4516 = vsel %vm4514, %v1119, %v1603
    %vm4517 = vcmask 1043456
    %v4518 = vsel %vm4517, %v4515, %v2092
    %v4519 = vsel %vm4517, %v4516, %v2093
    %vm4520 = vcmask 1045504
    %v4521 = vsel %vm4520, %v4518, %v2582
    %v4522 = vsel %vm4520, %v4519, %v2583
    %v4523 = vsel %vm4514, %v3048, %v3532
    %v4524 = vsel %vm4514, %v3049, %v3533
    %v4525 = vsel %vm4517, %v4523, %v4022
    %v4526 = vsel %vm4517, %v4524, %v4023
    %v4527 = vsel %vm4520, %v4525, %v4512
    %v4528 = vsel %vm4520, %v4526, %v4513
    %v4529 = vld [vmem:[#allocation6] sm:$0xff]
    %v4530 = vld [vmem:[#allocation6 + $0x8] sm:$0xff]
    %v4531 = vld [vmem:[#allocation6 + $0x10] sm:$0xff]
    %v4532 = vld [vmem:[#allocation6 + $0x18] sm:$0xff]
    %v4533 = vld [vmem:[#allocation6 + $0x20] sm:$0xff]
    %v4534 = vld [vmem:[#allocation6 + $0x28] sm:$0xff]
    %v4535 = vld [vmem:[#allocation6 + $0x30] sm:$0xff]
    %v4536 = vld [vmem:[#allocation6 + $0x38] sm:$0xff]
    %v4537 = vld [vmem:[#allocation6 + $0x40] sm:$0xff]
    %v4538 = vld [vmem:[#allocation6 + $0x48] sm:$0xff]
    %v4539 = vld [vmem:[#allocation6 + $0x50] sm:$0xff]
    %v4540 = vld [vmem:[#allocation6 + $0x58] sm:$0xff]
    %v4541 = vld [vmem:[#allocation6 + $0x60] sm:$0xff]
    %v4542 = vld [vmem:[#allocation6 + $0x68] sm:$0xff]
    %v4543 = vld [vmem:[#allocation6 + $0x70] sm:$0xff]
    %v4544 = vld [vmem:[#allocation6 + $0x78] sm:$0xff]
    %v4545 = vld [vmem:[#allocation6 + $0x80] sm:$0xff]
    %v4546 = vld [vmem:[#allocation6 + $0x88] sm:$0xff]
    %v4547 = vld [vmem:[#allocation6 + $0x90] sm:$0xff]
    %v4548 = vld [vmem:[#allocation6 + $0x98] sm:$0xff]
    %v4549 = vld [vmem:[#allocation6 + $0xa0] sm:$0xff]
    %v4550 = vld [vmem:[#allocation6 + $0xa8] sm:$0xff]
    %v4551 = vld [vmem:[#allocation6 + $0xb0] sm:$0xff]
    %v4552 = vld [vmem:[#allocation6 + $0xb8] sm:$0xff]
    %v4553 = vld [vmem:[#allocation6 + $0xc0] sm:$0xff]
    %v4554 = vld [vmem:[#allocation6 + $0xc8] sm:$0xff]
    %v4555 = vld [vmem:[#allocation6 + $0xd0] sm:$0xff]
    %v4556 = vld [vmem:[#allocation6 + $0xd8] sm:$0xff]
    %v4557 = vld [vmem:[#allocation6 + $0xe0] sm:$0xff]
    %v4558 = vld [vmem:[#allocation6 + $0xe8] sm:$0xff]
    %v4559 = vld [vmem:[#allocation6 + $0xf0] sm:$0xff]
    %v4560 = vld [vmem:[#allocation6 + $0xf8] sm:$0xff]
    %v4561 = vld [vmem:[#allocation6 + $0x100] sm:$0xff]
    %v4562 = vld [vmem:[#allocation6 + $0x108] sm:$0xff]
    %v4563 = vld [vmem:[#allocation6 + $0x110] sm:$0xff]
    %v4564 = vld [vmem:[#allocation6 + $0x118] sm:$0xff]
    %v4565 = vld [vmem:[#allocation6 + $0x120] sm:$0xff]
    %v4566 = vld [vmem:[#allocation6 + $0x128] sm:$0xff]
    %v4567 = vld [vmem:[#allocation6 + $0x130] sm:$0xff]
    %v4568 = vld [vmem:[#allocation6 + $0x138] sm:$0xff]
    %v4569 = vld [vmem:[#allocation6 + $0x140] sm:$0xff]
    %v4570 = vld [vmem:[#allocation6 + $0x148] sm:$0xff]
    %v4571 = vld [vmem:[#allocation6 + $0x150] sm:$0xff]
    %v4572 = vld [vmem:[#allocation6 + $0x158] sm:$0xff]
    %v4573 = vld [vmem:[#allocation6 + $0x160] sm:$0xff]
    %v4574 = vld [vmem:[#allocation6 + $0x168] sm:$0xff]
    %v4575 = vld [vmem:[#allocation6 + $0x170] sm:$0xff]
    %v4576 = vld [vmem:[#allocation6 + $0x178] sm:$0xff]
    %v4577 = vld [vmem:[#allocation6 + $0x180] sm:$0xff]
    %v4578 = vld [vmem:[#allocation6 + $0x188] sm:$0xff]
    %v4579 = vld [vmem:[#allocation6 + $0x190] sm:$0xff]
    %v4580 = vld [vmem:[#allocation6 + $0x198] sm:$0xff]
    %v4581 = vld [vmem:[#allocation6 + $0x1a0] sm:$0xff]
    %v4582 = vld [vmem:[#allocation6 + $0x1a8] sm:$0xff]
    %v4583 = vld [vmem:[#allocation6 + $0x1b0] sm:$0xff]
    %v4584 = vld [vmem:[#allocation6 + $0x1b8] sm:$0xff]
    %v4585 = vld [vmem:[#allocation6 + $0x1c0] sm:$0xff]
    %v4586 = vld [vmem:[#allocation6 + $0x1c8] sm:$0xff]
    %v4587 = vld [vmem:[#allocation6 + $0x1d0] sm:$0xff]
    %v4588 = vld [vmem:[#allocation6 + $0x1d8] sm:$0xff]
    %v4589 = vld [vmem:[#allocation6 + $0x1e0] sm:$0xff]
    %v4590 = vld [vmem:[#allocation6 + $0x1e8] sm:$0xff]
    %v4591 = vld [vmem:[#allocation6 + $0x1f0] sm:$0xff]
    %v4592 = vld [vmem:[#allocation6 + $0x1f8] sm:$0xff]
    %v4593 = vld [vmem:[#allocation6 + $0x200] sm:$0xff]
    %v4594 = vld [vmem:[#allocation6 + $0x208] sm:$0xff]
    %v4595 = vld [vmem:[#allocation6 + $0x210] sm:$0xff]
    %v4596 = vld [vmem:[#allocation6 + $0x218] sm:$0xff]
    %v4597 = vld [vmem:[#allocation6 + $0x220] sm:$0xff]
    %v4598 = vld [vmem:[#allocation6 + $0x228] sm:$0xff]
    %v4599 = vld [vmem:[#allocation6 + $0x230] sm:$0xff]
    %v4600 = vld [vmem:[#allocation6 + $0x238] sm:$0xff]
    %v4601 = vld [vmem:[#allocation6 + $0x240] sm:$0xff]
    %v4602 = vld [vmem:[#allocation6 + $0x248] sm:$0xff]
    %v4603 = vld [vmem:[#allocation6 + $0x250] sm:$0xff]
    %v4604 = vld [vmem:[#allocation6 + $0x258] sm:$0xff]
    %v4605 = vld [vmem:[#allocation6 + $0x260] sm:$0xff]
    %v4606 = vld [vmem:[#allocation6 + $0x268] sm:$0xff]
    %v4607 = vld [vmem:[#allocation6 + $0x270] sm:$0xff]
    %v4608 = vld [vmem:[#allocation6 + $0x278] sm:$0xff]
    %v4609 = vld [vmem:[#allocation6 + $0x280] sm:$0xff]
    %v4610 = vld [vmem:[#allocation6 + $0x288] sm:$0xff]
    %v4611 = vld [vmem:[#allocation6 + $0x290] sm:$0xff]
    %v4612 = vld [vmem:[#allocation6 + $0x298] sm:$0xff]
    %v4613 = vld [vmem:[#allocation6 + $0x2a0] sm:$0xff]
    %v4614 = vld [vmem:[#allocation6 + $0x2a8] sm:$0xff]
    %v4615 = vld [vmem:[#allocation6 + $0x2b0] sm:$0xff]
    %v4616 = vld [vmem:[#allocation6 + $0x2b8] sm:$0xff]
    %v4617 = vld [vmem:[#allocation6 + $0x2c0] sm:$0xff]
    %v4618 = vld [vmem:[#allocation6 + $0x2c8] sm:$0xff]
    %v4619 = vld [vmem:[#allocation6 + $0x2d0] sm:$0xff]
    %v4620 = vld [vmem:[#allocation6 + $0x2d8] sm:$0xff]
    %v4621 = vld [vmem:[#allocation6 + $0x2e0] sm:$0xff]
    %v4622 = vld [vmem:[#allocation6 + $0x2e8] sm:$0xff]
    %v4623 = vld [vmem:[#allocation6 + $0x2f0] sm:$0xff]
    %v4624 = vld [vmem:[#allocation6 + $0x2f8] sm:$0xff]
    %v4625 = vld [vmem:[#allocation6 + $0x300] sm:$0xff]
    %v4626 = vld [vmem:[#allocation6 + $0x308] sm:$0xff]
    %v4627 = vld [vmem:[#allocation6 + $0x310] sm:$0xff]
    %v4628 = vld [vmem:[#allocation6 + $0x318] sm:$0xff]
    %v4629 = vld [vmem:[#allocation6 + $0x320] sm:$0xff]
    %v4630 = vld [vmem:[#allocation6 + $0x328] sm:$0xff]
    %v4631 = vld [vmem:[#allocation6 + $0x330] sm:$0xff]
    %v4632 = vld [vmem:[#allocation6 + $0x338] sm:$0xff]
    %v4633 = vld [vmem:[#allocation6 + $0x340] sm:$0xff]
    %v4634 = vld [vmem:[#allocation6 + $0x348] sm:$0xff]
    %v4635 = vld [vmem:[#allocation6 + $0x350] sm:$0xff]
    %v4636 = vld [vmem:[#allocation6 + $0x358] sm:$0xff]
    %v4637 = vld [vmem:[#allocation6 + $0x360] sm:$0xff]
    %v4638 = vld [vmem:[#allocation6 + $0x368] sm:$0xff]
    %v4639 = vld [vmem:[#allocation6 + $0x370] sm:$0xff]
    %v4640 = vld [vmem:[#allocation6 + $0x378] sm:$0xff]
    %v4641 = vld [vmem:[#allocation6 + $0x380] sm:$0xff]
    %v4642 = vld [vmem:[#allocation6 + $0x388] sm:$0xff]
    %v4643 = vld [vmem:[#allocation6 + $0x390] sm:$0xff]
    %v4644 = vld [vmem:[#allocation6 + $0x398] sm:$0xff]
    %v4645 = vld [vmem:[#allocation6 + $0x3a0] sm:$0xff]
    %v4646 = vld [vmem:[#allocation6 + $0x3a8] sm:$0xff]
    %v4647 = vld [vmem:[#allocation6 + $0x3b0] sm:$0xff]
    %v4648 = vld [vmem:[#allocation6 + $0x3b8] sm:$0xff]
    %v4649 = vld [vmem:[#allocation6 + $0x3c0] sm:$0xff]
    %v4650 = vld [vmem:[#allocation6 + $0x3c8] sm:$0xff]
    %v4651 = vld [vmem:[#allocation6 + $0x3d0] sm:$0xff]
    %v4652 = vld [vmem:[#allocation6 + $0x3d8] sm:$0xff]
    %v4653 = vld [vmem:[#allocation6 + $0x3e0] sm:$0xff]
    %v4654 = vld [vmem:[#allocation6 + $0x3e8] sm:$0xff]
    %v4655 = vld [vmem:[#allocation6 + $0x3f0] sm:$0xff]
    %v4656 = vld [vmem:[#allocation6 + $0x3f8] sm:$0xff]
    %v4657 = vld [vmem:[#allocation7] sm:$0xff]
    %v4658 = vld [vmem:[#allocation7 + $0x8] sm:$0xff]
    %v4659 = vld [vmem:[#allocation7 + $0x10] sm:$0xff]
    %v4660 = vld [vmem:[#allocation7 + $0x18] sm:$0xff]
    %v4661 = vld [vmem:[#allocation7 + $0x20] sm:$0xff]
    %v4662 = vld [vmem:[#allocation7 + $0x28] sm:$0xff]
    %v4663 = vld [vmem:[#allocation7 + $0x30] sm:$0xff]
    %v4664 = vld [vmem:[#allocation7 + $0x38] sm:$0xff]
    %v4665 = vld [vmem:[#allocation7 + $0x40] sm:$0xff]
    %v4666 = vld [vmem:[#allocation7 + $0x48] sm:$0xff]
    %v4667 = vld [vmem:[#allocation7 + $0x50] sm:$0xff]
    %v4668 = vld [vmem:[#allocation7 + $0x58] sm:$0xff]
    %v4669 = vld [vmem:[#allocation7 + $0x60] sm:$0xff]
    %v4670 = vld [vmem:[#allocation7 + $0x68] sm:$0xff]
    %v4671 = vld [vmem:[#allocation7 + $0x70] sm:$0xff]
    %v4672 = vld [vmem:[#allocation7 + $0x78] sm:$0xff]
    %v4673 = vld [vmem:[#allocation7 + $0x80] sm:$0xff]
    %v4674 = vld [vmem:[#allocation7 + $0x88] sm:$0xff]
    %v4675 = vld [vmem:[#allocation7 + $0x90] sm:$0xff]
    %v4676 = vld [vmem:[#allocation7 + $0x98] sm:$0xff]
    %v4677 = vld [vmem:[#allocation7 + $0xa0] sm:$0xff]
    %v4678 = vld [vmem:[#allocation7 + $0xa8] sm:$0xff]
    %v4679 = vld [vmem:[#allocation7 + $0xb0] sm:$0xff]
    %v4680 = vld [vmem:[#allocation7 + $0xb8] sm:$0xff]
    %v4681 = vld [vmem:[#allocation7 + $0xc0] sm:$0xff]
    %v4682 = vld [vmem:[#allocation7 + $0xc8] sm:$0xff]
    %v4683 = vld [vmem:[#allocation7 + $0xd0] sm:$0xff]
    %v4684 = vld [vmem:[#allocation7 + $0xd8] sm:$0xff]
    %v4685 = vld [vmem:[#allocation7 + $0xe0] sm:$0xff]
    %v4686 = vld [vmem:[#allocation7 + $0xe8] sm:$0xff]
    %v4687 = vld [vmem:[#allocation7 + $0xf0] sm:$0xff]
    %v4688 = vld [vmem:[#allocation7 + $0xf8] sm:$0xff]
    %v4689 = vld [vmem:[#allocation7 + $0x100] sm:$0xff]
    %v4690 = vld [vmem:[#allocation7 + $0x108] sm:$0xff]
    %v4691 = vld [vmem:[#allocation7 + $0x110] sm:$0xff]
    %v4692 = vld [vmem:[#allocation7 + $0x118] sm:$0xff]
    %v4693 = vld [vmem:[#allocation7 + $0x120] sm:$0xff]
    %v4694 = vld [vmem:[#allocation7 + $0x128] sm:$0xff]
    %v4695 = vld [vmem:[#allocation7 + $0x130] sm:$0xff]
    %v4696 = vld [vmem:[#allocation7 + $0x138] sm:$0xff]
    %v4697 = vld [vmem:[#allocation7 + $0x140] sm:$0xff]
    %v4698 = vld [vmem:[#allocation7 + $0x148] sm:$0xff]
    %v4699 = vld [vmem:[#allocation7 + $0x150] sm:$0xff]
    %v4700 = vld [vmem:[#allocation7 + $0x158] sm:$0xff]
    %v4701 = vld [vmem:[#allocation7 + $0x160] sm:$0xff]
    %v4702 = vld [vmem:[#allocation7 + $0x168] sm:$0xff]
    %v4703 = vld [vmem:[#allocation7 + $0x170] sm:$0xff]
    %v4704 = vld [vmem:[#allocation7 + $0x178] sm:$0xff]
    %v4705 = vld [vmem:[#allocation7 + $0x180] sm:$0xff]
    %v4706 = vld [vmem:[#allocation7 + $0x188] sm:$0xff]
    %v4707 = vld [vmem:[#allocation7 + $0x190] sm:$0xff]
    %v4708 = vld [vmem:[#allocation7 + $0x198] sm:$0xff]
    %v4709 = vld [vmem:[#allocation7 + $0x1a0] sm:$0xff]
    %v4710 = vld [vmem:[#allocation7 + $0x1a8] sm:$0xff]
    %v4711 = vld [vmem:[#allocation7 + $0x1b0] sm:$0xff]
    %v4712 = vld [vmem:[#allocation7 + $0x1b8] sm:$0xff]
    %v4713 = vld [vmem:[#allocation7 + $0x1c0] sm:$0xff]
    %v4714 = vld [vmem:[#allocation7 + $0x1c8] sm:$0xff]
    %v4715 = vld [vmem:[#allocation7 + $0x1d0] sm:$0xff]
    %v4716 = vld [vmem:[#allocation7 + $0x1d8] sm:$0xff]
    %v4717 = vld [vmem:[#allocation7 + $0x1e0] sm:$0xff]
    %v4718 = vld [vmem:[#allocation7 + $0x1e8] sm:$0xff]
    %v4719 = vld [vmem:[#allocation7 + $0x1f0] sm:$0xff]
    %v4720 = vld [vmem:[#allocation7 + $0x1f8] sm:$0xff]
    %v4721 = vld [vmem:[%s6] sm:$0xf]
    %v4723 = vperm.slane %v4721, 0
    %v4724 = vperm.slane %v4721, 1
    %v4725 = vperm.slane %v4721, 2
    %v4726 = vperm.slane %v4721, 3
    %4731 = vmatpush.msra.mxu0 %v4589
    %4732 = vmatpush.msra.mxu0 %v4585
    %4733 = vmatpush.msra.mxu0 %v4581
    %4734 = vmatpush.msra.mxu0 %v4577
    %4735 = vmatpush.msra.mxu0 %v4573
    %4736 = vmatpush.msra.mxu0 %v4569
    %4737 = vmatpush.msra.mxu0 %v4565
    %4738 = vmatpush.msra.mxu0 %v4561
    %4739 = vmatpush.msra.mxu0 %v4557
    %4740 = vmatpush.msra.mxu0 %v4553
    %4741 = vmatpush.msra.mxu0 %v4549
    %4742 = vmatpush.msra.mxu0 %v4545
    %4743 = vmatpush.msra.mxu0 %v4541
    %4744 = vmatpush.msra.mxu0 %v4537
    %4745 = vmatpush.msra.mxu0 %v4533
    %4746 = vmatpush.msra.mxu0 %v4529
    %4747 = vmatmul.f32.gmra.mxu0 %v4521
    %v4748 = vpop.f32.mrf.mxu0
    %v4749 = vadd.f32 %v4723, %v4748
    %4750 = vmatmul.f32.gmra.mxu0 %v4527
    %v4751 = vpop.f32.mrf.mxu0
    %v4752 = vadd.f32 %v4723, %v4751
    %4753 = vdwg.mxu0
    %4754 = vmatpush.msra.mxu0 %v4653
    %4755 = vmatpush.msra.mxu0 %v4649
    %4756 = vmatpush.msra.mxu0 %v4645
    %4757 = vmatpush.msra.mxu0 %v4641
    %4758 = vmatpush.msra.mxu0 %v4637
    %4759 = vmatpush.msra.mxu0 %v4633
    %4760 = vmatpush.msra.mxu0 %v4629
    %4761 = vmatpush.msra.mxu0 %v4625
    %4762 = vmatpush.msra.mxu0 %v4621
    %4763 = vmatpush.msra.mxu0 %v4617
    %4764 = vmatpush.msra.mxu0 %v4613
    %4765 = vmatpush.msra.mxu0 %v4609
    %4766 = vmatpush.msra.mxu0 %v4605
    %4767 = vmatpush.msra.mxu0 %v4601
    %4768 = vmatpush.msra.mxu0 %v4597
    %4769 = vmatpush.msra.mxu0 %v4593
    %4770 = vmatmul.f32.gmra.mxu0 %v4522
    %v4771 = vpop.f32.mrf.mxu0
    %v4772 = vadd.f32 %v4749, %v4771
    %4773 = vmatmul.f32.gmra.mxu0 %v4528
    %v4774 = vpop.f32.mrf.mxu0
    %v4775 = vadd.f32 %v4752, %v4774
    %4776 = vdwg.mxu0
    %4777 = vmatpush.msra.mxu0 %v4590
    %4778 = vmatpush.msra.mxu0 %v4586
    %4779 = vmatpush.msra.mxu0 %v4582
    %4780 = vmatpush.msra.mxu0 %v4578
    %4781 = vmatpush.msra.mxu0 %v4574
    %4782 = vmatpush.msra.mxu0 %v4570
    %4783 = vmatpush.msra.mxu0 %v4566
    %4784 = vmatpush.msra.mxu0 %v4562
    %4785 = vmatpush.msra.mxu0 %v4558
    %4786 = vmatpush.msra.mxu0 %v4554
    %4787 = vmatpush.msra.mxu0 %v4550
    %4788 = vmatpush.msra.mxu0 %v4546
    %4789 = vmatpush.msra.mxu0 %v4542
    %4790 = vmatpush.msra.mxu0 %v4538
    %4791 = vmatpush.msra.mxu0 %v4534
    %4792 = vmatpush.msra.mxu0 %v4530
    %4793 = vmatmul.f32.gmra.mxu0 %v4521
    %v4794 = vpop.f32.mrf.mxu0
    %v4795 = vadd.f32 %v4724, %v4794
    %4796 = vmatmul.f32.gmra.mxu0 %v4527
    %v4797 = vpop.f32.mrf.mxu0
    %v4798 = vadd.f32 %v4724, %v4797
    %4799 = vdwg.mxu0
    %4800 = vmatpush.msra.mxu0 %v4654
    %4801 = vmatpush.msra.mxu0 %v4650
    %4802 = vmatpush.msra.mxu0 %v4646
    %4803 = vmatpush.msra.mxu0 %v4642
    %4804 = vmatpush.msra.mxu0 %v4638
    %4805 = vmatpush.msra.mxu0 %v4634
    %4806 = vmatpush.msra.mxu0 %v4630
    %4807 = vmatpush.msra.mxu0 %v4626
    %4808 = vmatpush.msra.mxu0 %v4622
    %4809 = vmatpush.msra.mxu0 %v4618
    %4810 = vmatpush.msra.mxu0 %v4614
    %4811 = vmatpush.msra.mxu0 %v4610
    %4812 = vmatpush.msra.mxu0 %v4606
    %4813 = vmatpush.msra.mxu0 %v4602
    %4814 = vmatpush.msra.mxu0 %v4598
    %4815 = vmatpush.msra.mxu0 %v4594
    %4816 = vmatmul.f32.gmra.mxu0 %v4522
    %v4817 = vpop.f32.mrf.mxu0
    %v4818 = vadd.f32 %v4795, %v4817
    %4819 = vmatmul.f32.gmra.mxu0 %v4528
    %v4820 = vpop.f32.mrf.mxu0
    %v4821 = vadd.f32 %v4798, %v4820
    %4822 = vdwg.mxu0
    %4823 = vmatpush.msra.mxu0 %v4591
    %4824 = vmatpush.msra.mxu0 %v4587
    %4825 = vmatpush.msra.mxu0 %v4583
    %4826 = vmatpush.msra.mxu0 %v4579
    %4827 = vmatpush.msra.mxu0 %v4575
    %4828 = vmatpush.msra.mxu0 %v4571
    %4829 = vmatpush.msra.mxu0 %v4567
    %4830 = vmatpush.msra.mxu0 %v4563
    %4831 = vmatpush.msra.mxu0 %v4559
    %4832 = vmatpush.msra.mxu0 %v4555
    %4833 = vmatpush.msra.mxu0 %v4551
    %4834 = vmatpush.msra.mxu0 %v4547
    %4835 = vmatpush.msra.mxu0 %v4543
    %4836 = vmatpush.msra.mxu0 %v4539
    %4837 = vmatpush.msra.mxu0 %v4535
    %4838 = vmatpush.msra.mxu0 %v4531
    %4839 = vmatmul.f32.gmra.mxu0 %v4521
    %v4840 = vpop.f32.mrf.mxu0
    %v4841 = vadd.f32 %v4725, %v4840
    %4842 = vmatmul.f32.gmra.mxu0 %v4527
    %v4843 = vpop.f32.mrf.mxu0
    %v4844 = vadd.f32 %v4725, %v4843
    %4845 = vdwg.mxu0
    %4846 = vmatpush.msra.mxu0 %v4655
    %4847 = vmatpush.msra.mxu0 %v4651
    %4848 = vmatpush.msra.mxu0 %v4647
    %4849 = vmatpush.msra.mxu0 %v4643
    %4850 = vmatpush.msra.mxu0 %v4639
    %4851 = vmatpush.msra.mxu0 %v4635
    %4852 = vmatpush.msra.mxu0 %v4631
    %4853 = vmatpush.msra.mxu0 %v4627
    %4854 = vmatpush.msra.mxu0 %v4623
    %4855 = vmatpush.msra.mxu0 %v4619
    %4856 = vmatpush.msra.mxu0 %v4615
    %4857 = vmatpush.msra.mxu0 %v4611
    %4858 = vmatpush.msra.mxu0 %v4607
    %4859 = vmatpush.msra.mxu0 %v4603
    %4860 = vmatpush.msra.mxu0 %v4599
    %4861 = vmatpush.msra.mxu0 %v4595
    %4862 = vmatmul.f32.gmra.mxu0 %v4522
    %v4863 = vpop.f32.mrf.mxu0
    %v4864 = vadd.f32 %v4841, %v4863
    %4865 = vmatmul.f32.gmra.mxu0 %v4528
    %v4866 = vpop.f32.mrf.mxu0
    %v4867 = vadd.f32 %v4844, %v4866
    %4868 = vdwg.mxu0
    %4869 = vmatpush.msra.mxu0 %v4592
    %4870 = vmatpush.msra.mxu0 %v4588
    %4871 = vmatpush.msra.mxu0 %v4584
    %4872 = vmatpush.msra.mxu0 %v4580
    %4873 = vmatpush.msra.mxu0 %v4576
    %4874 = vmatpush.msra.mxu0 %v4572
    %4875 = vmatpush.msra.mxu0 %v4568
    %4876 = vmatpush.msra.mxu0 %v4564
    %4877 = vmatpush.msra.mxu0 %v4560
    %4878 = vmatpush.msra.mxu0 %v4556
    %4879 = vmatpush.msra.mxu0 %v4552
    %4880 = vmatpush.msra.mxu0 %v4548
    %4881 = vmatpush.msra.mxu0 %v4544
    %4882 = vmatpush.msra.mxu0 %v4540
    %4883 = vmatpush.msra.mxu0 %v4536
    %4884 = vmatpush.msra.mxu0 %v4532
    %4885 = vmatmul.f32.gmra.mxu0 %v4521
    %v4886 = vpop.f32.mrf.mxu0
    %v4887 = vadd.f32 %v4726, %v4886
    %4888 = vmatmul.f32.gmra.mxu0 %v4527
    %v4889 = vpop.f32.mrf.mxu0
    %v4890 = vadd.f32 %v4726, %v4889
    %4891 = vdwg.mxu0
    %4892 = vmatpush.msra.mxu0 %v4656
    %4893 = vmatpush.msra.mxu0 %v4652
    %4894 = vmatpush.msra.mxu0 %v4648
    %4895 = vmatpush.msra.mxu0 %v4644
    %4896 = vmatpush.msra.mxu0 %v4640
    %4897 = vmatpush.msra.mxu0 %v4636
    %4898 = vmatpush.msra.mxu0 %v4632
    %4899 = vmatpush.msra.mxu0 %v4628
    %4900 = vmatpush.msra.mxu0 %v4624
    %4901 = vmatpush.msra.mxu0 %v4620
    %4902 = vmatpush.msra.mxu0 %v4616
    %4903 = vmatpush.msra.mxu0 %v4612
    %4904 = vmatpush.msra.mxu0 %v4608
    %4905 = vmatpush.msra.mxu0 %v4604
    %4906 = vmatpush.msra.mxu0 %v4600
    %4907 = vmatpush.msra.mxu0 %v4596
    %4908 = vmatmul.f32.gmra.mxu0 %v4522
    %v4909 = vpop.f32.mrf.mxu0
    %v4910 = vadd.f32 %v4887, %v4909
    %4911 = vmatmul.f32.gmra.mxu0 %v4528
    %v4912 = vpop.f32.mrf.mxu0
    %v4913 = vadd.f32 %v4890, %v4912
    %4914 = vdwg.mxu0
    %4915 = vmatpush.msra.mxu0 %v4717
    %4916 = vmatpush.msra.mxu0 %v4713
    %4917 = vmatpush.msra.mxu0 %v4709
    %4918 = vmatpush.msra.mxu0 %v4705
    %4919 = vmatpush.msra.mxu0 %v4701
    %4920 = vmatpush.msra.mxu0 %v4697
    %4921 = vmatpush.msra.mxu0 %v4693
    %4922 = vmatpush.msra.mxu0 %v4689
    %4923 = vmatpush.msra.mxu0 %v4685
    %4924 = vmatpush.msra.mxu0 %v4681
    %4925 = vmatpush.msra.mxu0 %v4677
    %4926 = vmatpush.msra.mxu0 %v4673
    %4927 = vmatpush.msra.mxu0 %v4669
    %4928 = vmatpush.msra.mxu0 %v4665
    %4929 = vmatpush.msra.mxu0 %v4661
    %4930 = vmatpush.msra.mxu0 %v4657
    %4931 = vmatmul.f32.gmra.mxu0 0.0
    %v4932 = vpop.f32.mrf.mxu0
    %v4933 = vadd.f32 0.0, %v4932
    %4934 = vdwg.mxu0
    %4935 = vmatpush.msra.mxu0 %v4718
    %4936 = vmatpush.msra.mxu0 %v4714
    %4937 = vmatpush.msra.mxu0 %v4710
    %4938 = vmatpush.msra.mxu0 %v4706
    %4939 = vmatpush.msra.mxu0 %v4702
    %4940 = vmatpush.msra.mxu0 %v4698
    %4941 = vmatpush.msra.mxu0 %v4694
    %4942 = vmatpush.msra.mxu0 %v4690
    %4943 = vmatpush.msra.mxu0 %v4686
    %4944 = vmatpush.msra.mxu0 %v4682
    %4945 = vmatpush.msra.mxu0 %v4678
    %4946 = vmatpush.msra.mxu0 %v4674
    %4947 = vmatpush.msra.mxu0 %v4670
    %4948 = vmatpush.msra.mxu0 %v4666
    %4949 = vmatpush.msra.mxu0 %v4662
    %4950 = vmatpush.msra.mxu0 %v4658
    %4951 = vmatmul.f32.gmra.mxu0 0.0
    %v4952 = vpop.f32.mrf.mxu0
    %v4953 = vadd.f32 0.0, %v4952
    %4954 = vdwg.mxu0
    %4955 = vmatpush.msra.mxu0 %v4719
    %4956 = vmatpush.msra.mxu0 %v4715
    %4957 = vmatpush.msra.mxu0 %v4711
    %4958 = vmatpush.msra.mxu0 %v4707
    %4959 = vmatpush.msra.mxu0 %v4703
    %4960 = vmatpush.msra.mxu0 %v4699
    %4961 = vmatpush.msra.mxu0 %v4695
    %4962 = vmatpush.msra.mxu0 %v4691
    %4963 = vmatpush.msra.mxu0 %v4687
    %4964 = vmatpush.msra.mxu0 %v4683
    %4965 = vmatpush.msra.mxu0 %v4679
    %4966 = vmatpush.msra.mxu0 %v4675
    %4967 = vmatpush.msra.mxu0 %v4671
    %4968 = vmatpush.msra.mxu0 %v4667
    %4969 = vmatpush.msra.mxu0 %v4663
    %4970 = vmatpush.msra.mxu0 %v4659
    %4971 = vmatmul.f32.gmra.mxu0 0.0
    %v4972 = vpop.f32.mrf.mxu0
    %v4973 = vadd.f32 0.0, %v4972
    %4974 = vdwg.mxu0
    %4975 = vmatpush.msra.mxu0 %v4720
    %4976 = vmatpush.msra.mxu0 %v4716
    %4977 = vmatpush.msra.mxu0 %v4712
    %4978 = vmatpush.msra.mxu0 %v4708
    %4979 = vmatpush.msra.mxu0 %v4704
    %4980 = vmatpush.msra.mxu0 %v4700
    %4981 = vmatpush.msra.mxu0 %v4696
    %4982 = vmatpush.msra.mxu0 %v4692
    %4983 = vmatpush.msra.mxu0 %v4688
    %4984 = vmatpush.msra.mxu0 %v4684
    %4985 = vmatpush.msra.mxu0 %v4680
    %4986 = vmatpush.msra.mxu0 %v4676
    %4987 = vmatpush.msra.mxu0 %v4672
    %4988 = vmatpush.msra.mxu0 %v4668
    %4989 = vmatpush.msra.mxu0 %v4664
    %4990 = vmatpush.msra.mxu0 %v4660
    %4991 = vmatmul.f32.gmra.mxu0 0.0
    %v4992 = vpop.f32.mrf.mxu0
    %v4993 = vadd.f32 0.0, %v4992
    %4994 = vdwg.mxu0
    %v4995 = vadd.f32 %v4772, %v4933
    %v4996 = vadd.f32 %v4818, %v4953
    %v4997 = vadd.f32 %v4864, %v4973
    %v4998 = vadd.f32 %v4910, %v4993
    %v4999 = vxor.u32 %v4995, 2147483648
    %v5000 = vxor.u32 %v4996, 2147483648
    %v5001 = vxor.u32 %v4997, 2147483648
    %v5002 = vmul.f32 %v4999, 1.442695
    %v5003 = vpow.pop %v5002
    %v5004 = vmul.f32 %v5000, 1.442695
    %v5005 = vpow.pop %v5004
    %v5006 = vmul.f32 %v5001, 1.442695
    %v5007 = vpow.pop %v5006
    %v5008 = vadd.f32 %v5003, 1.0
    %v5009 = vadd.f32 %v5005, 1.0
    %v5010 = vadd.f32 %v5007, 1.0
    %v5011 = vrcp.pop %v5008
    %v5012 = vmul.f32 %v5008, %v5011
    %v5013 = vsub.f32 1.0, %v5012
    %v5014 = vmul.f32 %v5011, %v5013
    %v5015 = vadd.f32 %v5011, %v5014
    %vm5016 = vweird.f32 %v5008
    %vm5017 = vweird.f32 %v5011
    %vm5018 = vmor %vm5016, %vm5017
    %v5019 = vsel %vm5018, %v5011, %v5015
    %v5020 = vand.u32 2147483647, %v5008
    %vm5021 = vcmp.eq.f32.partialorder %v5020, 8.507059e+37
    %v5022 = vand.u32 %v5008, 2147483648
    %v5023 = vor.u32 1.1754944e-38, %v5022
    %v5024 = vsel %vm5021, %v5023, %v5019
    %v5025 = vmul.f32 1.0, %v5024
    %v5026 = vrcp.pop %v5009
    %v5027 = vmul.f32 %v5009, %v5026
    %v5028 = vsub.f32 1.0, %v5027
    %v5029 = vmul.f32 %v5026, %v5028
    %v5030 = vadd.f32 %v5026, %v5029
    %vm5031 = vweird.f32 %v5009
    %vm5032 = vweird.f32 %v5026
    %vm5033 = vmor %vm5031, %vm5032
    %v5034 = vsel %vm5033, %v5026, %v5030
    %v5035 = vand.u32 2147483647, %v5009
    %vm5036 = vcmp.eq.f32.partialorder %v5035, 8.507059e+37
    %v5037 = vand.u32 %v5009, 2147483648
    %v5038 = vor.u32 1.1754944e-38, %v5037
    %v5039 = vsel %vm5036, %v5038, %v5034
    %v5040 = vmul.f32 1.0, %v5039
    %v5041 = vrcp.pop %v5010
    %v5042 = vmul.f32 %v5010, %v5041
    %v5043 = vsub.f32 1.0, %v5042
    %v5044 = vmul.f32 %v5041, %v5043
    %v5045 = vadd.f32 %v5041, %v5044
    %vm5046 = vweird.f32 %v5010
    %vm5047 = vweird.f32 %v5041
    %vm5048 = vmor %vm5046, %vm5047
    %v5049 = vsel %vm5048, %v5041, %v5045
    %v5050 = vand.u32 2147483647, %v5010
    %vm5051 = vcmp.eq.f32.partialorder %v5050, 8.507059e+37
    %v5052 = vand.u32 %v5010, 2147483648
    %v5053 = vor.u32 1.1754944e-38, %v5052
    %v5054 = vsel %vm5051, %v5053, %v5049
    %v5055 = vmul.f32 1.0, %v5054
    %v5056 = vmax.f32 %v4998, 0.0
    %v5057 = vmul.f32 %v5040, 0.0
    %v5058 = vmul.f32 %v5025, %v5056
    %v5059 = vadd.f32 %v5057, %v5058
    %v5060 = vmax.f32 %v5059, 0.0
    %v5061 = vmul.f32 %v5055, %v5060
    %5062 = vmatpush.msra.mxu0 %v4717
    %5063 = vmatpush.msra.mxu0 %v4713
    %5064 = vmatpush.msra.mxu0 %v4709
    %5065 = vmatpush.msra.mxu0 %v4705
    %5066 = vmatpush.msra.mxu0 %v4701
    %5067 = vmatpush.msra.mxu0 %v4697
    %5068 = vmatpush.msra.mxu0 %v4693
    %5069 = vmatpush.msra.mxu0 %v4689
    %5070 = vmatpush.msra.mxu0 %v4685
    %5071 = vmatpush.msra.mxu0 %v4681
    %5072 = vmatpush.msra.mxu0 %v4677
    %5073 = vmatpush.msra.mxu0 %v4673
    %5074 = vmatpush.msra.mxu0 %v4669
    %5075 = vmatpush.msra.mxu0 %v4665
    %5076 = vmatpush.msra.mxu0 %v4661
    %5077 = vmatpush.msra.mxu0 %v4657
    %5078 = vmatmul.f32.gmra.mxu0 %v5061
    %v5079 = vpop.f32.mrf.mxu0
    %v5080 = vadd.f32 0.0, %v5079
    %5081 = vdwg.mxu0
    %5082 = vmatpush.msra.mxu0 %v4718
    %5083 = vmatpush.msra.mxu0 %v4714
    %5084 = vmatpush.msra.mxu0 %v4710
    %5085 = vmatpush.msra.mxu0 %v4706
    %5086 = vmatpush.msra.mxu0 %v4702
    %5087 = vmatpush.msra.mxu0 %v4698
    %5088 = vmatpush.msra.mxu0 %v4694
    %5089 = vmatpush.msra.mxu0 %v4690
    %5090 = vmatpush.msra.mxu0 %v4686
    %5091 = vmatpush.msra.mxu0 %v4682
    %5092 = vmatpush.msra.mxu0 %v4678
    %5093 = vmatpush.msra.mxu0 %v4674
    %5094 = vmatpush.msra.mxu0 %v4670
    %5095 = vmatpush.msra.mxu0 %v4666
    %5096 = vmatpush.msra.mxu0 %v4662
    %5097 = vmatpush.msra.mxu0 %v4658
    %5098 = vmatmul.f32.gmra.mxu0 %v5061
    %v5099 = vpop.f32.mrf.mxu0
    %v5100 = vadd.f32 0.0, %v5099
    %5101 = vdwg.mxu0
    %5102 = vmatpush.msra.mxu0 %v4719
    %5103 = vmatpush.msra.mxu0 %v4715
    %5104 = vmatpush.msra.mxu0 %v4711
    %5105 = vmatpush.msra.mxu0 %v4707
    %5106 = vmatpush.msra.mxu0 %v4703
    %5107 = vmatpush.msra.mxu0 %v4699
    %5108 = vmatpush.msra.mxu0 %v4695
    %5109 = vmatpush.msra.mxu0 %v4691
    %5110 = vmatpush.msra.mxu0 %v4687
    %5111 = vmatpush.msra.mxu0 %v4683
    %5112 = vmatpush.msra.mxu0 %v4679
    %5113 = vmatpush.msra.mxu0 %v4675
    %5114 = vmatpush.msra.mxu0 %v4671
    %5115 = vmatpush.msra.mxu0 %v4667
    %5116 = vmatpush.msra.mxu0 %v4663
    %5117 = vmatpush.msra.mxu0 %v4659
    %5118 = vmatmul.f32.gmra.mxu0 %v5061
    %v5119 = vpop.f32.mrf.mxu0
    %v5120 = vadd.f32 0.0, %v5119
    %5121 = vdwg.mxu0
    %5122 = vmatpush.msra.mxu0 %v4720
    %5123 = vmatpush.msra.mxu0 %v4716
    %5124 = vmatpush.msra.mxu0 %v4712
    %5125 = vmatpush.msra.mxu0 %v4708
    %5126 = vmatpush.msra.mxu0 %v4704
    %5127 = vmatpush.msra.mxu0 %v4700
    %5128 = vmatpush.msra.mxu0 %v4696
    %5129 = vmatpush.msra.mxu0 %v4692
    %5130 = vmatpush.msra.mxu0 %v4688
    %5131 = vmatpush.msra.mxu0 %v4684
    %5132 = vmatpush.msra.mxu0 %v4680
    %5133 = vmatpush.msra.mxu0 %v4676
    %5134 = vmatpush.msra.mxu0 %v4672
    %5135 = vmatpush.msra.mxu0 %v4668
    %5136 = vmatpush.msra.mxu0 %v4664
    %5137 = vmatpush.msra.mxu0 %v4660
    %5138 = vmatmul.f32.gmra.mxu0 %v5061
    %v5139 = vpop.f32.mrf.mxu0
    %v5140 = vadd.f32 0.0, %v5139
    %5141 = vdwg.mxu0
    %v5146 = vrot.slane %v5080, 6
    %v5147 = vrot.slane %v5100, 6
    %v5148 = vrot.slane %v5120, 6
    %v5149 = vrot.slane %v5140, 6
    %v5154 = vadd.f32 %v4772, %v5146
    %v5155 = vadd.f32 %v4818, %v5147
    %v5156 = vadd.f32 %v4864, %v5148
    %v5157 = vadd.f32 %v4910, %v5149
    %v5158 = vxor.u32 %v5154, 2147483648
    %v5159 = vxor.u32 %v5155, 2147483648
    %v5160 = vxor.u32 %v5156, 2147483648
    %v5161 = vmul.f32 %v5158, 1.442695
    %v5162 = vpow.pop %v5161
    %v5163 = vmul.f32 %v5159, 1.442695
    %v5164 = vpow.pop %v5163
    %v5165 = vmul.f32 %v5160, 1.442695
    %v5166 = vpow.pop %v5165
    %v5167 = vadd.f32 %v5162, 1.0
    %v5168 = vadd.f32 %v5164, 1.0
    %v5169 = vadd.f32 %v5166, 1.0
    %v5170 = vrcp.pop %v5167
    %v5171 = vmul.f32 %v5167, %v5170
    %v5172 = vsub.f32 1.0, %v5171
    %v5173 = vmul.f32 %v5170, %v5172
    %v5174 = vadd.f32 %v5170, %v5173
    %vm5175 = vweird.f32 %v5167
    %vm5176 = vweird.f32 %v5170
    %vm5177 = vmor %vm5175, %vm5176
    %v5178 = vsel %vm5177, %v5170, %v5174
    %v5179 = vand.u32 2147483647, %v5167
    %vm5180 = vcmp.eq.f32.partialorder %v5179, 8.507059e+37
    %v5181 = vand.u32 %v5167, 2147483648
    %v5182 = vor.u32 1.1754944e-38, %v5181
    %v5183 = vsel %vm5180, %v5182, %v5178
    %v5184 = vmul.f32 1.0, %v5183
    %v5185 = vrcp.pop %v5168
    %v5186 = vmul.f32 %v5168, %v5185
    %v5187 = vsub.f32 1.0, %v5186
    %v5188 = vmul.f32 %v5185, %v5187
    %v5189 = vadd.f32 %v5185, %v5188
    %vm5190 = vweird.f32 %v5168
    %vm5191 = vweird.f32 %v5185
    %vm5192 = vmor %vm5190, %vm5191
    %v5193 = vsel %vm5192, %v5185, %v5189
    %v5194 = vand.u32 2147483647, %v5168
    %vm5195 = vcmp.eq.f32.partialorder %v5194, 8.507059e+37
    %v5196 = vand.u32 %v5168, 2147483648
    %v5197 = vor.u32 1.1754944e-38, %v5196
    %v5198 = vsel %vm5195, %v5197, %v5193
    %v5199 = vmul.f32 1.0, %v5198
    %v5200 = vrcp.pop %v5169
    %v5201 = vmul.f32 %v5169, %v5200
    %v5202 = vsub.f32 1.0, %v5201
    %v5203 = vmul.f32 %v5200, %v5202
    %v5204 = vadd.f32 %v5200, %v5203
    %vm5205 = vweird.f32 %v5169
    %vm5206 = vweird.f32 %v5200
    %vm5207 = vmor %vm5205, %vm5206
    %v5208 = vsel %vm5207, %v5200, %v5204
    %v5209 = vand.u32 2147483647, %v5169
    %vm5210 = vcmp.eq.f32.partialorder %v5209, 8.507059e+37
    %v5211 = vand.u32 %v5169, 2147483648
    %v5212 = vor.u32 1.1754944e-38, %v5211
    %v5213 = vsel %vm5210, %v5212, %v5208
    %v5214 = vmul.f32 1.0, %v5213
    %v5215 = vmax.f32 %v5157, 0.0
    %v5217 = vrot.slane %v5059, 6
    %v5219 = vmul.f32 %v5199, %v5217
    %v5220 = vmul.f32 %v5184, %v5215
    %v5221 = vadd.f32 %v5219, %v5220
    %v5222 = vmax.f32 %v5221, 0.0
    %v5223 = vmul.f32 %v5214, %v5222
    %v5225 = vrot.slane %v5223, 2
    %5227 = vmatpush.msra.mxu0 %v4717
    %5228 = vmatpush.msra.mxu0 %v4713
    %5229 = vmatpush.msra.mxu0 %v4709
    %5230 = vmatpush.msra.mxu0 %v4705
    %5231 = vmatpush.msra.mxu0 %v4701
    %5232 = vmatpush.msra.mxu0 %v4697
    %5233 = vmatpush.msra.mxu0 %v4693
    %5234 = vmatpush.msra.mxu0 %v4689
    %5235 = vmatpush.msra.mxu0 %v4685
    %5236 = vmatpush.msra.mxu0 %v4681
    %5237 = vmatpush.msra.mxu0 %v4677
    %5238 = vmatpush.msra.mxu0 %v4673
    %5239 = vmatpush.msra.mxu0 %v4669
    %5240 = vmatpush.msra.mxu0 %v4665
    %5241 = vmatpush.msra.mxu0 %v4661
    %5242 = vmatpush.msra.mxu0 %v4657
    %5243 = vmatmul.f32.gmra.mxu0 %v5225
    %v5244 = vpop.f32.mrf.mxu0
    %v5245 = vadd.f32 0.0, %v5244
    %5246 = vdwg.mxu0
    %5247 = vmatpush.msra.mxu0 %v4718
    %5248 = vmatpush.msra.mxu0 %v4714
    %5249 = vmatpush.msra.mxu0 %v4710
    %5250 = vmatpush.msra.mxu0 %v4706
    %5251 = vmatpush.msra.mxu0 %v4702
    %5252 = vmatpush.msra.mxu0 %v4698
    %5253 = vmatpush.msra.mxu0 %v4694
    %5254 = vmatpush.msra.mxu0 %v4690
    %5255 = vmatpush.msra.mxu0 %v4686
    %5256 = vmatpush.msra.mxu0 %v4682
    %5257 = vmatpush.msra.mxu0 %v4678
    %5258 = vmatpush.msra.mxu0 %v4674
    %5259 = vmatpush.msra.mxu0 %v4670
    %5260 = vmatpush.msra.mxu0 %v4666
    %5261 = vmatpush.msra.mxu0 %v4662
    %5262 = vmatpush.msra.mxu0 %v4658
    %5263 = vmatmul.f32.gmra.mxu0 %v5225
    %v5264 = vpop.f32.mrf.mxu0
    %v5265 = vadd.f32 0.0, %v5264
    %5266 = vdwg.mxu0
    %5267 = vmatpush.msra.mxu0 %v4719
    %5268 = vmatpush.msra.mxu0 %v4715
    %5269 = vmatpush.msra.mxu0 %v4711
    %5270 = vmatpush.msra.mxu0 %v4707
    %5271 = vmatpush.msra.mxu0 %v4703
    %5272 = vmatpush.msra.mxu0 %v4699
    %5273 = vmatpush.msra.mxu0 %v4695
    %5274 = vmatpush.msra.mxu0 %v4691
    %5275 = vmatpush.msra.mxu0 %v4687
    %5276 = vmatpush.msra.mxu0 %v4683
    %5277 = vmatpush.msra.mxu0 %v4679
    %5278 = vmatpush.msra.mxu0 %v4675
    %5279 = vmatpush.msra.mxu0 %v4671
    %5280 = vmatpush.msra.mxu0 %v4667
    %5281 = vmatpush.msra.mxu0 %v4663
    %5282 = vmatpush.msra.mxu0 %v4659
    %5283 = vmatmul.f32.gmra.mxu0 %v5225
    %v5284 = vpop.f32.mrf.mxu0
    %v5285 = vadd.f32 0.0, %v5284
    %5286 = vdwg.mxu0
    %5287 = vmatpush.msra.mxu0 %v4720
    %5288 = vmatpush.msra.mxu0 %v4716
    %5289 = vmatpush.msra.mxu0 %v4712
    %5290 = vmatpush.msra.mxu0 %v4708
    %5291 = vmatpush.msra.mxu0 %v4704
    %5292 = vmatpush.msra.mxu0 %v4700
    %5293 = vmatpush.msra.mxu0 %v4696
    %5294 = vmatpush.msra.mxu0 %v4692
    %5295 = vmatpush.msra.mxu0 %v4688
    %5296 = vmatpush.msra.mxu0 %v4684
    %5297 = vmatpush.msra.mxu0 %v4680
    %5298 = vmatpush.msra.mxu0 %v4676
    %5299 = vmatpush.msra.mxu0 %v4672
    %5300 = vmatpush.msra.mxu0 %v4668
    %5301 = vmatpush.msra.mxu0 %v4664
    %5302 = vmatpush.msra.mxu0 %v4660
    %5303 = vmatmul.f32.gmra.mxu0 %v5225
    %v5304 = vpop.f32.mrf.mxu0
    %v5305 = vadd.f32 0.0, %v5304
    %5306 = vdwg.mxu0
    %v5311 = vrot.slane %v5245, 4
    %v5312 = vrot.slane %v5265, 4
    %v5313 = vrot.slane %v5285, 4
    %v5314 = vrot.slane %v5305, 4
    %v5319 = vadd.f32 %v4772, %v5311
    %v5320 = vadd.f32 %v4818, %v5312
    %v5321 = vadd.f32 %v4864, %v5313
    %v5322 = vadd.f32 %v4910, %v5314
    %v5323 = vxor.u32 %v5319, 2147483648
    %v5324 = vxor.u32 %v5320, 2147483648
    %v5325 = vxor.u32 %v5321, 2147483648
    %v5326 = vmul.f32 %v5323, 1.442695
    %v5327 = vpow.pop %v5326
    %v5328 = vmul.f32 %v5324, 1.442695
    %v5329 = vpow.pop %v5328
    %v5330 = vmul.f32 %v5325, 1.442695
    %v5331 = vpow.pop %v5330
    %v5332 = vadd.f32 %v5327, 1.0
    %v5333 = vadd.f32 %v5329, 1.0
    %v5334 = vadd.f32 %v5331, 1.0
    %v5335 = vrcp.pop %v5332
    %v5336 = vmul.f32 %v5332, %v5335
    %v5337 = vsub.f32 1.0, %v5336
    %v5338 = vmul.f32 %v5335, %v5337
    %v5339 = vadd.f32 %v5335, %v5338
    %vm5340 = vweird.f32 %v5332
    %vm5341 = vweird.f32 %v5335
    %vm5342 = vmor %vm5340, %vm5341
    %v5343 = vsel %vm5342, %v5335, %v5339
    %v5344 = vand.u32 2147483647, %v5332
    %vm5345 = vcmp.eq.f32.partialorder %v5344, 8.507059e+37
    %v5346 = vand.u32 %v5332, 2147483648
    %v5347 = vor.u32 1.1754944e-38, %v5346
    %v5348 = vsel %vm5345, %v5347, %v5343
    %v5349 = vmul.f32 1.0, %v5348
    %v5350 = vrcp.pop %v5333
    %v5351 = vmul.f32 %v5333, %v5350
    %v5352 = vsub.f32 1.0, %v5351
    %v5353 = vmul.f32 %v5350, %v5352
    %v5354 = vadd.f32 %v5350, %v5353
    %vm5355 = vweird.f32 %v5333
    %vm5356 = vweird.f32 %v5350
    %vm5357 = vmor %vm5355, %vm5356
    %v5358 = vsel %vm5357, %v5350, %v5354
    %v5359 = vand.u32 2147483647, %v5333
    %vm5360 = vcmp.eq.f32.partialorder %v5359, 8.507059e+37
    %v5361 = vand.u32 %v5333, 2147483648
    %v5362 = vor.u32 1.1754944e-38, %v5361
    %v5363 = vsel %vm5360, %v5362, %v5358
    %v5364 = vmul.f32 1.0, %v5363
    %v5365 = vrcp.pop %v5334
    %v5366 = vmul.f32 %v5334, %v5365
    %v5367 = vsub.f32 1.0, %v5366
    %v5368 = vmul.f32 %v5365, %v5367
    %v5369 = vadd.f32 %v5365, %v5368
    %vm5370 = vweird.f32 %v5334
    %vm5371 = vweird.f32 %v5365
    %vm5372 = vmor %vm5370, %vm5371
    %v5373 = vsel %vm5372, %v5365, %v5369
    %v5374 = vand.u32 2147483647, %v5334
    %vm5375 = vcmp.eq.f32.partialorder %v5374, 8.507059e+37
    %v5376 = vand.u32 %v5334, 2147483648
    %v5377 = vor.u32 1.1754944e-38, %v5376
    %v5378 = vsel %vm5375, %v5377, %v5373
    %v5379 = vmul.f32 1.0, %v5378
    %v5380 = vmax.f32 %v5322, 0.0
    %v5382 = vrot.slane %v5221, 6
    %v5384 = vmul.f32 %v5364, %v5382
    %v5385 = vmul.f32 %v5349, %v5380
    %v5386 = vadd.f32 %v5384, %v5385
    %v5387 = vmax.f32 %v5386, 0.0
    %v5388 = vmul.f32 %v5379, %v5387
    %v5390 = vrot.slane %v5388, 4
    %5392 = vmatpush.msra.mxu0 %v4717
    %5393 = vmatpush.msra.mxu0 %v4713
    %5394 = vmatpush.msra.mxu0 %v4709
    %5395 = vmatpush.msra.mxu0 %v4705
    %5396 = vmatpush.msra.mxu0 %v4701
    %5397 = vmatpush.msra.mxu0 %v4697
    %5398 = vmatpush.msra.mxu0 %v4693
    %5399 = vmatpush.msra.mxu0 %v4689
    %5400 = vmatpush.msra.mxu0 %v4685
    %5401 = vmatpush.msra.mxu0 %v4681
    %5402 = vmatpush.msra.mxu0 %v4677
    %5403 = vmatpush.msra.mxu0 %v4673
    %5404 = vmatpush.msra.mxu0 %v4669
    %5405 = vmatpush.msra.mxu0 %v4665
    %5406 = vmatpush.msra.mxu0 %v4661
    %5407 = vmatpush.msra.mxu0 %v4657
    %5408 = vmatmul.f32.gmra.mxu0 %v5390
    %v5409 = vpop.f32.mrf.mxu0
    %v5410 = vadd.f32 0.0, %v5409
    %5411 = vdwg.mxu0
    %5412 = vmatpush.msra.mxu0 %v4718
    %5413 = vmatpush.msra.mxu0 %v4714
    %5414 = vmatpush.msra.mxu0 %v4710
    %5415 = vmatpush.msra.mxu0 %v4706
    %5416 = vmatpush.msra.mxu0 %v4702
    %5417 = vmatpush.msra.mxu0 %v4698
    %5418 = vmatpush.msra.mxu0 %v4694
    %5419 = vmatpush.msra.mxu0 %v4690
    %5420 = vmatpush.msra.mxu0 %v4686
    %5421 = vmatpush.msra.mxu0 %v4682
    %5422 = vmatpush.msra.mxu0 %v4678
    %5423 = vmatpush.msra.mxu0 %v4674
    %5424 = vmatpush.msra.mxu0 %v4670
    %5425 = vmatpush.msra.mxu0 %v4666
    %5426 = vmatpush.msra.mxu0 %v4662
    %5427 = vmatpush.msra.mxu0 %v4658
    %5428 = vmatmul.f32.gmra.mxu0 %v5390
    %v5429 = vpop.f32.mrf.mxu0
    %v5430 = vadd.f32 0.0, %v5429
    %5431 = vdwg.mxu0
    %5432 = vmatpush.msra.mxu0 %v4719
    %5433 = vmatpush.msra.mxu0 %v4715
    %5434 = vmatpush.msra.mxu0 %v4711
    %5435 = vmatpush.msra.mxu0 %v4707
    %5436 = vmatpush.msra.mxu0 %v4703
    %5437 = vmatpush.msra.mxu0 %v4699
    %5438 = vmatpush.msra.mxu0 %v4695
    %5439 = vmatpush.msra.mxu0 %v4691
    %5440 = vmatpush.msra.mxu0 %v4687
    %5441 = vmatpush.msra.mxu0 %v4683
    %5442 = vmatpush.msra.mxu0 %v4679
    %5443 = vmatpush.msra.mxu0 %v4675
    %5444 = vmatpush.msra.mxu0 %v4671
    %5445 = vmatpush.msra.mxu0 %v4667
    %5446 = vmatpush.msra.mxu0 %v4663
    %5447 = vmatpush.msra.mxu0 %v4659
    %5448 = vmatmul.f32.gmra.mxu0 %v5390
    %v5449 = vpop.f32.mrf.mxu0
    %v5450 = vadd.f32 0.0, %v5449
    %5451 = vdwg.mxu0
    %5452 = vmatpush.msra.mxu0 %v4720
    %5453 = vmatpush.msra.mxu0 %v4716
    %5454 = vmatpush.msra.mxu0 %v4712
    %5455 = vmatpush.msra.mxu0 %v4708
    %5456 = vmatpush.msra.mxu0 %v4704
    %5457 = vmatpush.msra.mxu0 %v4700
    %5458 = vmatpush.msra.mxu0 %v4696
    %5459 = vmatpush.msra.mxu0 %v4692
    %5460 = vmatpush.msra.mxu0 %v4688
    %5461 = vmatpush.msra.mxu0 %v4684
    %5462 = vmatpush.msra.mxu0 %v4680
    %5463 = vmatpush.msra.mxu0 %v4676
    %5464 = vmatpush.msra.mxu0 %v4672
    %5465 = vmatpush.msra.mxu0 %v4668
    %5466 = vmatpush.msra.mxu0 %v4664
    %5467 = vmatpush.msra.mxu0 %v4660
    %5468 = vmatmul.f32.gmra.mxu0 %v5390
    %v5469 = vpop.f32.mrf.mxu0
    %v5470 = vadd.f32 0.0, %v5469
    %5471 = vdwg.mxu0
    %v5476 = vrot.slane %v5410, 2
    %v5477 = vrot.slane %v5430, 2
    %v5478 = vrot.slane %v5450, 2
    %v5479 = vrot.slane %v5470, 2
    %v5484 = vadd.f32 %v4772, %v5476
    %v5485 = vadd.f32 %v4818, %v5477
    %v5486 = vadd.f32 %v4864, %v5478
    %v5487 = vadd.f32 %v4910, %v5479
    %v5488 = vxor.u32 %v5484, 2147483648
    %v5489 = vxor.u32 %v5485, 2147483648
    %v5490 = vxor.u32 %v5486, 2147483648
    %v5491 = vmul.f32 %v5488, 1.442695
    %v5492 = vpow.pop %v5491
    %v5493 = vmul.f32 %v5489, 1.442695
    %v5494 = vpow.pop %v5493
    %v5495 = vmul.f32 %v5490, 1.442695
    %v5496 = vpow.pop %v5495
    %v5497 = vadd.f32 %v5492, 1.0
    %v5498 = vadd.f32 %v5494, 1.0
    %v5499 = vadd.f32 %v5496, 1.0
    %v5500 = vrcp.pop %v5497
    %v5501 = vmul.f32 %v5497, %v5500
    %v5502 = vsub.f32 1.0, %v5501
    %v5503 = vmul.f32 %v5500, %v5502
    %v5504 = vadd.f32 %v5500, %v5503
    %vm5505 = vweird.f32 %v5497
    %vm5506 = vweird.f32 %v5500
    %vm5507 = vmor %vm5505, %vm5506
    %v5508 = vsel %vm5507, %v5500, %v5504
    %v5509 = vand.u32 2147483647, %v5497
    %vm5510 = vcmp.eq.f32.partialorder %v5509, 8.507059e+37
    %v5511 = vand.u32 %v5497, 2147483648
    %v5512 = vor.u32 1.1754944e-38, %v5511
    %v5513 = vsel %vm5510, %v5512, %v5508
    %v5514 = vmul.f32 1.0, %v5513
    %v5515 = vrcp.pop %v5498
    %v5516 = vmul.f32 %v5498, %v5515
    %v5517 = vsub.f32 1.0, %v5516
    %v5518 = vmul.f32 %v5515, %v5517
    %v5519 = vadd.f32 %v5515, %v5518
    %vm5520 = vweird.f32 %v5498
    %vm5521 = vweird.f32 %v5515
    %vm5522 = vmor %vm5520, %vm5521
    %v5523 = vsel %vm5522, %v5515, %v5519
    %v5524 = vand.u32 2147483647, %v5498
    %vm5525 = vcmp.eq.f32.partialorder %v5524, 8.507059e+37
    %v5526 = vand.u32 %v5498, 2147483648
    %v5527 = vor.u32 1.1754944e-38, %v5526
    %v5528 = vsel %vm5525, %v5527, %v5523
    %v5529 = vmul.f32 1.0, %v5528
    %v5530 = vrcp.pop %v5499
    %v5531 = vmul.f32 %v5499, %v5530
    %v5532 = vsub.f32 1.0, %v5531
    %v5533 = vmul.f32 %v5530, %v5532
    %v5534 = vadd.f32 %v5530, %v5533
    %vm5535 = vweird.f32 %v5499
    %vm5536 = vweird.f32 %v5530
    %vm5537 = vmor %vm5535, %vm5536
    %v5538 = vsel %vm5537, %v5530, %v5534
    %v5539 = vand.u32 2147483647, %v5499
    %vm5540 = vcmp.eq.f32.partialorder %v5539, 8.507059e+37
    %v5541 = vand.u32 %v5499, 2147483648
    %v5542 = vor.u32 1.1754944e-38, %v5541
    %v5543 = vsel %vm5540, %v5542, %v5538
    %v5544 = vmul.f32 1.0, %v5543
    %v5545 = vmax.f32 %v5487, 0.0
    %v5547 = vrot.slane %v5386, 6
    %v5549 = vmul.f32 %v5529, %v5547
    %v5550 = vmul.f32 %v5514, %v5545
    %v5551 = vadd.f32 %v5549, %v5550
    %v5552 = vmax.f32 %v5551, 0.0
    %v5553 = vmul.f32 %v5544, %v5552
    %v5555 = vrot.slane %v5553, 6
    %5557 = vmatpush.msra.mxu0 %v4717
    %5558 = vmatpush.msra.mxu0 %v4713
    %5559 = vmatpush.msra.mxu0 %v4709
    %5560 = vmatpush.msra.mxu0 %v4705
    %5561 = vmatpush.msra.mxu0 %v4701
    %5562 = vmatpush.msra.mxu0 %v4697
    %5563 = vmatpush.msra.mxu0 %v4693
    %5564 = vmatpush.msra.mxu0 %v4689
    %5565 = vmatpush.msra.mxu0 %v4685
    %5566 = vmatpush.msra.mxu0 %v4681
    %5567 = vmatpush.msra.mxu0 %v4677
    %5568 = vmatpush.msra.mxu0 %v4673
    %5569 = vmatpush.msra.mxu0 %v4669
    %5570 = vmatpush.msra.mxu0 %v4665
    %5571 = vmatpush.msra.mxu0 %v4661
    %5572 = vmatpush.msra.mxu0 %v4657
    %5573 = vmatmul.f32.gmra.mxu0 %v5555
    %v5574 = vpop.f32.mrf.mxu0
    %v5575 = vadd.f32 0.0, %v5574
    %5576 = vdwg.mxu0
    %5577 = vmatpush.msra.mxu0 %v4718
    %5578 = vmatpush.msra.mxu0 %v4714
    %5579 = vmatpush.msra.mxu0 %v4710
    %5580 = vmatpush.msra.mxu0 %v4706
    %5581 = vmatpush.msra.mxu0 %v4702
    %5582 = vmatpush.msra.mxu0 %v4698
    %5583 = vmatpush.msra.mxu0 %v4694
    %5584 = vmatpush.msra.mxu0 %v4690
    %5585 = vmatpush.msra.mxu0 %v4686
    %5586 = vmatpush.msra.mxu0 %v4682
    %5587 = vmatpush.msra.mxu0 %v4678
    %5588 = vmatpush.msra.mxu0 %v4674
    %5589 = vmatpush.msra.mxu0 %v4670
    %5590 = vmatpush.msra.mxu0 %v4666
    %5591 = vmatpush.msra.mxu0 %v4662
    %5592 = vmatpush.msra.mxu0 %v4658
    %5593 = vmatmul.f32.gmra.mxu0 %v5555
    %v5594 = vpop.f32.mrf.mxu0
    %v5595 = vadd.f32 0.0, %v5594
    %5596 = vdwg.mxu0
    %5597 = vmatpush.msra.mxu0 %v4719
    %5598 = vmatpush.msra.mxu0 %v4715
    %5599 = vmatpush.msra.mxu0 %v4711
    %5600 = vmatpush.msra.mxu0 %v4707
    %5601 = vmatpush.msra.mxu0 %v4703
    %5602 = vmatpush.msra.mxu0 %v4699
    %5603 = vmatpush.msra.mxu0 %v4695
    %5604 = vmatpush.msra.mxu0 %v4691
    %5605 = vmatpush.msra.mxu0 %v4687
    %5606 = vmatpush.msra.mxu0 %v4683
    %5607 = vmatpush.msra.mxu0 %v4679
    %5608 = vmatpush.msra.mxu0 %v4675
    %5609 = vmatpush.msra.mxu0 %v4671
    %5610 = vmatpush.msra.mxu0 %v4667
    %5611 = vmatpush.msra.mxu0 %v4663
    %5612 = vmatpush.msra.mxu0 %v4659
    %5613 = vmatmul.f32.gmra.mxu0 %v5555
    %v5614 = vpop.f32.mrf.mxu0
    %v5615 = vadd.f32 0.0, %v5614
    %5616 = vdwg.mxu0
    %5617 = vmatpush.msra.mxu0 %v4720
    %5618 = vmatpush.msra.mxu0 %v4716
    %5619 = vmatpush.msra.mxu0 %v4712
    %5620 = vmatpush.msra.mxu0 %v4708
    %5621 = vmatpush.msra.mxu0 %v4704
    %5622 = vmatpush.msra.mxu0 %v4700
    %5623 = vmatpush.msra.mxu0 %v4696
    %5624 = vmatpush.msra.mxu0 %v4692
    %5625 = vmatpush.msra.mxu0 %v4688
    %5626 = vmatpush.msra.mxu0 %v4684
    %5627 = vmatpush.msra.mxu0 %v4680
    %5628 = vmatpush.msra.mxu0 %v4676
    %5629 = vmatpush.msra.mxu0 %v4672
    %5630 = vmatpush.msra.mxu0 %v4668
    %5631 = vmatpush.msra.mxu0 %v4664
    %5632 = vmatpush.msra.mxu0 %v4660
    %5633 = vmatmul.f32.gmra.mxu0 %v5555
    %v5634 = vpop.f32.mrf.mxu0
    %v5635 = vadd.f32 0.0, %v5634
    %5636 = vdwg.mxu0
    %v5637 = vadd.f32 %v4775, %v5575
    %v5638 = vadd.f32 %v4821, %v5595
    %v5639 = vadd.f32 %v4867, %v5615
    %v5640 = vadd.f32 %v4913, %v5635
    %v5641 = vxor.u32 %v5637, 2147483648
    %v5642 = vxor.u32 %v5638, 2147483648
    %v5643 = vxor.u32 %v5639, 2147483648
    %v5644 = vmul.f32 %v5641, 1.442695
    %v5645 = vpow.pop %v5644
    %v5646 = vmul.f32 %v5642, 1.442695
    %v5647 = vpow.pop %v5646
    %v5648 = vmul.f32 %v5643, 1.442695
    %v5649 = vpow.pop %v5648
    %v5650 = vadd.f32 %v5645, 1.0
    %v5651 = vadd.f32 %v5647, 1.0
    %v5652 = vadd.f32 %v5649, 1.0
    %v5653 = vrcp.pop %v5650
    %v5654 = vmul.f32 %v5650, %v5653
    %v5655 = vsub.f32 1.0, %v5654
    %v5656 = vmul.f32 %v5653, %v5655
    %v5657 = vadd.f32 %v5653, %v5656
    %vm5658 = vweird.f32 %v5650
    %vm5659 = vweird.f32 %v5653
    %vm5660 = vmor %vm5658, %vm5659
    %v5661 = vsel %vm5660, %v5653, %v5657
    %v5662 = vand.u32 2147483647, %v5650
    %vm5663 = vcmp.eq.f32.partialorder %v5662, 8.507059e+37
    %v5664 = vand.u32 %v5650, 2147483648
    %v5665 = vor.u32 1.1754944e-38, %v5664
    %v5666 = vsel %vm5663, %v5665, %v5661
    %v5667 = vmul.f32 1.0, %v5666
    %v5668 = vrcp.pop %v5651
    %v5669 = vmul.f32 %v5651, %v5668
    %v5670 = vsub.f32 1.0, %v5669
    %v5671 = vmul.f32 %v5668, %v5670
    %v5672 = vadd.f32 %v5668, %v5671
    %vm5673 = vweird.f32 %v5651
    %vm5674 = vweird.f32 %v5668
    %vm5675 = vmor %vm5673, %vm5674
    %v5676 = vsel %vm5675, %v5668, %v5672
    %v5677 = vand.u32 2147483647, %v5651
    %vm5678 = vcmp.eq.f32.partialorder %v5677, 8.507059e+37
    %v5679 = vand.u32 %v5651, 2147483648
    %v5680 = vor.u32 1.1754944e-38, %v5679
    %v5681 = vsel %vm5678, %v5680, %v5676
    %v5682 = vmul.f32 1.0, %v5681
    %v5683 = vrcp.pop %v5652
    %v5684 = vmul.f32 %v5652, %v5683
    %v5685 = vsub.f32 1.0, %v5684
    %v5686 = vmul.f32 %v5683, %v5685
    %v5687 = vadd.f32 %v5683, %v5686
    %vm5688 = vweird.f32 %v5652
    %vm5689 = vweird.f32 %v5683
    %vm5690 = vmor %vm5688, %vm5689
    %v5691 = vsel %vm5690, %v5683, %v5687
    %v5692 = vand.u32 2147483647, %v5652
    %vm5693 = vcmp.eq.f32.partialorder %v5692, 8.507059e+37
    %v5694 = vand.u32 %v5652, 2147483648
    %v5695 = vor.u32 1.1754944e-38, %v5694
    %v5696 = vsel %vm5693, %v5695, %v5691
    %v5697 = vmul.f32 1.0, %v5696
    %v5698 = vmax.f32 %v5640, 0.0
    %v5700 = vrot.slane %v5551, 6
    %v5702 = vmul.f32 %v5682, %v5700
    %v5703 = vmul.f32 %v5667, %v5698
    %v5704 = vadd.f32 %v5702, %v5703
    %v5705 = vmax.f32 %v5704, 0.0
    %v5706 = vmul.f32 %v5697, %v5705
    %5707 = vmatpush.msra.mxu0 %v4717
    %5708 = vmatpush.msra.mxu0 %v4713
    %5709 = vmatpush.msra.mxu0 %v4709
    %5710 = vmatpush.msra.mxu0 %v4705
    %5711 = vmatpush.msra.mxu0 %v4701
    %5712 = vmatpush.msra.mxu0 %v4697
    %5713 = vmatpush.msra.mxu0 %v4693
    %5714 = vmatpush.msra.mxu0 %v4689
    %5715 = vmatpush.msra.mxu0 %v4685
    %5716 = vmatpush.msra.mxu0 %v4681
    %5717 = vmatpush.msra.mxu0 %v4677
    %5718 = vmatpush.msra.mxu0 %v4673
    %5719 = vmatpush.msra.mxu0 %v4669
    %5720 = vmatpush.msra.mxu0 %v4665
    %5721 = vmatpush.msra.mxu0 %v4661
    %5722 = vmatpush.msra.mxu0 %v4657
    %5723 = vmatmul.f32.gmra.mxu0 %v5706
    %v5724 = vpop.f32.mrf.mxu0
    %v5725 = vadd.f32 0.0, %v5724
    %5726 = vdwg.mxu0
    %5727 = vmatpush.msra.mxu0 %v4718
    %5728 = vmatpush.msra.mxu0 %v4714
    %5729 = vmatpush.msra.mxu0 %v4710
    %5730 = vmatpush.msra.mxu0 %v4706
    %5731 = vmatpush.msra.mxu0 %v4702
    %5732 = vmatpush.msra.mxu0 %v4698
    %5733 = vmatpush.msra.mxu0 %v4694
    %5734 = vmatpush.msra.mxu0 %v4690
    %5735 = vmatpush.msra.mxu0 %v4686
    %5736 = vmatpush.msra.mxu0 %v4682
    %5737 = vmatpush.msra.mxu0 %v4678
    %5738 = vmatpush.msra.mxu0 %v4674
    %5739 = vmatpush.msra.mxu0 %v4670
    %5740 = vmatpush.msra.mxu0 %v4666
    %5741 = vmatpush.msra.mxu0 %v4662
    %5742 = vmatpush.msra.mxu0 %v4658
    %5743 = vmatmul.f32.gmra.mxu0 %v5706
    %v5744 = vpop.f32.mrf.mxu0
    %v5745 = vadd.f32 0.0, %v5744
    %5746 = vdwg.mxu0
    %5747 = vmatpush.msra.mxu0 %v4719
    %5748 = vmatpush.msra.mxu0 %v4715
    %5749 = vmatpush.msra.mxu0 %v4711
    %5750 = vmatpush.msra.mxu0 %v4707
    %5751 = vmatpush.msra.mxu0 %v4703
    %5752 = vmatpush.msra.mxu0 %v4699
    %5753 = vmatpush.msra.mxu0 %v4695
    %5754 = vmatpush.msra.mxu0 %v4691
    %5755 = vmatpush.msra.mxu0 %v4687
    %5756 = vmatpush.msra.mxu0 %v4683
    %5757 = vmatpush.msra.mxu0 %v4679
    %5758 = vmatpush.msra.mxu0 %v4675
    %5759 = vmatpush.msra.mxu0 %v4671
    %5760 = vmatpush.msra.mxu0 %v4667
    %5761 = vmatpush.msra.mxu0 %v4663
    %5762 = vmatpush.msra.mxu0 %v4659
    %5763 = vmatmul.f32.gmra.mxu0 %v5706
    %v5764 = vpop.f32.mrf.mxu0
    %v5765 = vadd.f32 0.0, %v5764
    %5766 = vdwg.mxu0
    %5767 = vmatpush.msra.mxu0 %v4720
    %5768 = vmatpush.msra.mxu0 %v4716
    %5769 = vmatpush.msra.mxu0 %v4712
    %5770 = vmatpush.msra.mxu0 %v4708
    %5771 = vmatpush.msra.mxu0 %v4704
    %5772 = vmatpush.msra.mxu0 %v4700
    %5773 = vmatpush.msra.mxu0 %v4696
    %5774 = vmatpush.msra.mxu0 %v4692
    %5775 = vmatpush.msra.mxu0 %v4688
    %5776 = vmatpush.msra.mxu0 %v4684
    %5777 = vmatpush.msra.mxu0 %v4680
    %5778 = vmatpush.msra.mxu0 %v4676
    %5779 = vmatpush.msra.mxu0 %v4672
    %5780 = vmatpush.msra.mxu0 %v4668
    %5781 = vmatpush.msra.mxu0 %v4664
    %5782 = vmatpush.msra.mxu0 %v4660
    %5783 = vmatmul.f32.gmra.mxu0 %v5706
    %v5784 = vpop.f32.mrf.mxu0
    %v5785 = vadd.f32 0.0, %v5784
    %5786 = vdwg.mxu0
    %v5791 = vrot.slane %v5725, 6
    %v5792 = vrot.slane %v5745, 6
    %v5793 = vrot.slane %v5765, 6
    %v5794 = vrot.slane %v5785, 6
    %v5799 = vadd.f32 %v4775, %v5791
    %v5800 = vadd.f32 %v4821, %v5792
    %v5801 = vadd.f32 %v4867, %v5793
    %v5802 = vadd.f32 %v4913, %v5794
    %v5803 = vxor.u32 %v5799, 2147483648
    %v5804 = vxor.u32 %v5800, 2147483648
    %v5805 = vxor.u32 %v5801, 2147483648
    %v5806 = vmul.f32 %v5803, 1.442695
    %v5807 = vpow.pop %v5806
    %v5808 = vmul.f32 %v5804, 1.442695
    %v5809 = vpow.pop %v5808
    %v5810 = vmul.f32 %v5805, 1.442695
    %v5811 = vpow.pop %v5810
    %v5812 = vadd.f32 %v5807, 1.0
    %v5813 = vadd.f32 %v5809, 1.0
    %v5814 = vadd.f32 %v5811, 1.0
    %v5815 = vrcp.pop %v5812
    %v5816 = vmul.f32 %v5812, %v5815
    %v5817 = vsub.f32 1.0, %v5816
    %v5818 = vmul.f32 %v5815, %v5817
    %v5819 = vadd.f32 %v5815, %v5818
    %vm5820 = vweird.f32 %v5812
    %vm5821 = vweird.f32 %v5815
    %vm5822 = vmor %vm5820, %vm5821
    %v5823 = vsel %vm5822, %v5815, %v5819
    %v5824 = vand.u32 2147483647, %v5812
    %vm5825 = vcmp.eq.f32.partialorder %v5824, 8.507059e+37
    %v5826 = vand.u32 %v5812, 2147483648
    %v5827 = vor.u32 1.1754944e-38, %v5826
    %v5828 = vsel %vm5825, %v5827, %v5823
    %v5829 = vmul.f32 1.0, %v5828
    %v5830 = vrcp.pop %v5813
    %v5831 = vmul.f32 %v5813, %v5830
    %v5832 = vsub.f32 1.0, %v5831
    %v5833 = vmul.f32 %v5830, %v5832
    %v5834 = vadd.f32 %v5830, %v5833
    %vm5835 = vweird.f32 %v5813
    %vm5836 = vweird.f32 %v5830
    %vm5837 = vmor %vm5835, %vm5836
    %v5838 = vsel %vm5837, %v5830, %v5834
    %v5839 = vand.u32 2147483647, %v5813
    %vm5840 = vcmp.eq.f32.partialorder %v5839, 8.507059e+37
    %v5841 = vand.u32 %v5813, 2147483648
    %v5842 = vor.u32 1.1754944e-38, %v5841
    %v5843 = vsel %vm5840, %v5842, %v5838
    %v5844 = vmul.f32 1.0, %v5843
    %v5845 = vrcp.pop %v5814
    %v5846 = vmul.f32 %v5814, %v5845
    %v5847 = vsub.f32 1.0, %v5846
    %v5848 = vmul.f32 %v5845, %v5847
    %v5849 = vadd.f32 %v5845, %v5848
    %vm5850 = vweird.f32 %v5814
    %vm5851 = vweird.f32 %v5845
    %vm5852 = vmor %vm5850, %vm5851
    %v5853 = vsel %vm5852, %v5845, %v5849
    %v5854 = vand.u32 2147483647, %v5814
    %vm5855 = vcmp.eq.f32.partialorder %v5854, 8.507059e+37
    %v5856 = vand.u32 %v5814, 2147483648
    %v5857 = vor.u32 1.1754944e-38, %v5856
    %v5858 = vsel %vm5855, %v5857, %v5853
    %v5859 = vmul.f32 1.0, %v5858
    %v5860 = vmax.f32 %v5802, 0.0
    %v5862 = vrot.slane %v5704, 6
    %v5864 = vmul.f32 %v5844, %v5862
    %v5865 = vmul.f32 %v5829, %v5860
    %v5866 = vadd.f32 %v5864, %v5865
    %v5867 = vmax.f32 %v5866, 0.0
    %v5868 = vmul.f32 %v5859, %v5867
    %v5870 = vrot.slane %v5868, 2
    %5872 = vmatpush.msra.mxu0 %v4717
    %5873 = vmatpush.msra.mxu0 %v4713
    %5874 = vmatpush.msra.mxu0 %v4709
    %5875 = vmatpush.msra.mxu0 %v4705
    %5876 = vmatpush.msra.mxu0 %v4701
    %5877 = vmatpush.msra.mxu0 %v4697
    %5878 = vmatpush.msra.mxu0 %v4693
    %5879 = vmatpush.msra.mxu0 %v4689
    %5880 = vmatpush.msra.mxu0 %v4685
    %5881 = vmatpush.msra.mxu0 %v4681
    %5882 = vmatpush.msra.mxu0 %v4677
    %5883 = vmatpush.msra.mxu0 %v4673
    %5884 = vmatpush.msra.mxu0 %v4669
    %5885 = vmatpush.msra.mxu0 %v4665
    %5886 = vmatpush.msra.mxu0 %v4661
    %5887 = vmatpush.msra.mxu0 %v4657
    %5888 = vmatmul.f32.gmra.mxu0 %v5870
    %v5889 = vpop.f32.mrf.mxu0
    %v5890 = vadd.f32 0.0, %v5889
    %5891 = vdwg.mxu0
    %5892 = vmatpush.msra.mxu0 %v4718
    %5893 = vmatpush.msra.mxu0 %v4714
    %5894 = vmatpush.msra.mxu0 %v4710
    %5895 = vmatpush.msra.mxu0 %v4706
    %5896 = vmatpush.msra.mxu0 %v4702
    %5897 = vmatpush.msra.mxu0 %v4698
    %5898 = vmatpush.msra.mxu0 %v4694
    %5899 = vmatpush.msra.mxu0 %v4690
    %5900 = vmatpush.msra.mxu0 %v4686
    %5901 = vmatpush.msra.mxu0 %v4682
    %5902 = vmatpush.msra.mxu0 %v4678
    %5903 = vmatpush.msra.mxu0 %v4674
    %5904 = vmatpush.msra.mxu0 %v4670
    %5905 = vmatpush.msra.mxu0 %v4666
    %5906 = vmatpush.msra.mxu0 %v4662
    %5907 = vmatpush.msra.mxu0 %v4658
    %5908 = vmatmul.f32.gmra.mxu0 %v5870
    %v5909 = vpop.f32.mrf.mxu0
    %v5910 = vadd.f32 0.0, %v5909
    %5911 = vdwg.mxu0
    %5912 = vmatpush.msra.mxu0 %v4719
    %5913 = vmatpush.msra.mxu0 %v4715
    %5914 = vmatpush.msra.mxu0 %v4711
    %5915 = vmatpush.msra.mxu0 %v4707
    %5916 = vmatpush.msra.mxu0 %v4703
    %5917 = vmatpush.msra.mxu0 %v4699
    %5918 = vmatpush.msra.mxu0 %v4695
    %5919 = vmatpush.msra.mxu0 %v4691
    %5920 = vmatpush.msra.mxu0 %v4687
    %5921 = vmatpush.msra.mxu0 %v4683
    %5922 = vmatpush.msra.mxu0 %v4679
    %5923 = vmatpush.msra.mxu0 %v4675
    %5924 = vmatpush.msra.mxu0 %v4671
    %5925 = vmatpush.msra.mxu0 %v4667
    %5926 = vmatpush.msra.mxu0 %v4663
    %5927 = vmatpush.msra.mxu0 %v4659
    %5928 = vmatmul.f32.gmra.mxu0 %v5870
    %v5929 = vpop.f32.mrf.mxu0
    %v5930 = vadd.f32 0.0, %v5929
    %5931 = vdwg.mxu0
    %5932 = vmatpush.msra.mxu0 %v4720
    %5933 = vmatpush.msra.mxu0 %v4716
    %5934 = vmatpush.msra.mxu0 %v4712
    %5935 = vmatpush.msra.mxu0 %v4708
    %5936 = vmatpush.msra.mxu0 %v4704
    %5937 = vmatpush.msra.mxu0 %v4700
    %5938 = vmatpush.msra.mxu0 %v4696
    %5939 = vmatpush.msra.mxu0 %v4692
    %5940 = vmatpush.msra.mxu0 %v4688
    %5941 = vmatpush.msra.mxu0 %v4684
    %5942 = vmatpush.msra.mxu0 %v4680
    %5943 = vmatpush.msra.mxu0 %v4676
    %5944 = vmatpush.msra.mxu0 %v4672
    %5945 = vmatpush.msra.mxu0 %v4668
    %5946 = vmatpush.msra.mxu0 %v4664
    %5947 = vmatpush.msra.mxu0 %v4660
    %5948 = vmatmul.f32.gmra.mxu0 %v5870
    %v5949 = vpop.f32.mrf.mxu0
    %v5950 = vadd.f32 0.0, %v5949
    %5951 = vdwg.mxu0
    %v5956 = vrot.slane %v5890, 4
    %v5957 = vrot.slane %v5910, 4
    %v5958 = vrot.slane %v5930, 4
    %v5959 = vrot.slane %v5950, 4
    %v5964 = vadd.f32 %v4775, %v5956
    %v5965 = vadd.f32 %v4821, %v5957
    %v5966 = vadd.f32 %v4867, %v5958
    %v5967 = vadd.f32 %v4913, %v5959
    %v5968 = vxor.u32 %v5964, 2147483648
    %v5969 = vxor.u32 %v5965, 2147483648
    %v5970 = vxor.u32 %v5966, 2147483648
    %v5971 = vmul.f32 %v5968, 1.442695
    %v5972 = vpow.pop %v5971
    %v5973 = vmul.f32 %v5969, 1.442695
    %v5974 = vpow.pop %v5973
    %v5975 = vmul.f32 %v5970, 1.442695
    %v5976 = vpow.pop %v5975
    %v5977 = vadd.f32 %v5972, 1.0
    %v5978 = vadd.f32 %v5974, 1.0
    %v5979 = vadd.f32 %v5976, 1.0
    %v5980 = vrcp.pop %v5977
    %v5981 = vmul.f32 %v5977, %v5980
    %v5982 = vsub.f32 1.0, %v5981
    %v5983 = vmul.f32 %v5980, %v5982
    %v5984 = vadd.f32 %v5980, %v5983
    %vm5985 = vweird.f32 %v5977
    %vm5986 = vweird.f32 %v5980
    %vm5987 = vmor %vm5985, %vm5986
    %v5988 = vsel %vm5987, %v5980, %v5984
    %v5989 = vand.u32 2147483647, %v5977
    %vm5990 = vcmp.eq.f32.partialorder %v5989, 8.507059e+37
    %v5991 = vand.u32 %v5977, 2147483648
    %v5992 = vor.u32 1.1754944e-38, %v5991
    %v5993 = vsel %vm5990, %v5992, %v5988
    %v5994 = vmul.f32 1.0, %v5993
    %v5995 = vrcp.pop %v5978
    %v5996 = vmul.f32 %v5978, %v5995
    %v5997 = vsub.f32 1.0, %v5996
    %v5998 = vmul.f32 %v5995, %v5997
    %v5999 = vadd.f32 %v5995, %v5998
    %vm6000 = vweird.f32 %v5978
    %vm6001 = vweird.f32 %v5995
    %vm6002 = vmor %vm6000, %vm6001
    %v6003 = vsel %vm6002, %v5995, %v5999
    %v6004 = vand.u32 2147483647, %v5978
    %vm6005 = vcmp.eq.f32.partialorder %v6004, 8.507059e+37
    %v6006 = vand.u32 %v5978, 2147483648
    %v6007 = vor.u32 1.1754944e-38, %v6006
    %v6008 = vsel %vm6005, %v6007, %v6003
    %v6009 = vmul.f32 1.0, %v6008
    %v6010 = vrcp.pop %v5979
    %v6011 = vmul.f32 %v5979, %v6010
    %v6012 = vsub.f32 1.0, %v6011
    %v6013 = vmul.f32 %v6010, %v6012
    %v6014 = vadd.f32 %v6010, %v6013
    %vm6015 = vweird.f32 %v5979
    %vm6016 = vweird.f32 %v6010
    %vm6017 = vmor %vm6015, %vm6016
    %v6018 = vsel %vm6017, %v6010, %v6014
    %v6019 = vand.u32 2147483647, %v5979
    %vm6020 = vcmp.eq.f32.partialorder %v6019, 8.507059e+37
    %v6021 = vand.u32 %v5979, 2147483648
    %v6022 = vor.u32 1.1754944e-38, %v6021
    %v6023 = vsel %vm6020, %v6022, %v6018
    %v6024 = vmul.f32 1.0, %v6023
    %v6025 = vmax.f32 %v5967, 0.0
    %v6027 = vrot.slane %v5866, 6
    %v6029 = vmul.f32 %v6009, %v6027
    %v6030 = vmul.f32 %v5994, %v6025
    %v6031 = vadd.f32 %v6029, %v6030
    %v6032 = vmax.f32 %v6031, 0.0
    %v6033 = vmul.f32 %v6024, %v6032
    %v6035 = vrot.slane %v6033, 4
    %6037 = vmatpush.msra.mxu0 %v4717
    %6038 = vmatpush.msra.mxu0 %v4713
    %6039 = vmatpush.msra.mxu0 %v4709
    %6040 = vmatpush.msra.mxu0 %v4705
    %6041 = vmatpush.msra.mxu0 %v4701
    %6042 = vmatpush.msra.mxu0 %v4697
    %6043 = vmatpush.msra.mxu0 %v4693
    %6044 = vmatpush.msra.mxu0 %v4689
    %6045 = vmatpush.msra.mxu0 %v4685
    %6046 = vmatpush.msra.mxu0 %v4681
    %6047 = vmatpush.msra.mxu0 %v4677
    %6048 = vmatpush.msra.mxu0 %v4673
    %6049 = vmatpush.msra.mxu0 %v4669
    %6050 = vmatpush.msra.mxu0 %v4665
    %6051 = vmatpush.msra.mxu0 %v4661
    %6052 = vmatpush.msra.mxu0 %v4657
    %6053 = vmatmul.f32.gmra.mxu0 %v6035
    %v6054 = vpop.f32.mrf.mxu0
    %v6055 = vadd.f32 0.0, %v6054
    %6056 = vdwg.mxu0
    %6057 = vmatpush.msra.mxu0 %v4718
    %6058 = vmatpush.msra.mxu0 %v4714
    %6059 = vmatpush.msra.mxu0 %v4710
    %6060 = vmatpush.msra.mxu0 %v4706
    %6061 = vmatpush.msra.mxu0 %v4702
    %6062 = vmatpush.msra.mxu0 %v4698
    %6063 = vmatpush.msra.mxu0 %v4694
    %6064 = vmatpush.msra.mxu0 %v4690
    %6065 = vmatpush.msra.mxu0 %v4686
    %6066 = vmatpush.msra.mxu0 %v4682
    %6067 = vmatpush.msra.mxu0 %v4678
    %6068 = vmatpush.msra.mxu0 %v4674
    %6069 = vmatpush.msra.mxu0 %v4670
    %6070 = vmatpush.msra.mxu0 %v4666
    %6071 = vmatpush.msra.mxu0 %v4662
    %6072 = vmatpush.msra.mxu0 %v4658
    %6073 = vmatmul.f32.gmra.mxu0 %v6035
    %v6074 = vpop.f32.mrf.mxu0
    %v6075 = vadd.f32 0.0, %v6074
    %6076 = vdwg.mxu0
    %6077 = vmatpush.msra.mxu0 %v4719
    %6078 = vmatpush.msra.mxu0 %v4715
    %6079 = vmatpush.msra.mxu0 %v4711
    %6080 = vmatpush.msra.mxu0 %v4707
    %6081 = vmatpush.msra.mxu0 %v4703
    %6082 = vmatpush.msra.mxu0 %v4699
    %6083 = vmatpush.msra.mxu0 %v4695
    %6084 = vmatpush.msra.mxu0 %v4691
    %6085 = vmatpush.msra.mxu0 %v4687
    %6086 = vmatpush.msra.mxu0 %v4683
    %6087 = vmatpush.msra.mxu0 %v4679
    %6088 = vmatpush.msra.mxu0 %v4675
    %6089 = vmatpush.msra.mxu0 %v4671
    %6090 = vmatpush.msra.mxu0 %v4667
    %6091 = vmatpush.msra.mxu0 %v4663
    %6092 = vmatpush.msra.mxu0 %v4659
    %6093 = vmatmul.f32.gmra.mxu0 %v6035
    %v6094 = vpop.f32.mrf.mxu0
    %v6095 = vadd.f32 0.0, %v6094
    %6096 = vdwg.mxu0
    %6097 = vmatpush.msra.mxu0 %v4720
    %6098 = vmatpush.msra.mxu0 %v4716
    %6099 = vmatpush.msra.mxu0 %v4712
    %6100 = vmatpush.msra.mxu0 %v4708
    %6101 = vmatpush.msra.mxu0 %v4704
    %6102 = vmatpush.msra.mxu0 %v4700
    %6103 = vmatpush.msra.mxu0 %v4696
    %6104 = vmatpush.msra.mxu0 %v4692
    %6105 = vmatpush.msra.mxu0 %v4688
    %6106 = vmatpush.msra.mxu0 %v4684
    %6107 = vmatpush.msra.mxu0 %v4680
    %6108 = vmatpush.msra.mxu0 %v4676
    %6109 = vmatpush.msra.mxu0 %v4672
    %6110 = vmatpush.msra.mxu0 %v4668
    %6111 = vmatpush.msra.mxu0 %v4664
    %6112 = vmatpush.msra.mxu0 %v4660
    %6113 = vmatmul.f32.gmra.mxu0 %v6035
    %v6114 = vpop.f32.mrf.mxu0
    %v6115 = vadd.f32 0.0, %v6114
    %6116 = vdwg.mxu0
    %v6121 = vrot.slane %v6055, 2
    %v6122 = vrot.slane %v6075, 2
    %v6123 = vrot.slane %v6095, 2
    %v6124 = vrot.slane %v6115, 2
    %v6129 = vadd.f32 %v4775, %v6121
    %v6130 = vadd.f32 %v4821, %v6122
    %v6131 = vadd.f32 %v4867, %v6123
    %v6132 = vadd.f32 %v4913, %v6124
    %v6133 = vxor.u32 %v6129, 2147483648
    %v6134 = vxor.u32 %v6130, 2147483648
    %v6135 = vxor.u32 %v6131, 2147483648
    %v6136 = vmul.f32 %v6133, 1.442695
    %v6137 = vpow.pop %v6136
    %v6138 = vmul.f32 %v6134, 1.442695
    %v6139 = vpow.pop %v6138
    %v6140 = vmul.f32 %v6135, 1.442695
    %v6141 = vpow.pop %v6140
    %v6142 = vadd.f32 %v6137, 1.0
    %v6143 = vadd.f32 %v6139, 1.0
    %v6144 = vadd.f32 %v6141, 1.0
    %v6145 = vrcp.pop %v6142
    %v6146 = vmul.f32 %v6142, %v6145
    %v6147 = vsub.f32 1.0, %v6146
    %v6148 = vmul.f32 %v6145, %v6147
    %v6149 = vadd.f32 %v6145, %v6148
    %vm6150 = vweird.f32 %v6142
    %vm6151 = vweird.f32 %v6145
    %vm6152 = vmor %vm6150, %vm6151
    %v6153 = vsel %vm6152, %v6145, %v6149
    %v6154 = vand.u32 2147483647, %v6142
    %vm6155 = vcmp.eq.f32.partialorder %v6154, 8.507059e+37
    %v6156 = vand.u32 %v6142, 2147483648
    %v6157 = vor.u32 1.1754944e-38, %v6156
    %v6158 = vsel %vm6155, %v6157, %v6153
    %v6159 = vmul.f32 1.0, %v6158
    %v6160 = vrcp.pop %v6143
    %v6161 = vmul.f32 %v6143, %v6160
    %v6162 = vsub.f32 1.0, %v6161
    %v6163 = vmul.f32 %v6160, %v6162
    %v6164 = vadd.f32 %v6160, %v6163
    %vm6165 = vweird.f32 %v6143
    %vm6166 = vweird.f32 %v6160
    %vm6167 = vmor %vm6165, %vm6166
    %v6168 = vsel %vm6167, %v6160, %v6164
    %v6169 = vand.u32 2147483647, %v6143
    %vm6170 = vcmp.eq.f32.partialorder %v6169, 8.507059e+37
    %v6171 = vand.u32 %v6143, 2147483648
    %v6172 = vor.u32 1.1754944e-38, %v6171
    %v6173 = vsel %vm6170, %v6172, %v6168
    %v6174 = vmul.f32 1.0, %v6173
    %v6175 = vrcp.pop %v6144
    %v6176 = vmul.f32 %v6144, %v6175
    %v6177 = vsub.f32 1.0, %v6176
    %v6178 = vmul.f32 %v6175, %v6177
    %v6179 = vadd.f32 %v6175, %v6178
    %vm6180 = vweird.f32 %v6144
    %vm6181 = vweird.f32 %v6175
    %vm6182 = vmor %vm6180, %vm6181
    %v6183 = vsel %vm6182, %v6175, %v6179
    %v6184 = vand.u32 2147483647, %v6144
    %vm6185 = vcmp.eq.f32.partialorder %v6184, 8.507059e+37
    %v6186 = vand.u32 %v6144, 2147483648
    %v6187 = vor.u32 1.1754944e-38, %v6186
    %v6188 = vsel %vm6185, %v6187, %v6183
    %v6189 = vmul.f32 1.0, %v6188
    %v6190 = vmax.f32 %v6132, 0.0
    %v6192 = vrot.slane %v6031, 6
    %v6194 = vmul.f32 %v6174, %v6192
    %v6195 = vmul.f32 %v6159, %v6190
    %v6196 = vadd.f32 %v6194, %v6195
    %v6197 = vmax.f32 %v6196, 0.0
    %v6198 = vmul.f32 %v6189, %v6197
    %v6199 = vsel %vm4514, %v5061, %v5223
    %v6200 = vsel %vm4517, %v6199, %v5388
    %v6201 = vsel %vm4520, %v6200, %v5553
    %v6202 = vsel %vm4514, %v5706, %v5868
    %v6203 = vsel %vm4517, %v6202, %v6033
    %v6204 = vsel %vm4520, %v6203, %v6198
    %v6205 = vld [vmem:[#allocation9] sm:$0xff]
    %v6206 = vld [vmem:[#allocation9 + $0x8] sm:$0xff]
    %v6207 = vld [vmem:[#allocation9 + $0x10] sm:$0xff]
    %v6208 = vld [vmem:[#allocation9 + $0x18] sm:$0xff]
    %v6209 = vld [vmem:[#allocation9 + $0x20] sm:$0xff]
    %v6210 = vld [vmem:[#allocation9 + $0x28] sm:$0xff]
    %v6211 = vld [vmem:[#allocation9 + $0x30] sm:$0xff]
    %v6212 = vld [vmem:[#allocation9 + $0x38] sm:$0xff]
    %v6213 = vld [vmem:[#allocation9 + $0x40] sm:$0xff]
    %v6214 = vld [vmem:[#allocation9 + $0x48] sm:$0xff]
    %v6215 = vld [vmem:[#allocation9 + $0x50] sm:$0xff]
    %v6216 = vld [vmem:[#allocation9 + $0x58] sm:$0xff]
    %v6217 = vld [vmem:[#allocation9 + $0x60] sm:$0xff]
    %v6218 = vld [vmem:[#allocation9 + $0x68] sm:$0xff]
    %v6219 = vld [vmem:[#allocation9 + $0x70] sm:$0xff]
    %v6220 = vld [vmem:[#allocation9 + $0x78] sm:$0xff]
    %v6221 = vld [vmem:[#allocation9 + $0x80] sm:$0xff]
    %v6222 = vld [vmem:[#allocation9 + $0x88] sm:$0xff]
    %v6223 = vld [vmem:[#allocation9 + $0x90] sm:$0xff]
    %v6224 = vld [vmem:[#allocation9 + $0x98] sm:$0xff]
    %v6225 = vld [vmem:[#allocation9 + $0xa0] sm:$0xff]
    %v6226 = vld [vmem:[#allocation9 + $0xa8] sm:$0xff]
    %v6227 = vld [vmem:[#allocation9 + $0xb0] sm:$0xff]
    %v6228 = vld [vmem:[#allocation9 + $0xb8] sm:$0xff]
    %v6229 = vld [vmem:[#allocation9 + $0xc0] sm:$0xff]
    %v6230 = vld [vmem:[#allocation9 + $0xc8] sm:$0xff]
    %v6231 = vld [vmem:[#allocation9 + $0xd0] sm:$0xff]
    %v6232 = vld [vmem:[#allocation9 + $0xd8] sm:$0xff]
    %v6233 = vld [vmem:[#allocation9 + $0xe0] sm:$0xff]
    %v6234 = vld [vmem:[#allocation9 + $0xe8] sm:$0xff]
    %v6235 = vld [vmem:[#allocation9 + $0xf0] sm:$0xff]
    %v6236 = vld [vmem:[#allocation9 + $0xf8] sm:$0xff]
    %v6237 = vld [vmem:[#allocation10] sm:$0xff]
    %v6238 = vld [vmem:[#allocation10 + $0x8] sm:$0xff]
    %v6239 = vld [vmem:[#allocation10 + $0x10] sm:$0xff]
    %v6240 = vld [vmem:[#allocation10 + $0x18] sm:$0xff]
    %v6241 = vld [vmem:[#allocation10 + $0x20] sm:$0xff]
    %v6242 = vld [vmem:[#allocation10 + $0x28] sm:$0xff]
    %v6243 = vld [vmem:[#allocation10 + $0x30] sm:$0xff]
    %v6244 = vld [vmem:[#allocation10 + $0x38] sm:$0xff]
    %v6245 = vld [vmem:[#allocation10 + $0x40] sm:$0xff]
    %v6246 = vld [vmem:[#allocation10 + $0x48] sm:$0xff]
    %v6247 = vld [vmem:[#allocation10 + $0x50] sm:$0xff]
    %v6248 = vld [vmem:[#allocation10 + $0x58] sm:$0xff]
    %v6249 = vld [vmem:[#allocation10 + $0x60] sm:$0xff]
    %v6250 = vld [vmem:[#allocation10 + $0x68] sm:$0xff]
    %v6251 = vld [vmem:[#allocation10 + $0x70] sm:$0xff]
    %v6252 = vld [vmem:[#allocation10 + $0x78] sm:$0xff]
    %v6253 = vld [vmem:[#allocation12] sm:$0x3]
    %v6255 = vperm.slane %v6253, 0
    %v6256 = vperm.slane %v6253, 1
    %6259 = vmatpush.msra.mxu0 %v6235
    %6260 = vmatpush.msra.mxu0 %v6233
    %6261 = vmatpush.msra.mxu0 %v6231
    %6262 = vmatpush.msra.mxu0 %v6229
    %6263 = vmatpush.msra.mxu0 %v6227
    %6264 = vmatpush.msra.mxu0 %v6225
    %6265 = vmatpush.msra.mxu0 %v6223
    %6266 = vmatpush.msra.mxu0 %v6221
    %6267 = vmatpush.msra.mxu0 %v6219
    %6268 = vmatpush.msra.mxu0 %v6217
    %6269 = vmatpush.msra.mxu0 %v6215
    %6270 = vmatpush.msra.mxu0 %v6213
    %6271 = vmatpush.msra.mxu0 %v6211
    %6272 = vmatpush.msra.mxu0 %v6209
    %6273 = vmatpush.msra.mxu0 %v6207
    %6274 = vmatpush.msra.mxu0 %v6205
    %6275 = vmatmul.f32.gmra.mxu0 %v6201
    %v6276 = vpop.f32.mrf.mxu0
    %v6277 = vadd.f32 %v6255, %v6276
    %6278 = vmatmul.f32.gmra.mxu0 %v6204
    %v6279 = vpop.f32.mrf.mxu0
    %v6280 = vadd.f32 %v6255, %v6279
    %6281 = vdwg.mxu0
    %6282 = vmatpush.msra.mxu0 %v6236
    %6283 = vmatpush.msra.mxu0 %v6234
    %6284 = vmatpush.msra.mxu0 %v6232
    %6285 = vmatpush.msra.mxu0 %v6230
    %6286 = vmatpush.msra.mxu0 %v6228
    %6287 = vmatpush.msra.mxu0 %v6226
    %6288 = vmatpush.msra.mxu0 %v6224
    %6289 = vmatpush.msra.mxu0 %v6222
    %6290 = vmatpush.msra.mxu0 %v6220
    %6291 = vmatpush.msra.mxu0 %v6218
    %6292 = vmatpush.msra.mxu0 %v6216
    %6293 = vmatpush.msra.mxu0 %v6214
    %6294 = vmatpush.msra.mxu0 %v6212
    %6295 = vmatpush.msra.mxu0 %v6210
    %6296 = vmatpush.msra.mxu0 %v6208
    %6297 = vmatpush.msra.mxu0 %v6206
    %6298 = vmatmul.f32.gmra.mxu0 %v6201
    %v6299 = vpop.f32.mrf.mxu0
    %v6300 = vadd.f32 %v6256, %v6299
    %6301 = vmatmul.f32.gmra.mxu0 %v6204
    %v6302 = vpop.f32.mrf.mxu0
    %v6303 = vadd.f32 %v6256, %v6302
    %6304 = vdwg.mxu0
    %vm6305 = vcmask 523264
    %v6307 = vsel %vm6305, 0.0, 0
    %6309 = vmatpush.msra.mxu0 0.0
    %6310 = vmatpush.msra.mxu0 0.0
    %6311 = vmatpush.msra.mxu0 0.0
    %6312 = vmatpush.msra.mxu0 0.0
    %6313 = vmatpush.msra.mxu0 0.0
    %6314 = vmatpush.msra.mxu0 0.0
    %6315 = vmatpush.msra.mxu0 0.0
    %6316 = vmatpush.msra.mxu0 0.0
    %6317 = vmatpush.msra.mxu0 %v6251
    %6318 = vmatpush.msra.mxu0 %v6249
    %6319 = vmatpush.msra.mxu0 %v6247
    %6320 = vmatpush.msra.mxu0 %v6245
    %6321 = vmatpush.msra.mxu0 %v6243
    %6322 = vmatpush.msra.mxu0 %v6241
    %6323 = vmatpush.msra.mxu0 %v6239
    %6324 = vmatpush.msra.mxu0 %v6237
    %6325 = vmatmul.f32.gmra.mxu0 %v6307
    %v6326 = vpop.f32.mrf.mxu0
    %v6327 = vadd.f32 0.0, %v6326
    %6328 = vdwg.mxu0
    %6329 = vmatpush.msra.mxu0 0.0
    %6330 = vmatpush.msra.mxu0 0.0
    %6331 = vmatpush.msra.mxu0 0.0
    %6332 = vmatpush.msra.mxu0 0.0
    %6333 = vmatpush.msra.mxu0 0.0
    %6334 = vmatpush.msra.mxu0 0.0
    %6335 = vmatpush.msra.mxu0 0.0
    %6336 = vmatpush.msra.mxu0 0.0
    %6337 = vmatpush.msra.mxu0 %v6252
    %6338 = vmatpush.msra.mxu0 %v6250
    %6339 = vmatpush.msra.mxu0 %v6248
    %6340 = vmatpush.msra.mxu0 %v6246
    %6341 = vmatpush.msra.mxu0 %v6244
    %6342 = vmatpush.msra.mxu0 %v6242
    %6343 = vmatpush.msra.mxu0 %v6240
    %6344 = vmatpush.msra.mxu0 %v6238
    %6345 = vmatmul.f32.gmra.mxu0 %v6307
    %v6346 = vpop.f32.mrf.mxu0
    %v6347 = vadd.f32 0.0, %v6346
    %6348 = vdwg.mxu0
    %v6349 = vadd.f32 %v6277, %v6327
    %v6350 = vadd.f32 %v6300, %v6347
    %v6351 = vxor.u32 %v6349, 2147483648
    %v6352 = vxor.u32 %v6350, 2147483648
    %v6353 = vmul.f32 %v6351, 1.442695
    %v6354 = vpow.pop %v6353
    %v6355 = vmul.f32 %v6352, 1.442695
    %v6356 = vpow.pop %v6355
    %v6357 = vadd.f32 %v6354, 1.0
    %v6358 = vadd.f32 %v6356, 1.0
    %v6359 = vrcp.pop %v6357
    %v6360 = vmul.f32 %v6357, %v6359
    %v6361 = vsub.f32 1.0, %v6360
    %v6362 = vmul.f32 %v6359, %v6361
    %v6363 = vadd.f32 %v6359, %v6362
    %vm6364 = vweird.f32 %v6357
    %vm6365 = vweird.f32 %v6359
    %vm6366 = vmor %vm6364, %vm6365
    %v6367 = vsel %vm6366, %v6359, %v6363
    %v6368 = vand.u32 2147483647, %v6357
    %vm6369 = vcmp.eq.f32.partialorder %v6368, 8.507059e+37
    %v6370 = vand.u32 %v6357, 2147483648
    %v6371 = vor.u32 1.1754944e-38, %v6370
    %v6372 = vsel %vm6369, %v6371, %v6367
    %v6373 = vmul.f32 1.0, %v6372
    %v6374 = vrcp.pop %v6358
    %v6375 = vmul.f32 %v6358, %v6374
    %v6376 = vsub.f32 1.0, %v6375
    %v6377 = vmul.f32 %v6374, %v6376
    %v6378 = vadd.f32 %v6374, %v6377
    %vm6379 = vweird.f32 %v6358
    %vm6380 = vweird.f32 %v6374
    %vm6381 = vmor %vm6379, %vm6380
    %v6382 = vsel %vm6381, %v6374, %v6378
    %v6383 = vand.u32 2147483647, %v6358
    %vm6384 = vcmp.eq.f32.partialorder %v6383, 8.507059e+37
    %v6385 = vand.u32 %v6358, 2147483648
    %v6386 = vor.u32 1.1754944e-38, %v6385
    %v6387 = vsel %vm6384, %v6386, %v6382
    %v6388 = vmul.f32 1.0, %v6387
    %v6389 = vmax.f32 %v6350, 0.0
    %v6390 = vmul.f32 %v6373, 0.0
    %6392 = vrot.lane.b32.xlu0 %v6389, 64
    %v6393 = vpop.permute.xlu0 %6392
    %v6395 = vmul.f32 %v6373, %v6393
    %6397 = vrot.lane.b32.xlu0 %v6395, 64
    %v6398 = vpop.permute.xlu0 %6397
    %v6400 = vadd.f32 %v6390, %v6398
    %v6401 = vmax.f32 %v6400, 0.0
    %6403 = vrot.lane.b32.xlu0 %v6401, 64
    %v6404 = vpop.permute.xlu0 %6403
    %v6406 = vmul.f32 %v6388, %v6404
    %v6408 = vsel %vm6305, %v6406, 0
    %6410 = vmatpush.msra.mxu0 0.0
    %6411 = vmatpush.msra.mxu0 0.0
    %6412 = vmatpush.msra.mxu0 0.0
    %6413 = vmatpush.msra.mxu0 0.0
    %6414 = vmatpush.msra.mxu0 0.0
    %6415 = vmatpush.msra.mxu0 0.0
    %6416 = vmatpush.msra.mxu0 0.0
    %6417 = vmatpush.msra.mxu0 0.0
    %6418 = vmatpush.msra.mxu0 %v6251
    %6419 = vmatpush.msra.mxu0 %v6249
    %6420 = vmatpush.msra.mxu0 %v6247
    %6421 = vmatpush.msra.mxu0 %v6245
    %6422 = vmatpush.msra.mxu0 %v6243
    %6423 = vmatpush.msra.mxu0 %v6241
    %6424 = vmatpush.msra.mxu0 %v6239
    %6425 = vmatpush.msra.mxu0 %v6237
    %6426 = vmatmul.f32.gmra.mxu0 %v6408
    %v6427 = vpop.f32.mrf.mxu0
    %v6428 = vadd.f32 0.0, %v6427
    %6429 = vdwg.mxu0
    %6430 = vmatpush.msra.mxu0 0.0
    %6431 = vmatpush.msra.mxu0 0.0
    %6432 = vmatpush.msra.mxu0 0.0
    %6433 = vmatpush.msra.mxu0 0.0
    %6434 = vmatpush.msra.mxu0 0.0
    %6435 = vmatpush.msra.mxu0 0.0
    %6436 = vmatpush.msra.mxu0 0.0
    %6437 = vmatpush.msra.mxu0 0.0
    %6438 = vmatpush.msra.mxu0 %v6252
    %6439 = vmatpush.msra.mxu0 %v6250
    %6440 = vmatpush.msra.mxu0 %v6248
    %6441 = vmatpush.msra.mxu0 %v6246
    %6442 = vmatpush.msra.mxu0 %v6244
    %6443 = vmatpush.msra.mxu0 %v6242
    %6444 = vmatpush.msra.mxu0 %v6240
    %6445 = vmatpush.msra.mxu0 %v6238
    %6446 = vmatmul.f32.gmra.mxu0 %v6408
    %v6447 = vpop.f32.mrf.mxu0
    %v6448 = vadd.f32 0.0, %v6447
    %6449 = vdwg.mxu0
    %v6452 = vrot.slane %v6428, 6
    %v6453 = vrot.slane %v6448, 6
    %v6456 = vadd.f32 %v6277, %v6452
    %v6457 = vadd.f32 %v6300, %v6453
    %v6458 = vxor.u32 %v6456, 2147483648
    %v6459 = vxor.u32 %v6457, 2147483648
    %v6460 = vmul.f32 %v6458, 1.442695
    %v6461 = vpow.pop %v6460
    %v6462 = vmul.f32 %v6459, 1.442695
    %v6463 = vpow.pop %v6462
    %v6464 = vadd.f32 %v6461, 1.0
    %v6465 = vadd.f32 %v6463, 1.0
    %v6466 = vrcp.pop %v6464
    %v6467 = vmul.f32 %v6464, %v6466
    %v6468 = vsub.f32 1.0, %v6467
    %v6469 = vmul.f32 %v6466, %v6468
    %v6470 = vadd.f32 %v6466, %v6469
    %vm6471 = vweird.f32 %v6464
    %vm6472 = vweird.f32 %v6466
    %vm6473 = vmor %vm6471, %vm6472
    %v6474 = vsel %vm6473, %v6466, %v6470
    %v6475 = vand.u32 2147483647, %v6464
    %vm6476 = vcmp.eq.f32.partialorder %v6475, 8.507059e+37
    %v6477 = vand.u32 %v6464, 2147483648
    %v6478 = vor.u32 1.1754944e-38, %v6477
    %v6479 = vsel %vm6476, %v6478, %v6474
    %v6480 = vmul.f32 1.0, %v6479
    %v6481 = vrcp.pop %v6465
    %v6482 = vmul.f32 %v6465, %v6481
    %v6483 = vsub.f32 1.0, %v6482
    %v6484 = vmul.f32 %v6481, %v6483
    %v6485 = vadd.f32 %v6481, %v6484
    %vm6486 = vweird.f32 %v6465
    %vm6487 = vweird.f32 %v6481
    %vm6488 = vmor %vm6486, %vm6487
    %v6489 = vsel %vm6488, %v6481, %v6485
    %v6490 = vand.u32 2147483647, %v6465
    %vm6491 = vcmp.eq.f32.partialorder %v6490, 8.507059e+37
    %v6492 = vand.u32 %v6465, 2147483648
    %v6493 = vor.u32 1.1754944e-38, %v6492
    %v6494 = vsel %vm6491, %v6493, %v6489
    %v6495 = vmul.f32 1.0, %v6494
    %v6496 = vmax.f32 %v6457, 0.0
    %v6498 = vrot.slane %v6400, 6
    %v6500 = vmul.f32 %v6480, %v6498
    %6502 = vrot.lane.b32.xlu0 %v6496, 64
    %v6503 = vpop.permute.xlu0 %6502
    %v6505 = vmul.f32 %v6480, %v6503
    %6507 = vrot.lane.b32.xlu0 %v6505, 64
    %v6508 = vpop.permute.xlu0 %6507
    %v6510 = vadd.f32 %v6500, %v6508
    %v6511 = vmax.f32 %v6510, 0.0
    %6513 = vrot.lane.b32.xlu0 %v6511, 64
    %v6514 = vpop.permute.xlu0 %6513
    %v6516 = vmul.f32 %v6495, %v6514
    %v6518 = vrot.slane %v6516, 2
    %v6519 = vsel %vm6305, %v6518, 0
    %6521 = vmatpush.msra.mxu0 0.0
    %6522 = vmatpush.msra.mxu0 0.0
    %6523 = vmatpush.msra.mxu0 0.0
    %6524 = vmatpush.msra.mxu0 0.0
    %6525 = vmatpush.msra.mxu0 0.0
    %6526 = vmatpush.msra.mxu0 0.0
    %6527 = vmatpush.msra.mxu0 0.0
    %6528 = vmatpush.msra.mxu0 0.0
    %6529 = vmatpush.msra.mxu0 %v6251
    %6530 = vmatpush.msra.mxu0 %v6249
    %6531 = vmatpush.msra.mxu0 %v6247
    %6532 = vmatpush.msra.mxu0 %v6245
    %6533 = vmatpush.msra.mxu0 %v6243
    %6534 = vmatpush.msra.mxu0 %v6241
    %6535 = vmatpush.msra.mxu0 %v6239
    %6536 = vmatpush.msra.mxu0 %v6237
    %6537 = vmatmul.f32.gmra.mxu0 %v6519
    %v6538 = vpop.f32.mrf.mxu0
    %v6539 = vadd.f32 0.0, %v6538
    %6540 = vdwg.mxu0
    %6541 = vmatpush.msra.mxu0 0.0
    %6542 = vmatpush.msra.mxu0 0.0
    %6543 = vmatpush.msra.mxu0 0.0
    %6544 = vmatpush.msra.mxu0 0.0
    %6545 = vmatpush.msra.mxu0 0.0
    %6546 = vmatpush.msra.mxu0 0.0
    %6547 = vmatpush.msra.mxu0 0.0
    %6548 = vmatpush.msra.mxu0 0.0
    %6549 = vmatpush.msra.mxu0 %v6252
    %6550 = vmatpush.msra.mxu0 %v6250
    %6551 = vmatpush.msra.mxu0 %v6248
    %6552 = vmatpush.msra.mxu0 %v6246
    %6553 = vmatpush.msra.mxu0 %v6244
    %6554 = vmatpush.msra.mxu0 %v6242
    %6555 = vmatpush.msra.mxu0 %v6240
    %6556 = vmatpush.msra.mxu0 %v6238
    %6557 = vmatmul.f32.gmra.mxu0 %v6519
    %v6558 = vpop.f32.mrf.mxu0
    %v6559 = vadd.f32 0.0, %v6558
    %6560 = vdwg.mxu0
    %v6563 = vrot.slane %v6539, 4
    %v6564 = vrot.slane %v6559, 4
    %v6567 = vadd.f32 %v6277, %v6563
    %v6568 = vadd.f32 %v6300, %v6564
    %v6569 = vxor.u32 %v6567, 2147483648
    %v6570 = vxor.u32 %v6568, 2147483648
    %v6571 = vmul.f32 %v6569, 1.442695
    %v6572 = vpow.pop %v6571
    %v6573 = vmul.f32 %v6570, 1.442695
    %v6574 = vpow.pop %v6573
    %v6575 = vadd.f32 %v6572, 1.0
    %v6576 = vadd.f32 %v6574, 1.0
    %v6577 = vrcp.pop %v6575
    %v6578 = vmul.f32 %v6575, %v6577
    %v6579 = vsub.f32 1.0, %v6578
    %v6580 = vmul.f32 %v6577, %v6579
    %v6581 = vadd.f32 %v6577, %v6580
    %vm6582 = vweird.f32 %v6575
    %vm6583 = vweird.f32 %v6577
    %vm6584 = vmor %vm6582, %vm6583
    %v6585 = vsel %vm6584, %v6577, %v6581
    %v6586 = vand.u32 2147483647, %v6575
    %vm6587 = vcmp.eq.f32.partialorder %v6586, 8.507059e+37
    %v6588 = vand.u32 %v6575, 2147483648
    %v6589 = vor.u32 1.1754944e-38, %v6588
    %v6590 = vsel %vm6587, %v6589, %v6585
    %v6591 = vmul.f32 1.0, %v6590
    %v6592 = vrcp.pop %v6576
    %v6593 = vmul.f32 %v6576, %v6592
    %v6594 = vsub.f32 1.0, %v6593
    %v6595 = vmul.f32 %v6592, %v6594
    %v6596 = vadd.f32 %v6592, %v6595
    %vm6597 = vweird.f32 %v6576
    %vm6598 = vweird.f32 %v6592
    %vm6599 = vmor %vm6597, %vm6598
    %v6600 = vsel %vm6599, %v6592, %v6596
    %v6601 = vand.u32 2147483647, %v6576
    %vm6602 = vcmp.eq.f32.partialorder %v6601, 8.507059e+37
    %v6603 = vand.u32 %v6576, 2147483648
    %v6604 = vor.u32 1.1754944e-38, %v6603
    %v6605 = vsel %vm6602, %v6604, %v6600
    %v6606 = vmul.f32 1.0, %v6605
    %v6607 = vmax.f32 %v6568, 0.0
    %v6609 = vrot.slane %v6510, 6
    %v6611 = vmul.f32 %v6591, %v6609
    %6613 = vrot.lane.b32.xlu0 %v6607, 64
    %v6614 = vpop.permute.xlu0 %6613
    %v6616 = vmul.f32 %v6591, %v6614
    %6618 = vrot.lane.b32.xlu0 %v6616, 64
    %v6619 = vpop.permute.xlu0 %6618
    %v6621 = vadd.f32 %v6611, %v6619
    %v6622 = vmax.f32 %v6621, 0.0
    %6624 = vrot.lane.b32.xlu0 %v6622, 64
    %v6625 = vpop.permute.xlu0 %6624
    %v6627 = vmul.f32 %v6606, %v6625
    %v6629 = vrot.slane %v6627, 4
    %v6630 = vsel %vm6305, %v6629, 0
    %6632 = vmatpush.msra.mxu0 0.0
    %6633 = vmatpush.msra.mxu0 0.0
    %6634 = vmatpush.msra.mxu0 0.0
    %6635 = vmatpush.msra.mxu0 0.0
    %6636 = vmatpush.msra.mxu0 0.0
    %6637 = vmatpush.msra.mxu0 0.0
    %6638 = vmatpush.msra.mxu0 0.0
    %6639 = vmatpush.msra.mxu0 0.0
    %6640 = vmatpush.msra.mxu0 %v6251
    %6641 = vmatpush.msra.mxu0 %v6249
    %6642 = vmatpush.msra.mxu0 %v6247
    %6643 = vmatpush.msra.mxu0 %v6245
    %6644 = vmatpush.msra.mxu0 %v6243
    %6645 = vmatpush.msra.mxu0 %v6241
    %6646 = vmatpush.msra.mxu0 %v6239
    %6647 = vmatpush.msra.mxu0 %v6237
    %6648 = vmatmul.f32.gmra.mxu0 %v6630
    %v6649 = vpop.f32.mrf.mxu0
    %v6650 = vadd.f32 0.0, %v6649
    %6651 = vdwg.mxu0
    %6652 = vmatpush.msra.mxu0 0.0
    %6653 = vmatpush.msra.mxu0 0.0
    %6654 = vmatpush.msra.mxu0 0.0
    %6655 = vmatpush.msra.mxu0 0.0
    %6656 = vmatpush.msra.mxu0 0.0
    %6657 = vmatpush.msra.mxu0 0.0
    %6658 = vmatpush.msra.mxu0 0.0
    %6659 = vmatpush.msra.mxu0 0.0
    %6660 = vmatpush.msra.mxu0 %v6252
    %6661 = vmatpush.msra.mxu0 %v6250
    %6662 = vmatpush.msra.mxu0 %v6248
    %6663 = vmatpush.msra.mxu0 %v6246
    %6664 = vmatpush.msra.mxu0 %v6244
    %6665 = vmatpush.msra.mxu0 %v6242
    %6666 = vmatpush.msra.mxu0 %v6240
    %6667 = vmatpush.msra.mxu0 %v6238
    %6668 = vmatmul.f32.gmra.mxu0 %v6630
    %v6669 = vpop.f32.mrf.mxu0
    %v6670 = vadd.f32 0.0, %v6669
    %6671 = vdwg.mxu0
    %v6674 = vrot.slane %v6650, 2
    %v6675 = vrot.slane %v6670, 2
    %v6678 = vadd.f32 %v6277, %v6674
    %v6679 = vadd.f32 %v6300, %v6675
    %v6680 = vxor.u32 %v6678, 2147483648
    %v6681 = vxor.u32 %v6679, 2147483648
    %v6682 = vmul.f32 %v6680, 1.442695
    %v6683 = vpow.pop %v6682
    %v6684 = vmul.f32 %v6681, 1.442695
    %v6685 = vpow.pop %v6684
    %v6686 = vadd.f32 %v6683, 1.0
    %v6687 = vadd.f32 %v6685, 1.0
    %v6688 = vrcp.pop %v6686
    %v6689 = vmul.f32 %v6686, %v6688
    %v6690 = vsub.f32 1.0, %v6689
    %v6691 = vmul.f32 %v6688, %v6690
    %v6692 = vadd.f32 %v6688, %v6691
    %vm6693 = vweird.f32 %v6686
    %vm6694 = vweird.f32 %v6688
    %vm6695 = vmor %vm6693, %vm6694
    %v6696 = vsel %vm6695, %v6688, %v6692
    %v6697 = vand.u32 2147483647, %v6686
    %vm6698 = vcmp.eq.f32.partialorder %v6697, 8.507059e+37
    %v6699 = vand.u32 %v6686, 2147483648
    %v6700 = vor.u32 1.1754944e-38, %v6699
    %v6701 = vsel %vm6698, %v6700, %v6696
    %v6702 = vmul.f32 1.0, %v6701
    %v6703 = vrcp.pop %v6687
    %v6704 = vmul.f32 %v6687, %v6703
    %v6705 = vsub.f32 1.0, %v6704
    %v6706 = vmul.f32 %v6703, %v6705
    %v6707 = vadd.f32 %v6703, %v6706
    %vm6708 = vweird.f32 %v6687
    %vm6709 = vweird.f32 %v6703
    %vm6710 = vmor %vm6708, %vm6709
    %v6711 = vsel %vm6710, %v6703, %v6707
    %v6712 = vand.u32 2147483647, %v6687
    %vm6713 = vcmp.eq.f32.partialorder %v6712, 8.507059e+37
    %v6714 = vand.u32 %v6687, 2147483648
    %v6715 = vor.u32 1.1754944e-38, %v6714
    %v6716 = vsel %vm6713, %v6715, %v6711
    %v6717 = vmul.f32 1.0, %v6716
    %v6718 = vmax.f32 %v6679, 0.0
    %v6720 = vrot.slane %v6621, 6
    %v6722 = vmul.f32 %v6702, %v6720
    %6724 = vrot.lane.b32.xlu0 %v6718, 64
    %v6725 = vpop.permute.xlu0 %6724
    %v6727 = vmul.f32 %v6702, %v6725
    %6729 = vrot.lane.b32.xlu0 %v6727, 64
    %v6730 = vpop.permute.xlu0 %6729
    %v6732 = vadd.f32 %v6722, %v6730
    %v6733 = vmax.f32 %v6732, 0.0
    %6735 = vrot.lane.b32.xlu0 %v6733, 64
    %v6736 = vpop.permute.xlu0 %6735
    %v6738 = vmul.f32 %v6717, %v6736
    %v6740 = vrot.slane %v6738, 6
    %v6741 = vsel %vm6305, %v6740, 0
    %6743 = vmatpush.msra.mxu0 0.0
    %6744 = vmatpush.msra.mxu0 0.0
    %6745 = vmatpush.msra.mxu0 0.0
    %6746 = vmatpush.msra.mxu0 0.0
    %6747 = vmatpush.msra.mxu0 0.0
    %6748 = vmatpush.msra.mxu0 0.0
    %6749 = vmatpush.msra.mxu0 0.0
    %6750 = vmatpush.msra.mxu0 0.0
    %6751 = vmatpush.msra.mxu0 %v6251
    %6752 = vmatpush.msra.mxu0 %v6249
    %6753 = vmatpush.msra.mxu0 %v6247
    %6754 = vmatpush.msra.mxu0 %v6245
    %6755 = vmatpush.msra.mxu0 %v6243
    %6756 = vmatpush.msra.mxu0 %v6241
    %6757 = vmatpush.msra.mxu0 %v6239
    %6758 = vmatpush.msra.mxu0 %v6237
    %6759 = vmatmul.f32.gmra.mxu0 %v6741
    %v6760 = vpop.f32.mrf.mxu0
    %v6761 = vadd.f32 0.0, %v6760
    %6762 = vdwg.mxu0
    %6763 = vmatpush.msra.mxu0 0.0
    %6764 = vmatpush.msra.mxu0 0.0
    %6765 = vmatpush.msra.mxu0 0.0
    %6766 = vmatpush.msra.mxu0 0.0
    %6767 = vmatpush.msra.mxu0 0.0
    %6768 = vmatpush.msra.mxu0 0.0
    %6769 = vmatpush.msra.mxu0 0.0
    %6770 = vmatpush.msra.mxu0 0.0
    %6771 = vmatpush.msra.mxu0 %v6252
    %6772 = vmatpush.msra.mxu0 %v6250
    %6773 = vmatpush.msra.mxu0 %v6248
    %6774 = vmatpush.msra.mxu0 %v6246
    %6775 = vmatpush.msra.mxu0 %v6244
    %6776 = vmatpush.msra.mxu0 %v6242
    %6777 = vmatpush.msra.mxu0 %v6240
    %6778 = vmatpush.msra.mxu0 %v6238
    %6779 = vmatmul.f32.gmra.mxu0 %v6741
    %v6780 = vpop.f32.mrf.mxu0
    %v6781 = vadd.f32 0.0, %v6780
    %6782 = vdwg.mxu0
    %v6783 = vadd.f32 %v6280, %v6761
    %v6784 = vadd.f32 %v6303, %v6781
    %v6785 = vxor.u32 %v6783, 2147483648
    %v6786 = vxor.u32 %v6784, 2147483648
    %v6787 = vmul.f32 %v6785, 1.442695
    %v6788 = vpow.pop %v6787
    %v6789 = vmul.f32 %v6786, 1.442695
    %v6790 = vpow.pop %v6789
    %v6791 = vadd.f32 %v6788, 1.0
    %v6792 = vadd.f32 %v6790, 1.0
    %v6793 = vrcp.pop %v6791
    %v6794 = vmul.f32 %v6791, %v6793
    %v6795 = vsub.f32 1.0, %v6794
    %v6796 = vmul.f32 %v6793, %v6795
    %v6797 = vadd.f32 %v6793, %v6796
    %vm6798 = vweird.f32 %v6791
    %vm6799 = vweird.f32 %v6793
    %vm6800 = vmor %vm6798, %vm6799
    %v6801 = vsel %vm6800, %v6793, %v6797
    %v6802 = vand.u32 2147483647, %v6791
    %vm6803 = vcmp.eq.f32.partialorder %v6802, 8.507059e+37
    %v6804 = vand.u32 %v6791, 2147483648
    %v6805 = vor.u32 1.1754944e-38, %v6804
    %v6806 = vsel %vm6803, %v6805, %v6801
    %v6807 = vmul.f32 1.0, %v6806
    %v6808 = vrcp.pop %v6792
    %v6809 = vmul.f32 %v6792, %v6808
    %v6810 = vsub.f32 1.0, %v6809
    %v6811 = vmul.f32 %v6808, %v6810
    %v6812 = vadd.f32 %v6808, %v6811
    %vm6813 = vweird.f32 %v6792
    %vm6814 = vweird.f32 %v6808
    %vm6815 = vmor %vm6813, %vm6814
    %v6816 = vsel %vm6815, %v6808, %v6812
    %v6817 = vand.u32 2147483647, %v6792
    %vm6818 = vcmp.eq.f32.partialorder %v6817, 8.507059e+37
    %v6819 = vand.u32 %v6792, 2147483648
    %v6820 = vor.u32 1.1754944e-38, %v6819
    %v6821 = vsel %vm6818, %v6820, %v6816
    %v6822 = vmul.f32 1.0, %v6821
    %v6823 = vmax.f32 %v6784, 0.0
    %v6825 = vrot.slane %v6732, 6
    %v6827 = vmul.f32 %v6807, %v6825
    %6829 = vrot.lane.b32.xlu0 %v6823, 64
    %v6830 = vpop.permute.xlu0 %6829
    %v6832 = vmul.f32 %v6807, %v6830
    %6834 = vrot.lane.b32.xlu0 %v6832, 64
    %v6835 = vpop.permute.xlu0 %6834
    %v6837 = vadd.f32 %v6827, %v6835
    %v6838 = vmax.f32 %v6837, 0.0
    %6840 = vrot.lane.b32.xlu0 %v6838, 64
    %v6841 = vpop.permute.xlu0 %6840
    %v6843 = vmul.f32 %v6822, %v6841
    %v6845 = vsel %vm6305, %v6843, 0
    %6847 = vmatpush.msra.mxu0 0.0
    %6848 = vmatpush.msra.mxu0 0.0
    %6849 = vmatpush.msra.mxu0 0.0
    %6850 = vmatpush.msra.mxu0 0.0
    %6851 = vmatpush.msra.mxu0 0.0
    %6852 = vmatpush.msra.mxu0 0.0
    %6853 = vmatpush.msra.mxu0 0.0
    %6854 = vmatpush.msra.mxu0 0.0
    %6855 = vmatpush.msra.mxu0 %v6251
    %6856 = vmatpush.msra.mxu0 %v6249
    %6857 = vmatpush.msra.mxu0 %v6247
    %6858 = vmatpush.msra.mxu0 %v6245
    %6859 = vmatpush.msra.mxu0 %v6243
    %6860 = vmatpush.msra.mxu0 %v6241
    %6861 = vmatpush.msra.mxu0 %v6239
    %6862 = vmatpush.msra.mxu0 %v6237
    %6863 = vmatmul.f32.gmra.mxu0 %v6845
    %v6864 = vpop.f32.mrf.mxu0
    %v6865 = vadd.f32 0.0, %v6864
    %6866 = vdwg.mxu0
    %6867 = vmatpush.msra.mxu0 0.0
    %6868 = vmatpush.msra.mxu0 0.0
    %6869 = vmatpush.msra.mxu0 0.0
    %6870 = vmatpush.msra.mxu0 0.0
    %6871 = vmatpush.msra.mxu0 0.0
    %6872 = vmatpush.msra.mxu0 0.0
    %6873 = vmatpush.msra.mxu0 0.0
    %6874 = vmatpush.msra.mxu0 0.0
    %6875 = vmatpush.msra.mxu0 %v6252
    %6876 = vmatpush.msra.mxu0 %v6250
    %6877 = vmatpush.msra.mxu0 %v6248
    %6878 = vmatpush.msra.mxu0 %v6246
    %6879 = vmatpush.msra.mxu0 %v6244
    %6880 = vmatpush.msra.mxu0 %v6242
    %6881 = vmatpush.msra.mxu0 %v6240
    %6882 = vmatpush.msra.mxu0 %v6238
    %6883 = vmatmul.f32.gmra.mxu0 %v6845
    %v6884 = vpop.f32.mrf.mxu0
    %v6885 = vadd.f32 0.0, %v6884
    %6886 = vdwg.mxu0
    %v6889 = vrot.slane %v6865, 6
    %v6890 = vrot.slane %v6885, 6
    %v6893 = vadd.f32 %v6280, %v6889
    %v6894 = vadd.f32 %v6303, %v6890
    %v6895 = vxor.u32 %v6893, 2147483648
    %v6896 = vxor.u32 %v6894, 2147483648
    %v6897 = vmul.f32 %v6895, 1.442695
    %v6898 = vpow.pop %v6897
    %v6899 = vmul.f32 %v6896, 1.442695
    %v6900 = vpow.pop %v6899
    %v6901 = vadd.f32 %v6898, 1.0
    %v6902 = vadd.f32 %v6900, 1.0
    %v6903 = vrcp.pop %v6901
    %v6904 = vmul.f32 %v6901, %v6903
    %v6905 = vsub.f32 1.0, %v6904
    %v6906 = vmul.f32 %v6903, %v6905
    %v6907 = vadd.f32 %v6903, %v6906
    %vm6908 = vweird.f32 %v6901
    %vm6909 = vweird.f32 %v6903
    %vm6910 = vmor %vm6908, %vm6909
    %v6911 = vsel %vm6910, %v6903, %v6907
    %v6912 = vand.u32 2147483647, %v6901
    %vm6913 = vcmp.eq.f32.partialorder %v6912, 8.507059e+37
    %v6914 = vand.u32 %v6901, 2147483648
    %v6915 = vor.u32 1.1754944e-38, %v6914
    %v6916 = vsel %vm6913, %v6915, %v6911
    %v6917 = vmul.f32 1.0, %v6916
    %v6918 = vrcp.pop %v6902
    %v6919 = vmul.f32 %v6902, %v6918
    %v6920 = vsub.f32 1.0, %v6919
    %v6921 = vmul.f32 %v6918, %v6920
    %v6922 = vadd.f32 %v6918, %v6921
    %vm6923 = vweird.f32 %v6902
    %vm6924 = vweird.f32 %v6918
    %vm6925 = vmor %vm6923, %vm6924
    %v6926 = vsel %vm6925, %v6918, %v6922
    %v6927 = vand.u32 2147483647, %v6902
    %vm6928 = vcmp.eq.f32.partialorder %v6927, 8.507059e+37
    %v6929 = vand.u32 %v6902, 2147483648
    %v6930 = vor.u32 1.1754944e-38, %v6929
    %v6931 = vsel %vm6928, %v6930, %v6926
    %v6932 = vmul.f32 1.0, %v6931
    %v6933 = vmax.f32 %v6894, 0.0
    %v6935 = vrot.slane %v6837, 6
    %v6937 = vmul.f32 %v6917, %v6935
    %6939 = vrot.lane.b32.xlu0 %v6933, 64
    %v6940 = vpop.permute.xlu0 %6939
    %v6942 = vmul.f32 %v6917, %v6940
    %6944 = vrot.lane.b32.xlu0 %v6942, 64
    %v6945 = vpop.permute.xlu0 %6944
    %v6947 = vadd.f32 %v6937, %v6945
    %v6948 = vmax.f32 %v6947, 0.0
    %6950 = vrot.lane.b32.xlu0 %v6948, 64
    %v6951 = vpop.permute.xlu0 %6950
    %v6953 = vmul.f32 %v6932, %v6951
    %v6955 = vrot.slane %v6953, 2
    %v6956 = vsel %vm6305, %v6955, 0
    %6958 = vmatpush.msra.mxu0 0.0
    %6959 = vmatpush.msra.mxu0 0.0
    %6960 = vmatpush.msra.mxu0 0.0
    %6961 = vmatpush.msra.mxu0 0.0
    %6962 = vmatpush.msra.mxu0 0.0
    %6963 = vmatpush.msra.mxu0 0.0
    %6964 = vmatpush.msra.mxu0 0.0
    %6965 = vmatpush.msra.mxu0 0.0
    %6966 = vmatpush.msra.mxu0 %v6251
    %6967 = vmatpush.msra.mxu0 %v6249
    %6968 = vmatpush.msra.mxu0 %v6247
    %6969 = vmatpush.msra.mxu0 %v6245
    %6970 = vmatpush.msra.mxu0 %v6243
    %6971 = vmatpush.msra.mxu0 %v6241
    %6972 = vmatpush.msra.mxu0 %v6239
    %6973 = vmatpush.msra.mxu0 %v6237
    %6974 = vmatmul.f32.gmra.mxu0 %v6956
    %v6975 = vpop.f32.mrf.mxu0
    %v6976 = vadd.f32 0.0, %v6975
    %6977 = vdwg.mxu0
    %6978 = vmatpush.msra.mxu0 0.0
    %6979 = vmatpush.msra.mxu0 0.0
    %6980 = vmatpush.msra.mxu0 0.0
    %6981 = vmatpush.msra.mxu0 0.0
    %6982 = vmatpush.msra.mxu0 0.0
    %6983 = vmatpush.msra.mxu0 0.0
    %6984 = vmatpush.msra.mxu0 0.0
    %6985 = vmatpush.msra.mxu0 0.0
    %6986 = vmatpush.msra.mxu0 %v6252
    %6987 = vmatpush.msra.mxu0 %v6250
    %6988 = vmatpush.msra.mxu0 %v6248
    %6989 = vmatpush.msra.mxu0 %v6246
    %6990 = vmatpush.msra.mxu0 %v6244
    %6991 = vmatpush.msra.mxu0 %v6242
    %6992 = vmatpush.msra.mxu0 %v6240
    %6993 = vmatpush.msra.mxu0 %v6238
    %6994 = vmatmul.f32.gmra.mxu0 %v6956
    %v6995 = vpop.f32.mrf.mxu0
    %v6996 = vadd.f32 0.0, %v6995
    %6997 = vdwg.mxu0
    %v7000 = vrot.slane %v6976, 4
    %v7001 = vrot.slane %v6996, 4
    %v7004 = vadd.f32 %v6280, %v7000
    %v7005 = vadd.f32 %v6303, %v7001
    %v7006 = vxor.u32 %v7004, 2147483648
    %v7007 = vxor.u32 %v7005, 2147483648
    %v7008 = vmul.f32 %v7006, 1.442695
    %v7009 = vpow.pop %v7008
    %v7010 = vmul.f32 %v7007, 1.442695
    %v7011 = vpow.pop %v7010
    %v7012 = vadd.f32 %v7009, 1.0
    %v7013 = vadd.f32 %v7011, 1.0
    %v7014 = vrcp.pop %v7012
    %v7015 = vmul.f32 %v7012, %v7014
    %v7016 = vsub.f32 1.0, %v7015
    %v7017 = vmul.f32 %v7014, %v7016
    %v7018 = vadd.f32 %v7014, %v7017
    %vm7019 = vweird.f32 %v7012
    %vm7020 = vweird.f32 %v7014
    %vm7021 = vmor %vm7019, %vm7020
    %v7022 = vsel %vm7021, %v7014, %v7018
    %v7023 = vand.u32 2147483647, %v7012
    %vm7024 = vcmp.eq.f32.partialorder %v7023, 8.507059e+37
    %v7025 = vand.u32 %v7012, 2147483648
    %v7026 = vor.u32 1.1754944e-38, %v7025
    %v7027 = vsel %vm7024, %v7026, %v7022
    %v7028 = vmul.f32 1.0, %v7027
    %v7029 = vrcp.pop %v7013
    %v7030 = vmul.f32 %v7013, %v7029
    %v7031 = vsub.f32 1.0, %v7030
    %v7032 = vmul.f32 %v7029, %v7031
    %v7033 = vadd.f32 %v7029, %v7032
    %vm7034 = vweird.f32 %v7013
    %vm7035 = vweird.f32 %v7029
    %vm7036 = vmor %vm7034, %vm7035
    %v7037 = vsel %vm7036, %v7029, %v7033
    %v7038 = vand.u32 2147483647, %v7013
    %vm7039 = vcmp.eq.f32.partialorder %v7038, 8.507059e+37
    %v7040 = vand.u32 %v7013, 2147483648
    %v7041 = vor.u32 1.1754944e-38, %v7040
    %v7042 = vsel %vm7039, %v7041, %v7037
    %v7043 = vmul.f32 1.0, %v7042
    %v7044 = vmax.f32 %v7005, 0.0
    %v7046 = vrot.slane %v6947, 6
    %v7048 = vmul.f32 %v7028, %v7046
    %7050 = vrot.lane.b32.xlu0 %v7044, 64
    %v7051 = vpop.permute.xlu0 %7050
    %v7053 = vmul.f32 %v7028, %v7051
    %7055 = vrot.lane.b32.xlu0 %v7053, 64
    %v7056 = vpop.permute.xlu0 %7055
    %v7058 = vadd.f32 %v7048, %v7056
    %v7059 = vmax.f32 %v7058, 0.0
    %7061 = vrot.lane.b32.xlu0 %v7059, 64
    %v7062 = vpop.permute.xlu0 %7061
    %v7064 = vmul.f32 %v7043, %v7062
    %v7066 = vrot.slane %v7064, 4
    %v7067 = vsel %vm6305, %v7066, 0
    %7069 = vmatpush.msra.mxu0 0.0
    %7070 = vmatpush.msra.mxu0 0.0
    %7071 = vmatpush.msra.mxu0 0.0
    %7072 = vmatpush.msra.mxu0 0.0
    %7073 = vmatpush.msra.mxu0 0.0
    %7074 = vmatpush.msra.mxu0 0.0
    %7075 = vmatpush.msra.mxu0 0.0
    %7076 = vmatpush.msra.mxu0 0.0
    %7077 = vmatpush.msra.mxu0 %v6251
    %7078 = vmatpush.msra.mxu0 %v6249
    %7079 = vmatpush.msra.mxu0 %v6247
    %7080 = vmatpush.msra.mxu0 %v6245
    %7081 = vmatpush.msra.mxu0 %v6243
    %7082 = vmatpush.msra.mxu0 %v6241
    %7083 = vmatpush.msra.mxu0 %v6239
    %7084 = vmatpush.msra.mxu0 %v6237
    %7085 = vmatmul.f32.gmra.mxu0 %v7067
    %v7086 = vpop.f32.mrf.mxu0
    %v7087 = vadd.f32 0.0, %v7086
    %7088 = vdwg.mxu0
    %7089 = vmatpush.msra.mxu0 0.0
    %7090 = vmatpush.msra.mxu0 0.0
    %7091 = vmatpush.msra.mxu0 0.0
    %7092 = vmatpush.msra.mxu0 0.0
    %7093 = vmatpush.msra.mxu0 0.0
    %7094 = vmatpush.msra.mxu0 0.0
    %7095 = vmatpush.msra.mxu0 0.0
    %7096 = vmatpush.msra.mxu0 0.0
    %7097 = vmatpush.msra.mxu0 %v6252
    %7098 = vmatpush.msra.mxu0 %v6250
    %7099 = vmatpush.msra.mxu0 %v6248
    %7100 = vmatpush.msra.mxu0 %v6246
    %7101 = vmatpush.msra.mxu0 %v6244
    %7102 = vmatpush.msra.mxu0 %v6242
    %7103 = vmatpush.msra.mxu0 %v6240
    %7104 = vmatpush.msra.mxu0 %v6238
    %7105 = vmatmul.f32.gmra.mxu0 %v7067
    %v7106 = vpop.f32.mrf.mxu0
    %v7107 = vadd.f32 0.0, %v7106
    %7108 = vdwg.mxu0
    %v7111 = vrot.slane %v7087, 2
    %v7112 = vrot.slane %v7107, 2
    %v7115 = vadd.f32 %v6280, %v7111
    %v7116 = vadd.f32 %v6303, %v7112
    %v7117 = vxor.u32 %v7115, 2147483648
    %v7118 = vxor.u32 %v7116, 2147483648
    %v7119 = vmul.f32 %v7117, 1.442695
    %v7120 = vpow.pop %v7119
    %v7121 = vmul.f32 %v7118, 1.442695
    %v7122 = vpow.pop %v7121
    %v7123 = vadd.f32 %v7120, 1.0
    %v7124 = vadd.f32 %v7122, 1.0
    %v7125 = vrcp.pop %v7123
    %v7126 = vmul.f32 %v7123, %v7125
    %v7127 = vsub.f32 1.0, %v7126
    %v7128 = vmul.f32 %v7125, %v7127
    %v7129 = vadd.f32 %v7125, %v7128
    %vm7130 = vweird.f32 %v7123
    %vm7131 = vweird.f32 %v7125
    %vm7132 = vmor %vm7130, %vm7131
    %v7133 = vsel %vm7132, %v7125, %v7129
    %v7134 = vand.u32 2147483647, %v7123
    %vm7135 = vcmp.eq.f32.partialorder %v7134, 8.507059e+37
    %v7136 = vand.u32 %v7123, 2147483648
    %v7137 = vor.u32 1.1754944e-38, %v7136
    %v7138 = vsel %vm7135, %v7137, %v7133
    %v7139 = vmul.f32 1.0, %v7138
    %v7140 = vrcp.pop %v7124
    %v7141 = vmul.f32 %v7124, %v7140
    %v7142 = vsub.f32 1.0, %v7141
    %v7143 = vmul.f32 %v7140, %v7142
    %v7144 = vadd.f32 %v7140, %v7143
    %vm7145 = vweird.f32 %v7124
    %vm7146 = vweird.f32 %v7140
    %vm7147 = vmor %vm7145, %vm7146
    %v7148 = vsel %vm7147, %v7140, %v7144
    %v7149 = vand.u32 2147483647, %v7124
    %vm7150 = vcmp.eq.f32.partialorder %v7149, 8.507059e+37
    %v7151 = vand.u32 %v7124, 2147483648
    %v7152 = vor.u32 1.1754944e-38, %v7151
    %v7153 = vsel %vm7150, %v7152, %v7148
    %v7154 = vmul.f32 1.0, %v7153
    %v7155 = vmax.f32 %v7116, 0.0
    %v7157 = vrot.slane %v7058, 6
    %v7159 = vmul.f32 %v7139, %v7157
    %7161 = vrot.lane.b32.xlu0 %v7155, 64
    %v7162 = vpop.permute.xlu0 %7161
    %v7164 = vmul.f32 %v7139, %v7162
    %7166 = vrot.lane.b32.xlu0 %v7164, 64
    %v7167 = vpop.permute.xlu0 %7166
    %v7169 = vadd.f32 %v7159, %v7167
    %v7170 = vmax.f32 %v7169, 0.0
    %7172 = vrot.lane.b32.xlu0 %v7170, 64
    %v7173 = vpop.permute.xlu0 %7172
    %v7175 = vmul.f32 %v7154, %v7173
    %v7176 = vsel %vm4514, %v6406, %v6516
    %v7177 = vsel %vm4517, %v7176, %v6627
    %v7178 = vsel %vm4520, %v7177, %v6738
    %v7179 = vsel %vm4514, %v6843, %v6953
    %v7180 = vsel %vm4517, %v7179, %v7064
    %v7181 = vsel %vm4520, %v7180, %v7175
    %v7182 = vld [vmem:[#allocation13] sm:$0xff]
    %v7183 = vld [vmem:[#allocation13 + $0x8] sm:$0xff]
    %v7184 = vld [vmem:[#allocation13 + $0x10] sm:$0xff]
    %v7185 = vld [vmem:[#allocation13 + $0x18] sm:$0xff]
    %v7186 = vld [vmem:[#allocation13 + $0x20] sm:$0xff]
    %v7187 = vld [vmem:[#allocation13 + $0x28] sm:$0xff]
    %v7188 = vld [vmem:[#allocation13 + $0x30] sm:$0xff]
    %v7189 = vld [vmem:[#allocation13 + $0x38] sm:$0xff]
    %v7190 = vld [vmem:[%s11] sm:$0xff]
    %v7191 = vld [vmem:[%s11 + $0x8] sm:$0xff]
    %v7192 = vld [vmem:[%s11 + $0x10] sm:$0xff]
    %v7193 = vld [vmem:[%s11 + $0x18] sm:$0xff]
    %v7194 = vld [vmem:[%s12] sm:$0x1]
    %v7196 = vperm.slane %v7194, 0
    %v7199 = vsel %vm6305, %v7178, 0
    %v7202 = vsel %vm6305, %v7181, 0
    %7204 = vmatpush.msra.mxu0 0.0
    %7205 = vmatpush.msra.mxu0 0.0
    %7206 = vmatpush.msra.mxu0 0.0
    %7207 = vmatpush.msra.mxu0 0.0
    %7208 = vmatpush.msra.mxu0 0.0
    %7209 = vmatpush.msra.mxu0 0.0
    %7210 = vmatpush.msra.mxu0 0.0
    %7211 = vmatpush.msra.mxu0 0.0
    %7212 = vmatpush.msra.mxu0 %v7189
    %7213 = vmatpush.msra.mxu0 %v7188
    %7214 = vmatpush.msra.mxu0 %v7187
    %7215 = vmatpush.msra.mxu0 %v7186
    %7216 = vmatpush.msra.mxu0 %v7185
    %7217 = vmatpush.msra.mxu0 %v7184
    %7218 = vmatpush.msra.mxu0 %v7183
    %7219 = vmatpush.msra.mxu0 %v7182
    %7220 = vmatmul.f32.gmra.mxu0 %v7199
    %v7221 = vpop.f32.mrf.mxu0
    %v7222 = vadd.f32 %v7196, %v7221
    %7223 = vmatmul.f32.gmra.mxu0 %v7202
    %v7224 = vpop.f32.mrf.mxu0
    %v7225 = vadd.f32 %v7196, %v7224
    %7226 = vdwg.mxu0
    %v7227 = vsel %vm475, 0.0, 0
    %7229 = vmatpush.msra.mxu0 0.0
    %7230 = vmatpush.msra.mxu0 0.0
    %7231 = vmatpush.msra.mxu0 0.0
    %7232 = vmatpush.msra.mxu0 0.0
    %7233 = vmatpush.msra.mxu0 0.0
    %7234 = vmatpush.msra.mxu0 0.0
    %7235 = vmatpush.msra.mxu0 0.0
    %7236 = vmatpush.msra.mxu0 0.0
    %7237 = vmatpush.msra.mxu0 0.0
    %7238 = vmatpush.msra.mxu0 0.0
    %7239 = vmatpush.msra.mxu0 0.0
    %7240 = vmatpush.msra.mxu0 0.0
    %7241 = vmatpush.msra.mxu0 %v7193
    %7242 = vmatpush.msra.mxu0 %v7192
    %7243 = vmatpush.msra.mxu0 %v7191
    %7244 = vmatpush.msra.mxu0 %v7190
    %7245 = vmatmul.f32.gmra.mxu0 %v7227
    %v7246 = vpop.f32.mrf.mxu0
    %v7247 = vadd.f32 0.0, %v7246
    %7248 = vdwg.mxu0
    %v7249 = vadd.f32 %v7222, %v7247
    %v7250 = vxor.u32 %v7249, 2147483648
    %v7251 = vmul.f32 %v7250, 1.442695
    %v7252 = vpow.pop %v7251
    %v7253 = vadd.f32 %v7252, 1.0
    %v7254 = vrcp.pop %v7253
    %v7255 = vmul.f32 %v7253, %v7254
    %v7256 = vsub.f32 1.0, %v7255
    %v7257 = vmul.f32 %v7254, %v7256
    %v7258 = vadd.f32 %v7254, %v7257
    %vm7259 = vweird.f32 %v7253
    %vm7260 = vweird.f32 %v7254
    %vm7261 = vmor %vm7259, %vm7260
    %v7262 = vsel %vm7261, %v7254, %v7258
    %v7263 = vand.u32 2147483647, %v7253
    %vm7264 = vcmp.eq.f32.partialorder %v7263, 8.507059e+37
    %v7265 = vand.u32 %v7253, 2147483648
    %v7266 = vor.u32 1.1754944e-38, %v7265
    %v7267 = vsel %vm7264, %v7266, %v7262
    %v7268 = vmul.f32 1.0, %v7267
    %v7269 = vmax.f32 %v7249, 0.0
    %v7270 = vmul.f32 %v7268, 0.0
    %7272 = vrot.lane.b32.xlu0 %v7269, 32
    %v7273 = vpop.permute.xlu0 %7272
    %v7275 = vmul.f32 %v7268, %v7273
    %7277 = vrot.lane.b32.xlu0 %v7275, 32
    %v7278 = vpop.permute.xlu0 %7277
    %v7280 = vadd.f32 %v7270, %v7278
    %v7281 = vmax.f32 %v7280, 0.0
    %7283 = vrot.lane.b32.xlu0 %v7281, 32
    %v7284 = vpop.permute.xlu0 %7283
    %v7286 = vmul.f32 %v7268, %v7284
    %7288 = vrot.lane.b32.xlu0 %v7286, 64
    %v7289 = vpop.permute.xlu0 %7288
    %v7290 = vsel %vm475, %v7289, 0
    %7292 = vmatpush.msra.mxu0 0.0
    %7293 = vmatpush.msra.mxu0 0.0
    %7294 = vmatpush.msra.mxu0 0.0
    %7295 = vmatpush.msra.mxu0 0.0
    %7296 = vmatpush.msra.mxu0 0.0
    %7297 = vmatpush.msra.mxu0 0.0
    %7298 = vmatpush.msra.mxu0 0.0
    %7299 = vmatpush.msra.mxu0 0.0
    %7300 = vmatpush.msra.mxu0 0.0
    %7301 = vmatpush.msra.mxu0 0.0
    %7302 = vmatpush.msra.mxu0 0.0
    %7303 = vmatpush.msra.mxu0 0.0
    %7304 = vmatpush.msra.mxu0 %v7193
    %7305 = vmatpush.msra.mxu0 %v7192
    %7306 = vmatpush.msra.mxu0 %v7191
    %7307 = vmatpush.msra.mxu0 %v7190
    %7308 = vmatmul.f32.gmra.mxu0 %v7290
    %v7309 = vpop.f32.mrf.mxu0
    %v7310 = vadd.f32 0.0, %v7309
    %7311 = vdwg.mxu0
    %v7313 = vrot.slane %v7310, 6
    %v7315 = vadd.f32 %v7222, %v7313
    %v7316 = vxor.u32 %v7315, 2147483648
    %v7317 = vmul.f32 %v7316, 1.442695
    %v7318 = vpow.pop %v7317
    %v7319 = vadd.f32 %v7318, 1.0
    %v7320 = vrcp.pop %v7319
    %v7321 = vmul.f32 %v7319, %v7320
    %v7322 = vsub.f32 1.0, %v7321
    %v7323 = vmul.f32 %v7320, %v7322
    %v7324 = vadd.f32 %v7320, %v7323
    %vm7325 = vweird.f32 %v7319
    %vm7326 = vweird.f32 %v7320
    %vm7327 = vmor %vm7325, %vm7326
    %v7328 = vsel %vm7327, %v7320, %v7324
    %v7329 = vand.u32 2147483647, %v7319
    %vm7330 = vcmp.eq.f32.partialorder %v7329, 8.507059e+37
    %v7331 = vand.u32 %v7319, 2147483648
    %v7332 = vor.u32 1.1754944e-38, %v7331
    %v7333 = vsel %vm7330, %v7332, %v7328
    %v7334 = vmul.f32 1.0, %v7333
    %v7335 = vmax.f32 %v7315, 0.0
    %v7337 = vrot.slane %v7280, 6
    %v7339 = vmul.f32 %v7334, %v7337
    %7341 = vrot.lane.b32.xlu0 %v7335, 32
    %v7342 = vpop.permute.xlu0 %7341
    %v7344 = vmul.f32 %v7334, %v7342
    %7346 = vrot.lane.b32.xlu0 %v7344, 32
    %v7347 = vpop.permute.xlu0 %7346
    %v7349 = vadd.f32 %v7339, %v7347
    %v7350 = vmax.f32 %v7349, 0.0
    %7352 = vrot.lane.b32.xlu0 %v7350, 32
    %v7353 = vpop.permute.xlu0 %7352
    %v7355 = vmul.f32 %v7334, %v7353
    %v7357 = vrot.slane %v7355, 2
    %7358 = vrot.lane.b32.xlu0 %v7357, 64
    %v7359 = vpop.permute.xlu0 %7358
    %v7360 = vsel %vm475, %v7359, 0
    %7362 = vmatpush.msra.mxu0 0.0
    %7363 = vmatpush.msra.mxu0 0.0
    %7364 = vmatpush.msra.mxu0 0.0
    %7365 = vmatpush.msra.mxu0 0.0
    %7366 = vmatpush.msra.mxu0 0.0
    %7367 = vmatpush.msra.mxu0 0.0
    %7368 = vmatpush.msra.mxu0 0.0
    %7369 = vmatpush.msra.mxu0 0.0
    %7370 = vmatpush.msra.mxu0 0.0
    %7371 = vmatpush.msra.mxu0 0.0
    %7372 = vmatpush.msra.mxu0 0.0
    %7373 = vmatpush.msra.mxu0 0.0
    %7374 = vmatpush.msra.mxu0 %v7193
    %7375 = vmatpush.msra.mxu0 %v7192
    %7376 = vmatpush.msra.mxu0 %v7191
    %7377 = vmatpush.msra.mxu0 %v7190
    %7378 = vmatmul.f32.gmra.mxu0 %v7360
    %v7379 = vpop.f32.mrf.mxu0
    %v7380 = vadd.f32 0.0, %v7379
    %7381 = vdwg.mxu0
    %v7383 = vrot.slane %v7380, 4
    %v7385 = vadd.f32 %v7222, %v7383
    %v7386 = vxor.u32 %v7385, 2147483648
    %v7387 = vmul.f32 %v7386, 1.442695
    %v7388 = vpow.pop %v7387
    %v7389 = vadd.f32 %v7388, 1.0
    %v7390 = vrcp.pop %v7389
    %v7391 = vmul.f32 %v7389, %v7390
    %v7392 = vsub.f32 1.0, %v7391
    %v7393 = vmul.f32 %v7390, %v7392
    %v7394 = vadd.f32 %v7390, %v7393
    %vm7395 = vweird.f32 %v7389
    %vm7396 = vweird.f32 %v7390
    %vm7397 = vmor %vm7395, %vm7396
    %v7398 = vsel %vm7397, %v7390, %v7394
    %v7399 = vand.u32 2147483647, %v7389
    %vm7400 = vcmp.eq.f32.partialorder %v7399, 8.507059e+37
    %v7401 = vand.u32 %v7389, 2147483648
    %v7402 = vor.u32 1.1754944e-38, %v7401
    %v7403 = vsel %vm7400, %v7402, %v7398
    %v7404 = vmul.f32 1.0, %v7403
    %v7405 = vmax.f32 %v7385, 0.0
    %v7407 = vrot.slane %v7349, 6
    %v7409 = vmul.f32 %v7404, %v7407
    %7411 = vrot.lane.b32.xlu0 %v7405, 32
    %v7412 = vpop.permute.xlu0 %7411
    %v7414 = vmul.f32 %v7404, %v7412
    %7416 = vrot.lane.b32.xlu0 %v7414, 32
    %v7417 = vpop.permute.xlu0 %7416
    %v7419 = vadd.f32 %v7409, %v7417
    %v7420 = vmax.f32 %v7419, 0.0
    %7422 = vrot.lane.b32.xlu0 %v7420, 32
    %v7423 = vpop.permute.xlu0 %7422
    %v7425 = vmul.f32 %v7404, %v7423
    %v7427 = vrot.slane %v7425, 4
    %7428 = vrot.lane.b32.xlu0 %v7427, 64
    %v7429 = vpop.permute.xlu0 %7428
    %v7430 = vsel %vm475, %v7429, 0
    %7432 = vmatpush.msra.mxu0 0.0
    %7433 = vmatpush.msra.mxu0 0.0
    %7434 = vmatpush.msra.mxu0 0.0
    %7435 = vmatpush.msra.mxu0 0.0
    %7436 = vmatpush.msra.mxu0 0.0
    %7437 = vmatpush.msra.mxu0 0.0
    %7438 = vmatpush.msra.mxu0 0.0
    %7439 = vmatpush.msra.mxu0 0.0
    %7440 = vmatpush.msra.mxu0 0.0
    %7441 = vmatpush.msra.mxu0 0.0
    %7442 = vmatpush.msra.mxu0 0.0
    %7443 = vmatpush.msra.mxu0 0.0
    %7444 = vmatpush.msra.mxu0 %v7193
    %7445 = vmatpush.msra.mxu0 %v7192
    %7446 = vmatpush.msra.mxu0 %v7191
    %7447 = vmatpush.msra.mxu0 %v7190
    %7448 = vmatmul.f32.gmra.mxu0 %v7430
    %v7449 = vpop.f32.mrf.mxu0
    %v7450 = vadd.f32 0.0, %v7449
    %7451 = vdwg.mxu0
    %v7453 = vrot.slane %v7450, 2
    %v7455 = vadd.f32 %v7222, %v7453
    %v7456 = vxor.u32 %v7455, 2147483648
    %v7457 = vmul.f32 %v7456, 1.442695
    %v7458 = vpow.pop %v7457
    %v7459 = vadd.f32 %v7458, 1.0
    %v7460 = vrcp.pop %v7459
    %v7461 = vmul.f32 %v7459, %v7460
    %v7462 = vsub.f32 1.0, %v7461
    %v7463 = vmul.f32 %v7460, %v7462
    %v7464 = vadd.f32 %v7460, %v7463
    %vm7465 = vweird.f32 %v7459
    %vm7466 = vweird.f32 %v7460
    %vm7467 = vmor %vm7465, %vm7466
    %v7468 = vsel %vm7467, %v7460, %v7464
    %v7469 = vand.u32 2147483647, %v7459
    %vm7470 = vcmp.eq.f32.partialorder %v7469, 8.507059e+37
    %v7471 = vand.u32 %v7459, 2147483648
    %v7472 = vor.u32 1.1754944e-38, %v7471
    %v7473 = vsel %vm7470, %v7472, %v7468
    %v7474 = vmul.f32 1.0, %v7473
    %v7475 = vmax.f32 %v7455, 0.0
    %v7477 = vrot.slane %v7419, 6
    %v7479 = vmul.f32 %v7474, %v7477
    %7481 = vrot.lane.b32.xlu0 %v7475, 32
    %v7482 = vpop.permute.xlu0 %7481
    %v7484 = vmul.f32 %v7474, %v7482
    %7486 = vrot.lane.b32.xlu0 %v7484, 32
    %v7487 = vpop.permute.xlu0 %7486
    %v7489 = vadd.f32 %v7479, %v7487
    %v7490 = vmax.f32 %v7489, 0.0
    %7492 = vrot.lane.b32.xlu0 %v7490, 32
    %v7493 = vpop.permute.xlu0 %7492
    %v7495 = vmul.f32 %v7474, %v7493
    %v7497 = vrot.slane %v7495, 6
    %7498 = vrot.lane.b32.xlu0 %v7497, 64
    %v7499 = vpop.permute.xlu0 %7498
    %v7500 = vsel %vm475, %v7499, 0
    %7502 = vmatpush.msra.mxu0 0.0
    %7503 = vmatpush.msra.mxu0 0.0
    %7504 = vmatpush.msra.mxu0 0.0
    %7505 = vmatpush.msra.mxu0 0.0
    %7506 = vmatpush.msra.mxu0 0.0
    %7507 = vmatpush.msra.mxu0 0.0
    %7508 = vmatpush.msra.mxu0 0.0
    %7509 = vmatpush.msra.mxu0 0.0
    %7510 = vmatpush.msra.mxu0 0.0
    %7511 = vmatpush.msra.mxu0 0.0
    %7512 = vmatpush.msra.mxu0 0.0
    %7513 = vmatpush.msra.mxu0 0.0
    %7514 = vmatpush.msra.mxu0 %v7193
    %7515 = vmatpush.msra.mxu0 %v7192
    %7516 = vmatpush.msra.mxu0 %v7191
    %7517 = vmatpush.msra.mxu0 %v7190
    %7518 = vmatmul.f32.gmra.mxu0 %v7500
    %v7519 = vpop.f32.mrf.mxu0
    %v7520 = vadd.f32 0.0, %v7519
    %7521 = vdwg.mxu0
    %v7522 = vadd.f32 %v7225, %v7520
    %v7523 = vxor.u32 %v7522, 2147483648
    %v7524 = vmul.f32 %v7523, 1.442695
    %v7525 = vpow.pop %v7524
    %v7526 = vadd.f32 %v7525, 1.0
    %v7527 = vrcp.pop %v7526
    %v7528 = vmul.f32 %v7526, %v7527
    %v7529 = vsub.f32 1.0, %v7528
    %v7530 = vmul.f32 %v7527, %v7529
    %v7531 = vadd.f32 %v7527, %v7530
    %vm7532 = vweird.f32 %v7526
    %vm7533 = vweird.f32 %v7527
    %vm7534 = vmor %vm7532, %vm7533
    %v7535 = vsel %vm7534, %v7527, %v7531
    %v7536 = vand.u32 2147483647, %v7526
    %vm7537 = vcmp.eq.f32.partialorder %v7536, 8.507059e+37
    %v7538 = vand.u32 %v7526, 2147483648
    %v7539 = vor.u32 1.1754944e-38, %v7538
    %v7540 = vsel %vm7537, %v7539, %v7535
    %v7541 = vmul.f32 1.0, %v7540
    %v7542 = vmax.f32 %v7522, 0.0
    %v7544 = vrot.slane %v7489, 6
    %v7546 = vmul.f32 %v7541, %v7544
    %7548 = vrot.lane.b32.xlu0 %v7542, 32
    %v7549 = vpop.permute.xlu0 %7548
    %v7551 = vmul.f32 %v7541, %v7549
    %7553 = vrot.lane.b32.xlu0 %v7551, 32
    %v7554 = vpop.permute.xlu0 %7553
    %v7556 = vadd.f32 %v7546, %v7554
    %v7557 = vmax.f32 %v7556, 0.0
    %7559 = vrot.lane.b32.xlu0 %v7557, 32
    %v7560 = vpop.permute.xlu0 %7559
    %v7562 = vmul.f32 %v7541, %v7560
    %7564 = vrot.lane.b32.xlu0 %v7562, 64
    %v7565 = vpop.permute.xlu0 %7564
    %v7566 = vsel %vm475, %v7565, 0
    %7568 = vmatpush.msra.mxu0 0.0
    %7569 = vmatpush.msra.mxu0 0.0
    %7570 = vmatpush.msra.mxu0 0.0
    %7571 = vmatpush.msra.mxu0 0.0
    %7572 = vmatpush.msra.mxu0 0.0
    %7573 = vmatpush.msra.mxu0 0.0
    %7574 = vmatpush.msra.mxu0 0.0
    %7575 = vmatpush.msra.mxu0 0.0
    %7576 = vmatpush.msra.mxu0 0.0
    %7577 = vmatpush.msra.mxu0 0.0
    %7578 = vmatpush.msra.mxu0 0.0
    %7579 = vmatpush.msra.mxu0 0.0
    %7580 = vmatpush.msra.mxu0 %v7193
    %7581 = vmatpush.msra.mxu0 %v7192
    %7582 = vmatpush.msra.mxu0 %v7191
    %7583 = vmatpush.msra.mxu0 %v7190
    %7584 = vmatmul.f32.gmra.mxu0 %v7566
    %v7585 = vpop.f32.mrf.mxu0
    %v7586 = vadd.f32 0.0, %v7585
    %7587 = vdwg.mxu0
    %v7589 = vrot.slane %v7586, 6
    %v7591 = vadd.f32 %v7225, %v7589
    %v7592 = vxor.u32 %v7591, 2147483648
    %v7593 = vmul.f32 %v7592, 1.442695
    %v7594 = vpow.pop %v7593
    %v7595 = vadd.f32 %v7594, 1.0
    %v7596 = vrcp.pop %v7595
    %v7597 = vmul.f32 %v7595, %v7596
    %v7598 = vsub.f32 1.0, %v7597
    %v7599 = vmul.f32 %v7596, %v7598
    %v7600 = vadd.f32 %v7596, %v7599
    %vm7601 = vweird.f32 %v7595
    %vm7602 = vweird.f32 %v7596
    %vm7603 = vmor %vm7601, %vm7602
    %v7604 = vsel %vm7603, %v7596, %v7600
    %v7605 = vand.u32 2147483647, %v7595
    %vm7606 = vcmp.eq.f32.partialorder %v7605, 8.507059e+37
    %v7607 = vand.u32 %v7595, 2147483648
    %v7608 = vor.u32 1.1754944e-38, %v7607
    %v7609 = vsel %vm7606, %v7608, %v7604
    %v7610 = vmul.f32 1.0, %v7609
    %v7611 = vmax.f32 %v7591, 0.0
    %v7613 = vrot.slane %v7556, 6
    %v7615 = vmul.f32 %v7610, %v7613
    %7617 = vrot.lane.b32.xlu0 %v7611, 32
    %v7618 = vpop.permute.xlu0 %7617
    %v7620 = vmul.f32 %v7610, %v7618
    %7622 = vrot.lane.b32.xlu0 %v7620, 32
    %v7623 = vpop.permute.xlu0 %7622
    %v7625 = vadd.f32 %v7615, %v7623
    %v7626 = vmax.f32 %v7625, 0.0
    %7628 = vrot.lane.b32.xlu0 %v7626, 32
    %v7629 = vpop.permute.xlu0 %7628
    %v7631 = vmul.f32 %v7610, %v7629
    %v7633 = vrot.slane %v7631, 2
    %7634 = vrot.lane.b32.xlu0 %v7633, 64
    %v7635 = vpop.permute.xlu0 %7634
    %v7636 = vsel %vm475, %v7635, 0
    %7638 = vmatpush.msra.mxu0 0.0
    %7639 = vmatpush.msra.mxu0 0.0
    %7640 = vmatpush.msra.mxu0 0.0
    %7641 = vmatpush.msra.mxu0 0.0
    %7642 = vmatpush.msra.mxu0 0.0
    %7643 = vmatpush.msra.mxu0 0.0
    %7644 = vmatpush.msra.mxu0 0.0
    %7645 = vmatpush.msra.mxu0 0.0
    %7646 = vmatpush.msra.mxu0 0.0
    %7647 = vmatpush.msra.mxu0 0.0
    %7648 = vmatpush.msra.mxu0 0.0
    %7649 = vmatpush.msra.mxu0 0.0
    %7650 = vmatpush.msra.mxu0 %v7193
    %7651 = vmatpush.msra.mxu0 %v7192
    %7652 = vmatpush.msra.mxu0 %v7191
    %7653 = vmatpush.msra.mxu0 %v7190
    %7654 = vmatmul.f32.gmra.mxu0 %v7636
    %v7655 = vpop.f32.mrf.mxu0
    %v7656 = vadd.f32 0.0, %v7655
    %7657 = vdwg.mxu0
    %v7659 = vrot.slane %v7656, 4
    %v7661 = vadd.f32 %v7225, %v7659
    %v7662 = vxor.u32 %v7661, 2147483648
    %v7663 = vmul.f32 %v7662, 1.442695
    %v7664 = vpow.pop %v7663
    %v7665 = vadd.f32 %v7664, 1.0
    %v7666 = vrcp.pop %v7665
    %v7667 = vmul.f32 %v7665, %v7666
    %v7668 = vsub.f32 1.0, %v7667
    %v7669 = vmul.f32 %v7666, %v7668
    %v7670 = vadd.f32 %v7666, %v7669
    %vm7671 = vweird.f32 %v7665
    %vm7672 = vweird.f32 %v7666
    %vm7673 = vmor %vm7671, %vm7672
    %v7674 = vsel %vm7673, %v7666, %v7670
    %v7675 = vand.u32 2147483647, %v7665
    %vm7676 = vcmp.eq.f32.partialorder %v7675, 8.507059e+37
    %v7677 = vand.u32 %v7665, 2147483648
    %v7678 = vor.u32 1.1754944e-38, %v7677
    %v7679 = vsel %vm7676, %v7678, %v7674
    %v7680 = vmul.f32 1.0, %v7679
    %v7681 = vmax.f32 %v7661, 0.0
    %v7683 = vrot.slane %v7625, 6
    %v7685 = vmul.f32 %v7680, %v7683
    %7687 = vrot.lane.b32.xlu0 %v7681, 32
    %v7688 = vpop.permute.xlu0 %7687
    %v7690 = vmul.f32 %v7680, %v7688
    %7692 = vrot.lane.b32.xlu0 %v7690, 32
    %v7693 = vpop.permute.xlu0 %7692
    %v7695 = vadd.f32 %v7685, %v7693
    %v7696 = vmax.f32 %v7695, 0.0
    %7698 = vrot.lane.b32.xlu0 %v7696, 32
    %v7699 = vpop.permute.xlu0 %7698
    %v7701 = vmul.f32 %v7680, %v7699
    %v7703 = vrot.slane %v7701, 4
    %7704 = vrot.lane.b32.xlu0 %v7703, 64
    %v7705 = vpop.permute.xlu0 %7704
    %v7706 = vsel %vm475, %v7705, 0
    %7708 = vmatpush.msra.mxu0 0.0
    %7709 = vmatpush.msra.mxu0 0.0
    %7710 = vmatpush.msra.mxu0 0.0
    %7711 = vmatpush.msra.mxu0 0.0
    %7712 = vmatpush.msra.mxu0 0.0
    %7713 = vmatpush.msra.mxu0 0.0
    %7714 = vmatpush.msra.mxu0 0.0
    %7715 = vmatpush.msra.mxu0 0.0
    %7716 = vmatpush.msra.mxu0 0.0
    %7717 = vmatpush.msra.mxu0 0.0
    %7718 = vmatpush.msra.mxu0 0.0
    %7719 = vmatpush.msra.mxu0 0.0
    %7720 = vmatpush.msra.mxu0 %v7193
    %7721 = vmatpush.msra.mxu0 %v7192
    %7722 = vmatpush.msra.mxu0 %v7191
    %7723 = vmatpush.msra.mxu0 %v7190
    %7724 = vmatmul.f32.gmra.mxu0 %v7706
    %v7725 = vpop.f32.mrf.mxu0
    %v7726 = vadd.f32 0.0, %v7725
    %7727 = vdwg.mxu0
    %v7729 = vrot.slane %v7726, 2
    %v7731 = vadd.f32 %v7225, %v7729
    %v7732 = vxor.u32 %v7731, 2147483648
    %v7733 = vmul.f32 %v7732, 1.442695
    %v7734 = vpow.pop %v7733
    %v7735 = vadd.f32 %v7734, 1.0
    %v7736 = vrcp.pop %v7735
    %v7737 = vmul.f32 %v7735, %v7736
    %v7738 = vsub.f32 1.0, %v7737
    %v7739 = vmul.f32 %v7736, %v7738
    %v7740 = vadd.f32 %v7736, %v7739
    %vm7741 = vweird.f32 %v7735
    %vm7742 = vweird.f32 %v7736
    %vm7743 = vmor %vm7741, %vm7742
    %v7744 = vsel %vm7743, %v7736, %v7740
    %v7745 = vand.u32 2147483647, %v7735
    %vm7746 = vcmp.eq.f32.partialorder %v7745, 8.507059e+37
    %v7747 = vand.u32 %v7735, 2147483648
    %v7748 = vor.u32 1.1754944e-38, %v7747
    %v7749 = vsel %vm7746, %v7748, %v7744
    %v7750 = vmul.f32 1.0, %v7749
    %v7751 = vmax.f32 %v7731, 0.0
    %v7753 = vrot.slane %v7695, 6
    %v7755 = vmul.f32 %v7750, %v7753
    %7757 = vrot.lane.b32.xlu0 %v7751, 32
    %v7758 = vpop.permute.xlu0 %7757
    %v7760 = vmul.f32 %v7750, %v7758
    %7762 = vrot.lane.b32.xlu0 %v7760, 32
    %v7763 = vpop.permute.xlu0 %7762
    %v7765 = vadd.f32 %v7755, %v7763
    %v7766 = vmax.f32 %v7765, 0.0
    %7768 = vrot.lane.b32.xlu0 %v7766, 32
    %v7769 = vpop.permute.xlu0 %7768
    %v7771 = vmul.f32 %v7750, %v7769
    %7773 = vrot.lane.b32.xlu0 %v7771, 64
    %v7774 = vpop.permute.xlu0 %7773
    %v7776 = vsel %vm475, %v7774, 0.0
    %7777 = vst [vmem:[%s13 - $0x6] sm:$0xc0] %v7776
    // Predicated region
    $region86: #{encoder_forward.1} parent=1 // pred_check
      _
    $region87: #{encoder_forward.1} parent=1 // pred_check_branch
      %7779 = sbr.rel (0) target = $region89
    $region88: #{encoder_forward.1} parent=1 // pred_region
      _
    $region89: #{encoder_forward.1} parent=1 // pred_fallthru
      _
    // Predicated region
    $region90: #{encoder_forward.1} parent=1 // pred_check
      _
    $region91: #{encoder_forward.1} parent=1 // pred_check_branch
      %7781 = sbr.rel (0) target = $region93
    $region92: #{encoder_forward.1} parent=1 // pred_region
      _
    $region93: #{encoder_forward.1} parent=1 // pred_fallthru
      _
    %7782 = vsyncpa [#allocation3], 1
    %7783 = vsyncpa [#allocation5], 1
    %7784 = vsyncpa [#allocation8], 1
    %7785 = vsyncpa [#allocation11], 1
    %7786 = vsyncpa [#allocation14], 1

</llo_original>
